<compile_context>
chip_gen: v7x
topology: tpu7x:2x2x1
jax: 0.10.0
libtpu: 0.0.40
codegen_flags: <defaults>
</compile_context>

<pallas_src>
import functools
import numpy as np
import jax
import jax.numpy as jnp
from jax.experimental import pallas as pl
from jax.experimental.pallas import tpu as pltpu

DIM_H = 8
N_Z = 32
BATCH = 2
K = 4
EPS = 1e-5

C1, C2, C3 = DIM_H * 8, DIM_H * 4, DIM_H * 2      # 64, 32, 16
H0, H1, H2, H3 = 7, 10, 13, 28                    # spatial sizes per stage

B_TILE = 8           # batch tile (multiple of 8 so every M dim is sublane aligned)
FCP = 512            # padded lanes per FC row block   (7*64 = 448 valid)
NB1 = 384            # padded lanes per kh block, L1   (10*32 = 320 valid)
NB2 = 256            # padded lanes per kh block, L2   (13*16 = 208 valid)
NB3 = 128            # padded lanes per kh block, L3   (28*1  = 28  valid)


# ------------------------------ kernel ---------------------------------------

def _bn_relu(y, gamma, beta, *, n_chan, lanes_valid, n_spatial, n_valid_batch):
    # y: (R, L) f32 with lanes = ow*n_chan + c (zero beyond lanes_valid) and rows
    # = oh*B_TILE + b.  Training-mode BatchNorm2d (batch stats, biased variance)
    # + ReLU.  Stats exclude batch-padding rows via n_valid_batch.
    rows, lanes = y.shape

    bidx = jax.lax.broadcasted_iota(jnp.int32, (rows, lanes), 0) % B_TILE
    yv = jnp.where(bidx < n_valid_batch, y, 0.0)
    s = jnp.concatenate([jnp.sum(yv, axis=0, keepdims=True),
                         jnp.sum(yv * y, axis=0, keepdims=True)], axis=0)  # (2, L)

    # lane -> channel reduction mask (built in-kernel, no HBM constant)
    lane_i = jax.lax.broadcasted_iota(jnp.int32, (lanes, 128), 0)
    chan_i = jax.lax.broadcasted_iota(jnp.int32, (lanes, 128), 1)
    reduce_m = jnp.where((lane_i % n_chan == chan_i) & (lane_i < lanes_valid),
                         1.0, 0.0)
    st = jnp.dot(s, reduce_m, preferred_element_type=jnp.float32)          # (2,128)

    inv_n = 1.0 / (n_valid_batch.astype(jnp.float32) * float(n_spatial))
    mean = st[0:1, :] * inv_n
    var = st[1:2, :] * inv_n - mean * mean
    scale = gamma * jax.lax.rsqrt(var + EPS)                               # (1,128)
    shift = beta - mean * scale

    # channel -> lane broadcast mask
    chan_j = jax.lax.broadcasted_iota(jnp.int32, (128, lanes), 0)
    lane_j = jax.lax.broadcasted_iota(jnp.int32, (128, lanes), 1)
    bcast_m = jnp.where(lane_j % n_chan == chan_j, 1.0, 0.0)
    sb = jnp.dot(jnp.concatenate([scale, shift], axis=0), bcast_m,
                 preferred_element_type=jnp.float32)                       # (2, L)

    return jnp.maximum(y * sb[0:1, :] + sb[1:2, :], 0.0)


def _decoder_kernel(x_ref, fcw_ref, fcb_ref, w1_ref, w2_ref, w3_ref, bnp_ref,
                    o_ref, a1_ref, acc1_ref, acc2_ref, ev_ref, od_ref, *, b_total):
    B = B_TILE
    # valid (un-padded) samples in this batch tile -> exact BN statistics
    nv = jnp.minimum(jnp.int32(b_total) - pl.program_id(0) * B, B)

    # ---- FC + ReLU: one wide MXU matmul, scattered into height-major layout ----
    fc = jnp.dot(x_ref[...].astype(jnp.bfloat16), fcw_ref[...],
                 preferred_element_type=jnp.float32) + fcb_ref[...]
    fc = jnp.maximum(fc, 0.0)                                   # (B, 7*512)
    for h in range(H0):
        a1_ref[h * B:(h + 1) * B, :] = fc[:, h * FCP:(h + 1) * FCP]

    # ---- ConvT(64->32, k4, s1) + BN + ReLU ----
    c1 = jnp.dot(a1_ref[...].astype(jnp.bfloat16), w1_ref[...],
                 preferred_element_type=jnp.float32)            # (7B, 4*384)
    acc1_ref[...] = jnp.zeros_like(acc1_ref)
    for kh in range(K):                                         # height overlap-add
        acc1_ref[kh * B:(kh + H0) * B, :] += c1[:, kh * NB1:(kh + 1) * NB1]
    a2 = _bn_relu(acc1_ref[...], bnp_ref[0:1, :], bnp_ref[1:2, :],
                  n_chan=C2, lanes_valid=H1 * C2, n_spatial=H1 * H1,
                  n_valid_batch=nv)                             # (10B, 384)

    # ---- ConvT(32->16, k4, s1) + BN + ReLU ----
    c2 = jnp.dot(a2.astype(jnp.bfloat16), w2_ref[...],
                 preferred_element_type=jnp.float32)            # (10B, 4*256)
    acc2_ref[...] = jnp.zeros_like(acc2_ref)
    for kh in range(K):
        acc2_ref[kh * B:(kh + H1) * B, :] += c2[:, kh * NB2:(kh + 1) * NB2]
    a3 = _bn_relu(acc2_ref[...], bnp_ref[2:3, :], bnp_ref[3:4, :],
                  n_chan=C3, lanes_valid=H2 * C3, n_spatial=H2 * H2,
                  n_valid_batch=nv)                             # (13B, 256)

    # ---- ConvT(16->1, k4, s2) + Tanh (polyphase over output-row parity) ----
    c3 = jnp.dot(a3.astype(jnp.bfloat16), w3_ref[...],
                 preferred_element_type=jnp.float32)            # (13B, 4*128)
    ev_ref[...] = jnp.zeros_like(ev_ref)
    od_ref[...] = jnp.zeros_like(od_ref)
    ev_ref[0:H2 * B, :] += c3[:, 0 * NB3:1 * NB3]        # kh=0 -> oh even, j = ih
    od_ref[0:H2 * B, :] += c3[:, 1 * NB3:2 * NB3]        # kh=1 -> oh odd,  j = ih
    ev_ref[B:(H2 + 1) * B, :] += c3[:, 2 * NB3:3 * NB3]  # kh=2 -> oh even, j = ih+1
    od_ref[B:(H2 + 1) * B, :] += c3[:, 3 * NB3:4 * NB3]  # kh=3 -> oh odd,  j = ih+1

    b3 = bnp_ref[4:5, :]                                 # bias replicated over lanes
    o_ref[0, :, :] = jnp.tanh(ev_ref[...] + b3)
    o_ref[1, :, :] = jnp.tanh(od_ref[...] + b3)


# -------------------------- init-time folding ---------------------------------

def _prep_fc(fc_w, fc_b):
    # fc_w: (N_Z, C1*H0*H0), torch column index o = c*49 + h*7 + w.
    # -> (N_Z, H0*FCP), column j = h*FCP + w*C1 + c  (per-h block padded to 512).
    w = np.asarray(fc_w, np.float32)
    b = np.asarray(fc_b, np.float32)
    h = np.arange(H0)[:, None, None]
    ww = np.arange(H0)[None, :, None]
    c = np.arange(C1)[None, None, :]
    src = (c * (H0 * H0) + h * H0 + ww).reshape(H0, H0 * C1)      # (7, 448)
    wp = np.zeros((N_Z, H0 * FCP), np.float32)
    bp = np.zeros((1, H0 * FCP), np.float32)
    for hh in range(H0):
        wp[:, hh * FCP:hh * FCP + H0 * C1] = w[:, src[hh]]
        bp[0, hh * FCP:hh * FCP + H0 * C1] = b[src[hh]]
    return jnp.asarray(wp, jnp.bfloat16), jnp.asarray(bp, jnp.float32)


def _fold_deconv_weight(w, w_in, stride, in_pad, nb):
    # w: (K, K, Ci, Co)  ->  (in_pad, K*nb) width-unfolded (Toeplitz / polyphase):
    #   row  = iw*Ci + ci   (rows >= w_in*Ci are zero padding)
    #   col  = kh*nb + ow*Co + co   with ow = stride*iw + kw (cols beyond OW*Co zero)
    w = np.asarray(w, np.float32)
    k, _, ci, co = w.shape
    wf = np.zeros((in_pad, k, nb), np.float32)
    for kh in range(k):
        for iw in range(w_in):
            for kw in range(k):
                ow = stride * iw + kw
                wf[iw * ci:(iw + 1) * ci, kh, ow * co:(ow + 1) * co] = w[kh, kw]
    return jnp.asarray(wf.reshape(in_pad, k * nb), jnp.bfloat16)


def init_params(key):
    keys = jax.random.split(key, 12)
    n = lambda k, s, sc=0.1: sc * jax.random.normal(k, s, jnp.float32)
    return {
        "fc_w": n(keys[0], (N_Z, C1 * H0 * H0)),
        "fc_b": n(keys[1], (C1 * H0 * H0,)),
        "w1": n(keys[2], (K, K, C1, C2)),
        "b1": n(keys[3], (C2,)),     # no effect on output (train-mode BN)
        "g1": 1.0 + n(keys[4], (C2,)),
        "be1": n(keys[5], (C2,)),
        "w2": n(keys[6], (K, K, C2, C3)),
        "b2": n(keys[7], (C3,)),     # no effect on output (train-mode BN)
        "g2": 1.0 + n(keys[8], (C3,)),
        "be2": n(keys[9], (C3,)),
        "w3": n(keys[10], (K, K, C3, 1)),
        "b3": n(keys[11], (1,)),
    }
    # TODO(synk): BatchNorm running_mean/running_var updates (a training-mode side
    # effect of the PyTorch module) are not modeled; only the forward output is.


def prepare_inputs(p):
    fcw, fcb = _prep_fc(p["fc_w"], p["fc_b"])
    w1f = _fold_deconv_weight(p["w1"], H0, 1, FCP, NB1)
    w2f = _fold_deconv_weight(p["w2"], H1, 1, NB1, NB2)
    w3f = _fold_deconv_weight(p["w3"], H2, 2, NB2, NB3)
    bnp = np.zeros((8, 128), np.float32)
    bnp[0, :C2] = np.asarray(p["g1"])
    bnp[1, :C2] = np.asarray(p["be1"])
    bnp[2, :C3] = np.asarray(p["g2"])
    bnp[3, :C3] = np.asarray(p["be2"])
    bnp[4, :] = float(np.asarray(p["b3"])[0])
    return (fcw, fcb, w1f, w2f, w3f, jnp.asarray(bnp))


# ------------------------------ wrapper ---------------------------------------

@jax.jit
def decoder_forward(x, weights):
    fcw, fcb, w1f, w2f, w3f, bnp = weights
    B = x.shape[0]
    n_tiles = pl.cdiv(B, B_TILE)
    b_pad = n_tiles * B_TILE
    x_pad = jnp.pad(x, ((0, b_pad - B), (0, 0)))

    # TODO(synk): whole-batch training BN statistics are exact when the batch fits
    # in one tile (B <= B_TILE, demo case); for B > B_TILE each tile normalizes
    # with its own tile's statistics.
    pinned = lambda a: pl.BlockSpec(a.shape, lambda i: (0, 0))   # weight stays in VMEM

    out = pl.pallas_call(
        functools.partial(_decoder_kernel, b_total=B),
        out_shape=jax.ShapeDtypeStruct((2, 14 * b_pad, 128), jnp.float32),
        grid=(n_tiles,),
        in_specs=[
            pl.BlockSpec((B_TILE, N_Z), lambda i: (i, 0)),
            pinned(fcw), pinned(fcb),
            pinned(w1f), pinned(w2f), pinned(w3f),
            pinned(bnp),
        ],
        out_specs=pl.BlockSpec((2, 14 * B_TILE, 128), lambda i: (0, i, 0)),
        scratch_shapes=[
            pltpu.VMEM((H0 * B_TILE, FCP), jnp.float32),   # a1
            pltpu.VMEM((H1 * B_TILE, NB1), jnp.float32),   # layer-1 accumulator
            pltpu.VMEM((H2 * B_TILE, NB2), jnp.float32),   # layer-2 accumulator
            pltpu.VMEM((14 * B_TILE, NB3), jnp.float32),   # even output rows
            pltpu.VMEM((14 * B_TILE, NB3), jnp.float32),   # odd output rows
        ],
        compiler_params=pltpu.CompilerParams(
            dimension_semantics=("parallel",),
            vmem_limit_bytes=32 * 1024 * 1024),
    )(x_pad, fcw, fcb, w1f, w2f, w3f, bnp)

    # (2=parity, tile, j, b, ow) -> (b, oh=2*j+p, ow)
    o = out.reshape(2, n_tiles, 14, B_TILE, 128)
    o = o.transpose(1, 3, 2, 0, 4).reshape(b_pad, 2 * 14, 128)
    return o[:B, :, :H3].reshape(B, 1, H3, H3)


# -------------------------- pure-JAX reference ---------------------------------

def _ref_deconv(x, w, stride):
    # x: (B,H,W,Ci) NHWC ; w: (K,K,Ci,Co) ; ConvTranspose2d, pad=0.
    b, hh, ww, _ = x.shape
    k, _, _, co = w.shape
    oh = (hh - 1) * stride + k
    out = jnp.zeros((b, oh, oh, co), jnp.float32)
    for kh in range(k):
        for kw in range(k):
            contrib = jnp.einsum("bhwc,cd->bhwd", x, w[kh, kw],
                                 precision=jax.lax.Precision.HIGHEST)
            out = out.at[:, kh:kh + (hh - 1) * stride + 1:stride,
                         kw:kw + (ww - 1) * stride + 1:stride, :].add(contrib)
    return out


def _ref_bn_relu(y, gamma, beta):
    mean = jnp.mean(y, axis=(0, 1, 2), keepdims=True)
    var = jnp.mean((y - mean) ** 2, axis=(0, 1, 2), keepdims=True)
    return jnp.maximum((y - mean) * jax.lax.rsqrt(var + EPS) * gamma + beta, 0.0)


def decoder_reference(x, p):
    f = jnp.maximum(jnp.dot(x, p["fc_w"],
                            precision=jax.lax.Precision.HIGHEST) + p["fc_b"], 0.0)
    h = f.reshape(x.shape[0], C1, H0, H0).transpose(0, 2, 3, 1)        # NHWC
    h = _ref_bn_relu(_ref_deconv(h, p["w1"], 1) + p["b1"], p["g1"], p["be1"])
    h = _ref_bn_relu(_ref_deconv(h, p["w2"], 1) + p["b2"], p["g2"], p["be2"])
    y = jnp.tanh(_ref_deconv(h, p["w3"], 2) + p["b3"])
    return y.transpose(0, 3, 1, 2)                                     # NCHW


# -------------------------------- main ------------------------------------------

if __name__ == "__main__":
    key = jax.random.PRNGKey(0)
    kx, kp = jax.random.split(key)
    x = jax.random.normal(kx, (BATCH, N_Z), jnp.float32)
    params = init_params(kp)
    weights = prepare_inputs(params)

    out = jax.block_until_ready(decoder_forward(x, weights))

    assert out.shape == (BATCH, 1, H3, H3), out.shape
    assert out.dtype == jnp.float32
    assert bool(jnp.all(jnp.isfinite(out)))

    ref = jax.block_until_ready(jax.jit(decoder_reference)(x, params))
    assert float(jnp.max(jnp.abs(out - ref))) < 5e-2, "mismatch vs pure-JAX reference"

    print("KERNEL_OK")
</pallas_src>

<mosaic_0001>
module attributes {stable_mosaic.version = 11 : i64} {
  func.func @_decoder_kernel(%arg0: i32, %arg1: memref<8x32xf32, #tpu.memory_space<vmem>>, %arg2: memref<32x3584xbf16, #tpu.memory_space<vmem>>, %arg3: memref<1x3584xf32, #tpu.memory_space<vmem>>, %arg4: memref<512x1536xbf16, #tpu.memory_space<vmem>>, %arg5: memref<384x1024xbf16, #tpu.memory_space<vmem>>, %arg6: memref<256x512xbf16, #tpu.memory_space<vmem>>, %arg7: memref<8x128xf32, #tpu.memory_space<vmem>>, %arg8: memref<2x112x128xf32, #tpu.memory_space<vmem>>, %arg9: memref<56x512xf32, #tpu.memory_space<vmem>>, %arg10: memref<80x384xf32, #tpu.memory_space<vmem>>, %arg11: memref<104x256xf32, #tpu.memory_space<vmem>>, %arg12: memref<112x128xf32, #tpu.memory_space<vmem>>, %arg13: memref<112x128xf32, #tpu.memory_space<vmem>>) attributes {dimension_semantics = [#tpu.dimension_semantics<parallel>], iteration_bounds = array<i64: 1>, scalar_prefetch = 0 : i64, scratch_operands = 5 : i64, tpu.core_type = #tpu.core_type<tc>, window_params = [{transform_indices = @transform_0, window_bounds = array<i64: 8, 32>}, {pipeline_mode = #tpu.pipeline_mode<synchronous>, transform_indices = @transform_1, window_bounds = array<i64: 32, 3584>}, {pipeline_mode = #tpu.pipeline_mode<synchronous>, transform_indices = @transform_2, window_bounds = array<i64: 1, 3584>}, {pipeline_mode = #tpu.pipeline_mode<synchronous>, transform_indices = @transform_3, window_bounds = array<i64: 512, 1536>}, {pipeline_mode = #tpu.pipeline_mode<synchronous>, transform_indices = @transform_4, window_bounds = array<i64: 384, 1024>}, {pipeline_mode = #tpu.pipeline_mode<synchronous>, transform_indices = @transform_5, window_bounds = array<i64: 256, 512>}, {pipeline_mode = #tpu.pipeline_mode<synchronous>, transform_indices = @transform_6, window_bounds = array<i64: 8, 128>}, {transform_indices = @transform_7, window_bounds = array<i64: 2, 112, 128>}]} {
    %c8_i32 = arith.constant 8 : i32
    %0 = arith.muli %arg0, %c8_i32 : i32
    %c2_i32 = arith.constant 2 : i32
    %1 = arith.subi %c2_i32, %0 : i32
    %c8_i32_0 = arith.constant 8 : i32
    %2 = arith.minsi %1, %c8_i32_0 : i32
    %c0 = arith.constant 0 : index
    %c0_1 = arith.constant 0 : index
    %3 = vector.load %arg1[%c0, %c0_1] : memref<8x32xf32, #tpu.memory_space<vmem>>, vector<8x32xf32>
    %4 = arith.truncf %3 : vector<8x32xf32> to vector<8x32xbf16>
    %c0_2 = arith.constant 0 : index
    %c0_3 = arith.constant 0 : index
    %5 = vector.load %arg2[%c0_2, %c0_3] : memref<32x3584xbf16, #tpu.memory_space<vmem>>, vector<32x3584xbf16>
    %cst = arith.constant dense<0.000000e+00> : vector<8x3584xf32>
    %6 = tpu.matmul %4, %5, %cst {dimension_numbers = #tpu.dot_dimension_numbers<[1], [0], [0], [1], [0, 0, 1, 1], [], []>} : vector<8x32xbf16>, vector<32x3584xbf16>, vector<8x3584xf32> -> vector<8x3584xf32>
    %c0_4 = arith.constant 0 : index
    %c0_5 = arith.constant 0 : index
    %7 = vector.load %arg3[%c0_4, %c0_5] : memref<1x3584xf32, #tpu.memory_space<vmem>>, vector<1x3584xf32>
    %8 = vector.broadcast %7 : vector<1x3584xf32> to vector<8x3584xf32>
    %9 = arith.addf %6, %8 : vector<8x3584xf32>
    %cst_6 = arith.constant 0.000000e+00 : f32
    %10 = vector.broadcast %cst_6 : f32 to vector<8x3584xf32>
    %11 = arith.maximumf %9, %10 : vector<8x3584xf32>
    %12 = vector.extract_strided_slice %11 {offsets = [0, 0], sizes = [8, 512], strides = [1, 1]} : vector<8x3584xf32> to vector<8x512xf32>
    %c0_7 = arith.constant 0 : index
    %c0_8 = arith.constant 0 : index
    %13 = vector.load %arg9[%c0_7, %c0_8] : memref<56x512xf32, #tpu.memory_space<vmem>>, vector<8x512xf32>
    tpu.vector_store %arg9[%c0_7, %c0_8], %12 {strides = array<i32>} : memref<56x512xf32, #tpu.memory_space<vmem>>, vector<8x512xf32>,
    %14 = vector.extract_strided_slice %11 {offsets = [0, 512], sizes = [8, 512], strides = [1, 1]} : vector<8x3584xf32> to vector<8x512xf32>
    %c8 = arith.constant 8 : index
    %c0_9 = arith.constant 0 : index
    %15 = vector.load %arg9[%c8, %c0_9] : memref<56x512xf32, #tpu.memory_space<vmem>>, vector<8x512xf32>
    tpu.vector_store %arg9[%c8, %c0_9], %14 {strides = array<i32>} : memref<56x512xf32, #tpu.memory_space<vmem>>, vector<8x512xf32>,
    %16 = vector.extract_strided_slice %11 {offsets = [0, 1024], sizes = [8, 512], strides = [1, 1]} : vector<8x3584xf32> to vector<8x512xf32>
    %c16 = arith.constant 16 : index
    %c0_10 = arith.constant 0 : index
    %17 = vector.load %arg9[%c16, %c0_10] : memref<56x512xf32, #tpu.memory_space<vmem>>, vector<8x512xf32>
    tpu.vector_store %arg9[%c16, %c0_10], %16 {strides = array<i32>} : memref<56x512xf32, #tpu.memory_space<vmem>>, vector<8x512xf32>,
    %18 = vector.extract_strided_slice %11 {offsets = [0, 1536], sizes = [8, 512], strides = [1, 1]} : vector<8x3584xf32> to vector<8x512xf32>
    %c24 = arith.constant 24 : index
    %c0_11 = arith.constant 0 : index
    %19 = vector.load %arg9[%c24, %c0_11] : memref<56x512xf32, #tpu.memory_space<vmem>>, vector<8x512xf32>
    tpu.vector_store %arg9[%c24, %c0_11], %18 {strides = array<i32>} : memref<56x512xf32, #tpu.memory_space<vmem>>, vector<8x512xf32>,
    %20 = vector.extract_strided_slice %11 {offsets = [0, 2048], sizes = [8, 512], strides = [1, 1]} : vector<8x3584xf32> to vector<8x512xf32>
    %c32 = arith.constant 32 : index
    %c0_12 = arith.constant 0 : index
    %21 = vector.load %arg9[%c32, %c0_12] : memref<56x512xf32, #tpu.memory_space<vmem>>, vector<8x512xf32>
    tpu.vector_store %arg9[%c32, %c0_12], %20 {strides = array<i32>} : memref<56x512xf32, #tpu.memory_space<vmem>>, vector<8x512xf32>,
    %22 = vector.extract_strided_slice %11 {offsets = [0, 2560], sizes = [8, 512], strides = [1, 1]} : vector<8x3584xf32> to vector<8x512xf32>
    %c40 = arith.constant 40 : index
    %c0_13 = arith.constant 0 : index
    %23 = vector.load %arg9[%c40, %c0_13] : memref<56x512xf32, #tpu.memory_space<vmem>>, vector<8x512xf32>
    tpu.vector_store %arg9[%c40, %c0_13], %22 {strides = array<i32>} : memref<56x512xf32, #tpu.memory_space<vmem>>, vector<8x512xf32>,
    %24 = vector.extract_strided_slice %11 {offsets = [0, 3072], sizes = [8, 512], strides = [1, 1]} : vector<8x3584xf32> to vector<8x512xf32>
    %c48 = arith.constant 48 : index
    %c0_14 = arith.constant 0 : index
    %25 = vector.load %arg9[%c48, %c0_14] : memref<56x512xf32, #tpu.memory_space<vmem>>, vector<8x512xf32>
    tpu.vector_store %arg9[%c48, %c0_14], %24 {strides = array<i32>} : memref<56x512xf32, #tpu.memory_space<vmem>>, vector<8x512xf32>,
    %c0_15 = arith.constant 0 : index
    %c0_16 = arith.constant 0 : index
    %26 = vector.load %arg9[%c0_15, %c0_16] : memref<56x512xf32, #tpu.memory_space<vmem>>, vector<56x512xf32>
    %27 = arith.truncf %26 : vector<56x512xf32> to vector<56x512xbf16>
    %c0_17 = arith.constant 0 : index
    %c0_18 = arith.constant 0 : index
    %28 = vector.load %arg4[%c0_17, %c0_18] : memref<512x1536xbf16, #tpu.memory_space<vmem>>, vector<512x1536xbf16>
    %cst_19 = arith.constant dense<0.000000e+00> : vector<56x1536xf32>
    %29 = tpu.matmul %27, %28, %cst_19 {dimension_numbers = #tpu.dot_dimension_numbers<[1], [0], [0], [1], [0, 0, 1, 1], [], []>} : vector<56x512xbf16>, vector<512x1536xbf16>, vector<56x1536xf32> -> vector<56x1536xf32>
    %cst_20 = arith.constant 0.000000e+00 : f32
    %30 = vector.broadcast %cst_20 : f32 to vector<80x384xf32>
    %c0_21 = arith.constant 0 : index
    %c0_22 = arith.constant 0 : index
    %31 = vector.load %arg10[%c0_21, %c0_22] : memref<80x384xf32, #tpu.memory_space<vmem>>, vector<80x384xf32>
    tpu.vector_store %arg10[%c0_21, %c0_22], %30 {strides = array<i32>} : memref<80x384xf32, #tpu.memory_space<vmem>>, vector<80x384xf32>,
    %c0_23 = arith.constant 0 : index
    %c0_24 = arith.constant 0 : index
    %32 = vector.load %arg10[%c0_23, %c0_24] : memref<80x384xf32, #tpu.memory_space<vmem>>, vector<56x384xf32>
    %33 = vector.extract_strided_slice %29 {offsets = [0, 0], sizes = [56, 384], strides = [1, 1]} : vector<56x1536xf32> to vector<56x384xf32>
    %34 = arith.addf %32, %33 : vector<56x384xf32>
    %c0_25 = arith.constant 0 : index
    %c0_26 = arith.constant 0 : index
    %35 = vector.load %arg10[%c0_25, %c0_26] : memref<80x384xf32, #tpu.memory_space<vmem>>, vector<56x384xf32>
    tpu.vector_store %arg10[%c0_25, %c0_26], %34 {strides = array<i32>} : memref<80x384xf32, #tpu.memory_space<vmem>>, vector<56x384xf32>,
    %c8_27 = arith.constant 8 : index
    %c0_28 = arith.constant 0 : index
    %36 = vector.load %arg10[%c8_27, %c0_28] : memref<80x384xf32, #tpu.memory_space<vmem>>, vector<56x384xf32>
    %37 = vector.extract_strided_slice %29 {offsets = [0, 384], sizes = [56, 384], strides = [1, 1]} : vector<56x1536xf32> to vector<56x384xf32>
    %38 = arith.addf %36, %37 : vector<56x384xf32>
    %c8_29 = arith.constant 8 : index
    %c0_30 = arith.constant 0 : index
    %39 = vector.load %arg10[%c8_29, %c0_30] : memref<80x384xf32, #tpu.memory_space<vmem>>, vector<56x384xf32>
    tpu.vector_store %arg10[%c8_29, %c0_30], %38 {strides = array<i32>} : memref<80x384xf32, #tpu.memory_space<vmem>>, vector<56x384xf32>,
    %c16_31 = arith.constant 16 : index
    %c0_32 = arith.constant 0 : index
    %40 = vector.load %arg10[%c16_31, %c0_32] : memref<80x384xf32, #tpu.memory_space<vmem>>, vector<56x384xf32>
    %41 = vector.extract_strided_slice %29 {offsets = [0, 768], sizes = [56, 384], strides = [1, 1]} : vector<56x1536xf32> to vector<56x384xf32>
    %42 = arith.addf %40, %41 : vector<56x384xf32>
    %c16_33 = arith.constant 16 : index
    %c0_34 = arith.constant 0 : index
    %43 = vector.load %arg10[%c16_33, %c0_34] : memref<80x384xf32, #tpu.memory_space<vmem>>, vector<56x384xf32>
    tpu.vector_store %arg10[%c16_33, %c0_34], %42 {strides = array<i32>} : memref<80x384xf32, #tpu.memory_space<vmem>>, vector<56x384xf32>,
    %c24_35 = arith.constant 24 : index
    %c0_36 = arith.constant 0 : index
    %44 = vector.load %arg10[%c24_35, %c0_36] : memref<80x384xf32, #tpu.memory_space<vmem>>, vector<56x384xf32>
    %45 = vector.extract_strided_slice %29 {offsets = [0, 1152], sizes = [56, 384], strides = [1, 1]} : vector<56x1536xf32> to vector<56x384xf32>
    %46 = arith.addf %44, %45 : vector<56x384xf32>
    %c24_37 = arith.constant 24 : index
    %c0_38 = arith.constant 0 : index
    %47 = vector.load %arg10[%c24_37, %c0_38] : memref<80x384xf32, #tpu.memory_space<vmem>>, vector<56x384xf32>
    tpu.vector_store %arg10[%c24_37, %c0_38], %46 {strides = array<i32>} : memref<80x384xf32, #tpu.memory_space<vmem>>, vector<56x384xf32>,
    %c0_39 = arith.constant 0 : index
    %c0_40 = arith.constant 0 : index
    %48 = vector.load %arg10[%c0_39, %c0_40] : memref<80x384xf32, #tpu.memory_space<vmem>>, vector<80x384xf32>
    %c0_41 = arith.constant 0 : index
    %c0_42 = arith.constant 0 : index
    %49 = vector.load %arg7[%c0_41, %c0_42] : memref<8x128xf32, #tpu.memory_space<vmem>>, vector<1x128xf32>
    %c1 = arith.constant 1 : index
    %c0_43 = arith.constant 0 : index
    %50 = vector.load %arg7[%c1, %c0_43] : memref<8x128xf32, #tpu.memory_space<vmem>>, vector<1x128xf32>
    %51 = tpu.iota {dimensions = array<i32: 0>} : vector<80x384xi32>
    %c8_i32_44 = arith.constant 8 : i32
    %c0_i32 = arith.constant 0 : i32
    %52 = arith.cmpi eq, %c8_i32_44, %c0_i32 : i32
    %c1_i32 = arith.constant 1 : i32
    %53 = arith.select %52, %c1_i32, %c8_i32_44 : i32
    %54 = vector.broadcast %53 : i32 to vector<80x384xi32>
    %55 = arith.remsi %51, %54 : vector<80x384xi32>
    %c0_i32_45 = arith.constant 0 : i32
    %56 = vector.broadcast %c0_i32_45 : i32 to vector<80x384xi32>
    %57 = arith.cmpi ne, %55, %56 : vector<80x384xi32>
    %c0_i32_46 = arith.constant 0 : i32
    %58 = vector.broadcast %c0_i32_46 : i32 to vector<80x384xi32>
    %59 = arith.cmpi slt, %55, %58 : vector<80x384xi32>
    %c0_i32_47 = arith.constant 0 : i32
    %60 = arith.cmpi slt, %53, %c0_i32_47 : i32
    %61 = vector.broadcast %60 : i1 to vector<80x384xi1>
    %62 = vector.broadcast %61 : vector<80x384xi1> to vector<80x384xi1>
    %63 = arith.xori %59, %62 : vector<80x384xi1>
    %64 = arith.andi %63, %57 : vector<80x384xi1>
    %65 = vector.broadcast %53 : i32 to vector<80x384xi32>
    %66 = arith.addi %55, %65 : vector<80x384xi32>
    %67 = arith.select %64, %66, %55 : vector<80x384xi1>, vector<80x384xi32>
    %68 = vector.broadcast %2 : i32 to vector<80x384xi32>
    %69 = arith.cmpi slt, %67, %68 : vector<80x384xi32>
    %cst_48 = arith.constant 0.000000e+00 : f32
    %70 = vector.broadcast %cst_48 : f32 to vector<80x384xf32>
    %71 = arith.select %69, %48, %70 : vector<80x384xi1>, vector<80x384xf32>
    %cst_49 = arith.constant dense<0.000000e+00> : vector<384xf32>
    %72 = vector.multi_reduction <add>, %71, %cst_49 [0] : vector<80x384xf32> to vector<384xf32>
    %73 = vector.shape_cast %72 : vector<384xf32> to vector<1x384xf32>
    %74 = arith.mulf %71, %48 : vector<80x384xf32>
    %cst_50 = arith.constant dense<0.000000e+00> : vector<384xf32>
    %75 = vector.multi_reduction <add>, %74, %cst_50 [0] : vector<80x384xf32> to vector<384xf32>
    %76 = vector.shape_cast %75 : vector<384xf32> to vector<1x384xf32>
    %77 = tpu.concatenate %73, %76 in 0 : vector<1x384xf32>, vector<1x384xf32> -> vector<2x384xf32>
    %78 = tpu.iota {dimensions = array<i32: 0>} : vector<384x128xi32>
    %79 = tpu.iota {dimensions = array<i32: 1>} : vector<384x128xi32>
    %c32_i32 = arith.constant 32 : i32
    %c0_i32_51 = arith.constant 0 : i32
    %80 = arith.cmpi eq, %c32_i32, %c0_i32_51 : i32
    %c1_i32_52 = arith.constant 1 : i32
    %81 = arith.select %80, %c1_i32_52, %c32_i32 : i32
    %82 = vector.broadcast %81 : i32 to vector<384x128xi32>
    %83 = arith.remsi %78, %82 : vector<384x128xi32>
    %c0_i32_53 = arith.constant 0 : i32
    %84 = vector.broadcast %c0_i32_53 : i32 to vector<384x128xi32>
    %85 = arith.cmpi ne, %83, %84 : vector<384x128xi32>
    %c0_i32_54 = arith.constant 0 : i32
    %86 = vector.broadcast %c0_i32_54 : i32 to vector<384x128xi32>
    %87 = arith.cmpi slt, %83, %86 : vector<384x128xi32>
    %c0_i32_55 = arith.constant 0 : i32
    %88 = arith.cmpi slt, %81, %c0_i32_55 : i32
    %89 = vector.broadcast %88 : i1 to vector<384x128xi1>
    %90 = vector.broadcast %89 : vector<384x128xi1> to vector<384x128xi1>
    %91 = arith.xori %87, %90 : vector<384x128xi1>
    %92 = arith.andi %91, %85 : vector<384x128xi1>
    %93 = vector.broadcast %81 : i32 to vector<384x128xi32>
    %94 = arith.addi %83, %93 : vector<384x128xi32>
    %95 = arith.select %92, %94, %83 : vector<384x128xi1>, vector<384x128xi32>
    %96 = arith.cmpi eq, %95, %79 : vector<384x128xi32>
    %c320_i32 = arith.constant 320 : i32
    %97 = vector.broadcast %c320_i32 : i32 to vector<384x128xi32>
    %98 = arith.cmpi slt, %78, %97 : vector<384x128xi32>
    %99 = arith.andi %96, %98 : vector<384x128xi1>
    %cst_56 = arith.constant 1.000000e+00 : f32
    %cst_57 = arith.constant 0.000000e+00 : f32
    %100 = vector.broadcast %cst_56 : f32 to vector<384x128xf32>
    %101 = vector.broadcast %cst_57 : f32 to vector<384x128xf32>
    %102 = arith.select %99, %100, %101 : vector<384x128xi1>, vector<384x128xf32>
    %cst_58 = arith.constant dense<0.000000e+00> : vector<2x128xf32>
    %103 = tpu.matmul %77, %102, %cst_58 {dimension_numbers = #tpu.dot_dimension_numbers<[1], [0], [0], [1], [0, 0, 1, 1], [], []>} : vector<2x384xf32>, vector<384x128xf32>, vector<2x128xf32> -> vector<2x128xf32>
    %104 = arith.sitofp %2 : i32 to f32
    %cst_59 = arith.constant 1.000000e+02 : f32
    %105 = arith.mulf %104, %cst_59 : f32
    %cst_60 = arith.constant 1.000000e+00 : f32
    %106 = arith.divf %cst_60, %105 : f32
    %107 = vector.extract_strided_slice %103 {offsets = [0, 0], sizes = [1, 128], strides = [1, 1]} : vector<2x128xf32> to vector<1x128xf32>
    %108 = vector.broadcast %106 : f32 to vector<1x128xf32>
    %109 = arith.mulf %107, %108 : vector<1x128xf32>
    %110 = vector.extract_strided_slice %103 {offsets = [1, 0], sizes = [1, 128], strides = [1, 1]} : vector<2x128xf32> to vector<1x128xf32>
    %111 = vector.broadcast %106 : f32 to vector<1x128xf32>
    %112 = arith.mulf %110, %111 : vector<1x128xf32>
    %113 = arith.mulf %109, %109 : vector<1x128xf32>
    %114 = arith.subf %112, %113 : vector<1x128xf32>
    %cst_61 = arith.constant 9.99999974E-6 : f32
    %115 = vector.broadcast %cst_61 : f32 to vector<1x128xf32>
    %116 = arith.addf %114, %115 : vector<1x128xf32>
    %117 = math.rsqrt %116 : vector<1x128xf32>
    %118 = arith.mulf %49, %117 : vector<1x128xf32>
    %119 = arith.mulf %109, %118 : vector<1x128xf32>
    %120 = arith.subf %50, %119 : vector<1x128xf32>
    %121 = tpu.iota {dimensions = array<i32: 0>} : vector<128x384xi32>
    %122 = tpu.iota {dimensions = array<i32: 1>} : vector<128x384xi32>
    %c32_i32_62 = arith.constant 32 : i32
    %c0_i32_63 = arith.constant 0 : i32
    %123 = arith.cmpi eq, %c32_i32_62, %c0_i32_63 : i32
    %c1_i32_64 = arith.constant 1 : i32
    %124 = arith.select %123, %c1_i32_64, %c32_i32_62 : i32
    %125 = vector.broadcast %124 : i32 to vector<128x384xi32>
    %126 = arith.remsi %122, %125 : vector<128x384xi32>
    %c0_i32_65 = arith.constant 0 : i32
    %127 = vector.broadcast %c0_i32_65 : i32 to vector<128x384xi32>
    %128 = arith.cmpi ne, %126, %127 : vector<128x384xi32>
    %c0_i32_66 = arith.constant 0 : i32
    %129 = vector.broadcast %c0_i32_66 : i32 to vector<128x384xi32>
    %130 = arith.cmpi slt, %126, %129 : vector<128x384xi32>
    %c0_i32_67 = arith.constant 0 : i32
    %131 = arith.cmpi slt, %124, %c0_i32_67 : i32
    %132 = vector.broadcast %131 : i1 to vector<128x384xi1>
    %133 = vector.broadcast %132 : vector<128x384xi1> to vector<128x384xi1>
    %134 = arith.xori %130, %133 : vector<128x384xi1>
    %135 = arith.andi %134, %128 : vector<128x384xi1>
    %136 = vector.broadcast %124 : i32 to vector<128x384xi32>
    %137 = arith.addi %126, %136 : vector<128x384xi32>
    %138 = arith.select %135, %137, %126 : vector<128x384xi1>, vector<128x384xi32>
    %139 = arith.cmpi eq, %138, %121 : vector<128x384xi32>
    %cst_68 = arith.constant 1.000000e+00 : f32
    %cst_69 = arith.constant 0.000000e+00 : f32
    %140 = vector.broadcast %cst_68 : f32 to vector<128x384xf32>
    %141 = vector.broadcast %cst_69 : f32 to vector<128x384xf32>
    %142 = arith.select %139, %140, %141 : vector<128x384xi1>, vector<128x384xf32>
    %143 = tpu.concatenate %118, %120 in 0 : vector<1x128xf32>, vector<1x128xf32> -> vector<2x128xf32>
    %cst_70 = arith.constant dense<0.000000e+00> : vector<2x384xf32>
    %144 = tpu.matmul %143, %142, %cst_70 {dimension_numbers = #tpu.dot_dimension_numbers<[1], [0], [0], [1], [0, 0, 1, 1], [], []>} : vector<2x128xf32>, vector<128x384xf32>, vector<2x384xf32> -> vector<2x384xf32>
    %145 = vector.extract_strided_slice %144 {offsets = [0, 0], sizes = [1, 384], strides = [1, 1]} : vector<2x384xf32> to vector<1x384xf32>
    %146 = vector.broadcast %145 : vector<1x384xf32> to vector<80x384xf32>
    %147 = arith.mulf %48, %146 : vector<80x384xf32>
    %148 = vector.extract_strided_slice %144 {offsets = [1, 0], sizes = [1, 384], strides = [1, 1]} : vector<2x384xf32> to vector<1x384xf32>
    %149 = vector.broadcast %148 : vector<1x384xf32> to vector<80x384xf32>
    %150 = arith.addf %147, %149 : vector<80x384xf32>
    %cst_71 = arith.constant 0.000000e+00 : f32
    %151 = vector.broadcast %cst_71 : f32 to vector<80x384xf32>
    %152 = arith.maximumf %150, %151 : vector<80x384xf32>
    %153 = arith.truncf %152 : vector<80x384xf32> to vector<80x384xbf16>
    %c0_72 = arith.constant 0 : index
    %c0_73 = arith.constant 0 : index
    %154 = vector.load %arg5[%c0_72, %c0_73] : memref<384x1024xbf16, #tpu.memory_space<vmem>>, vector<384x1024xbf16>
    %cst_74 = arith.constant dense<0.000000e+00> : vector<80x1024xf32>
    %155 = tpu.matmul %153, %154, %cst_74 {dimension_numbers = #tpu.dot_dimension_numbers<[1], [0], [0], [1], [0, 0, 1, 1], [], []>} : vector<80x384xbf16>, vector<384x1024xbf16>, vector<80x1024xf32> -> vector<80x1024xf32>
    %cst_75 = arith.constant 0.000000e+00 : f32
    %156 = vector.broadcast %cst_75 : f32 to vector<104x256xf32>
    %c0_76 = arith.constant 0 : index
    %c0_77 = arith.constant 0 : index
    %157 = vector.load %arg11[%c0_76, %c0_77] : memref<104x256xf32, #tpu.memory_space<vmem>>, vector<104x256xf32>
    tpu.vector_store %arg11[%c0_76, %c0_77], %156 {strides = array<i32>} : memref<104x256xf32, #tpu.memory_space<vmem>>, vector<104x256xf32>,
    %c0_78 = arith.constant 0 : index
    %c0_79 = arith.constant 0 : index
    %158 = vector.load %arg11[%c0_78, %c0_79] : memref<104x256xf32, #tpu.memory_space<vmem>>, vector<80x256xf32>
    %159 = vector.extract_strided_slice %155 {offsets = [0, 0], sizes = [80, 256], strides = [1, 1]} : vector<80x1024xf32> to vector<80x256xf32>
    %160 = arith.addf %158, %159 : vector<80x256xf32>
    %c0_80 = arith.constant 0 : index
    %c0_81 = arith.constant 0 : index
    %161 = vector.load %arg11[%c0_80, %c0_81] : memref<104x256xf32, #tpu.memory_space<vmem>>, vector<80x256xf32>
    tpu.vector_store %arg11[%c0_80, %c0_81], %160 {strides = array<i32>} : memref<104x256xf32, #tpu.memory_space<vmem>>, vector<80x256xf32>,
    %c8_82 = arith.constant 8 : index
    %c0_83 = arith.constant 0 : index
    %162 = vector.load %arg11[%c8_82, %c0_83] : memref<104x256xf32, #tpu.memory_space<vmem>>, vector<80x256xf32>
    %163 = vector.extract_strided_slice %155 {offsets = [0, 256], sizes = [80, 256], strides = [1, 1]} : vector<80x1024xf32> to vector<80x256xf32>
    %164 = arith.addf %162, %163 : vector<80x256xf32>
    %c8_84 = arith.constant 8 : index
    %c0_85 = arith.constant 0 : index
    %165 = vector.load %arg11[%c8_84, %c0_85] : memref<104x256xf32, #tpu.memory_space<vmem>>, vector<80x256xf32>
    tpu.vector_store %arg11[%c8_84, %c0_85], %164 {strides = array<i32>} : memref<104x256xf32, #tpu.memory_space<vmem>>, vector<80x256xf32>,
    %c16_86 = arith.constant 16 : index
    %c0_87 = arith.constant 0 : index
    %166 = vector.load %arg11[%c16_86, %c0_87] : memref<104x256xf32, #tpu.memory_space<vmem>>, vector<80x256xf32>
    %167 = vector.extract_strided_slice %155 {offsets = [0, 512], sizes = [80, 256], strides = [1, 1]} : vector<80x1024xf32> to vector<80x256xf32>
    %168 = arith.addf %166, %167 : vector<80x256xf32>
    %c16_88 = arith.constant 16 : index
    %c0_89 = arith.constant 0 : index
    %169 = vector.load %arg11[%c16_88, %c0_89] : memref<104x256xf32, #tpu.memory_space<vmem>>, vector<80x256xf32>
    tpu.vector_store %arg11[%c16_88, %c0_89], %168 {strides = array<i32>} : memref<104x256xf32, #tpu.memory_space<vmem>>, vector<80x256xf32>,
    %c24_90 = arith.constant 24 : index
    %c0_91 = arith.constant 0 : index
    %170 = vector.load %arg11[%c24_90, %c0_91] : memref<104x256xf32, #tpu.memory_space<vmem>>, vector<80x256xf32>
    %171 = vector.extract_strided_slice %155 {offsets = [0, 768], sizes = [80, 256], strides = [1, 1]} : vector<80x1024xf32> to vector<80x256xf32>
    %172 = arith.addf %170, %171 : vector<80x256xf32>
    %c24_92 = arith.constant 24 : index
    %c0_93 = arith.constant 0 : index
    %173 = vector.load %arg11[%c24_92, %c0_93] : memref<104x256xf32, #tpu.memory_space<vmem>>, vector<80x256xf32>
    tpu.vector_store %arg11[%c24_92, %c0_93], %172 {strides = array<i32>} : memref<104x256xf32, #tpu.memory_space<vmem>>, vector<80x256xf32>,
    %c0_94 = arith.constant 0 : index
    %c0_95 = arith.constant 0 : index
    %174 = vector.load %arg11[%c0_94, %c0_95] : memref<104x256xf32, #tpu.memory_space<vmem>>, vector<104x256xf32>
    %c2 = arith.constant 2 : index
    %c0_96 = arith.constant 0 : index
    %175 = vector.load %arg7[%c2, %c0_96] : memref<8x128xf32, #tpu.memory_space<vmem>>, vector<1x128xf32>
    %c3 = arith.constant 3 : index
    %c0_97 = arith.constant 0 : index
    %176 = vector.load %arg7[%c3, %c0_97] : memref<8x128xf32, #tpu.memory_space<vmem>>, vector<1x128xf32>
    %177 = tpu.iota {dimensions = array<i32: 0>} : vector<104x256xi32>
    %c8_i32_98 = arith.constant 8 : i32
    %c0_i32_99 = arith.constant 0 : i32
    %178 = arith.cmpi eq, %c8_i32_98, %c0_i32_99 : i32
    %c1_i32_100 = arith.constant 1 : i32
    %179 = arith.select %178, %c1_i32_100, %c8_i32_98 : i32
    %180 = vector.broadcast %179 : i32 to vector<104x256xi32>
    %181 = arith.remsi %177, %180 : vector<104x256xi32>
    %c0_i32_101 = arith.constant 0 : i32
    %182 = vector.broadcast %c0_i32_101 : i32 to vector<104x256xi32>
    %183 = arith.cmpi ne, %181, %182 : vector<104x256xi32>
    %c0_i32_102 = arith.constant 0 : i32
    %184 = vector.broadcast %c0_i32_102 : i32 to vector<104x256xi32>
    %185 = arith.cmpi slt, %181, %184 : vector<104x256xi32>
    %c0_i32_103 = arith.constant 0 : i32
    %186 = arith.cmpi slt, %179, %c0_i32_103 : i32
    %187 = vector.broadcast %186 : i1 to vector<104x256xi1>
    %188 = vector.broadcast %187 : vector<104x256xi1> to vector<104x256xi1>
    %189 = arith.xori %185, %188 : vector<104x256xi1>
    %190 = arith.andi %189, %183 : vector<104x256xi1>
    %191 = vector.broadcast %179 : i32 to vector<104x256xi32>
    %192 = arith.addi %181, %191 : vector<104x256xi32>
    %193 = arith.select %190, %192, %181 : vector<104x256xi1>, vector<104x256xi32>
    %194 = vector.broadcast %2 : i32 to vector<104x256xi32>
    %195 = arith.cmpi slt, %193, %194 : vector<104x256xi32>
    %cst_104 = arith.constant 0.000000e+00 : f32
    %196 = vector.broadcast %cst_104 : f32 to vector<104x256xf32>
    %197 = arith.select %195, %174, %196 : vector<104x256xi1>, vector<104x256xf32>
    %cst_105 = arith.constant dense<0.000000e+00> : vector<256xf32>
    %198 = vector.multi_reduction <add>, %197, %cst_105 [0] : vector<104x256xf32> to vector<256xf32>
    %199 = vector.shape_cast %198 : vector<256xf32> to vector<1x256xf32>
    %200 = arith.mulf %197, %174 : vector<104x256xf32>
    %cst_106 = arith.constant dense<0.000000e+00> : vector<256xf32>
    %201 = vector.multi_reduction <add>, %200, %cst_106 [0] : vector<104x256xf32> to vector<256xf32>
    %202 = vector.shape_cast %201 : vector<256xf32> to vector<1x256xf32>
    %203 = tpu.concatenate %199, %202 in 0 : vector<1x256xf32>, vector<1x256xf32> -> vector<2x256xf32>
    %204 = tpu.iota {dimensions = array<i32: 0>} : vector<256x128xi32>
    %205 = tpu.iota {dimensions = array<i32: 1>} : vector<256x128xi32>
    %c16_i32 = arith.constant 16 : i32
    %c0_i32_107 = arith.constant 0 : i32
    %206 = arith.cmpi eq, %c16_i32, %c0_i32_107 : i32
    %c1_i32_108 = arith.constant 1 : i32
    %207 = arith.select %206, %c1_i32_108, %c16_i32 : i32
    %208 = vector.broadcast %207 : i32 to vector<256x128xi32>
    %209 = arith.remsi %204, %208 : vector<256x128xi32>
    %c0_i32_109 = arith.constant 0 : i32
    %210 = vector.broadcast %c0_i32_109 : i32 to vector<256x128xi32>
    %211 = arith.cmpi ne, %209, %210 : vector<256x128xi32>
    %c0_i32_110 = arith.constant 0 : i32
    %212 = vector.broadcast %c0_i32_110 : i32 to vector<256x128xi32>
    %213 = arith.cmpi slt, %209, %212 : vector<256x128xi32>
    %c0_i32_111 = arith.constant 0 : i32
    %214 = arith.cmpi slt, %207, %c0_i32_111 : i32
    %215 = vector.broadcast %214 : i1 to vector<256x128xi1>
    %216 = vector.broadcast %215 : vector<256x128xi1> to vector<256x128xi1>
    %217 = arith.xori %213, %216 : vector<256x128xi1>
    %218 = arith.andi %217, %211 : vector<256x128xi1>
    %219 = vector.broadcast %207 : i32 to vector<256x128xi32>
    %220 = arith.addi %209, %219 : vector<256x128xi32>
    %221 = arith.select %218, %220, %209 : vector<256x128xi1>, vector<256x128xi32>
    %222 = arith.cmpi eq, %221, %205 : vector<256x128xi32>
    %c208_i32 = arith.constant 208 : i32
    %223 = vector.broadcast %c208_i32 : i32 to vector<256x128xi32>
    %224 = arith.cmpi slt, %204, %223 : vector<256x128xi32>
    %225 = arith.andi %222, %224 : vector<256x128xi1>
    %cst_112 = arith.constant 1.000000e+00 : f32
    %cst_113 = arith.constant 0.000000e+00 : f32
    %226 = vector.broadcast %cst_112 : f32 to vector<256x128xf32>
    %227 = vector.broadcast %cst_113 : f32 to vector<256x128xf32>
    %228 = arith.select %225, %226, %227 : vector<256x128xi1>, vector<256x128xf32>
    %cst_114 = arith.constant dense<0.000000e+00> : vector<2x128xf32>
    %229 = tpu.matmul %203, %228, %cst_114 {dimension_numbers = #tpu.dot_dimension_numbers<[1], [0], [0], [1], [0, 0, 1, 1], [], []>} : vector<2x256xf32>, vector<256x128xf32>, vector<2x128xf32> -> vector<2x128xf32>
    %230 = arith.sitofp %2 : i32 to f32
    %cst_115 = arith.constant 1.690000e+02 : f32
    %231 = arith.mulf %230, %cst_115 : f32
    %cst_116 = arith.constant 1.000000e+00 : f32
    %232 = arith.divf %cst_116, %231 : f32
    %233 = vector.extract_strided_slice %229 {offsets = [0, 0], sizes = [1, 128], strides = [1, 1]} : vector<2x128xf32> to vector<1x128xf32>
    %234 = vector.broadcast %232 : f32 to vector<1x128xf32>
    %235 = arith.mulf %233, %234 : vector<1x128xf32>
    %236 = vector.extract_strided_slice %229 {offsets = [1, 0], sizes = [1, 128], strides = [1, 1]} : vector<2x128xf32> to vector<1x128xf32>
    %237 = vector.broadcast %232 : f32 to vector<1x128xf32>
    %238 = arith.mulf %236, %237 : vector<1x128xf32>
    %239 = arith.mulf %235, %235 : vector<1x128xf32>
    %240 = arith.subf %238, %239 : vector<1x128xf32>
    %cst_117 = arith.constant 9.99999974E-6 : f32
    %241 = vector.broadcast %cst_117 : f32 to vector<1x128xf32>
    %242 = arith.addf %240, %241 : vector<1x128xf32>
    %243 = math.rsqrt %242 : vector<1x128xf32>
    %244 = arith.mulf %175, %243 : vector<1x128xf32>
    %245 = arith.mulf %235, %244 : vector<1x128xf32>
    %246 = arith.subf %176, %245 : vector<1x128xf32>
    %247 = tpu.iota {dimensions = array<i32: 0>} : vector<128x256xi32>
    %248 = tpu.iota {dimensions = array<i32: 1>} : vector<128x256xi32>
    %c16_i32_118 = arith.constant 16 : i32
    %c0_i32_119 = arith.constant 0 : i32
    %249 = arith.cmpi eq, %c16_i32_118, %c0_i32_119 : i32
    %c1_i32_120 = arith.constant 1 : i32
    %250 = arith.select %249, %c1_i32_120, %c16_i32_118 : i32
    %251 = vector.broadcast %250 : i32 to vector<128x256xi32>
    %252 = arith.remsi %248, %251 : vector<128x256xi32>
    %c0_i32_121 = arith.constant 0 : i32
    %253 = vector.broadcast %c0_i32_121 : i32 to vector<128x256xi32>
    %254 = arith.cmpi ne, %252, %253 : vector<128x256xi32>
    %c0_i32_122 = arith.constant 0 : i32
    %255 = vector.broadcast %c0_i32_122 : i32 to vector<128x256xi32>
    %256 = arith.cmpi slt, %252, %255 : vector<128x256xi32>
    %c0_i32_123 = arith.constant 0 : i32
    %257 = arith.cmpi slt, %250, %c0_i32_123 : i32
    %258 = vector.broadcast %257 : i1 to vector<128x256xi1>
    %259 = vector.broadcast %258 : vector<128x256xi1> to vector<128x256xi1>
    %260 = arith.xori %256, %259 : vector<128x256xi1>
    %261 = arith.andi %260, %254 : vector<128x256xi1>
    %262 = vector.broadcast %250 : i32 to vector<128x256xi32>
    %263 = arith.addi %252, %262 : vector<128x256xi32>
    %264 = arith.select %261, %263, %252 : vector<128x256xi1>, vector<128x256xi32>
    %265 = arith.cmpi eq, %264, %247 : vector<128x256xi32>
    %cst_124 = arith.constant 1.000000e+00 : f32
    %cst_125 = arith.constant 0.000000e+00 : f32
    %266 = vector.broadcast %cst_124 : f32 to vector<128x256xf32>
    %267 = vector.broadcast %cst_125 : f32 to vector<128x256xf32>
    %268 = arith.select %265, %266, %267 : vector<128x256xi1>, vector<128x256xf32>
    %269 = tpu.concatenate %244, %246 in 0 : vector<1x128xf32>, vector<1x128xf32> -> vector<2x128xf32>
    %cst_126 = arith.constant dense<0.000000e+00> : vector<2x256xf32>
    %270 = tpu.matmul %269, %268, %cst_126 {dimension_numbers = #tpu.dot_dimension_numbers<[1], [0], [0], [1], [0, 0, 1, 1], [], []>} : vector<2x128xf32>, vector<128x256xf32>, vector<2x256xf32> -> vector<2x256xf32>
    %271 = vector.extract_strided_slice %270 {offsets = [0, 0], sizes = [1, 256], strides = [1, 1]} : vector<2x256xf32> to vector<1x256xf32>
    %272 = vector.broadcast %271 : vector<1x256xf32> to vector<104x256xf32>
    %273 = arith.mulf %174, %272 : vector<104x256xf32>
    %274 = vector.extract_strided_slice %270 {offsets = [1, 0], sizes = [1, 256], strides = [1, 1]} : vector<2x256xf32> to vector<1x256xf32>
    %275 = vector.broadcast %274 : vector<1x256xf32> to vector<104x256xf32>
    %276 = arith.addf %273, %275 : vector<104x256xf32>
    %cst_127 = arith.constant 0.000000e+00 : f32
    %277 = vector.broadcast %cst_127 : f32 to vector<104x256xf32>
    %278 = arith.maximumf %276, %277 : vector<104x256xf32>
    %279 = arith.truncf %278 : vector<104x256xf32> to vector<104x256xbf16>
    %c0_128 = arith.constant 0 : index
    %c0_129 = arith.constant 0 : index
    %280 = vector.load %arg6[%c0_128, %c0_129] : memref<256x512xbf16, #tpu.memory_space<vmem>>, vector<256x512xbf16>
    %cst_130 = arith.constant dense<0.000000e+00> : vector<104x512xf32>
    %281 = tpu.matmul %279, %280, %cst_130 {dimension_numbers = #tpu.dot_dimension_numbers<[1], [0], [0], [1], [0, 0, 1, 1], [], []>} : vector<104x256xbf16>, vector<256x512xbf16>, vector<104x512xf32> -> vector<104x512xf32>
    %cst_131 = arith.constant 0.000000e+00 : f32
    %282 = vector.broadcast %cst_131 : f32 to vector<112x128xf32>
    %c0_132 = arith.constant 0 : index
    %c0_133 = arith.constant 0 : index
    %283 = vector.load %arg12[%c0_132, %c0_133] : memref<112x128xf32, #tpu.memory_space<vmem>>, vector<112x128xf32>
    tpu.vector_store %arg12[%c0_132, %c0_133], %282 {strides = array<i32>} : memref<112x128xf32, #tpu.memory_space<vmem>>, vector<112x128xf32>,
    %cst_134 = arith.constant 0.000000e+00 : f32
    %284 = vector.broadcast %cst_134 : f32 to vector<112x128xf32>
    %c0_135 = arith.constant 0 : index
    %c0_136 = arith.constant 0 : index
    %285 = vector.load %arg13[%c0_135, %c0_136] : memref<112x128xf32, #tpu.memory_space<vmem>>, vector<112x128xf32>
    tpu.vector_store %arg13[%c0_135, %c0_136], %284 {strides = array<i32>} : memref<112x128xf32, #tpu.memory_space<vmem>>, vector<112x128xf32>,
    %c0_137 = arith.constant 0 : index
    %c0_138 = arith.constant 0 : index
    %286 = vector.load %arg12[%c0_137, %c0_138] : memref<112x128xf32, #tpu.memory_space<vmem>>, vector<104x128xf32>
    %287 = vector.extract_strided_slice %281 {offsets = [0, 0], sizes = [104, 128], strides = [1, 1]} : vector<104x512xf32> to vector<104x128xf32>
    %288 = arith.addf %286, %287 : vector<104x128xf32>
    %c0_139 = arith.constant 0 : index
    %c0_140 = arith.constant 0 : index
    %289 = vector.load %arg12[%c0_139, %c0_140] : memref<112x128xf32, #tpu.memory_space<vmem>>, vector<104x128xf32>
    tpu.vector_store %arg12[%c0_139, %c0_140], %288 {strides = array<i32>} : memref<112x128xf32, #tpu.memory_space<vmem>>, vector<104x128xf32>,
    %c0_141 = arith.constant 0 : index
    %c0_142 = arith.constant 0 : index
    %290 = vector.load %arg13[%c0_141, %c0_142] : memref<112x128xf32, #tpu.memory_space<vmem>>, vector<104x128xf32>
    %291 = vector.extract_strided_slice %281 {offsets = [0, 128], sizes = [104, 128], strides = [1, 1]} : vector<104x512xf32> to vector<104x128xf32>
    %292 = arith.addf %290, %291 : vector<104x128xf32>
    %c0_143 = arith.constant 0 : index
    %c0_144 = arith.constant 0 : index
    %293 = vector.load %arg13[%c0_143, %c0_144] : memref<112x128xf32, #tpu.memory_space<vmem>>, vector<104x128xf32>
    tpu.vector_store %arg13[%c0_143, %c0_144], %292 {strides = array<i32>} : memref<112x128xf32, #tpu.memory_space<vmem>>, vector<104x128xf32>,
    %c8_145 = arith.constant 8 : index
    %c0_146 = arith.constant 0 : index
    %294 = vector.load %arg12[%c8_145, %c0_146] : memref<112x128xf32, #tpu.memory_space<vmem>>, vector<104x128xf32>
    %295 = vector.extract_strided_slice %281 {offsets = [0, 256], sizes = [104, 128], strides = [1, 1]} : vector<104x512xf32> to vector<104x128xf32>
    %296 = arith.addf %294, %295 : vector<104x128xf32>
    %c8_147 = arith.constant 8 : index
    %c0_148 = arith.constant 0 : index
    %297 = vector.load %arg12[%c8_147, %c0_148] : memref<112x128xf32, #tpu.memory_space<vmem>>, vector<104x128xf32>
    tpu.vector_store %arg12[%c8_147, %c0_148], %296 {strides = array<i32>} : memref<112x128xf32, #tpu.memory_space<vmem>>, vector<104x128xf32>,
    %c8_149 = arith.constant 8 : index
    %c0_150 = arith.constant 0 : index
    %298 = vector.load %arg13[%c8_149, %c0_150] : memref<112x128xf32, #tpu.memory_space<vmem>>, vector<104x128xf32>
    %299 = vector.extract_strided_slice %281 {offsets = [0, 384], sizes = [104, 128], strides = [1, 1]} : vector<104x512xf32> to vector<104x128xf32>
    %300 = arith.addf %298, %299 : vector<104x128xf32>
    %c8_151 = arith.constant 8 : index
    %c0_152 = arith.constant 0 : index
    %301 = vector.load %arg13[%c8_151, %c0_152] : memref<112x128xf32, #tpu.memory_space<vmem>>, vector<104x128xf32>
    tpu.vector_store %arg13[%c8_151, %c0_152], %300 {strides = array<i32>} : memref<112x128xf32, #tpu.memory_space<vmem>>, vector<104x128xf32>,
    %c4 = arith.constant 4 : index
    %c0_153 = arith.constant 0 : index
    %302 = vector.load %arg7[%c4, %c0_153] : memref<8x128xf32, #tpu.memory_space<vmem>>, vector<1x128xf32>
    %c0_154 = arith.constant 0 : index
    %c0_155 = arith.constant 0 : index
    %303 = vector.load %arg12[%c0_154, %c0_155] : memref<112x128xf32, #tpu.memory_space<vmem>>, vector<112x128xf32>
    %304 = vector.broadcast %302 : vector<1x128xf32> to vector<112x128xf32>
    %305 = arith.addf %303, %304 : vector<112x128xf32>
    %306 = math.tanh %305 : vector<112x128xf32>
    %c0_156 = arith.constant 0 : index
    %c0_157 = arith.constant 0 : index
    %c0_158 = arith.constant 0 : index
    %307 = vector.load %arg8[%c0_156, %c0_157, %c0_158] : memref<2x112x128xf32, #tpu.memory_space<vmem>>, vector<1x112x128xf32>
    %308 = vector.shape_cast %307 : vector<1x112x128xf32> to vector<112x128xf32>
    %309 = vector.shape_cast %306 : vector<112x128xf32> to vector<1x112x128xf32>
    tpu.vector_store %arg8[%c0_156, %c0_157, %c0_158], %309 {strides = array<i32>} : memref<2x112x128xf32, #tpu.memory_space<vmem>>, vector<1x112x128xf32>,
    %c0_159 = arith.constant 0 : index
    %c0_160 = arith.constant 0 : index
    %310 = vector.load %arg13[%c0_159, %c0_160] : memref<112x128xf32, #tpu.memory_space<vmem>>, vector<112x128xf32>
    %311 = vector.broadcast %302 : vector<1x128xf32> to vector<112x128xf32>
    %312 = arith.addf %310, %311 : vector<112x128xf32>
    %313 = math.tanh %312 : vector<112x128xf32>
    %c1_161 = arith.constant 1 : index
    %c0_162 = arith.constant 0 : index
    %c0_163 = arith.constant 0 : index
    %314 = vector.load %arg8[%c1_161, %c0_162, %c0_163] : memref<2x112x128xf32, #tpu.memory_space<vmem>>, vector<1x112x128xf32>
    %315 = vector.shape_cast %314 : vector<1x112x128xf32> to vector<112x128xf32>
    %316 = vector.shape_cast %313 : vector<112x128xf32> to vector<1x112x128xf32>
    tpu.vector_store %arg8[%c1_161, %c0_162, %c0_163], %316 {strides = array<i32>} : memref<2x112x128xf32, #tpu.memory_space<vmem>>, vector<1x112x128xf32>,
    return
  }
  func.func @transform_0(%arg0: i32) -> (i32, i32) {
    %c0_i32 = arith.constant 0 : i32
    %c0_i32_0 = arith.constant 0 : i32
    return %arg0, %c0_i32 : i32, i32
  }
  func.func @transform_1(%arg0: i32) -> (i32, i32) {
    %c0_i32 = arith.constant 0 : i32
    %c0_i32_0 = arith.constant 0 : i32
    %c0_i32_1 = arith.constant 0 : i32
    return %c0_i32, %c0_i32_0 : i32, i32
  }
  func.func @transform_2(%arg0: i32) -> (i32, i32) {
    %c0_i32 = arith.constant 0 : i32
    %c0_i32_0 = arith.constant 0 : i32
    %c0_i32_1 = arith.constant 0 : i32
    return %c0_i32, %c0_i32_0 : i32, i32
  }
  func.func @transform_3(%arg0: i32) -> (i32, i32) {
    %c0_i32 = arith.constant 0 : i32
    %c0_i32_0 = arith.constant 0 : i32
    %c0_i32_1 = arith.constant 0 : i32
    return %c0_i32, %c0_i32_0 : i32, i32
  }
  func.func @transform_4(%arg0: i32) -> (i32, i32) {
    %c0_i32 = arith.constant 0 : i32
    %c0_i32_0 = arith.constant 0 : i32
    %c0_i32_1 = arith.constant 0 : i32
    return %c0_i32, %c0_i32_0 : i32, i32
  }
  func.func @transform_5(%arg0: i32) -> (i32, i32) {
    %c0_i32 = arith.constant 0 : i32
    %c0_i32_0 = arith.constant 0 : i32
    %c0_i32_1 = arith.constant 0 : i32
    return %c0_i32, %c0_i32_0 : i32, i32
  }
  func.func @transform_6(%arg0: i32) -> (i32, i32) {
    %c0_i32 = arith.constant 0 : i32
    %c0_i32_0 = arith.constant 0 : i32
    %c0_i32_1 = arith.constant 0 : i32
    return %c0_i32, %c0_i32_0 : i32, i32
  }
  func.func @transform_7(%arg0: i32) -> (i32, i32, i32) {
    %c0_i32 = arith.constant 0 : i32
    %c0_i32_0 = arith.constant 0 : i32
    %c0_i32_1 = arith.constant 0 : i32
    return %c0_i32, %arg0, %c0_i32_0 : i32, i32, i32
  }
}

</mosaic_0001>

<llo_original>
// kernel: decoder_forward.1
$region0: #{decoder_forward.1}
  #allocation0 [shape = 'u32[]', space=smem, size = 0x4, offset = 0x4, fixed_abs, tag = 'smem constant byte address 0x4 - core index']
  #allocation1 [shape = 'u32[144,128]{1,0:T(1,128)}', space=vmem, size = 0x12000, scoped, tag = 'internal scratch']
  #allocation2 [shape = 'f32[56,512]{1,0:T(8,128)}', space=vmem, size = 0x1c000, scoped, tag = 'scratch operand']
  #allocation3 [shape = 'f32[80,384]{1,0:T(8,128)}', space=vmem, size = 0x1e000, scoped, tag = 'scratch operand']
  #allocation4 [shape = 'f32[104,256]{1,0:T(8,128)}', space=vmem, size = 0x1a000, scoped, tag = 'scratch operand']
  #allocation5 [shape = 'f32[112,128]{1,0:T(8,128)}', space=vmem, size = 0xe000, scoped, tag = 'scratch operand']
  #allocation6 [shape = 'f32[112,128]{1,0:T(8,128)}', space=vmem, size = 0xe000, scoped, tag = 'scratch operand']
  %s0 = inlined_call_operand.vmem [shape: f32[8,32], index: 0, kind: input, shape index: {}]
  %s1 = inlined_call_operand.hbm [shape: bf16[32,3584], index: 1, kind: input, shape index: {}]
  %s2 = inlined_call_operand.hbm [shape: f32[1,3584], index: 2, kind: input, shape index: {}]
  %s3 = inlined_call_operand.hbm [shape: bf16[512,1536], index: 3, kind: input, shape index: {}]
  %s4 = inlined_call_operand.hbm [shape: bf16[384,1024], index: 4, kind: input, shape index: {}]
  %s5 = inlined_call_operand.hbm [shape: bf16[256,512], index: 5, kind: input, shape index: {}]
  %s6 = inlined_call_operand.hbm [shape: f32[8,128], index: 6, kind: input, shape index: {}]
  %s7 = inlined_call_operand.vmem [shape: f32[2,112,128], index: 7, kind: output, shape index: {}]
  %s8 = sld [smem:[#allocation0]]
  $region62: #{decoder_forward.1} parent=0
    _
  %s10 = ssub.s32 1, %s8
  %s11 = scalar_select 0, %s10, %s8
  $region1: #{decoder_forward.1} parent=0
    #allocation7 [shape = 'u8[229376]{0}', space=vmem, size = 0x38000, scoped, tag = 'input window, operand 1, single buffered']
    #allocation8 [shape = 's32[1]{0}', space=sflag, size = 0x4, scoped, tag = 'scoped memory for decoder_forward.1']
    #allocation9 [shape = 'u8[14336]{0}', space=vmem, size = 0x3800, scoped, tag = 'input window, operand 2, single buffered']
    #allocation10 [shape = 's32[1]{0}', space=sflag, size = 0x4, scoped, tag = 'scoped memory for decoder_forward.1']
    #allocation11 [shape = 'u8[1572864]{0}', space=vmem, size = 0x180000, scoped, tag = 'input window, operand 3, single buffered']
    #allocation12 [shape = 'u8[786432]{0}', space=vmem, size = 0xc0000, scoped, tag = 'input window, operand 4, single buffered']
    #allocation13 [shape = 's32[1]{0}', space=sflag, size = 0x4, scoped, tag = 'scoped memory for decoder_forward.1']
    #allocation14 [shape = 'u8[262144]{0}', space=vmem, size = 0x40000, scoped, tag = 'input window, operand 5, single buffered']
    #allocation15 [shape = 'u8[4096]{0}', space=vmem, size = 0x1000, scoped, tag = 'input window, operand 6, single buffered']
    #allocation16 [shape = 's32[1]{0}', space=sflag, size = 0x4, scoped, tag = 'scoped memory for decoder_forward.1']
    %12 = vsyncpa [#allocation8], 0
    %13 = vsyncpa [#allocation10], 0
    %14 = vsyncpa [#allocation13], 0
    %15 = vsyncpa [#allocation16], 0
    // Predicated region
    $region2: #{decoder_forward.1} parent=1 // pred_check
      _
    $region3: #{decoder_forward.1} parent=1 // pred_check_branch
      %17 = sbr.rel (0) target = $region5
    $region4: #{decoder_forward.1} parent=1 // pred_region
      _
    $region5: #{decoder_forward.1} parent=1 // pred_fallthru
      _
    // Predicated region
    $region6: #{decoder_forward.1} parent=1 // pred_check
      _
    $region7: #{decoder_forward.1} parent=1 // pred_check_branch
      %19 = sbr.rel (0) target = $region9
    $region8: #{decoder_forward.1} parent=1 // pred_region
      %s21 = ssub.s32 7168, 7168
      %22 = vsyncadd [#allocation8], %s21
      %s23 = sshll.u32 [#allocation7], 4
      %s24 = int_to_ptr.vmem [resolvable:$true] %s23
      %29 = dma.hbm_to_vmem [thread:$0]  %s1, 7168, %s24, [#allocation8], 1792, 1792, 112
    $region9: #{decoder_forward.1} parent=1 // pred_fallthru
      _
    // Predicated region
    $region10: #{decoder_forward.1} parent=1 // pred_check
      _
    $region11: #{decoder_forward.1} parent=1 // pred_check_branch
      %31 = sbr.rel (0) target = $region13
    $region12: #{decoder_forward.1} parent=1 // pred_region
      %s33 = ssub.s32 448, 448
      %34 = vsyncadd [#allocation10], %s33
      %s36 = sshll.u32 [#allocation9], 4
      %s37 = int_to_ptr.vmem [resolvable:$true] %s36
      %39 = dma.hbm_to_vmem [thread:$0]  %s2, 448, %s37, [#allocation10]
    $region13: #{decoder_forward.1} parent=1 // pred_fallthru
      _
    // Predicated region
    $region14: #{decoder_forward.1} parent=1 // pred_check
      _
    $region15: #{decoder_forward.1} parent=1 // pred_check_branch
      %41 = sbr.rel (0) target = $region17
    $region16: #{decoder_forward.1} parent=1 // pred_region
      %s43 = ssub.s32 49152, 49152
      %44 = vsyncadd [#allocation10], %s43
      %s45 = sshll.u32 [#allocation11], 4
      %s46 = int_to_ptr.vmem [resolvable:$true] %s45
      %51 = dma.hbm_to_vmem [thread:$0]  %s3, 49152, %s46, [#allocation10], 768, 768, 48
    $region17: #{decoder_forward.1} parent=1 // pred_fallthru
      _
    // Predicated region
    $region18: #{decoder_forward.1} parent=1 // pred_check
      _
    $region19: #{decoder_forward.1} parent=1 // pred_check_branch
      %53 = sbr.rel (0) target = $region21
    $region20: #{decoder_forward.1} parent=1 // pred_region
      %s55 = ssub.s32 24576, 24576
      %56 = vsyncadd [#allocation13], %s55
      %s57 = sshll.u32 [#allocation12], 4
      %s58 = int_to_ptr.vmem [resolvable:$true] %s57
      %63 = dma.hbm_to_vmem [thread:$0]  %s4, 24576, %s58, [#allocation13], 512, 512, 32
    $region21: #{decoder_forward.1} parent=1 // pred_fallthru
      _
    // Predicated region
    $region22: #{decoder_forward.1} parent=1 // pred_check
      _
    $region23: #{decoder_forward.1} parent=1 // pred_check_branch
      %65 = sbr.rel (0) target = $region25
    $region24: #{decoder_forward.1} parent=1 // pred_region
      %s67 = ssub.s32 8192, 8192
      %68 = vsyncadd [#allocation13], %s67
      %s69 = sshll.u32 [#allocation14], 4
      %s70 = int_to_ptr.vmem [resolvable:$true] %s69
      %75 = dma.hbm_to_vmem [thread:$0]  %s5, 8192, %s70, [#allocation13], 256, 256, 16
    $region25: #{decoder_forward.1} parent=1 // pred_fallthru
      _
    // Predicated region
    $region26: #{decoder_forward.1} parent=1 // pred_check
      _
    $region27: #{decoder_forward.1} parent=1 // pred_check_branch
      %77 = sbr.rel (0) target = $region29
    $region28: #{decoder_forward.1} parent=1 // pred_region
      %s79 = ssub.s32 128, 128
      %80 = vsyncadd [#allocation16], %s79
      %s82 = sshll.u32 [#allocation15], 4
      %s83 = int_to_ptr.vmem [resolvable:$true] %s82
      %85 = dma.hbm_to_vmem [thread:$0]  %s6, 128, %s83, [#allocation16]
    $region29: #{decoder_forward.1} parent=1 // pred_fallthru
      _
    // Predicated region
    $region30: #{decoder_forward.1} parent=1 // pred_check
      _
    $region31: #{decoder_forward.1} parent=1 // pred_check_branch
      %87 = sbr.rel (0) target = $region33
    $region32: #{decoder_forward.1} parent=1 // pred_region
      %88 = dma.done [#allocation8], 7168
    $region33: #{decoder_forward.1} parent=1 // pred_fallthru
      _
    // Predicated region
    $region34: #{decoder_forward.1} parent=1 // pred_check
      _
    $region35: #{decoder_forward.1} parent=1 // pred_check_branch
      %90 = sbr.rel (0) target = $region37
    $region36: #{decoder_forward.1} parent=1 // pred_region
      %91 = dma.done [#allocation10], 448
    $region37: #{decoder_forward.1} parent=1 // pred_fallthru
      _
    // Predicated region
    $region38: #{decoder_forward.1} parent=1 // pred_check
      _
    $region39: #{decoder_forward.1} parent=1 // pred_check_branch
      %93 = sbr.rel (0) target = $region41
    $region40: #{decoder_forward.1} parent=1 // pred_region
      %94 = dma.done [#allocation10], 49152
    $region41: #{decoder_forward.1} parent=1 // pred_fallthru
      _
    // Predicated region
    $region42: #{decoder_forward.1} parent=1 // pred_check
      _
    $region43: #{decoder_forward.1} parent=1 // pred_check_branch
      %96 = sbr.rel (0) target = $region45
    $region44: #{decoder_forward.1} parent=1 // pred_region
      %97 = dma.done [#allocation13], 24576
    $region45: #{decoder_forward.1} parent=1 // pred_fallthru
      _
    // Predicated region
    $region46: #{decoder_forward.1} parent=1 // pred_check
      _
    $region47: #{decoder_forward.1} parent=1 // pred_check_branch
      %99 = sbr.rel (0) target = $region49
    $region48: #{decoder_forward.1} parent=1 // pred_region
      %100 = dma.done [#allocation13], 8192
    $region49: #{decoder_forward.1} parent=1 // pred_fallthru
      _
    // Predicated region
    $region50: #{decoder_forward.1} parent=1 // pred_check
      _
    $region51: #{decoder_forward.1} parent=1 // pred_check_branch
      %102 = sbr.rel (0) target = $region53
    $region52: #{decoder_forward.1} parent=1 // pred_region
      %103 = dma.done [#allocation16], 128
    $region53: #{decoder_forward.1} parent=1 // pred_fallthru
      _
    %s105 = smul.u32 0, 8
    %s106 = ssub.s32 2, %s105
    %p107 = scmp.lt.s32.totalorder %s106, 8
    %s108 = scalar_select %p107, %s106, 8
    %v109 = vld [vmem:[%s0] sm:$0xff]
    %v110 = vpack.c.bf16 %v109, %v109
    %v111 = vld [vmem:[#allocation7] sm:$0xff]
    %v112 = vld [vmem:[#allocation7 + $0x8] sm:$0xff]
    %v113 = vld [vmem:[#allocation7 + $0x10] sm:$0xff]
    %v114 = vld [vmem:[#allocation7 + $0x18] sm:$0xff]
    %v115 = vld [vmem:[#allocation7 + $0x20] sm:$0xff]
    %v116 = vld [vmem:[#allocation7 + $0x28] sm:$0xff]
    %v117 = vld [vmem:[#allocation7 + $0x30] sm:$0xff]
    %v118 = vld [vmem:[#allocation7 + $0x38] sm:$0xff]
    %v119 = vld [vmem:[#allocation7 + $0x40] sm:$0xff]
    %v120 = vld [vmem:[#allocation7 + $0x48] sm:$0xff]
    %v121 = vld [vmem:[#allocation7 + $0x50] sm:$0xff]
    %v122 = vld [vmem:[#allocation7 + $0x58] sm:$0xff]
    %v123 = vld [vmem:[#allocation7 + $0x60] sm:$0xff]
    %v124 = vld [vmem:[#allocation7 + $0x68] sm:$0xff]
    %v125 = vld [vmem:[#allocation7 + $0x70] sm:$0xff]
    %v126 = vld [vmem:[#allocation7 + $0x78] sm:$0xff]
    %v127 = vld [vmem:[#allocation7 + $0x80] sm:$0xff]
    %v128 = vld [vmem:[#allocation7 + $0x88] sm:$0xff]
    %v129 = vld [vmem:[#allocation7 + $0x90] sm:$0xff]
    %v130 = vld [vmem:[#allocation7 + $0x98] sm:$0xff]
    %v131 = vld [vmem:[#allocation7 + $0xa0] sm:$0xff]
    %v132 = vld [vmem:[#allocation7 + $0xa8] sm:$0xff]
    %v133 = vld [vmem:[#allocation7 + $0xb0] sm:$0xff]
    %v134 = vld [vmem:[#allocation7 + $0xb8] sm:$0xff]
    %v135 = vld [vmem:[#allocation7 + $0xc0] sm:$0xff]
    %v136 = vld [vmem:[#allocation7 + $0xc8] sm:$0xff]
    %v137 = vld [vmem:[#allocation7 + $0xd0] sm:$0xff]
    %v138 = vld [vmem:[#allocation7 + $0xd8] sm:$0xff]
    %v139 = vld [vmem:[#allocation7 + $0xe0] sm:$0xff]
    %v140 = vld [vmem:[#allocation7 + $0xe8] sm:$0xff]
    %v141 = vld [vmem:[#allocation7 + $0xf0] sm:$0xff]
    %v142 = vld [vmem:[#allocation7 + $0xf8] sm:$0xff]
    %v143 = vld [vmem:[#allocation7 + $0x100] sm:$0xff]
    %v144 = vld [vmem:[#allocation7 + $0x108] sm:$0xff]
    %v145 = vld [vmem:[#allocation7 + $0x110] sm:$0xff]
    %v146 = vld [vmem:[#allocation7 + $0x118] sm:$0xff]
    %v147 = vld [vmem:[#allocation7 + $0x120] sm:$0xff]
    %v148 = vld [vmem:[#allocation7 + $0x128] sm:$0xff]
    %v149 = vld [vmem:[#allocation7 + $0x130] sm:$0xff]
    %v150 = vld [vmem:[#allocation7 + $0x138] sm:$0xff]
    %v151 = vld [vmem:[#allocation7 + $0x140] sm:$0xff]
    %v152 = vld [vmem:[#allocation7 + $0x148] sm:$0xff]
    %v153 = vld [vmem:[#allocation7 + $0x150] sm:$0xff]
    %v154 = vld [vmem:[#allocation7 + $0x158] sm:$0xff]
    %v155 = vld [vmem:[#allocation7 + $0x160] sm:$0xff]
    %v156 = vld [vmem:[#allocation7 + $0x168] sm:$0xff]
    %v157 = vld [vmem:[#allocation7 + $0x170] sm:$0xff]
    %v158 = vld [vmem:[#allocation7 + $0x178] sm:$0xff]
    %v159 = vld [vmem:[#allocation7 + $0x180] sm:$0xff]
    %v160 = vld [vmem:[#allocation7 + $0x188] sm:$0xff]
    %v161 = vld [vmem:[#allocation7 + $0x190] sm:$0xff]
    %v162 = vld [vmem:[#allocation7 + $0x198] sm:$0xff]
    %v163 = vld [vmem:[#allocation7 + $0x1a0] sm:$0xff]
    %v164 = vld [vmem:[#allocation7 + $0x1a8] sm:$0xff]
    %v165 = vld [vmem:[#allocation7 + $0x1b0] sm:$0xff]
    %v166 = vld [vmem:[#allocation7 + $0x1b8] sm:$0xff]
    %v167 = vld [vmem:[#allocation9] sm:$0xff]
    %v168 = vld [vmem:[#allocation9 + $0x8] sm:$0xff]
    %v169 = vld [vmem:[#allocation9 + $0x10] sm:$0xff]
    %v170 = vld [vmem:[#allocation9 + $0x18] sm:$0xf]
    %v175 = vlaneseq
    %v176 = vshrl.u32 %v175, 7
    %v177 = vsub.s32 0, %v176
    %v178 = vrot.slane %v167, %v177
    %v179 = vlaneseq
    %v180 = vshrl.u32 %v179, 7
    %v181 = vsub.s32 1, %v180
    %v182 = vrot.slane %v167, %v181
    %v183 = vlaneseq
    %v184 = vshrl.u32 %v183, 7
    %v185 = vsub.s32 2, %v184
    %v186 = vrot.slane %v167, %v185
    %v187 = vlaneseq
    %v188 = vshrl.u32 %v187, 7
    %v189 = vsub.s32 3, %v188
    %v190 = vrot.slane %v167, %v189
    %v191 = vlaneseq
    %v192 = vshrl.u32 %v191, 7
    %v193 = vsub.s32 4, %v192
    %v194 = vrot.slane %v167, %v193
    %v195 = vlaneseq
    %v196 = vshrl.u32 %v195, 7
    %v197 = vsub.s32 5, %v196
    %v198 = vrot.slane %v167, %v197
    %v199 = vlaneseq
    %v200 = vshrl.u32 %v199, 7
    %v201 = vsub.s32 6, %v200
    %v202 = vrot.slane %v167, %v201
    %v203 = vlaneseq
    %v204 = vshrl.u32 %v203, 7
    %v205 = vsub.s32 7, %v204
    %v206 = vrot.slane %v167, %v205
    %v207 = vlaneseq
    %v208 = vshrl.u32 %v207, 7
    %v209 = vsub.s32 0, %v208
    %v210 = vrot.slane %v168, %v209
    %v211 = vlaneseq
    %v212 = vshrl.u32 %v211, 7
    %v213 = vsub.s32 1, %v212
    %v214 = vrot.slane %v168, %v213
    %v215 = vlaneseq
    %v216 = vshrl.u32 %v215, 7
    %v217 = vsub.s32 2, %v216
    %v218 = vrot.slane %v168, %v217
    %v219 = vlaneseq
    %v220 = vshrl.u32 %v219, 7
    %v221 = vsub.s32 3, %v220
    %v222 = vrot.slane %v168, %v221
    %v223 = vlaneseq
    %v224 = vshrl.u32 %v223, 7
    %v225 = vsub.s32 4, %v224
    %v226 = vrot.slane %v168, %v225
    %v227 = vlaneseq
    %v228 = vshrl.u32 %v227, 7
    %v229 = vsub.s32 5, %v228
    %v230 = vrot.slane %v168, %v229
    %v231 = vlaneseq
    %v232 = vshrl.u32 %v231, 7
    %v233 = vsub.s32 6, %v232
    %v234 = vrot.slane %v168, %v233
    %v235 = vlaneseq
    %v236 = vshrl.u32 %v235, 7
    %v237 = vsub.s32 7, %v236
    %v238 = vrot.slane %v168, %v237
    %v239 = vlaneseq
    %v240 = vshrl.u32 %v239, 7
    %v241 = vsub.s32 0, %v240
    %v242 = vrot.slane %v169, %v241
    %v243 = vlaneseq
    %v244 = vshrl.u32 %v243, 7
    %v245 = vsub.s32 1, %v244
    %v246 = vrot.slane %v169, %v245
    %v247 = vlaneseq
    %v248 = vshrl.u32 %v247, 7
    %v249 = vsub.s32 2, %v248
    %v250 = vrot.slane %v169, %v249
    %v251 = vlaneseq
    %v252 = vshrl.u32 %v251, 7
    %v253 = vsub.s32 3, %v252
    %v254 = vrot.slane %v169, %v253
    %v255 = vlaneseq
    %v256 = vshrl.u32 %v255, 7
    %v257 = vsub.s32 4, %v256
    %v258 = vrot.slane %v169, %v257
    %v259 = vlaneseq
    %v260 = vshrl.u32 %v259, 7
    %v261 = vsub.s32 5, %v260
    %v262 = vrot.slane %v169, %v261
    %v263 = vlaneseq
    %v264 = vshrl.u32 %v263, 7
    %v265 = vsub.s32 6, %v264
    %v266 = vrot.slane %v169, %v265
    %v267 = vlaneseq
    %v268 = vshrl.u32 %v267, 7
    %v269 = vsub.s32 7, %v268
    %v270 = vrot.slane %v169, %v269
    %v271 = vlaneseq
    %v272 = vshrl.u32 %v271, 7
    %v273 = vsub.s32 0, %v272
    %v274 = vrot.slane %v170, %v273
    %v275 = vlaneseq
    %v276 = vshrl.u32 %v275, 7
    %v277 = vsub.s32 1, %v276
    %v278 = vrot.slane %v170, %v277
    %v279 = vlaneseq
    %v280 = vshrl.u32 %v279, 7
    %v281 = vsub.s32 2, %v280
    %v282 = vrot.slane %v170, %v281
    %v283 = vlaneseq
    %v284 = vshrl.u32 %v283, 7
    %v285 = vsub.s32 3, %v284
    %v286 = vrot.slane %v170, %v285
    %v371 = vunpack.c.l.b16 %v111
    %v372 = vunpack.c.h.b16 %v111
    %v373 = vunpack.c.l.b16 %v112
    %v374 = vunpack.c.h.b16 %v112
    %v375 = vunpack.c.l.b16 %v113
    %v376 = vunpack.c.h.b16 %v113
    %v377 = vunpack.c.l.b16 %v114
    %v378 = vunpack.c.h.b16 %v114
    %v379 = vunpack.c.l.b16 %v115
    %v380 = vunpack.c.h.b16 %v115
    %v381 = vunpack.c.l.b16 %v116
    %v382 = vunpack.c.h.b16 %v116
    %v383 = vunpack.c.l.b16 %v117
    %v384 = vunpack.c.h.b16 %v117
    %v385 = vunpack.c.l.b16 %v118
    %v386 = vunpack.c.h.b16 %v118
    %v387 = vunpack.c.l.b16 %v119
    %v388 = vunpack.c.h.b16 %v119
    %v389 = vunpack.c.l.b16 %v120
    %v390 = vunpack.c.h.b16 %v120
    %v391 = vunpack.c.l.b16 %v121
    %v392 = vunpack.c.h.b16 %v121
    %v393 = vunpack.c.l.b16 %v122
    %v394 = vunpack.c.h.b16 %v122
    %v395 = vunpack.c.l.b16 %v123
    %v396 = vunpack.c.h.b16 %v123
    %v397 = vunpack.c.l.b16 %v124
    %v398 = vunpack.c.h.b16 %v124
    %v399 = vunpack.c.l.b16 %v125
    %v400 = vunpack.c.h.b16 %v125
    %v401 = vunpack.c.l.b16 %v126
    %v402 = vunpack.c.h.b16 %v126
    %v403 = vunpack.c.l.b16 %v127
    %v404 = vunpack.c.h.b16 %v127
    %v405 = vunpack.c.l.b16 %v128
    %v406 = vunpack.c.h.b16 %v128
    %v407 = vunpack.c.l.b16 %v129
    %v408 = vunpack.c.h.b16 %v129
    %v409 = vunpack.c.l.b16 %v130
    %v410 = vunpack.c.h.b16 %v130
    %v411 = vunpack.c.l.b16 %v131
    %v412 = vunpack.c.h.b16 %v131
    %v413 = vunpack.c.l.b16 %v132
    %v414 = vunpack.c.h.b16 %v132
    %v415 = vunpack.c.l.b16 %v133
    %v416 = vunpack.c.h.b16 %v133
    %v417 = vunpack.c.l.b16 %v134
    %v418 = vunpack.c.h.b16 %v134
    %v419 = vunpack.c.l.b16 %v135
    %v420 = vunpack.c.h.b16 %v135
    %v421 = vunpack.c.l.b16 %v136
    %v422 = vunpack.c.h.b16 %v136
    %v423 = vunpack.c.l.b16 %v137
    %v424 = vunpack.c.h.b16 %v137
    %v425 = vunpack.c.l.b16 %v138
    %v426 = vunpack.c.h.b16 %v138
    %v427 = vunpack.c.l.b16 %v139
    %v428 = vunpack.c.h.b16 %v139
    %v429 = vunpack.c.l.b16 %v140
    %v430 = vunpack.c.h.b16 %v140
    %v431 = vunpack.c.l.b16 %v141
    %v432 = vunpack.c.h.b16 %v141
    %v433 = vunpack.c.l.b16 %v142
    %v434 = vunpack.c.h.b16 %v142
    %v435 = vunpack.c.l.b16 %v143
    %v436 = vunpack.c.h.b16 %v143
    %v437 = vunpack.c.l.b16 %v144
    %v438 = vunpack.c.h.b16 %v144
    %v439 = vunpack.c.l.b16 %v145
    %v440 = vunpack.c.h.b16 %v145
    %v441 = vunpack.c.l.b16 %v146
    %v442 = vunpack.c.h.b16 %v146
    %v443 = vunpack.c.l.b16 %v147
    %v444 = vunpack.c.h.b16 %v147
    %v445 = vunpack.c.l.b16 %v148
    %v446 = vunpack.c.h.b16 %v148
    %v447 = vunpack.c.l.b16 %v149
    %v448 = vunpack.c.h.b16 %v149
    %v449 = vunpack.c.l.b16 %v150
    %v450 = vunpack.c.h.b16 %v150
    %v451 = vunpack.c.l.b16 %v151
    %v452 = vunpack.c.h.b16 %v151
    %v453 = vunpack.c.l.b16 %v152
    %v454 = vunpack.c.h.b16 %v152
    %v455 = vunpack.c.l.b16 %v153
    %v456 = vunpack.c.h.b16 %v153
    %v457 = vunpack.c.l.b16 %v154
    %v458 = vunpack.c.h.b16 %v154
    %v459 = vunpack.c.l.b16 %v155
    %v460 = vunpack.c.h.b16 %v155
    %v461 = vunpack.c.l.b16 %v156
    %v462 = vunpack.c.h.b16 %v156
    %v463 = vunpack.c.l.b16 %v157
    %v464 = vunpack.c.h.b16 %v157
    %v465 = vunpack.c.l.b16 %v158
    %v466 = vunpack.c.h.b16 %v158
    %v467 = vunpack.c.l.b16 %v159
    %v468 = vunpack.c.h.b16 %v159
    %v469 = vunpack.c.l.b16 %v160
    %v470 = vunpack.c.h.b16 %v160
    %v471 = vunpack.c.l.b16 %v161
    %v472 = vunpack.c.h.b16 %v161
    %v473 = vunpack.c.l.b16 %v162
    %v474 = vunpack.c.h.b16 %v162
    %v475 = vunpack.c.l.b16 %v163
    %v476 = vunpack.c.h.b16 %v163
    %v477 = vunpack.c.l.b16 %v164
    %v478 = vunpack.c.h.b16 %v164
    %v479 = vunpack.c.l.b16 %v165
    %v480 = vunpack.c.h.b16 %v165
    %v481 = vunpack.c.l.b16 %v166
    %v482 = vunpack.c.h.b16 %v166
    %v483 = vpack.c.b16 %v399, %v371
    %v484 = vpack.c.b16 %v400, %v372
    %v485 = vpack.c.b16 %v401, %v373
    %v486 = vpack.c.b16 %v402, %v374
    %v487 = vpack.c.b16 %v403, %v375
    %v488 = vpack.c.b16 %v404, %v376
    %v489 = vpack.c.b16 %v405, %v377
    %v490 = vpack.c.b16 %v406, %v378
    %v491 = vpack.c.b16 %v407, %v379
    %v492 = vpack.c.b16 %v408, %v380
    %v493 = vpack.c.b16 %v409, %v381
    %v494 = vpack.c.b16 %v410, %v382
    %v495 = vpack.c.b16 %v411, %v383
    %v496 = vpack.c.b16 %v412, %v384
    %v497 = vpack.c.b16 %v413, %v385
    %v498 = vpack.c.b16 %v414, %v386
    %v499 = vpack.c.b16 %v415, %v387
    %v500 = vpack.c.b16 %v416, %v388
    %v501 = vpack.c.b16 %v417, %v389
    %v502 = vpack.c.b16 %v418, %v390
    %v503 = vpack.c.b16 %v419, %v391
    %v504 = vpack.c.b16 %v420, %v392
    %v505 = vpack.c.b16 %v421, %v393
    %v506 = vpack.c.b16 %v422, %v394
    %v507 = vpack.c.b16 %v423, %v395
    %v508 = vpack.c.b16 %v424, %v396
    %v509 = vpack.c.b16 %v425, %v397
    %v510 = vpack.c.b16 %v426, %v398
    %v511 = vpack.c.b16 %v455, %v427
    %v512 = vpack.c.b16 %v456, %v428
    %v513 = vpack.c.b16 %v457, %v429
    %v514 = vpack.c.b16 %v458, %v430
    %v515 = vpack.c.b16 %v459, %v431
    %v516 = vpack.c.b16 %v460, %v432
    %v517 = vpack.c.b16 %v461, %v433
    %v518 = vpack.c.b16 %v462, %v434
    %v519 = vpack.c.b16 %v463, %v435
    %v520 = vpack.c.b16 %v464, %v436
    %v521 = vpack.c.b16 %v465, %v437
    %v522 = vpack.c.b16 %v466, %v438
    %v523 = vpack.c.b16 %v467, %v439
    %v524 = vpack.c.b16 %v468, %v440
    %v525 = vpack.c.b16 %v469, %v441
    %v526 = vpack.c.b16 %v470, %v442
    %v527 = vpack.c.b16 %v471, %v443
    %v528 = vpack.c.b16 %v472, %v444
    %v529 = vpack.c.b16 %v473, %v445
    %v530 = vpack.c.b16 %v474, %v446
    %v531 = vpack.c.b16 %v475, %v447
    %v532 = vpack.c.b16 %v476, %v448
    %v533 = vpack.c.b16 %v477, %v449
    %v534 = vpack.c.b16 %v478, %v450
    %v535 = vpack.c.b16 %v479, %v451
    %v536 = vpack.c.b16 %v480, %v452
    %v537 = vpack.c.b16 %v481, %v453
    %v538 = vpack.c.b16 %v482, %v454
    %vm595 = vcmask 261120
    %v597 = vsel %vm595, %v110, 0
    %599 = vmatprep.subr.bf16.mxu0 %v484
    %600 = vmatpush1.bf16.msra.mxu0 %v483
    %601 = vmatprep.subr.bf16.mxu0 %v512
    %602 = vmatpush1.bf16.msra.mxu0 %v511
    %603 = vmatprep.subr.bf16.mxu0 0
    %604 = vmatpush1.bf16.msra.mxu0 0
    %605 = vmatprep.subr.bf16.mxu0 0
    %606 = vmatpush1.bf16.msra.mxu0 0
    %607 = vmatprep.subr.bf16.mxu0 0
    %608 = vmatpush1.bf16.msra.mxu0 0
    %609 = vmatprep.subr.bf16.mxu0 0
    %610 = vmatpush1.bf16.msra.mxu0 0
    %611 = vmatprep.subr.bf16.mxu0 0
    %612 = vmatpush1.bf16.msra.mxu0 0
    %613 = vmatprep.subr.bf16.mxu0 0
    %614 = vmatpush1.bf16.msra.mxu0 0
    %615 = vmatprep.subr.bf16.mxu0 0
    %616 = vmatpush1.bf16.msra.mxu0 0
    %617 = vmatprep.subr.bf16.mxu0 0
    %618 = vmatpush1.bf16.msra.mxu0 0
    %619 = vmatprep.subr.bf16.mxu0 0
    %620 = vmatpush1.bf16.msra.mxu0 0
    %621 = vmatprep.subr.bf16.mxu0 0
    %622 = vmatpush1.bf16.msra.mxu0 0
    %623 = vmatprep.subr.bf16.mxu0 0
    %624 = vmatpush1.bf16.msra.mxu0 0
    %625 = vmatprep.subr.bf16.mxu0 0
    %626 = vmatpush1.bf16.msra.mxu0 0
    %627 = vmatprep.subr.bf16.mxu0 0
    %628 = vmatpush1.bf16.msra.mxu0 0
    %629 = vmatprep.subr.bf16.mxu0 0
    %630 = vmatpush1.bf16.msra.mxu0 0
    %631 = vmatprep.mubr.bf16.mxu0 0
    %632 = vmatmul.mubr.bf16.gmra.mrb[0].mxu0 %v597
    %v633 = vpop.f32.mrb[0].mxu0
    %v634 = vadd.f32 %v178, %v633
    %v635 = vpop.f32.mrb[0].mxu0
    %v636 = vadd.f32 %v182, %v635
    %v637 = vpop.f32.mrb[0].mxu0
    %v638 = vpop.f32.mrb[0].mxu0
    %639 = vdwg.mxu0
    %640 = vmatprep.subr.bf16.mxu0 %v486
    %641 = vmatpush1.bf16.msra.mxu0 %v485
    %642 = vmatprep.subr.bf16.mxu0 %v514
    %643 = vmatpush1.bf16.msra.mxu0 %v513
    %644 = vmatprep.subr.bf16.mxu0 0
    %645 = vmatpush1.bf16.msra.mxu0 0
    %646 = vmatprep.subr.bf16.mxu0 0
    %647 = vmatpush1.bf16.msra.mxu0 0
    %648 = vmatprep.subr.bf16.mxu0 0
    %649 = vmatpush1.bf16.msra.mxu0 0
    %650 = vmatprep.subr.bf16.mxu0 0
    %651 = vmatpush1.bf16.msra.mxu0 0
    %652 = vmatprep.subr.bf16.mxu0 0
    %653 = vmatpush1.bf16.msra.mxu0 0
    %654 = vmatprep.subr.bf16.mxu0 0
    %655 = vmatpush1.bf16.msra.mxu0 0
    %656 = vmatprep.subr.bf16.mxu0 0
    %657 = vmatpush1.bf16.msra.mxu0 0
    %658 = vmatprep.subr.bf16.mxu0 0
    %659 = vmatpush1.bf16.msra.mxu0 0
    %660 = vmatprep.subr.bf16.mxu0 0
    %661 = vmatpush1.bf16.msra.mxu0 0
    %662 = vmatprep.subr.bf16.mxu0 0
    %663 = vmatpush1.bf16.msra.mxu0 0
    %664 = vmatprep.subr.bf16.mxu0 0
    %665 = vmatpush1.bf16.msra.mxu0 0
    %666 = vmatprep.subr.bf16.mxu0 0
    %667 = vmatpush1.bf16.msra.mxu0 0
    %668 = vmatprep.subr.bf16.mxu0 0
    %669 = vmatpush1.bf16.msra.mxu0 0
    %670 = vmatprep.subr.bf16.mxu0 0
    %671 = vmatpush1.bf16.msra.mxu0 0
    %672 = vmatprep.mubr.bf16.mxu0 0
    %673 = vmatmul.mubr.bf16.gmra.mrb[0].mxu0 %v597
    %v674 = vpop.f32.mrb[0].mxu0
    %v675 = vadd.f32 %v186, %v674
    %v676 = vpop.f32.mrb[0].mxu0
    %v677 = vadd.f32 %v190, %v676
    %v678 = vpop.f32.mrb[0].mxu0
    %v679 = vpop.f32.mrb[0].mxu0
    %680 = vdwg.mxu0
    %681 = vmatprep.subr.bf16.mxu0 %v488
    %682 = vmatpush1.bf16.msra.mxu0 %v487
    %683 = vmatprep.subr.bf16.mxu0 %v516
    %684 = vmatpush1.bf16.msra.mxu0 %v515
    %685 = vmatprep.subr.bf16.mxu0 0
    %686 = vmatpush1.bf16.msra.mxu0 0
    %687 = vmatprep.subr.bf16.mxu0 0
    %688 = vmatpush1.bf16.msra.mxu0 0
    %689 = vmatprep.subr.bf16.mxu0 0
    %690 = vmatpush1.bf16.msra.mxu0 0
    %691 = vmatprep.subr.bf16.mxu0 0
    %692 = vmatpush1.bf16.msra.mxu0 0
    %693 = vmatprep.subr.bf16.mxu0 0
    %694 = vmatpush1.bf16.msra.mxu0 0
    %695 = vmatprep.subr.bf16.mxu0 0
    %696 = vmatpush1.bf16.msra.mxu0 0
    %697 = vmatprep.subr.bf16.mxu0 0
    %698 = vmatpush1.bf16.msra.mxu0 0
    %699 = vmatprep.subr.bf16.mxu0 0
    %700 = vmatpush1.bf16.msra.mxu0 0
    %701 = vmatprep.subr.bf16.mxu0 0
    %702 = vmatpush1.bf16.msra.mxu0 0
    %703 = vmatprep.subr.bf16.mxu0 0
    %704 = vmatpush1.bf16.msra.mxu0 0
    %705 = vmatprep.subr.bf16.mxu0 0
    %706 = vmatpush1.bf16.msra.mxu0 0
    %707 = vmatprep.subr.bf16.mxu0 0
    %708 = vmatpush1.bf16.msra.mxu0 0
    %709 = vmatprep.subr.bf16.mxu0 0
    %710 = vmatpush1.bf16.msra.mxu0 0
    %711 = vmatprep.subr.bf16.mxu0 0
    %712 = vmatpush1.bf16.msra.mxu0 0
    %713 = vmatprep.mubr.bf16.mxu0 0
    %714 = vmatmul.mubr.bf16.gmra.mrb[0].mxu0 %v597
    %v715 = vpop.f32.mrb[0].mxu0
    %v716 = vadd.f32 %v194, %v715
    %v717 = vpop.f32.mrb[0].mxu0
    %v718 = vadd.f32 %v198, %v717
    %v719 = vpop.f32.mrb[0].mxu0
    %v720 = vpop.f32.mrb[0].mxu0
    %721 = vdwg.mxu0
    %722 = vmatprep.subr.bf16.mxu0 %v490
    %723 = vmatpush1.bf16.msra.mxu0 %v489
    %724 = vmatprep.subr.bf16.mxu0 %v518
    %725 = vmatpush1.bf16.msra.mxu0 %v517
    %726 = vmatprep.subr.bf16.mxu0 0
    %727 = vmatpush1.bf16.msra.mxu0 0
    %728 = vmatprep.subr.bf16.mxu0 0
    %729 = vmatpush1.bf16.msra.mxu0 0
    %730 = vmatprep.subr.bf16.mxu0 0
    %731 = vmatpush1.bf16.msra.mxu0 0
    %732 = vmatprep.subr.bf16.mxu0 0
    %733 = vmatpush1.bf16.msra.mxu0 0
    %734 = vmatprep.subr.bf16.mxu0 0
    %735 = vmatpush1.bf16.msra.mxu0 0
    %736 = vmatprep.subr.bf16.mxu0 0
    %737 = vmatpush1.bf16.msra.mxu0 0
    %738 = vmatprep.subr.bf16.mxu0 0
    %739 = vmatpush1.bf16.msra.mxu0 0
    %740 = vmatprep.subr.bf16.mxu0 0
    %741 = vmatpush1.bf16.msra.mxu0 0
    %742 = vmatprep.subr.bf16.mxu0 0
    %743 = vmatpush1.bf16.msra.mxu0 0
    %744 = vmatprep.subr.bf16.mxu0 0
    %745 = vmatpush1.bf16.msra.mxu0 0
    %746 = vmatprep.subr.bf16.mxu0 0
    %747 = vmatpush1.bf16.msra.mxu0 0
    %748 = vmatprep.subr.bf16.mxu0 0
    %749 = vmatpush1.bf16.msra.mxu0 0
    %750 = vmatprep.subr.bf16.mxu0 0
    %751 = vmatpush1.bf16.msra.mxu0 0
    %752 = vmatprep.subr.bf16.mxu0 0
    %753 = vmatpush1.bf16.msra.mxu0 0
    %754 = vmatprep.mubr.bf16.mxu0 0
    %755 = vmatmul.mubr.bf16.gmra.mrb[0].mxu0 %v597
    %v756 = vpop.f32.mrb[0].mxu0
    %v757 = vadd.f32 %v202, %v756
    %v758 = vpop.f32.mrb[0].mxu0
    %v759 = vadd.f32 %v206, %v758
    %v760 = vpop.f32.mrb[0].mxu0
    %v761 = vpop.f32.mrb[0].mxu0
    %762 = vdwg.mxu0
    %763 = vmatprep.subr.bf16.mxu0 %v492
    %764 = vmatpush1.bf16.msra.mxu0 %v491
    %765 = vmatprep.subr.bf16.mxu0 %v520
    %766 = vmatpush1.bf16.msra.mxu0 %v519
    %767 = vmatprep.subr.bf16.mxu0 0
    %768 = vmatpush1.bf16.msra.mxu0 0
    %769 = vmatprep.subr.bf16.mxu0 0
    %770 = vmatpush1.bf16.msra.mxu0 0
    %771 = vmatprep.subr.bf16.mxu0 0
    %772 = vmatpush1.bf16.msra.mxu0 0
    %773 = vmatprep.subr.bf16.mxu0 0
    %774 = vmatpush1.bf16.msra.mxu0 0
    %775 = vmatprep.subr.bf16.mxu0 0
    %776 = vmatpush1.bf16.msra.mxu0 0
    %777 = vmatprep.subr.bf16.mxu0 0
    %778 = vmatpush1.bf16.msra.mxu0 0
    %779 = vmatprep.subr.bf16.mxu0 0
    %780 = vmatpush1.bf16.msra.mxu0 0
    %781 = vmatprep.subr.bf16.mxu0 0
    %782 = vmatpush1.bf16.msra.mxu0 0
    %783 = vmatprep.subr.bf16.mxu0 0
    %784 = vmatpush1.bf16.msra.mxu0 0
    %785 = vmatprep.subr.bf16.mxu0 0
    %786 = vmatpush1.bf16.msra.mxu0 0
    %787 = vmatprep.subr.bf16.mxu0 0
    %788 = vmatpush1.bf16.msra.mxu0 0
    %789 = vmatprep.subr.bf16.mxu0 0
    %790 = vmatpush1.bf16.msra.mxu0 0
    %791 = vmatprep.subr.bf16.mxu0 0
    %792 = vmatpush1.bf16.msra.mxu0 0
    %793 = vmatprep.subr.bf16.mxu0 0
    %794 = vmatpush1.bf16.msra.mxu0 0
    %795 = vmatprep.mubr.bf16.mxu0 0
    %796 = vmatmul.mubr.bf16.gmra.mrb[0].mxu0 %v597
    %v797 = vpop.f32.mrb[0].mxu0
    %v798 = vadd.f32 %v210, %v797
    %v799 = vpop.f32.mrb[0].mxu0
    %v800 = vadd.f32 %v214, %v799
    %v801 = vpop.f32.mrb[0].mxu0
    %v802 = vpop.f32.mrb[0].mxu0
    %803 = vdwg.mxu0
    %804 = vmatprep.subr.bf16.mxu0 %v494
    %805 = vmatpush1.bf16.msra.mxu0 %v493
    %806 = vmatprep.subr.bf16.mxu0 %v522
    %807 = vmatpush1.bf16.msra.mxu0 %v521
    %808 = vmatprep.subr.bf16.mxu0 0
    %809 = vmatpush1.bf16.msra.mxu0 0
    %810 = vmatprep.subr.bf16.mxu0 0
    %811 = vmatpush1.bf16.msra.mxu0 0
    %812 = vmatprep.subr.bf16.mxu0 0
    %813 = vmatpush1.bf16.msra.mxu0 0
    %814 = vmatprep.subr.bf16.mxu0 0
    %815 = vmatpush1.bf16.msra.mxu0 0
    %816 = vmatprep.subr.bf16.mxu0 0
    %817 = vmatpush1.bf16.msra.mxu0 0
    %818 = vmatprep.subr.bf16.mxu0 0
    %819 = vmatpush1.bf16.msra.mxu0 0
    %820 = vmatprep.subr.bf16.mxu0 0
    %821 = vmatpush1.bf16.msra.mxu0 0
    %822 = vmatprep.subr.bf16.mxu0 0
    %823 = vmatpush1.bf16.msra.mxu0 0
    %824 = vmatprep.subr.bf16.mxu0 0
    %825 = vmatpush1.bf16.msra.mxu0 0
    %826 = vmatprep.subr.bf16.mxu0 0
    %827 = vmatpush1.bf16.msra.mxu0 0
    %828 = vmatprep.subr.bf16.mxu0 0
    %829 = vmatpush1.bf16.msra.mxu0 0
    %830 = vmatprep.subr.bf16.mxu0 0
    %831 = vmatpush1.bf16.msra.mxu0 0
    %832 = vmatprep.subr.bf16.mxu0 0
    %833 = vmatpush1.bf16.msra.mxu0 0
    %834 = vmatprep.subr.bf16.mxu0 0
    %835 = vmatpush1.bf16.msra.mxu0 0
    %836 = vmatprep.mubr.bf16.mxu0 0
    %837 = vmatmul.mubr.bf16.gmra.mrb[0].mxu0 %v597
    %v838 = vpop.f32.mrb[0].mxu0
    %v839 = vadd.f32 %v218, %v838
    %v840 = vpop.f32.mrb[0].mxu0
    %v841 = vadd.f32 %v222, %v840
    %v842 = vpop.f32.mrb[0].mxu0
    %v843 = vpop.f32.mrb[0].mxu0
    %844 = vdwg.mxu0
    %845 = vmatprep.subr.bf16.mxu0 %v496
    %846 = vmatpush1.bf16.msra.mxu0 %v495
    %847 = vmatprep.subr.bf16.mxu0 %v524
    %848 = vmatpush1.bf16.msra.mxu0 %v523
    %849 = vmatprep.subr.bf16.mxu0 0
    %850 = vmatpush1.bf16.msra.mxu0 0
    %851 = vmatprep.subr.bf16.mxu0 0
    %852 = vmatpush1.bf16.msra.mxu0 0
    %853 = vmatprep.subr.bf16.mxu0 0
    %854 = vmatpush1.bf16.msra.mxu0 0
    %855 = vmatprep.subr.bf16.mxu0 0
    %856 = vmatpush1.bf16.msra.mxu0 0
    %857 = vmatprep.subr.bf16.mxu0 0
    %858 = vmatpush1.bf16.msra.mxu0 0
    %859 = vmatprep.subr.bf16.mxu0 0
    %860 = vmatpush1.bf16.msra.mxu0 0
    %861 = vmatprep.subr.bf16.mxu0 0
    %862 = vmatpush1.bf16.msra.mxu0 0
    %863 = vmatprep.subr.bf16.mxu0 0
    %864 = vmatpush1.bf16.msra.mxu0 0
    %865 = vmatprep.subr.bf16.mxu0 0
    %866 = vmatpush1.bf16.msra.mxu0 0
    %867 = vmatprep.subr.bf16.mxu0 0
    %868 = vmatpush1.bf16.msra.mxu0 0
    %869 = vmatprep.subr.bf16.mxu0 0
    %870 = vmatpush1.bf16.msra.mxu0 0
    %871 = vmatprep.subr.bf16.mxu0 0
    %872 = vmatpush1.bf16.msra.mxu0 0
    %873 = vmatprep.subr.bf16.mxu0 0
    %874 = vmatpush1.bf16.msra.mxu0 0
    %875 = vmatprep.subr.bf16.mxu0 0
    %876 = vmatpush1.bf16.msra.mxu0 0
    %877 = vmatprep.mubr.bf16.mxu0 0
    %878 = vmatmul.mubr.bf16.gmra.mrb[0].mxu0 %v597
    %v879 = vpop.f32.mrb[0].mxu0
    %v880 = vadd.f32 %v226, %v879
    %v881 = vpop.f32.mrb[0].mxu0
    %v882 = vadd.f32 %v230, %v881
    %v883 = vpop.f32.mrb[0].mxu0
    %v884 = vpop.f32.mrb[0].mxu0
    %885 = vdwg.mxu0
    %886 = vmatprep.subr.bf16.mxu0 %v498
    %887 = vmatpush1.bf16.msra.mxu0 %v497
    %888 = vmatprep.subr.bf16.mxu0 %v526
    %889 = vmatpush1.bf16.msra.mxu0 %v525
    %890 = vmatprep.subr.bf16.mxu0 0
    %891 = vmatpush1.bf16.msra.mxu0 0
    %892 = vmatprep.subr.bf16.mxu0 0
    %893 = vmatpush1.bf16.msra.mxu0 0
    %894 = vmatprep.subr.bf16.mxu0 0
    %895 = vmatpush1.bf16.msra.mxu0 0
    %896 = vmatprep.subr.bf16.mxu0 0
    %897 = vmatpush1.bf16.msra.mxu0 0
    %898 = vmatprep.subr.bf16.mxu0 0
    %899 = vmatpush1.bf16.msra.mxu0 0
    %900 = vmatprep.subr.bf16.mxu0 0
    %901 = vmatpush1.bf16.msra.mxu0 0
    %902 = vmatprep.subr.bf16.mxu0 0
    %903 = vmatpush1.bf16.msra.mxu0 0
    %904 = vmatprep.subr.bf16.mxu0 0
    %905 = vmatpush1.bf16.msra.mxu0 0
    %906 = vmatprep.subr.bf16.mxu0 0
    %907 = vmatpush1.bf16.msra.mxu0 0
    %908 = vmatprep.subr.bf16.mxu0 0
    %909 = vmatpush1.bf16.msra.mxu0 0
    %910 = vmatprep.subr.bf16.mxu0 0
    %911 = vmatpush1.bf16.msra.mxu0 0
    %912 = vmatprep.subr.bf16.mxu0 0
    %913 = vmatpush1.bf16.msra.mxu0 0
    %914 = vmatprep.subr.bf16.mxu0 0
    %915 = vmatpush1.bf16.msra.mxu0 0
    %916 = vmatprep.subr.bf16.mxu0 0
    %917 = vmatpush1.bf16.msra.mxu0 0
    %918 = vmatprep.mubr.bf16.mxu0 0
    %919 = vmatmul.mubr.bf16.gmra.mrb[0].mxu0 %v597
    %v920 = vpop.f32.mrb[0].mxu0
    %v921 = vadd.f32 %v234, %v920
    %v922 = vpop.f32.mrb[0].mxu0
    %v923 = vadd.f32 %v238, %v922
    %v924 = vpop.f32.mrb[0].mxu0
    %v925 = vpop.f32.mrb[0].mxu0
    %926 = vdwg.mxu0
    %927 = vmatprep.subr.bf16.mxu0 %v500
    %928 = vmatpush1.bf16.msra.mxu0 %v499
    %929 = vmatprep.subr.bf16.mxu0 %v528
    %930 = vmatpush1.bf16.msra.mxu0 %v527
    %931 = vmatprep.subr.bf16.mxu0 0
    %932 = vmatpush1.bf16.msra.mxu0 0
    %933 = vmatprep.subr.bf16.mxu0 0
    %934 = vmatpush1.bf16.msra.mxu0 0
    %935 = vmatprep.subr.bf16.mxu0 0
    %936 = vmatpush1.bf16.msra.mxu0 0
    %937 = vmatprep.subr.bf16.mxu0 0
    %938 = vmatpush1.bf16.msra.mxu0 0
    %939 = vmatprep.subr.bf16.mxu0 0
    %940 = vmatpush1.bf16.msra.mxu0 0
    %941 = vmatprep.subr.bf16.mxu0 0
    %942 = vmatpush1.bf16.msra.mxu0 0
    %943 = vmatprep.subr.bf16.mxu0 0
    %944 = vmatpush1.bf16.msra.mxu0 0
    %945 = vmatprep.subr.bf16.mxu0 0
    %946 = vmatpush1.bf16.msra.mxu0 0
    %947 = vmatprep.subr.bf16.mxu0 0
    %948 = vmatpush1.bf16.msra.mxu0 0
    %949 = vmatprep.subr.bf16.mxu0 0
    %950 = vmatpush1.bf16.msra.mxu0 0
    %951 = vmatprep.subr.bf16.mxu0 0
    %952 = vmatpush1.bf16.msra.mxu0 0
    %953 = vmatprep.subr.bf16.mxu0 0
    %954 = vmatpush1.bf16.msra.mxu0 0
    %955 = vmatprep.subr.bf16.mxu0 0
    %956 = vmatpush1.bf16.msra.mxu0 0
    %957 = vmatprep.subr.bf16.mxu0 0
    %958 = vmatpush1.bf16.msra.mxu0 0
    %959 = vmatprep.mubr.bf16.mxu0 0
    %960 = vmatmul.mubr.bf16.gmra.mrb[0].mxu0 %v597
    %v961 = vpop.f32.mrb[0].mxu0
    %v962 = vadd.f32 %v242, %v961
    %v963 = vpop.f32.mrb[0].mxu0
    %v964 = vadd.f32 %v246, %v963
    %v965 = vpop.f32.mrb[0].mxu0
    %v966 = vpop.f32.mrb[0].mxu0
    %967 = vdwg.mxu0
    %968 = vmatprep.subr.bf16.mxu0 %v502
    %969 = vmatpush1.bf16.msra.mxu0 %v501
    %970 = vmatprep.subr.bf16.mxu0 %v530
    %971 = vmatpush1.bf16.msra.mxu0 %v529
    %972 = vmatprep.subr.bf16.mxu0 0
    %973 = vmatpush1.bf16.msra.mxu0 0
    %974 = vmatprep.subr.bf16.mxu0 0
    %975 = vmatpush1.bf16.msra.mxu0 0
    %976 = vmatprep.subr.bf16.mxu0 0
    %977 = vmatpush1.bf16.msra.mxu0 0
    %978 = vmatprep.subr.bf16.mxu0 0
    %979 = vmatpush1.bf16.msra.mxu0 0
    %980 = vmatprep.subr.bf16.mxu0 0
    %981 = vmatpush1.bf16.msra.mxu0 0
    %982 = vmatprep.subr.bf16.mxu0 0
    %983 = vmatpush1.bf16.msra.mxu0 0
    %984 = vmatprep.subr.bf16.mxu0 0
    %985 = vmatpush1.bf16.msra.mxu0 0
    %986 = vmatprep.subr.bf16.mxu0 0
    %987 = vmatpush1.bf16.msra.mxu0 0
    %988 = vmatprep.subr.bf16.mxu0 0
    %989 = vmatpush1.bf16.msra.mxu0 0
    %990 = vmatprep.subr.bf16.mxu0 0
    %991 = vmatpush1.bf16.msra.mxu0 0
    %992 = vmatprep.subr.bf16.mxu0 0
    %993 = vmatpush1.bf16.msra.mxu0 0
    %994 = vmatprep.subr.bf16.mxu0 0
    %995 = vmatpush1.bf16.msra.mxu0 0
    %996 = vmatprep.subr.bf16.mxu0 0
    %997 = vmatpush1.bf16.msra.mxu0 0
    %998 = vmatprep.subr.bf16.mxu0 0
    %999 = vmatpush1.bf16.msra.mxu0 0
    %1000 = vmatprep.mubr.bf16.mxu0 0
    %1001 = vmatmul.mubr.bf16.gmra.mrb[0].mxu0 %v597
    %v1002 = vpop.f32.mrb[0].mxu0
    %v1003 = vadd.f32 %v250, %v1002
    %v1004 = vpop.f32.mrb[0].mxu0
    %v1005 = vadd.f32 %v254, %v1004
    %v1006 = vpop.f32.mrb[0].mxu0
    %v1007 = vpop.f32.mrb[0].mxu0
    %1008 = vdwg.mxu0
    %1009 = vmatprep.subr.bf16.mxu0 %v504
    %1010 = vmatpush1.bf16.msra.mxu0 %v503
    %1011 = vmatprep.subr.bf16.mxu0 %v532
    %1012 = vmatpush1.bf16.msra.mxu0 %v531
    %1013 = vmatprep.subr.bf16.mxu0 0
    %1014 = vmatpush1.bf16.msra.mxu0 0
    %1015 = vmatprep.subr.bf16.mxu0 0
    %1016 = vmatpush1.bf16.msra.mxu0 0
    %1017 = vmatprep.subr.bf16.mxu0 0
    %1018 = vmatpush1.bf16.msra.mxu0 0
    %1019 = vmatprep.subr.bf16.mxu0 0
    %1020 = vmatpush1.bf16.msra.mxu0 0
    %1021 = vmatprep.subr.bf16.mxu0 0
    %1022 = vmatpush1.bf16.msra.mxu0 0
    %1023 = vmatprep.subr.bf16.mxu0 0
    %1024 = vmatpush1.bf16.msra.mxu0 0
    %1025 = vmatprep.subr.bf16.mxu0 0
    %1026 = vmatpush1.bf16.msra.mxu0 0
    %1027 = vmatprep.subr.bf16.mxu0 0
    %1028 = vmatpush1.bf16.msra.mxu0 0
    %1029 = vmatprep.subr.bf16.mxu0 0
    %1030 = vmatpush1.bf16.msra.mxu0 0
    %1031 = vmatprep.subr.bf16.mxu0 0
    %1032 = vmatpush1.bf16.msra.mxu0 0
    %1033 = vmatprep.subr.bf16.mxu0 0
    %1034 = vmatpush1.bf16.msra.mxu0 0
    %1035 = vmatprep.subr.bf16.mxu0 0
    %1036 = vmatpush1.bf16.msra.mxu0 0
    %1037 = vmatprep.subr.bf16.mxu0 0
    %1038 = vmatpush1.bf16.msra.mxu0 0
    %1039 = vmatprep.subr.bf16.mxu0 0
    %1040 = vmatpush1.bf16.msra.mxu0 0
    %1041 = vmatprep.mubr.bf16.mxu0 0
    %1042 = vmatmul.mubr.bf16.gmra.mrb[0].mxu0 %v597
    %v1043 = vpop.f32.mrb[0].mxu0
    %v1044 = vadd.f32 %v258, %v1043
    %v1045 = vpop.f32.mrb[0].mxu0
    %v1046 = vadd.f32 %v262, %v1045
    %v1047 = vpop.f32.mrb[0].mxu0
    %v1048 = vpop.f32.mrb[0].mxu0
    %1049 = vdwg.mxu0
    %1050 = vmatprep.subr.bf16.mxu0 %v506
    %1051 = vmatpush1.bf16.msra.mxu0 %v505
    %1052 = vmatprep.subr.bf16.mxu0 %v534
    %1053 = vmatpush1.bf16.msra.mxu0 %v533
    %1054 = vmatprep.subr.bf16.mxu0 0
    %1055 = vmatpush1.bf16.msra.mxu0 0
    %1056 = vmatprep.subr.bf16.mxu0 0
    %1057 = vmatpush1.bf16.msra.mxu0 0
    %1058 = vmatprep.subr.bf16.mxu0 0
    %1059 = vmatpush1.bf16.msra.mxu0 0
    %1060 = vmatprep.subr.bf16.mxu0 0
    %1061 = vmatpush1.bf16.msra.mxu0 0
    %1062 = vmatprep.subr.bf16.mxu0 0
    %1063 = vmatpush1.bf16.msra.mxu0 0
    %1064 = vmatprep.subr.bf16.mxu0 0
    %1065 = vmatpush1.bf16.msra.mxu0 0
    %1066 = vmatprep.subr.bf16.mxu0 0
    %1067 = vmatpush1.bf16.msra.mxu0 0
    %1068 = vmatprep.subr.bf16.mxu0 0
    %1069 = vmatpush1.bf16.msra.mxu0 0
    %1070 = vmatprep.subr.bf16.mxu0 0
    %1071 = vmatpush1.bf16.msra.mxu0 0
    %1072 = vmatprep.subr.bf16.mxu0 0
    %1073 = vmatpush1.bf16.msra.mxu0 0
    %1074 = vmatprep.subr.bf16.mxu0 0
    %1075 = vmatpush1.bf16.msra.mxu0 0
    %1076 = vmatprep.subr.bf16.mxu0 0
    %1077 = vmatpush1.bf16.msra.mxu0 0
    %1078 = vmatprep.subr.bf16.mxu0 0
    %1079 = vmatpush1.bf16.msra.mxu0 0
    %1080 = vmatprep.subr.bf16.mxu0 0
    %1081 = vmatpush1.bf16.msra.mxu0 0
    %1082 = vmatprep.mubr.bf16.mxu0 0
    %1083 = vmatmul.mubr.bf16.gmra.mrb[0].mxu0 %v597
    %v1084 = vpop.f32.mrb[0].mxu0
    %v1085 = vadd.f32 %v266, %v1084
    %v1086 = vpop.f32.mrb[0].mxu0
    %v1087 = vadd.f32 %v270, %v1086
    %v1088 = vpop.f32.mrb[0].mxu0
    %v1089 = vpop.f32.mrb[0].mxu0
    %1090 = vdwg.mxu0
    %1091 = vmatprep.subr.bf16.mxu0 %v508
    %1092 = vmatpush1.bf16.msra.mxu0 %v507
    %1093 = vmatprep.subr.bf16.mxu0 %v536
    %1094 = vmatpush1.bf16.msra.mxu0 %v535
    %1095 = vmatprep.subr.bf16.mxu0 0
    %1096 = vmatpush1.bf16.msra.mxu0 0
    %1097 = vmatprep.subr.bf16.mxu0 0
    %1098 = vmatpush1.bf16.msra.mxu0 0
    %1099 = vmatprep.subr.bf16.mxu0 0
    %1100 = vmatpush1.bf16.msra.mxu0 0
    %1101 = vmatprep.subr.bf16.mxu0 0
    %1102 = vmatpush1.bf16.msra.mxu0 0
    %1103 = vmatprep.subr.bf16.mxu0 0
    %1104 = vmatpush1.bf16.msra.mxu0 0
    %1105 = vmatprep.subr.bf16.mxu0 0
    %1106 = vmatpush1.bf16.msra.mxu0 0
    %1107 = vmatprep.subr.bf16.mxu0 0
    %1108 = vmatpush1.bf16.msra.mxu0 0
    %1109 = vmatprep.subr.bf16.mxu0 0
    %1110 = vmatpush1.bf16.msra.mxu0 0
    %1111 = vmatprep.subr.bf16.mxu0 0
    %1112 = vmatpush1.bf16.msra.mxu0 0
    %1113 = vmatprep.subr.bf16.mxu0 0
    %1114 = vmatpush1.bf16.msra.mxu0 0
    %1115 = vmatprep.subr.bf16.mxu0 0
    %1116 = vmatpush1.bf16.msra.mxu0 0
    %1117 = vmatprep.subr.bf16.mxu0 0
    %1118 = vmatpush1.bf16.msra.mxu0 0
    %1119 = vmatprep.subr.bf16.mxu0 0
    %1120 = vmatpush1.bf16.msra.mxu0 0
    %1121 = vmatprep.subr.bf16.mxu0 0
    %1122 = vmatpush1.bf16.msra.mxu0 0
    %1123 = vmatprep.mubr.bf16.mxu0 0
    %1124 = vmatmul.mubr.bf16.gmra.mrb[0].mxu0 %v597
    %v1125 = vpop.f32.mrb[0].mxu0
    %v1126 = vadd.f32 %v274, %v1125
    %v1127 = vpop.f32.mrb[0].mxu0
    %v1128 = vadd.f32 %v278, %v1127
    %v1129 = vpop.f32.mrb[0].mxu0
    %v1130 = vpop.f32.mrb[0].mxu0
    %1131 = vdwg.mxu0
    %1132 = vmatprep.subr.bf16.mxu0 %v510
    %1133 = vmatpush1.bf16.msra.mxu0 %v509
    %1134 = vmatprep.subr.bf16.mxu0 %v538
    %1135 = vmatpush1.bf16.msra.mxu0 %v537
    %1136 = vmatprep.subr.bf16.mxu0 0
    %1137 = vmatpush1.bf16.msra.mxu0 0
    %1138 = vmatprep.subr.bf16.mxu0 0
    %1139 = vmatpush1.bf16.msra.mxu0 0
    %1140 = vmatprep.subr.bf16.mxu0 0
    %1141 = vmatpush1.bf16.msra.mxu0 0
    %1142 = vmatprep.subr.bf16.mxu0 0
    %1143 = vmatpush1.bf16.msra.mxu0 0
    %1144 = vmatprep.subr.bf16.mxu0 0
    %1145 = vmatpush1.bf16.msra.mxu0 0
    %1146 = vmatprep.subr.bf16.mxu0 0
    %1147 = vmatpush1.bf16.msra.mxu0 0
    %1148 = vmatprep.subr.bf16.mxu0 0
    %1149 = vmatpush1.bf16.msra.mxu0 0
    %1150 = vmatprep.subr.bf16.mxu0 0
    %1151 = vmatpush1.bf16.msra.mxu0 0
    %1152 = vmatprep.subr.bf16.mxu0 0
    %1153 = vmatpush1.bf16.msra.mxu0 0
    %1154 = vmatprep.subr.bf16.mxu0 0
    %1155 = vmatpush1.bf16.msra.mxu0 0
    %1156 = vmatprep.subr.bf16.mxu0 0
    %1157 = vmatpush1.bf16.msra.mxu0 0
    %1158 = vmatprep.subr.bf16.mxu0 0
    %1159 = vmatpush1.bf16.msra.mxu0 0
    %1160 = vmatprep.subr.bf16.mxu0 0
    %1161 = vmatpush1.bf16.msra.mxu0 0
    %1162 = vmatprep.subr.bf16.mxu0 0
    %1163 = vmatpush1.bf16.msra.mxu0 0
    %1164 = vmatprep.mubr.bf16.mxu0 0
    %1165 = vmatmul.mubr.bf16.gmra.mrb[0].mxu0 %v597
    %v1166 = vpop.f32.mrb[0].mxu0
    %v1167 = vadd.f32 %v282, %v1166
    %v1168 = vpop.f32.mrb[0].mxu0
    %v1169 = vadd.f32 %v286, %v1168
    %v1170 = vpop.f32.mrb[0].mxu0
    %v1171 = vpop.f32.mrb[0].mxu0
    %1172 = vdwg.mxu0
    %v1173 = vmax.f32 %v634, 0.0
    %v1174 = vmax.f32 %v636, 0.0
    %v1175 = vmax.f32 %v675, 0.0
    %v1176 = vmax.f32 %v677, 0.0
    %v1177 = vmax.f32 %v716, 0.0
    %v1178 = vmax.f32 %v718, 0.0
    %v1179 = vmax.f32 %v757, 0.0
    %v1180 = vmax.f32 %v759, 0.0
    %v1181 = vmax.f32 %v798, 0.0
    %v1182 = vmax.f32 %v800, 0.0
    %v1183 = vmax.f32 %v839, 0.0
    %v1184 = vmax.f32 %v841, 0.0
    %v1185 = vmax.f32 %v880, 0.0
    %v1186 = vmax.f32 %v882, 0.0
    %v1187 = vmax.f32 %v921, 0.0
    %v1188 = vmax.f32 %v923, 0.0
    %v1189 = vmax.f32 %v962, 0.0
    %v1190 = vmax.f32 %v964, 0.0
    %v1191 = vmax.f32 %v1003, 0.0
    %v1192 = vmax.f32 %v1005, 0.0
    %v1193 = vmax.f32 %v1044, 0.0
    %v1194 = vmax.f32 %v1046, 0.0
    %v1195 = vmax.f32 %v1085, 0.0
    %v1196 = vmax.f32 %v1087, 0.0
    %v1197 = vmax.f32 %v1126, 0.0
    %v1198 = vmax.f32 %v1128, 0.0
    %v1199 = vmax.f32 %v1167, 0.0
    %v1200 = vmax.f32 %v1169, 0.0
    %1201 = vst [vmem:[#allocation2] sm:$0xff] %v1173
    %1202 = vst [vmem:[#allocation2 + $0x8] sm:$0xff] %v1174
    %1203 = vst [vmem:[#allocation2 + $0x10] sm:$0xff] %v1175
    %1204 = vst [vmem:[#allocation2 + $0x18] sm:$0xff] %v1176
    %1205 = vst [vmem:[#allocation2 + $0x20] sm:$0xff] %v1177
    %1206 = vst [vmem:[#allocation2 + $0x28] sm:$0xff] %v1178
    %1207 = vst [vmem:[#allocation2 + $0x30] sm:$0xff] %v1179
    %1208 = vst [vmem:[#allocation2 + $0x38] sm:$0xff] %v1180
    %1209 = vst [vmem:[#allocation2 + $0x40] sm:$0xff] %v1181
    %1210 = vst [vmem:[#allocation2 + $0x48] sm:$0xff] %v1182
    %1211 = vst [vmem:[#allocation2 + $0x50] sm:$0xff] %v1183
    %1212 = vst [vmem:[#allocation2 + $0x58] sm:$0xff] %v1184
    %1213 = vst [vmem:[#allocation2 + $0x60] sm:$0xff] %v1185
    %1214 = vst [vmem:[#allocation2 + $0x68] sm:$0xff] %v1186
    %1215 = vst [vmem:[#allocation2 + $0x70] sm:$0xff] %v1187
    %1216 = vst [vmem:[#allocation2 + $0x78] sm:$0xff] %v1188
    %1217 = vst [vmem:[#allocation2 + $0x80] sm:$0xff] %v1189
    %1218 = vst [vmem:[#allocation2 + $0x88] sm:$0xff] %v1190
    %1219 = vst [vmem:[#allocation2 + $0x90] sm:$0xff] %v1191
    %1220 = vst [vmem:[#allocation2 + $0x98] sm:$0xff] %v1192
    %1221 = vst [vmem:[#allocation2 + $0xa0] sm:$0xff] %v1193
    %1222 = vst [vmem:[#allocation2 + $0xa8] sm:$0xff] %v1194
    %1223 = vst [vmem:[#allocation2 + $0xb0] sm:$0xff] %v1195
    %1224 = vst [vmem:[#allocation2 + $0xb8] sm:$0xff] %v1196
    %1225 = vst [vmem:[#allocation2 + $0xc0] sm:$0xff] %v1197
    %1226 = vst [vmem:[#allocation2 + $0xc8] sm:$0xff] %v1198
    %1227 = vst [vmem:[#allocation2 + $0xd0] sm:$0xff] %v1199
    %1228 = vst [vmem:[#allocation2 + $0xd8] sm:$0xff] %v1200
    %v1229 = vld [vmem:[#allocation2] sm:$0xff]
    %v1230 = vld [vmem:[#allocation2 + $0x8] sm:$0xff]
    %v1231 = vld [vmem:[#allocation2 + $0x10] sm:$0xff]
    %v1232 = vld [vmem:[#allocation2 + $0x18] sm:$0xff]
    %v1233 = vld [vmem:[#allocation2 + $0x20] sm:$0xff]
    %v1234 = vld [vmem:[#allocation2 + $0x28] sm:$0xff]
    %v1235 = vld [vmem:[#allocation2 + $0x30] sm:$0xff]
    %v1236 = vld [vmem:[#allocation2 + $0x38] sm:$0xff]
    %v1237 = vld [vmem:[#allocation2 + $0x40] sm:$0xff]
    %v1238 = vld [vmem:[#allocation2 + $0x48] sm:$0xff]
    %v1239 = vld [vmem:[#allocation2 + $0x50] sm:$0xff]
    %v1240 = vld [vmem:[#allocation2 + $0x58] sm:$0xff]
    %v1241 = vld [vmem:[#allocation2 + $0x60] sm:$0xff]
    %v1242 = vld [vmem:[#allocation2 + $0x68] sm:$0xff]
    %v1243 = vld [vmem:[#allocation2 + $0x70] sm:$0xff]
    %v1244 = vld [vmem:[#allocation2 + $0x78] sm:$0xff]
    %v1245 = vld [vmem:[#allocation2 + $0x80] sm:$0xff]
    %v1246 = vld [vmem:[#allocation2 + $0x88] sm:$0xff]
    %v1247 = vld [vmem:[#allocation2 + $0x90] sm:$0xff]
    %v1248 = vld [vmem:[#allocation2 + $0x98] sm:$0xff]
    %v1249 = vld [vmem:[#allocation2 + $0xa0] sm:$0xff]
    %v1250 = vld [vmem:[#allocation2 + $0xa8] sm:$0xff]
    %v1251 = vld [vmem:[#allocation2 + $0xb0] sm:$0xff]
    %v1252 = vld [vmem:[#allocation2 + $0xb8] sm:$0xff]
    %v1253 = vld [vmem:[#allocation2 + $0xc0] sm:$0xff]
    %v1254 = vld [vmem:[#allocation2 + $0xc8] sm:$0xff]
    %v1255 = vld [vmem:[#allocation2 + $0xd0] sm:$0xff]
    %v1256 = vld [vmem:[#allocation2 + $0xd8] sm:$0xff]
    %v1257 = vpack.c.bf16 %v1233, %v1229
    %v1258 = vpack.c.bf16 %v1234, %v1230
    %v1259 = vpack.c.bf16 %v1235, %v1231
    %v1260 = vpack.c.bf16 %v1236, %v1232
    %v1261 = vpack.c.bf16 %v1241, %v1237
    %v1262 = vpack.c.bf16 %v1242, %v1238
    %v1263 = vpack.c.bf16 %v1243, %v1239
    %v1264 = vpack.c.bf16 %v1244, %v1240
    %v1265 = vpack.c.bf16 %v1249, %v1245
    %v1266 = vpack.c.bf16 %v1250, %v1246
    %v1267 = vpack.c.bf16 %v1251, %v1247
    %v1268 = vpack.c.bf16 %v1252, %v1248
    %v1269 = vpack.c.bf16 %v1253, %v1253
    %v1270 = vpack.c.bf16 %v1254, %v1254
    %v1271 = vpack.c.bf16 %v1255, %v1255
    %v1272 = vpack.c.bf16 %v1256, %v1256
    %v1273 = vld [vmem:[#allocation11] sm:$0xff]
    %v1274 = vld [vmem:[#allocation11 + $0x8] sm:$0xff]
    %v1275 = vld [vmem:[#allocation11 + $0x10] sm:$0xff]
    %v1276 = vld [vmem:[#allocation11 + $0x18] sm:$0xff]
    %v1277 = vld [vmem:[#allocation11 + $0x20] sm:$0xff]
    %v1278 = vld [vmem:[#allocation11 + $0x28] sm:$0xff]
    %v1279 = vld [vmem:[#allocation11 + $0x30] sm:$0xff]
    %v1280 = vld [vmem:[#allocation11 + $0x38] sm:$0xff]
    %v1281 = vld [vmem:[#allocation11 + $0x40] sm:$0xff]
    %v1282 = vld [vmem:[#allocation11 + $0x48] sm:$0xff]
    %v1283 = vld [vmem:[#allocation11 + $0x50] sm:$0xff]
    %v1284 = vld [vmem:[#allocation11 + $0x58] sm:$0xff]
    %v1285 = vld [vmem:[#allocation11 + $0x60] sm:$0xff]
    %v1286 = vld [vmem:[#allocation11 + $0x68] sm:$0xff]
    %v1287 = vld [vmem:[#allocation11 + $0x70] sm:$0xff]
    %v1288 = vld [vmem:[#allocation11 + $0x78] sm:$0xff]
    %v1289 = vld [vmem:[#allocation11 + $0x80] sm:$0xff]
    %v1290 = vld [vmem:[#allocation11 + $0x88] sm:$0xff]
    %v1291 = vld [vmem:[#allocation11 + $0x90] sm:$0xff]
    %v1292 = vld [vmem:[#allocation11 + $0x98] sm:$0xff]
    %v1293 = vld [vmem:[#allocation11 + $0xa0] sm:$0xff]
    %v1294 = vld [vmem:[#allocation11 + $0xa8] sm:$0xff]
    %v1295 = vld [vmem:[#allocation11 + $0xb0] sm:$0xff]
    %v1296 = vld [vmem:[#allocation11 + $0xb8] sm:$0xff]
    %v1297 = vld [vmem:[#allocation11 + $0xc0] sm:$0xff]
    %v1298 = vld [vmem:[#allocation11 + $0xc8] sm:$0xff]
    %v1299 = vld [vmem:[#allocation11 + $0xd0] sm:$0xff]
    %v1300 = vld [vmem:[#allocation11 + $0xd8] sm:$0xff]
    %v1301 = vld [vmem:[#allocation11 + $0xe0] sm:$0xff]
    %v1302 = vld [vmem:[#allocation11 + $0xe8] sm:$0xff]
    %v1303 = vld [vmem:[#allocation11 + $0xf0] sm:$0xff]
    %v1304 = vld [vmem:[#allocation11 + $0xf8] sm:$0xff]
    %v1305 = vld [vmem:[#allocation11 + $0x100] sm:$0xff]
    %v1306 = vld [vmem:[#allocation11 + $0x108] sm:$0xff]
    %v1307 = vld [vmem:[#allocation11 + $0x110] sm:$0xff]
    %v1308 = vld [vmem:[#allocation11 + $0x118] sm:$0xff]
    %v1309 = vld [vmem:[#allocation11 + $0x120] sm:$0xff]
    %v1310 = vld [vmem:[#allocation11 + $0x128] sm:$0xff]
    %v1311 = vld [vmem:[#allocation11 + $0x130] sm:$0xff]
    %v1312 = vld [vmem:[#allocation11 + $0x138] sm:$0xff]
    %v1313 = vld [vmem:[#allocation11 + $0x140] sm:$0xff]
    %v1314 = vld [vmem:[#allocation11 + $0x148] sm:$0xff]
    %v1315 = vld [vmem:[#allocation11 + $0x150] sm:$0xff]
    %v1316 = vld [vmem:[#allocation11 + $0x158] sm:$0xff]
    %v1317 = vld [vmem:[#allocation11 + $0x160] sm:$0xff]
    %v1318 = vld [vmem:[#allocation11 + $0x168] sm:$0xff]
    %v1319 = vld [vmem:[#allocation11 + $0x170] sm:$0xff]
    %v1320 = vld [vmem:[#allocation11 + $0x178] sm:$0xff]
    %v1321 = vld [vmem:[#allocation11 + $0x180] sm:$0xff]
    %v1322 = vld [vmem:[#allocation11 + $0x188] sm:$0xff]
    %v1323 = vld [vmem:[#allocation11 + $0x190] sm:$0xff]
    %v1324 = vld [vmem:[#allocation11 + $0x198] sm:$0xff]
    %v1325 = vld [vmem:[#allocation11 + $0x1a0] sm:$0xff]
    %v1326 = vld [vmem:[#allocation11 + $0x1a8] sm:$0xff]
    %v1327 = vld [vmem:[#allocation11 + $0x1b0] sm:$0xff]
    %v1328 = vld [vmem:[#allocation11 + $0x1b8] sm:$0xff]
    %v1329 = vld [vmem:[#allocation11 + $0x1c0] sm:$0xff]
    %v1330 = vld [vmem:[#allocation11 + $0x1c8] sm:$0xff]
    %v1331 = vld [vmem:[#allocation11 + $0x1d0] sm:$0xff]
    %v1332 = vld [vmem:[#allocation11 + $0x1d8] sm:$0xff]
    %v1333 = vld [vmem:[#allocation11 + $0x1e0] sm:$0xff]
    %v1334 = vld [vmem:[#allocation11 + $0x1e8] sm:$0xff]
    %v1335 = vld [vmem:[#allocation11 + $0x1f0] sm:$0xff]
    %v1336 = vld [vmem:[#allocation11 + $0x1f8] sm:$0xff]
    %v1337 = vld [vmem:[#allocation11 + $0x200] sm:$0xff]
    %v1338 = vld [vmem:[#allocation11 + $0x208] sm:$0xff]
    %v1339 = vld [vmem:[#allocation11 + $0x210] sm:$0xff]
    %v1340 = vld [vmem:[#allocation11 + $0x218] sm:$0xff]
    %v1341 = vld [vmem:[#allocation11 + $0x220] sm:$0xff]
    %v1342 = vld [vmem:[#allocation11 + $0x228] sm:$0xff]
    %v1343 = vld [vmem:[#allocation11 + $0x230] sm:$0xff]
    %v1344 = vld [vmem:[#allocation11 + $0x238] sm:$0xff]
    %v1345 = vld [vmem:[#allocation11 + $0x240] sm:$0xff]
    %v1346 = vld [vmem:[#allocation11 + $0x248] sm:$0xff]
    %v1347 = vld [vmem:[#allocation11 + $0x250] sm:$0xff]
    %v1348 = vld [vmem:[#allocation11 + $0x258] sm:$0xff]
    %v1349 = vld [vmem:[#allocation11 + $0x260] sm:$0xff]
    %v1350 = vld [vmem:[#allocation11 + $0x268] sm:$0xff]
    %v1351 = vld [vmem:[#allocation11 + $0x270] sm:$0xff]
    %v1352 = vld [vmem:[#allocation11 + $0x278] sm:$0xff]
    %v1353 = vld [vmem:[#allocation11 + $0x280] sm:$0xff]
    %v1354 = vld [vmem:[#allocation11 + $0x288] sm:$0xff]
    %v1355 = vld [vmem:[#allocation11 + $0x290] sm:$0xff]
    %v1356 = vld [vmem:[#allocation11 + $0x298] sm:$0xff]
    %v1357 = vld [vmem:[#allocation11 + $0x2a0] sm:$0xff]
    %v1358 = vld [vmem:[#allocation11 + $0x2a8] sm:$0xff]
    %v1359 = vld [vmem:[#allocation11 + $0x2b0] sm:$0xff]
    %v1360 = vld [vmem:[#allocation11 + $0x2b8] sm:$0xff]
    %v1361 = vld [vmem:[#allocation11 + $0x2c0] sm:$0xff]
    %v1362 = vld [vmem:[#allocation11 + $0x2c8] sm:$0xff]
    %v1363 = vld [vmem:[#allocation11 + $0x2d0] sm:$0xff]
    %v1364 = vld [vmem:[#allocation11 + $0x2d8] sm:$0xff]
    %v1365 = vld [vmem:[#allocation11 + $0x2e0] sm:$0xff]
    %v1366 = vld [vmem:[#allocation11 + $0x2e8] sm:$0xff]
    %v1367 = vld [vmem:[#allocation11 + $0x2f0] sm:$0xff]
    %v1368 = vld [vmem:[#allocation11 + $0x2f8] sm:$0xff]
    %v1369 = vld [vmem:[#allocation11 + $0x300] sm:$0xff]
    %v1370 = vld [vmem:[#allocation11 + $0x308] sm:$0xff]
    %v1371 = vld [vmem:[#allocation11 + $0x310] sm:$0xff]
    %v1372 = vld [vmem:[#allocation11 + $0x318] sm:$0xff]
    %v1373 = vld [vmem:[#allocation11 + $0x320] sm:$0xff]
    %v1374 = vld [vmem:[#allocation11 + $0x328] sm:$0xff]
    %v1375 = vld [vmem:[#allocation11 + $0x330] sm:$0xff]
    %v1376 = vld [vmem:[#allocation11 + $0x338] sm:$0xff]
    %v1377 = vld [vmem:[#allocation11 + $0x340] sm:$0xff]
    %v1378 = vld [vmem:[#allocation11 + $0x348] sm:$0xff]
    %v1379 = vld [vmem:[#allocation11 + $0x350] sm:$0xff]
    %v1380 = vld [vmem:[#allocation11 + $0x358] sm:$0xff]
    %v1381 = vld [vmem:[#allocation11 + $0x360] sm:$0xff]
    %v1382 = vld [vmem:[#allocation11 + $0x368] sm:$0xff]
    %v1383 = vld [vmem:[#allocation11 + $0x370] sm:$0xff]
    %v1384 = vld [vmem:[#allocation11 + $0x378] sm:$0xff]
    %v1385 = vld [vmem:[#allocation11 + $0x380] sm:$0xff]
    %v1386 = vld [vmem:[#allocation11 + $0x388] sm:$0xff]
    %v1387 = vld [vmem:[#allocation11 + $0x390] sm:$0xff]
    %v1388 = vld [vmem:[#allocation11 + $0x398] sm:$0xff]
    %v1389 = vld [vmem:[#allocation11 + $0x3a0] sm:$0xff]
    %v1390 = vld [vmem:[#allocation11 + $0x3a8] sm:$0xff]
    %v1391 = vld [vmem:[#allocation11 + $0x3b0] sm:$0xff]
    %v1392 = vld [vmem:[#allocation11 + $0x3b8] sm:$0xff]
    %v1393 = vld [vmem:[#allocation11 + $0x3c0] sm:$0xff]
    %v1394 = vld [vmem:[#allocation11 + $0x3c8] sm:$0xff]
    %v1395 = vld [vmem:[#allocation11 + $0x3d0] sm:$0xff]
    %v1396 = vld [vmem:[#allocation11 + $0x3d8] sm:$0xff]
    %v1397 = vld [vmem:[#allocation11 + $0x3e0] sm:$0xff]
    %v1398 = vld [vmem:[#allocation11 + $0x3e8] sm:$0xff]
    %v1399 = vld [vmem:[#allocation11 + $0x3f0] sm:$0xff]
    %v1400 = vld [vmem:[#allocation11 + $0x3f8] sm:$0xff]
    %v1401 = vld [vmem:[#allocation11 + $0x400] sm:$0xff]
    %v1402 = vld [vmem:[#allocation11 + $0x408] sm:$0xff]
    %v1403 = vld [vmem:[#allocation11 + $0x410] sm:$0xff]
    %v1404 = vld [vmem:[#allocation11 + $0x418] sm:$0xff]
    %v1405 = vld [vmem:[#allocation11 + $0x420] sm:$0xff]
    %v1406 = vld [vmem:[#allocation11 + $0x428] sm:$0xff]
    %v1407 = vld [vmem:[#allocation11 + $0x430] sm:$0xff]
    %v1408 = vld [vmem:[#allocation11 + $0x438] sm:$0xff]
    %v1409 = vld [vmem:[#allocation11 + $0x440] sm:$0xff]
    %v1410 = vld [vmem:[#allocation11 + $0x448] sm:$0xff]
    %v1411 = vld [vmem:[#allocation11 + $0x450] sm:$0xff]
    %v1412 = vld [vmem:[#allocation11 + $0x458] sm:$0xff]
    %v1413 = vld [vmem:[#allocation11 + $0x460] sm:$0xff]
    %v1414 = vld [vmem:[#allocation11 + $0x468] sm:$0xff]
    %v1415 = vld [vmem:[#allocation11 + $0x470] sm:$0xff]
    %v1416 = vld [vmem:[#allocation11 + $0x478] sm:$0xff]
    %v1417 = vld [vmem:[#allocation11 + $0x480] sm:$0xff]
    %v1418 = vld [vmem:[#allocation11 + $0x488] sm:$0xff]
    %v1419 = vld [vmem:[#allocation11 + $0x490] sm:$0xff]
    %v1420 = vld [vmem:[#allocation11 + $0x498] sm:$0xff]
    %v1421 = vld [vmem:[#allocation11 + $0x4a0] sm:$0xff]
    %v1422 = vld [vmem:[#allocation11 + $0x4a8] sm:$0xff]
    %v1423 = vld [vmem:[#allocation11 + $0x4b0] sm:$0xff]
    %v1424 = vld [vmem:[#allocation11 + $0x4b8] sm:$0xff]
    %v1425 = vld [vmem:[#allocation11 + $0x4c0] sm:$0xff]
    %v1426 = vld [vmem:[#allocation11 + $0x4c8] sm:$0xff]
    %v1427 = vld [vmem:[#allocation11 + $0x4d0] sm:$0xff]
    %v1428 = vld [vmem:[#allocation11 + $0x4d8] sm:$0xff]
    %v1429 = vld [vmem:[#allocation11 + $0x4e0] sm:$0xff]
    %v1430 = vld [vmem:[#allocation11 + $0x4e8] sm:$0xff]
    %v1431 = vld [vmem:[#allocation11 + $0x4f0] sm:$0xff]
    %v1432 = vld [vmem:[#allocation11 + $0x4f8] sm:$0xff]
    %v1433 = vld [vmem:[#allocation11 + $0x500] sm:$0xff]
    %v1434 = vld [vmem:[#allocation11 + $0x508] sm:$0xff]
    %v1435 = vld [vmem:[#allocation11 + $0x510] sm:$0xff]
    %v1436 = vld [vmem:[#allocation11 + $0x518] sm:$0xff]
    %v1437 = vld [vmem:[#allocation11 + $0x520] sm:$0xff]
    %v1438 = vld [vmem:[#allocation11 + $0x528] sm:$0xff]
    %v1439 = vld [vmem:[#allocation11 + $0x530] sm:$0xff]
    %v1440 = vld [vmem:[#allocation11 + $0x538] sm:$0xff]
    %v1441 = vld [vmem:[#allocation11 + $0x540] sm:$0xff]
    %v1442 = vld [vmem:[#allocation11 + $0x548] sm:$0xff]
    %v1443 = vld [vmem:[#allocation11 + $0x550] sm:$0xff]
    %v1444 = vld [vmem:[#allocation11 + $0x558] sm:$0xff]
    %v1445 = vld [vmem:[#allocation11 + $0x560] sm:$0xff]
    %v1446 = vld [vmem:[#allocation11 + $0x568] sm:$0xff]
    %v1447 = vld [vmem:[#allocation11 + $0x570] sm:$0xff]
    %v1448 = vld [vmem:[#allocation11 + $0x578] sm:$0xff]
    %v1449 = vld [vmem:[#allocation11 + $0x580] sm:$0xff]
    %v1450 = vld [vmem:[#allocation11 + $0x588] sm:$0xff]
    %v1451 = vld [vmem:[#allocation11 + $0x590] sm:$0xff]
    %v1452 = vld [vmem:[#allocation11 + $0x598] sm:$0xff]
    %v1453 = vld [vmem:[#allocation11 + $0x5a0] sm:$0xff]
    %v1454 = vld [vmem:[#allocation11 + $0x5a8] sm:$0xff]
    %v1455 = vld [vmem:[#allocation11 + $0x5b0] sm:$0xff]
    %v1456 = vld [vmem:[#allocation11 + $0x5b8] sm:$0xff]
    %v1457 = vld [vmem:[#allocation11 + $0x5c0] sm:$0xff]
    %v1458 = vld [vmem:[#allocation11 + $0x5c8] sm:$0xff]
    %v1459 = vld [vmem:[#allocation11 + $0x5d0] sm:$0xff]
    %v1460 = vld [vmem:[#allocation11 + $0x5d8] sm:$0xff]
    %v1461 = vld [vmem:[#allocation11 + $0x5e0] sm:$0xff]
    %v1462 = vld [vmem:[#allocation11 + $0x5e8] sm:$0xff]
    %v1463 = vld [vmem:[#allocation11 + $0x5f0] sm:$0xff]
    %v1464 = vld [vmem:[#allocation11 + $0x5f8] sm:$0xff]
    %v1465 = vld [vmem:[#allocation11 + $0x600] sm:$0xff]
    %v1466 = vld [vmem:[#allocation11 + $0x608] sm:$0xff]
    %v1467 = vld [vmem:[#allocation11 + $0x610] sm:$0xff]
    %v1468 = vld [vmem:[#allocation11 + $0x618] sm:$0xff]
    %v1469 = vld [vmem:[#allocation11 + $0x620] sm:$0xff]
    %v1470 = vld [vmem:[#allocation11 + $0x628] sm:$0xff]
    %v1471 = vld [vmem:[#allocation11 + $0x630] sm:$0xff]
    %v1472 = vld [vmem:[#allocation11 + $0x638] sm:$0xff]
    %v1473 = vld [vmem:[#allocation11 + $0x640] sm:$0xff]
    %v1474 = vld [vmem:[#allocation11 + $0x648] sm:$0xff]
    %v1475 = vld [vmem:[#allocation11 + $0x650] sm:$0xff]
    %v1476 = vld [vmem:[#allocation11 + $0x658] sm:$0xff]
    %v1477 = vld [vmem:[#allocation11 + $0x660] sm:$0xff]
    %v1478 = vld [vmem:[#allocation11 + $0x668] sm:$0xff]
    %v1479 = vld [vmem:[#allocation11 + $0x670] sm:$0xff]
    %v1480 = vld [vmem:[#allocation11 + $0x678] sm:$0xff]
    %v1481 = vld [vmem:[#allocation11 + $0x680] sm:$0xff]
    %v1482 = vld [vmem:[#allocation11 + $0x688] sm:$0xff]
    %v1483 = vld [vmem:[#allocation11 + $0x690] sm:$0xff]
    %v1484 = vld [vmem:[#allocation11 + $0x698] sm:$0xff]
    %v1485 = vld [vmem:[#allocation11 + $0x6a0] sm:$0xff]
    %v1486 = vld [vmem:[#allocation11 + $0x6a8] sm:$0xff]
    %v1487 = vld [vmem:[#allocation11 + $0x6b0] sm:$0xff]
    %v1488 = vld [vmem:[#allocation11 + $0x6b8] sm:$0xff]
    %v1489 = vld [vmem:[#allocation11 + $0x6c0] sm:$0xff]
    %v1490 = vld [vmem:[#allocation11 + $0x6c8] sm:$0xff]
    %v1491 = vld [vmem:[#allocation11 + $0x6d0] sm:$0xff]
    %v1492 = vld [vmem:[#allocation11 + $0x6d8] sm:$0xff]
    %v1493 = vld [vmem:[#allocation11 + $0x6e0] sm:$0xff]
    %v1494 = vld [vmem:[#allocation11 + $0x6e8] sm:$0xff]
    %v1495 = vld [vmem:[#allocation11 + $0x6f0] sm:$0xff]
    %v1496 = vld [vmem:[#allocation11 + $0x6f8] sm:$0xff]
    %v1497 = vld [vmem:[#allocation11 + $0x700] sm:$0xff]
    %v1498 = vld [vmem:[#allocation11 + $0x708] sm:$0xff]
    %v1499 = vld [vmem:[#allocation11 + $0x710] sm:$0xff]
    %v1500 = vld [vmem:[#allocation11 + $0x718] sm:$0xff]
    %v1501 = vld [vmem:[#allocation11 + $0x720] sm:$0xff]
    %v1502 = vld [vmem:[#allocation11 + $0x728] sm:$0xff]
    %v1503 = vld [vmem:[#allocation11 + $0x730] sm:$0xff]
    %v1504 = vld [vmem:[#allocation11 + $0x738] sm:$0xff]
    %v1505 = vld [vmem:[#allocation11 + $0x740] sm:$0xff]
    %v1506 = vld [vmem:[#allocation11 + $0x748] sm:$0xff]
    %v1507 = vld [vmem:[#allocation11 + $0x750] sm:$0xff]
    %v1508 = vld [vmem:[#allocation11 + $0x758] sm:$0xff]
    %v1509 = vld [vmem:[#allocation11 + $0x760] sm:$0xff]
    %v1510 = vld [vmem:[#allocation11 + $0x768] sm:$0xff]
    %v1511 = vld [vmem:[#allocation11 + $0x770] sm:$0xff]
    %v1512 = vld [vmem:[#allocation11 + $0x778] sm:$0xff]
    %v1513 = vld [vmem:[#allocation11 + $0x780] sm:$0xff]
    %v1514 = vld [vmem:[#allocation11 + $0x788] sm:$0xff]
    %v1515 = vld [vmem:[#allocation11 + $0x790] sm:$0xff]
    %v1516 = vld [vmem:[#allocation11 + $0x798] sm:$0xff]
    %v1517 = vld [vmem:[#allocation11 + $0x7a0] sm:$0xff]
    %v1518 = vld [vmem:[#allocation11 + $0x7a8] sm:$0xff]
    %v1519 = vld [vmem:[#allocation11 + $0x7b0] sm:$0xff]
    %v1520 = vld [vmem:[#allocation11 + $0x7b8] sm:$0xff]
    %v1521 = vld [vmem:[#allocation11 + $0x7c0] sm:$0xff]
    %v1522 = vld [vmem:[#allocation11 + $0x7c8] sm:$0xff]
    %v1523 = vld [vmem:[#allocation11 + $0x7d0] sm:$0xff]
    %v1524 = vld [vmem:[#allocation11 + $0x7d8] sm:$0xff]
    %v1525 = vld [vmem:[#allocation11 + $0x7e0] sm:$0xff]
    %v1526 = vld [vmem:[#allocation11 + $0x7e8] sm:$0xff]
    %v1527 = vld [vmem:[#allocation11 + $0x7f0] sm:$0xff]
    %v1528 = vld [vmem:[#allocation11 + $0x7f8] sm:$0xff]
    %v1529 = vld [vmem:[#allocation11 + $0x800] sm:$0xff]
    %v1530 = vld [vmem:[#allocation11 + $0x808] sm:$0xff]
    %v1531 = vld [vmem:[#allocation11 + $0x810] sm:$0xff]
    %v1532 = vld [vmem:[#allocation11 + $0x818] sm:$0xff]
    %v1533 = vld [vmem:[#allocation11 + $0x820] sm:$0xff]
    %v1534 = vld [vmem:[#allocation11 + $0x828] sm:$0xff]
    %v1535 = vld [vmem:[#allocation11 + $0x830] sm:$0xff]
    %v1536 = vld [vmem:[#allocation11 + $0x838] sm:$0xff]
    %v1537 = vld [vmem:[#allocation11 + $0x840] sm:$0xff]
    %v1538 = vld [vmem:[#allocation11 + $0x848] sm:$0xff]
    %v1539 = vld [vmem:[#allocation11 + $0x850] sm:$0xff]
    %v1540 = vld [vmem:[#allocation11 + $0x858] sm:$0xff]
    %v1541 = vld [vmem:[#allocation11 + $0x860] sm:$0xff]
    %v1542 = vld [vmem:[#allocation11 + $0x868] sm:$0xff]
    %v1543 = vld [vmem:[#allocation11 + $0x870] sm:$0xff]
    %v1544 = vld [vmem:[#allocation11 + $0x878] sm:$0xff]
    %v1545 = vld [vmem:[#allocation11 + $0x880] sm:$0xff]
    %v1546 = vld [vmem:[#allocation11 + $0x888] sm:$0xff]
    %v1547 = vld [vmem:[#allocation11 + $0x890] sm:$0xff]
    %v1548 = vld [vmem:[#allocation11 + $0x898] sm:$0xff]
    %v1549 = vld [vmem:[#allocation11 + $0x8a0] sm:$0xff]
    %v1550 = vld [vmem:[#allocation11 + $0x8a8] sm:$0xff]
    %v1551 = vld [vmem:[#allocation11 + $0x8b0] sm:$0xff]
    %v1552 = vld [vmem:[#allocation11 + $0x8b8] sm:$0xff]
    %v1553 = vld [vmem:[#allocation11 + $0x8c0] sm:$0xff]
    %v1554 = vld [vmem:[#allocation11 + $0x8c8] sm:$0xff]
    %v1555 = vld [vmem:[#allocation11 + $0x8d0] sm:$0xff]
    %v1556 = vld [vmem:[#allocation11 + $0x8d8] sm:$0xff]
    %v1557 = vld [vmem:[#allocation11 + $0x8e0] sm:$0xff]
    %v1558 = vld [vmem:[#allocation11 + $0x8e8] sm:$0xff]
    %v1559 = vld [vmem:[#allocation11 + $0x8f0] sm:$0xff]
    %v1560 = vld [vmem:[#allocation11 + $0x8f8] sm:$0xff]
    %v1561 = vld [vmem:[#allocation11 + $0x900] sm:$0xff]
    %v1562 = vld [vmem:[#allocation11 + $0x908] sm:$0xff]
    %v1563 = vld [vmem:[#allocation11 + $0x910] sm:$0xff]
    %v1564 = vld [vmem:[#allocation11 + $0x918] sm:$0xff]
    %v1565 = vld [vmem:[#allocation11 + $0x920] sm:$0xff]
    %v1566 = vld [vmem:[#allocation11 + $0x928] sm:$0xff]
    %v1567 = vld [vmem:[#allocation11 + $0x930] sm:$0xff]
    %v1568 = vld [vmem:[#allocation11 + $0x938] sm:$0xff]
    %v1569 = vld [vmem:[#allocation11 + $0x940] sm:$0xff]
    %v1570 = vld [vmem:[#allocation11 + $0x948] sm:$0xff]
    %v1571 = vld [vmem:[#allocation11 + $0x950] sm:$0xff]
    %v1572 = vld [vmem:[#allocation11 + $0x958] sm:$0xff]
    %v1573 = vld [vmem:[#allocation11 + $0x960] sm:$0xff]
    %v1574 = vld [vmem:[#allocation11 + $0x968] sm:$0xff]
    %v1575 = vld [vmem:[#allocation11 + $0x970] sm:$0xff]
    %v1576 = vld [vmem:[#allocation11 + $0x978] sm:$0xff]
    %v1577 = vld [vmem:[#allocation11 + $0x980] sm:$0xff]
    %v1578 = vld [vmem:[#allocation11 + $0x988] sm:$0xff]
    %v1579 = vld [vmem:[#allocation11 + $0x990] sm:$0xff]
    %v1580 = vld [vmem:[#allocation11 + $0x998] sm:$0xff]
    %v1581 = vld [vmem:[#allocation11 + $0x9a0] sm:$0xff]
    %v1582 = vld [vmem:[#allocation11 + $0x9a8] sm:$0xff]
    %v1583 = vld [vmem:[#allocation11 + $0x9b0] sm:$0xff]
    %v1584 = vld [vmem:[#allocation11 + $0x9b8] sm:$0xff]
    %v1585 = vld [vmem:[#allocation11 + $0x9c0] sm:$0xff]
    %v1586 = vld [vmem:[#allocation11 + $0x9c8] sm:$0xff]
    %v1587 = vld [vmem:[#allocation11 + $0x9d0] sm:$0xff]
    %v1588 = vld [vmem:[#allocation11 + $0x9d8] sm:$0xff]
    %v1589 = vld [vmem:[#allocation11 + $0x9e0] sm:$0xff]
    %v1590 = vld [vmem:[#allocation11 + $0x9e8] sm:$0xff]
    %v1591 = vld [vmem:[#allocation11 + $0x9f0] sm:$0xff]
    %v1592 = vld [vmem:[#allocation11 + $0x9f8] sm:$0xff]
    %v1593 = vld [vmem:[#allocation11 + $0xa00] sm:$0xff]
    %v1594 = vld [vmem:[#allocation11 + $0xa08] sm:$0xff]
    %v1595 = vld [vmem:[#allocation11 + $0xa10] sm:$0xff]
    %v1596 = vld [vmem:[#allocation11 + $0xa18] sm:$0xff]
    %v1597 = vld [vmem:[#allocation11 + $0xa20] sm:$0xff]
    %v1598 = vld [vmem:[#allocation11 + $0xa28] sm:$0xff]
    %v1599 = vld [vmem:[#allocation11 + $0xa30] sm:$0xff]
    %v1600 = vld [vmem:[#allocation11 + $0xa38] sm:$0xff]
    %v1601 = vld [vmem:[#allocation11 + $0xa40] sm:$0xff]
    %v1602 = vld [vmem:[#allocation11 + $0xa48] sm:$0xff]
    %v1603 = vld [vmem:[#allocation11 + $0xa50] sm:$0xff]
    %v1604 = vld [vmem:[#allocation11 + $0xa58] sm:$0xff]
    %v1605 = vld [vmem:[#allocation11 + $0xa60] sm:$0xff]
    %v1606 = vld [vmem:[#allocation11 + $0xa68] sm:$0xff]
    %v1607 = vld [vmem:[#allocation11 + $0xa70] sm:$0xff]
    %v1608 = vld [vmem:[#allocation11 + $0xa78] sm:$0xff]
    %v1609 = vld [vmem:[#allocation11 + $0xa80] sm:$0xff]
    %v1610 = vld [vmem:[#allocation11 + $0xa88] sm:$0xff]
    %v1611 = vld [vmem:[#allocation11 + $0xa90] sm:$0xff]
    %v1612 = vld [vmem:[#allocation11 + $0xa98] sm:$0xff]
    %v1613 = vld [vmem:[#allocation11 + $0xaa0] sm:$0xff]
    %v1614 = vld [vmem:[#allocation11 + $0xaa8] sm:$0xff]
    %v1615 = vld [vmem:[#allocation11 + $0xab0] sm:$0xff]
    %v1616 = vld [vmem:[#allocation11 + $0xab8] sm:$0xff]
    %v1617 = vld [vmem:[#allocation11 + $0xac0] sm:$0xff]
    %v1618 = vld [vmem:[#allocation11 + $0xac8] sm:$0xff]
    %v1619 = vld [vmem:[#allocation11 + $0xad0] sm:$0xff]
    %v1620 = vld [vmem:[#allocation11 + $0xad8] sm:$0xff]
    %v1621 = vld [vmem:[#allocation11 + $0xae0] sm:$0xff]
    %v1622 = vld [vmem:[#allocation11 + $0xae8] sm:$0xff]
    %v1623 = vld [vmem:[#allocation11 + $0xaf0] sm:$0xff]
    %v1624 = vld [vmem:[#allocation11 + $0xaf8] sm:$0xff]
    %v1625 = vld [vmem:[#allocation11 + $0xb00] sm:$0xff]
    %v1626 = vld [vmem:[#allocation11 + $0xb08] sm:$0xff]
    %v1627 = vld [vmem:[#allocation11 + $0xb10] sm:$0xff]
    %v1628 = vld [vmem:[#allocation11 + $0xb18] sm:$0xff]
    %v1629 = vld [vmem:[#allocation11 + $0xb20] sm:$0xff]
    %v1630 = vld [vmem:[#allocation11 + $0xb28] sm:$0xff]
    %v1631 = vld [vmem:[#allocation11 + $0xb30] sm:$0xff]
    %v1632 = vld [vmem:[#allocation11 + $0xb38] sm:$0xff]
    %v1633 = vld [vmem:[#allocation11 + $0xb40] sm:$0xff]
    %v1634 = vld [vmem:[#allocation11 + $0xb48] sm:$0xff]
    %v1635 = vld [vmem:[#allocation11 + $0xb50] sm:$0xff]
    %v1636 = vld [vmem:[#allocation11 + $0xb58] sm:$0xff]
    %v1637 = vld [vmem:[#allocation11 + $0xb60] sm:$0xff]
    %v1638 = vld [vmem:[#allocation11 + $0xb68] sm:$0xff]
    %v1639 = vld [vmem:[#allocation11 + $0xb70] sm:$0xff]
    %v1640 = vld [vmem:[#allocation11 + $0xb78] sm:$0xff]
    %v1641 = vld [vmem:[#allocation11 + $0xb80] sm:$0xff]
    %v1642 = vld [vmem:[#allocation11 + $0xb88] sm:$0xff]
    %v1643 = vld [vmem:[#allocation11 + $0xb90] sm:$0xff]
    %v1644 = vld [vmem:[#allocation11 + $0xb98] sm:$0xff]
    %v1645 = vld [vmem:[#allocation11 + $0xba0] sm:$0xff]
    %v1646 = vld [vmem:[#allocation11 + $0xba8] sm:$0xff]
    %v1647 = vld [vmem:[#allocation11 + $0xbb0] sm:$0xff]
    %v1648 = vld [vmem:[#allocation11 + $0xbb8] sm:$0xff]
    %v1649 = vld [vmem:[#allocation11 + $0xbc0] sm:$0xff]
    %v1650 = vld [vmem:[#allocation11 + $0xbc8] sm:$0xff]
    %v1651 = vld [vmem:[#allocation11 + $0xbd0] sm:$0xff]
    %v1652 = vld [vmem:[#allocation11 + $0xbd8] sm:$0xff]
    %v1653 = vld [vmem:[#allocation11 + $0xbe0] sm:$0xff]
    %v1654 = vld [vmem:[#allocation11 + $0xbe8] sm:$0xff]
    %v1655 = vld [vmem:[#allocation11 + $0xbf0] sm:$0xff]
    %v1656 = vld [vmem:[#allocation11 + $0xbf8] sm:$0xff]
    %v2041 = vunpack.c.l.b16 %v1273
    %v2042 = vunpack.c.h.b16 %v1273
    %v2043 = vunpack.c.l.b16 %v1274
    %v2044 = vunpack.c.h.b16 %v1274
    %v2045 = vunpack.c.l.b16 %v1275
    %v2046 = vunpack.c.h.b16 %v1275
    %v2047 = vunpack.c.l.b16 %v1276
    %v2048 = vunpack.c.h.b16 %v1276
    %v2049 = vunpack.c.l.b16 %v1277
    %v2050 = vunpack.c.h.b16 %v1277
    %v2051 = vunpack.c.l.b16 %v1278
    %v2052 = vunpack.c.h.b16 %v1278
    %v2053 = vunpack.c.l.b16 %v1279
    %v2054 = vunpack.c.h.b16 %v1279
    %v2055 = vunpack.c.l.b16 %v1280
    %v2056 = vunpack.c.h.b16 %v1280
    %v2057 = vunpack.c.l.b16 %v1281
    %v2058 = vunpack.c.h.b16 %v1281
    %v2059 = vunpack.c.l.b16 %v1282
    %v2060 = vunpack.c.h.b16 %v1282
    %v2061 = vunpack.c.l.b16 %v1283
    %v2062 = vunpack.c.h.b16 %v1283
    %v2063 = vunpack.c.l.b16 %v1284
    %v2064 = vunpack.c.h.b16 %v1284
    %v2065 = vunpack.c.l.b16 %v1285
    %v2066 = vunpack.c.h.b16 %v1285
    %v2067 = vunpack.c.l.b16 %v1286
    %v2068 = vunpack.c.h.b16 %v1286
    %v2069 = vunpack.c.l.b16 %v1287
    %v2070 = vunpack.c.h.b16 %v1287
    %v2071 = vunpack.c.l.b16 %v1288
    %v2072 = vunpack.c.h.b16 %v1288
    %v2073 = vunpack.c.l.b16 %v1289
    %v2074 = vunpack.c.h.b16 %v1289
    %v2075 = vunpack.c.l.b16 %v1290
    %v2076 = vunpack.c.h.b16 %v1290
    %v2077 = vunpack.c.l.b16 %v1291
    %v2078 = vunpack.c.h.b16 %v1291
    %v2079 = vunpack.c.l.b16 %v1292
    %v2080 = vunpack.c.h.b16 %v1292
    %v2081 = vunpack.c.l.b16 %v1293
    %v2082 = vunpack.c.h.b16 %v1293
    %v2083 = vunpack.c.l.b16 %v1294
    %v2084 = vunpack.c.h.b16 %v1294
    %v2085 = vunpack.c.l.b16 %v1295
    %v2086 = vunpack.c.h.b16 %v1295
    %v2087 = vunpack.c.l.b16 %v1296
    %v2088 = vunpack.c.h.b16 %v1296
    %v2089 = vunpack.c.l.b16 %v1297
    %v2090 = vunpack.c.h.b16 %v1297
    %v2091 = vunpack.c.l.b16 %v1298
    %v2092 = vunpack.c.h.b16 %v1298
    %v2093 = vunpack.c.l.b16 %v1299
    %v2094 = vunpack.c.h.b16 %v1299
    %v2095 = vunpack.c.l.b16 %v1300
    %v2096 = vunpack.c.h.b16 %v1300
    %v2097 = vunpack.c.l.b16 %v1301
    %v2098 = vunpack.c.h.b16 %v1301
    %v2099 = vunpack.c.l.b16 %v1302
    %v2100 = vunpack.c.h.b16 %v1302
    %v2101 = vunpack.c.l.b16 %v1303
    %v2102 = vunpack.c.h.b16 %v1303
    %v2103 = vunpack.c.l.b16 %v1304
    %v2104 = vunpack.c.h.b16 %v1304
    %v2105 = vunpack.c.l.b16 %v1305
    %v2106 = vunpack.c.h.b16 %v1305
    %v2107 = vunpack.c.l.b16 %v1306
    %v2108 = vunpack.c.h.b16 %v1306
    %v2109 = vunpack.c.l.b16 %v1307
    %v2110 = vunpack.c.h.b16 %v1307
    %v2111 = vunpack.c.l.b16 %v1308
    %v2112 = vunpack.c.h.b16 %v1308
    %v2113 = vunpack.c.l.b16 %v1309
    %v2114 = vunpack.c.h.b16 %v1309
    %v2115 = vunpack.c.l.b16 %v1310
    %v2116 = vunpack.c.h.b16 %v1310
    %v2117 = vunpack.c.l.b16 %v1311
    %v2118 = vunpack.c.h.b16 %v1311
    %v2119 = vunpack.c.l.b16 %v1312
    %v2120 = vunpack.c.h.b16 %v1312
    %v2121 = vunpack.c.l.b16 %v1313
    %v2122 = vunpack.c.h.b16 %v1313
    %v2123 = vunpack.c.l.b16 %v1314
    %v2124 = vunpack.c.h.b16 %v1314
    %v2125 = vunpack.c.l.b16 %v1315
    %v2126 = vunpack.c.h.b16 %v1315
    %v2127 = vunpack.c.l.b16 %v1316
    %v2128 = vunpack.c.h.b16 %v1316
    %v2129 = vunpack.c.l.b16 %v1317
    %v2130 = vunpack.c.h.b16 %v1317
    %v2131 = vunpack.c.l.b16 %v1318
    %v2132 = vunpack.c.h.b16 %v1318
    %v2133 = vunpack.c.l.b16 %v1319
    %v2134 = vunpack.c.h.b16 %v1319
    %v2135 = vunpack.c.l.b16 %v1320
    %v2136 = vunpack.c.h.b16 %v1320
    %v2137 = vunpack.c.l.b16 %v1321
    %v2138 = vunpack.c.h.b16 %v1321
    %v2139 = vunpack.c.l.b16 %v1322
    %v2140 = vunpack.c.h.b16 %v1322
    %v2141 = vunpack.c.l.b16 %v1323
    %v2142 = vunpack.c.h.b16 %v1323
    %v2143 = vunpack.c.l.b16 %v1324
    %v2144 = vunpack.c.h.b16 %v1324
    %v2145 = vunpack.c.l.b16 %v1325
    %v2146 = vunpack.c.h.b16 %v1325
    %v2147 = vunpack.c.l.b16 %v1326
    %v2148 = vunpack.c.h.b16 %v1326
    %v2149 = vunpack.c.l.b16 %v1327
    %v2150 = vunpack.c.h.b16 %v1327
    %v2151 = vunpack.c.l.b16 %v1328
    %v2152 = vunpack.c.h.b16 %v1328
    %v2153 = vunpack.c.l.b16 %v1329
    %v2154 = vunpack.c.h.b16 %v1329
    %v2155 = vunpack.c.l.b16 %v1330
    %v2156 = vunpack.c.h.b16 %v1330
    %v2157 = vunpack.c.l.b16 %v1331
    %v2158 = vunpack.c.h.b16 %v1331
    %v2159 = vunpack.c.l.b16 %v1332
    %v2160 = vunpack.c.h.b16 %v1332
    %v2161 = vunpack.c.l.b16 %v1333
    %v2162 = vunpack.c.h.b16 %v1333
    %v2163 = vunpack.c.l.b16 %v1334
    %v2164 = vunpack.c.h.b16 %v1334
    %v2165 = vunpack.c.l.b16 %v1335
    %v2166 = vunpack.c.h.b16 %v1335
    %v2167 = vunpack.c.l.b16 %v1336
    %v2168 = vunpack.c.h.b16 %v1336
    %v2169 = vunpack.c.l.b16 %v1337
    %v2170 = vunpack.c.h.b16 %v1337
    %v2171 = vunpack.c.l.b16 %v1338
    %v2172 = vunpack.c.h.b16 %v1338
    %v2173 = vunpack.c.l.b16 %v1339
    %v2174 = vunpack.c.h.b16 %v1339
    %v2175 = vunpack.c.l.b16 %v1340
    %v2176 = vunpack.c.h.b16 %v1340
    %v2177 = vunpack.c.l.b16 %v1341
    %v2178 = vunpack.c.h.b16 %v1341
    %v2179 = vunpack.c.l.b16 %v1342
    %v2180 = vunpack.c.h.b16 %v1342
    %v2181 = vunpack.c.l.b16 %v1343
    %v2182 = vunpack.c.h.b16 %v1343
    %v2183 = vunpack.c.l.b16 %v1344
    %v2184 = vunpack.c.h.b16 %v1344
    %v2185 = vunpack.c.l.b16 %v1345
    %v2186 = vunpack.c.h.b16 %v1345
    %v2187 = vunpack.c.l.b16 %v1346
    %v2188 = vunpack.c.h.b16 %v1346
    %v2189 = vunpack.c.l.b16 %v1347
    %v2190 = vunpack.c.h.b16 %v1347
    %v2191 = vunpack.c.l.b16 %v1348
    %v2192 = vunpack.c.h.b16 %v1348
    %v2193 = vunpack.c.l.b16 %v1349
    %v2194 = vunpack.c.h.b16 %v1349
    %v2195 = vunpack.c.l.b16 %v1350
    %v2196 = vunpack.c.h.b16 %v1350
    %v2197 = vunpack.c.l.b16 %v1351
    %v2198 = vunpack.c.h.b16 %v1351
    %v2199 = vunpack.c.l.b16 %v1352
    %v2200 = vunpack.c.h.b16 %v1352
    %v2201 = vunpack.c.l.b16 %v1353
    %v2202 = vunpack.c.h.b16 %v1353
    %v2203 = vunpack.c.l.b16 %v1354
    %v2204 = vunpack.c.h.b16 %v1354
    %v2205 = vunpack.c.l.b16 %v1355
    %v2206 = vunpack.c.h.b16 %v1355
    %v2207 = vunpack.c.l.b16 %v1356
    %v2208 = vunpack.c.h.b16 %v1356
    %v2209 = vunpack.c.l.b16 %v1357
    %v2210 = vunpack.c.h.b16 %v1357
    %v2211 = vunpack.c.l.b16 %v1358
    %v2212 = vunpack.c.h.b16 %v1358
    %v2213 = vunpack.c.l.b16 %v1359
    %v2214 = vunpack.c.h.b16 %v1359
    %v2215 = vunpack.c.l.b16 %v1360
    %v2216 = vunpack.c.h.b16 %v1360
    %v2217 = vunpack.c.l.b16 %v1361
    %v2218 = vunpack.c.h.b16 %v1361
    %v2219 = vunpack.c.l.b16 %v1362
    %v2220 = vunpack.c.h.b16 %v1362
    %v2221 = vunpack.c.l.b16 %v1363
    %v2222 = vunpack.c.h.b16 %v1363
    %v2223 = vunpack.c.l.b16 %v1364
    %v2224 = vunpack.c.h.b16 %v1364
    %v2225 = vunpack.c.l.b16 %v1365
    %v2226 = vunpack.c.h.b16 %v1365
    %v2227 = vunpack.c.l.b16 %v1366
    %v2228 = vunpack.c.h.b16 %v1366
    %v2229 = vunpack.c.l.b16 %v1367
    %v2230 = vunpack.c.h.b16 %v1367
    %v2231 = vunpack.c.l.b16 %v1368
    %v2232 = vunpack.c.h.b16 %v1368
    %v2233 = vunpack.c.l.b16 %v1369
    %v2234 = vunpack.c.h.b16 %v1369
    %v2235 = vunpack.c.l.b16 %v1370
    %v2236 = vunpack.c.h.b16 %v1370
    %v2237 = vunpack.c.l.b16 %v1371
    %v2238 = vunpack.c.h.b16 %v1371
    %v2239 = vunpack.c.l.b16 %v1372
    %v2240 = vunpack.c.h.b16 %v1372
    %v2241 = vunpack.c.l.b16 %v1373
    %v2242 = vunpack.c.h.b16 %v1373
    %v2243 = vunpack.c.l.b16 %v1374
    %v2244 = vunpack.c.h.b16 %v1374
    %v2245 = vunpack.c.l.b16 %v1375
    %v2246 = vunpack.c.h.b16 %v1375
    %v2247 = vunpack.c.l.b16 %v1376
    %v2248 = vunpack.c.h.b16 %v1376
    %v2249 = vunpack.c.l.b16 %v1377
    %v2250 = vunpack.c.h.b16 %v1377
    %v2251 = vunpack.c.l.b16 %v1378
    %v2252 = vunpack.c.h.b16 %v1378
    %v2253 = vunpack.c.l.b16 %v1379
    %v2254 = vunpack.c.h.b16 %v1379
    %v2255 = vunpack.c.l.b16 %v1380
    %v2256 = vunpack.c.h.b16 %v1380
    %v2257 = vunpack.c.l.b16 %v1381
    %v2258 = vunpack.c.h.b16 %v1381
    %v2259 = vunpack.c.l.b16 %v1382
    %v2260 = vunpack.c.h.b16 %v1382
    %v2261 = vunpack.c.l.b16 %v1383
    %v2262 = vunpack.c.h.b16 %v1383
    %v2263 = vunpack.c.l.b16 %v1384
    %v2264 = vunpack.c.h.b16 %v1384
    %v2265 = vunpack.c.l.b16 %v1385
    %v2266 = vunpack.c.h.b16 %v1385
    %v2267 = vunpack.c.l.b16 %v1386
    %v2268 = vunpack.c.h.b16 %v1386
    %v2269 = vunpack.c.l.b16 %v1387
    %v2270 = vunpack.c.h.b16 %v1387
    %v2271 = vunpack.c.l.b16 %v1388
    %v2272 = vunpack.c.h.b16 %v1388
    %v2273 = vunpack.c.l.b16 %v1389
    %v2274 = vunpack.c.h.b16 %v1389
    %v2275 = vunpack.c.l.b16 %v1390
    %v2276 = vunpack.c.h.b16 %v1390
    %v2277 = vunpack.c.l.b16 %v1391
    %v2278 = vunpack.c.h.b16 %v1391
    %v2279 = vunpack.c.l.b16 %v1392
    %v2280 = vunpack.c.h.b16 %v1392
    %v2281 = vunpack.c.l.b16 %v1393
    %v2282 = vunpack.c.h.b16 %v1393
    %v2283 = vunpack.c.l.b16 %v1394
    %v2284 = vunpack.c.h.b16 %v1394
    %v2285 = vunpack.c.l.b16 %v1395
    %v2286 = vunpack.c.h.b16 %v1395
    %v2287 = vunpack.c.l.b16 %v1396
    %v2288 = vunpack.c.h.b16 %v1396
    %v2289 = vunpack.c.l.b16 %v1397
    %v2290 = vunpack.c.h.b16 %v1397
    %v2291 = vunpack.c.l.b16 %v1398
    %v2292 = vunpack.c.h.b16 %v1398
    %v2293 = vunpack.c.l.b16 %v1399
    %v2294 = vunpack.c.h.b16 %v1399
    %v2295 = vunpack.c.l.b16 %v1400
    %v2296 = vunpack.c.h.b16 %v1400
    %v2297 = vunpack.c.l.b16 %v1401
    %v2298 = vunpack.c.h.b16 %v1401
    %v2299 = vunpack.c.l.b16 %v1402
    %v2300 = vunpack.c.h.b16 %v1402
    %v2301 = vunpack.c.l.b16 %v1403
    %v2302 = vunpack.c.h.b16 %v1403
    %v2303 = vunpack.c.l.b16 %v1404
    %v2304 = vunpack.c.h.b16 %v1404
    %v2305 = vunpack.c.l.b16 %v1405
    %v2306 = vunpack.c.h.b16 %v1405
    %v2307 = vunpack.c.l.b16 %v1406
    %v2308 = vunpack.c.h.b16 %v1406
    %v2309 = vunpack.c.l.b16 %v1407
    %v2310 = vunpack.c.h.b16 %v1407
    %v2311 = vunpack.c.l.b16 %v1408
    %v2312 = vunpack.c.h.b16 %v1408
    %v2313 = vunpack.c.l.b16 %v1409
    %v2314 = vunpack.c.h.b16 %v1409
    %v2315 = vunpack.c.l.b16 %v1410
    %v2316 = vunpack.c.h.b16 %v1410
    %v2317 = vunpack.c.l.b16 %v1411
    %v2318 = vunpack.c.h.b16 %v1411
    %v2319 = vunpack.c.l.b16 %v1412
    %v2320 = vunpack.c.h.b16 %v1412
    %v2321 = vunpack.c.l.b16 %v1413
    %v2322 = vunpack.c.h.b16 %v1413
    %v2323 = vunpack.c.l.b16 %v1414
    %v2324 = vunpack.c.h.b16 %v1414
    %v2325 = vunpack.c.l.b16 %v1415
    %v2326 = vunpack.c.h.b16 %v1415
    %v2327 = vunpack.c.l.b16 %v1416
    %v2328 = vunpack.c.h.b16 %v1416
    %v2329 = vunpack.c.l.b16 %v1417
    %v2330 = vunpack.c.h.b16 %v1417
    %v2331 = vunpack.c.l.b16 %v1418
    %v2332 = vunpack.c.h.b16 %v1418
    %v2333 = vunpack.c.l.b16 %v1419
    %v2334 = vunpack.c.h.b16 %v1419
    %v2335 = vunpack.c.l.b16 %v1420
    %v2336 = vunpack.c.h.b16 %v1420
    %v2337 = vunpack.c.l.b16 %v1421
    %v2338 = vunpack.c.h.b16 %v1421
    %v2339 = vunpack.c.l.b16 %v1422
    %v2340 = vunpack.c.h.b16 %v1422
    %v2341 = vunpack.c.l.b16 %v1423
    %v2342 = vunpack.c.h.b16 %v1423
    %v2343 = vunpack.c.l.b16 %v1424
    %v2344 = vunpack.c.h.b16 %v1424
    %v2345 = vunpack.c.l.b16 %v1425
    %v2346 = vunpack.c.h.b16 %v1425
    %v2347 = vunpack.c.l.b16 %v1426
    %v2348 = vunpack.c.h.b16 %v1426
    %v2349 = vunpack.c.l.b16 %v1427
    %v2350 = vunpack.c.h.b16 %v1427
    %v2351 = vunpack.c.l.b16 %v1428
    %v2352 = vunpack.c.h.b16 %v1428
    %v2353 = vunpack.c.l.b16 %v1429
    %v2354 = vunpack.c.h.b16 %v1429
    %v2355 = vunpack.c.l.b16 %v1430
    %v2356 = vunpack.c.h.b16 %v1430
    %v2357 = vunpack.c.l.b16 %v1431
    %v2358 = vunpack.c.h.b16 %v1431
    %v2359 = vunpack.c.l.b16 %v1432
    %v2360 = vunpack.c.h.b16 %v1432
    %v2361 = vunpack.c.l.b16 %v1433
    %v2362 = vunpack.c.h.b16 %v1433
    %v2363 = vunpack.c.l.b16 %v1434
    %v2364 = vunpack.c.h.b16 %v1434
    %v2365 = vunpack.c.l.b16 %v1435
    %v2366 = vunpack.c.h.b16 %v1435
    %v2367 = vunpack.c.l.b16 %v1436
    %v2368 = vunpack.c.h.b16 %v1436
    %v2369 = vunpack.c.l.b16 %v1437
    %v2370 = vunpack.c.h.b16 %v1437
    %v2371 = vunpack.c.l.b16 %v1438
    %v2372 = vunpack.c.h.b16 %v1438
    %v2373 = vunpack.c.l.b16 %v1439
    %v2374 = vunpack.c.h.b16 %v1439
    %v2375 = vunpack.c.l.b16 %v1440
    %v2376 = vunpack.c.h.b16 %v1440
    %v2377 = vunpack.c.l.b16 %v1441
    %v2378 = vunpack.c.h.b16 %v1441
    %v2379 = vunpack.c.l.b16 %v1442
    %v2380 = vunpack.c.h.b16 %v1442
    %v2381 = vunpack.c.l.b16 %v1443
    %v2382 = vunpack.c.h.b16 %v1443
    %v2383 = vunpack.c.l.b16 %v1444
    %v2384 = vunpack.c.h.b16 %v1444
    %v2385 = vunpack.c.l.b16 %v1445
    %v2386 = vunpack.c.h.b16 %v1445
    %v2387 = vunpack.c.l.b16 %v1446
    %v2388 = vunpack.c.h.b16 %v1446
    %v2389 = vunpack.c.l.b16 %v1447
    %v2390 = vunpack.c.h.b16 %v1447
    %v2391 = vunpack.c.l.b16 %v1448
    %v2392 = vunpack.c.h.b16 %v1448
    %v2393 = vunpack.c.l.b16 %v1449
    %v2394 = vunpack.c.h.b16 %v1449
    %v2395 = vunpack.c.l.b16 %v1450
    %v2396 = vunpack.c.h.b16 %v1450
    %v2397 = vunpack.c.l.b16 %v1451
    %v2398 = vunpack.c.h.b16 %v1451
    %v2399 = vunpack.c.l.b16 %v1452
    %v2400 = vunpack.c.h.b16 %v1452
    %v2401 = vunpack.c.l.b16 %v1453
    %v2402 = vunpack.c.h.b16 %v1453
    %v2403 = vunpack.c.l.b16 %v1454
    %v2404 = vunpack.c.h.b16 %v1454
    %v2405 = vunpack.c.l.b16 %v1455
    %v2406 = vunpack.c.h.b16 %v1455
    %v2407 = vunpack.c.l.b16 %v1456
    %v2408 = vunpack.c.h.b16 %v1456
    %v2409 = vunpack.c.l.b16 %v1457
    %v2410 = vunpack.c.h.b16 %v1457
    %v2411 = vunpack.c.l.b16 %v1458
    %v2412 = vunpack.c.h.b16 %v1458
    %v2413 = vunpack.c.l.b16 %v1459
    %v2414 = vunpack.c.h.b16 %v1459
    %v2415 = vunpack.c.l.b16 %v1460
    %v2416 = vunpack.c.h.b16 %v1460
    %v2417 = vunpack.c.l.b16 %v1461
    %v2418 = vunpack.c.h.b16 %v1461
    %v2419 = vunpack.c.l.b16 %v1462
    %v2420 = vunpack.c.h.b16 %v1462
    %v2421 = vunpack.c.l.b16 %v1463
    %v2422 = vunpack.c.h.b16 %v1463
    %v2423 = vunpack.c.l.b16 %v1464
    %v2424 = vunpack.c.h.b16 %v1464
    %v2425 = vunpack.c.l.b16 %v1465
    %v2426 = vunpack.c.h.b16 %v1465
    %v2427 = vunpack.c.l.b16 %v1466
    %v2428 = vunpack.c.h.b16 %v1466
    %v2429 = vunpack.c.l.b16 %v1467
    %v2430 = vunpack.c.h.b16 %v1467
    %v2431 = vunpack.c.l.b16 %v1468
    %v2432 = vunpack.c.h.b16 %v1468
    %v2433 = vunpack.c.l.b16 %v1469
    %v2434 = vunpack.c.h.b16 %v1469
    %v2435 = vunpack.c.l.b16 %v1470
    %v2436 = vunpack.c.h.b16 %v1470
    %v2437 = vunpack.c.l.b16 %v1471
    %v2438 = vunpack.c.h.b16 %v1471
    %v2439 = vunpack.c.l.b16 %v1472
    %v2440 = vunpack.c.h.b16 %v1472
    %v2441 = vunpack.c.l.b16 %v1473
    %v2442 = vunpack.c.h.b16 %v1473
    %v2443 = vunpack.c.l.b16 %v1474
    %v2444 = vunpack.c.h.b16 %v1474
    %v2445 = vunpack.c.l.b16 %v1475
    %v2446 = vunpack.c.h.b16 %v1475
    %v2447 = vunpack.c.l.b16 %v1476
    %v2448 = vunpack.c.h.b16 %v1476
    %v2449 = vunpack.c.l.b16 %v1477
    %v2450 = vunpack.c.h.b16 %v1477
    %v2451 = vunpack.c.l.b16 %v1478
    %v2452 = vunpack.c.h.b16 %v1478
    %v2453 = vunpack.c.l.b16 %v1479
    %v2454 = vunpack.c.h.b16 %v1479
    %v2455 = vunpack.c.l.b16 %v1480
    %v2456 = vunpack.c.h.b16 %v1480
    %v2457 = vunpack.c.l.b16 %v1481
    %v2458 = vunpack.c.h.b16 %v1481
    %v2459 = vunpack.c.l.b16 %v1482
    %v2460 = vunpack.c.h.b16 %v1482
    %v2461 = vunpack.c.l.b16 %v1483
    %v2462 = vunpack.c.h.b16 %v1483
    %v2463 = vunpack.c.l.b16 %v1484
    %v2464 = vunpack.c.h.b16 %v1484
    %v2465 = vunpack.c.l.b16 %v1485
    %v2466 = vunpack.c.h.b16 %v1485
    %v2467 = vunpack.c.l.b16 %v1486
    %v2468 = vunpack.c.h.b16 %v1486
    %v2469 = vunpack.c.l.b16 %v1487
    %v2470 = vunpack.c.h.b16 %v1487
    %v2471 = vunpack.c.l.b16 %v1488
    %v2472 = vunpack.c.h.b16 %v1488
    %v2473 = vunpack.c.l.b16 %v1489
    %v2474 = vunpack.c.h.b16 %v1489
    %v2475 = vunpack.c.l.b16 %v1490
    %v2476 = vunpack.c.h.b16 %v1490
    %v2477 = vunpack.c.l.b16 %v1491
    %v2478 = vunpack.c.h.b16 %v1491
    %v2479 = vunpack.c.l.b16 %v1492
    %v2480 = vunpack.c.h.b16 %v1492
    %v2481 = vunpack.c.l.b16 %v1493
    %v2482 = vunpack.c.h.b16 %v1493
    %v2483 = vunpack.c.l.b16 %v1494
    %v2484 = vunpack.c.h.b16 %v1494
    %v2485 = vunpack.c.l.b16 %v1495
    %v2486 = vunpack.c.h.b16 %v1495
    %v2487 = vunpack.c.l.b16 %v1496
    %v2488 = vunpack.c.h.b16 %v1496
    %v2489 = vunpack.c.l.b16 %v1497
    %v2490 = vunpack.c.h.b16 %v1497
    %v2491 = vunpack.c.l.b16 %v1498
    %v2492 = vunpack.c.h.b16 %v1498
    %v2493 = vunpack.c.l.b16 %v1499
    %v2494 = vunpack.c.h.b16 %v1499
    %v2495 = vunpack.c.l.b16 %v1500
    %v2496 = vunpack.c.h.b16 %v1500
    %v2497 = vunpack.c.l.b16 %v1501
    %v2498 = vunpack.c.h.b16 %v1501
    %v2499 = vunpack.c.l.b16 %v1502
    %v2500 = vunpack.c.h.b16 %v1502
    %v2501 = vunpack.c.l.b16 %v1503
    %v2502 = vunpack.c.h.b16 %v1503
    %v2503 = vunpack.c.l.b16 %v1504
    %v2504 = vunpack.c.h.b16 %v1504
    %v2505 = vunpack.c.l.b16 %v1505
    %v2506 = vunpack.c.h.b16 %v1505
    %v2507 = vunpack.c.l.b16 %v1506
    %v2508 = vunpack.c.h.b16 %v1506
    %v2509 = vunpack.c.l.b16 %v1507
    %v2510 = vunpack.c.h.b16 %v1507
    %v2511 = vunpack.c.l.b16 %v1508
    %v2512 = vunpack.c.h.b16 %v1508
    %v2513 = vunpack.c.l.b16 %v1509
    %v2514 = vunpack.c.h.b16 %v1509
    %v2515 = vunpack.c.l.b16 %v1510
    %v2516 = vunpack.c.h.b16 %v1510
    %v2517 = vunpack.c.l.b16 %v1511
    %v2518 = vunpack.c.h.b16 %v1511
    %v2519 = vunpack.c.l.b16 %v1512
    %v2520 = vunpack.c.h.b16 %v1512
    %v2521 = vunpack.c.l.b16 %v1513
    %v2522 = vunpack.c.h.b16 %v1513
    %v2523 = vunpack.c.l.b16 %v1514
    %v2524 = vunpack.c.h.b16 %v1514
    %v2525 = vunpack.c.l.b16 %v1515
    %v2526 = vunpack.c.h.b16 %v1515
    %v2527 = vunpack.c.l.b16 %v1516
    %v2528 = vunpack.c.h.b16 %v1516
    %v2529 = vunpack.c.l.b16 %v1517
    %v2530 = vunpack.c.h.b16 %v1517
    %v2531 = vunpack.c.l.b16 %v1518
    %v2532 = vunpack.c.h.b16 %v1518
    %v2533 = vunpack.c.l.b16 %v1519
    %v2534 = vunpack.c.h.b16 %v1519
    %v2535 = vunpack.c.l.b16 %v1520
    %v2536 = vunpack.c.h.b16 %v1520
    %v2537 = vunpack.c.l.b16 %v1521
    %v2538 = vunpack.c.h.b16 %v1521
    %v2539 = vunpack.c.l.b16 %v1522
    %v2540 = vunpack.c.h.b16 %v1522
    %v2541 = vunpack.c.l.b16 %v1523
    %v2542 = vunpack.c.h.b16 %v1523
    %v2543 = vunpack.c.l.b16 %v1524
    %v2544 = vunpack.c.h.b16 %v1524
    %v2545 = vunpack.c.l.b16 %v1525
    %v2546 = vunpack.c.h.b16 %v1525
    %v2547 = vunpack.c.l.b16 %v1526
    %v2548 = vunpack.c.h.b16 %v1526
    %v2549 = vunpack.c.l.b16 %v1527
    %v2550 = vunpack.c.h.b16 %v1527
    %v2551 = vunpack.c.l.b16 %v1528
    %v2552 = vunpack.c.h.b16 %v1528
    %v2553 = vunpack.c.l.b16 %v1529
    %v2554 = vunpack.c.h.b16 %v1529
    %v2555 = vunpack.c.l.b16 %v1530
    %v2556 = vunpack.c.h.b16 %v1530
    %v2557 = vunpack.c.l.b16 %v1531
    %v2558 = vunpack.c.h.b16 %v1531
    %v2559 = vunpack.c.l.b16 %v1532
    %v2560 = vunpack.c.h.b16 %v1532
    %v2561 = vunpack.c.l.b16 %v1533
    %v2562 = vunpack.c.h.b16 %v1533
    %v2563 = vunpack.c.l.b16 %v1534
    %v2564 = vunpack.c.h.b16 %v1534
    %v2565 = vunpack.c.l.b16 %v1535
    %v2566 = vunpack.c.h.b16 %v1535
    %v2567 = vunpack.c.l.b16 %v1536
    %v2568 = vunpack.c.h.b16 %v1536
    %v2569 = vunpack.c.l.b16 %v1537
    %v2570 = vunpack.c.h.b16 %v1537
    %v2571 = vunpack.c.l.b16 %v1538
    %v2572 = vunpack.c.h.b16 %v1538
    %v2573 = vunpack.c.l.b16 %v1539
    %v2574 = vunpack.c.h.b16 %v1539
    %v2575 = vunpack.c.l.b16 %v1540
    %v2576 = vunpack.c.h.b16 %v1540
    %v2577 = vunpack.c.l.b16 %v1541
    %v2578 = vunpack.c.h.b16 %v1541
    %v2579 = vunpack.c.l.b16 %v1542
    %v2580 = vunpack.c.h.b16 %v1542
    %v2581 = vunpack.c.l.b16 %v1543
    %v2582 = vunpack.c.h.b16 %v1543
    %v2583 = vunpack.c.l.b16 %v1544
    %v2584 = vunpack.c.h.b16 %v1544
    %v2585 = vunpack.c.l.b16 %v1545
    %v2586 = vunpack.c.h.b16 %v1545
    %v2587 = vunpack.c.l.b16 %v1546
    %v2588 = vunpack.c.h.b16 %v1546
    %v2589 = vunpack.c.l.b16 %v1547
    %v2590 = vunpack.c.h.b16 %v1547
    %v2591 = vunpack.c.l.b16 %v1548
    %v2592 = vunpack.c.h.b16 %v1548
    %v2593 = vunpack.c.l.b16 %v1549
    %v2594 = vunpack.c.h.b16 %v1549
    %v2595 = vunpack.c.l.b16 %v1550
    %v2596 = vunpack.c.h.b16 %v1550
    %v2597 = vunpack.c.l.b16 %v1551
    %v2598 = vunpack.c.h.b16 %v1551
    %v2599 = vunpack.c.l.b16 %v1552
    %v2600 = vunpack.c.h.b16 %v1552
    %v2601 = vunpack.c.l.b16 %v1553
    %v2602 = vunpack.c.h.b16 %v1553
    %v2603 = vunpack.c.l.b16 %v1554
    %v2604 = vunpack.c.h.b16 %v1554
    %v2605 = vunpack.c.l.b16 %v1555
    %v2606 = vunpack.c.h.b16 %v1555
    %v2607 = vunpack.c.l.b16 %v1556
    %v2608 = vunpack.c.h.b16 %v1556
    %v2609 = vunpack.c.l.b16 %v1557
    %v2610 = vunpack.c.h.b16 %v1557
    %v2611 = vunpack.c.l.b16 %v1558
    %v2612 = vunpack.c.h.b16 %v1558
    %v2613 = vunpack.c.l.b16 %v1559
    %v2614 = vunpack.c.h.b16 %v1559
    %v2615 = vunpack.c.l.b16 %v1560
    %v2616 = vunpack.c.h.b16 %v1560
    %v2617 = vunpack.c.l.b16 %v1561
    %v2618 = vunpack.c.h.b16 %v1561
    %v2619 = vunpack.c.l.b16 %v1562
    %v2620 = vunpack.c.h.b16 %v1562
    %v2621 = vunpack.c.l.b16 %v1563
    %v2622 = vunpack.c.h.b16 %v1563
    %v2623 = vunpack.c.l.b16 %v1564
    %v2624 = vunpack.c.h.b16 %v1564
    %v2625 = vunpack.c.l.b16 %v1565
    %v2626 = vunpack.c.h.b16 %v1565
    %v2627 = vunpack.c.l.b16 %v1566
    %v2628 = vunpack.c.h.b16 %v1566
    %v2629 = vunpack.c.l.b16 %v1567
    %v2630 = vunpack.c.h.b16 %v1567
    %v2631 = vunpack.c.l.b16 %v1568
    %v2632 = vunpack.c.h.b16 %v1568
    %v2633 = vunpack.c.l.b16 %v1569
    %v2634 = vunpack.c.h.b16 %v1569
    %v2635 = vunpack.c.l.b16 %v1570
    %v2636 = vunpack.c.h.b16 %v1570
    %v2637 = vunpack.c.l.b16 %v1571
    %v2638 = vunpack.c.h.b16 %v1571
    %v2639 = vunpack.c.l.b16 %v1572
    %v2640 = vunpack.c.h.b16 %v1572
    %v2641 = vunpack.c.l.b16 %v1573
    %v2642 = vunpack.c.h.b16 %v1573
    %v2643 = vunpack.c.l.b16 %v1574
    %v2644 = vunpack.c.h.b16 %v1574
    %v2645 = vunpack.c.l.b16 %v1575
    %v2646 = vunpack.c.h.b16 %v1575
    %v2647 = vunpack.c.l.b16 %v1576
    %v2648 = vunpack.c.h.b16 %v1576
    %v2649 = vunpack.c.l.b16 %v1577
    %v2650 = vunpack.c.h.b16 %v1577
    %v2651 = vunpack.c.l.b16 %v1578
    %v2652 = vunpack.c.h.b16 %v1578
    %v2653 = vunpack.c.l.b16 %v1579
    %v2654 = vunpack.c.h.b16 %v1579
    %v2655 = vunpack.c.l.b16 %v1580
    %v2656 = vunpack.c.h.b16 %v1580
    %v2657 = vunpack.c.l.b16 %v1581
    %v2658 = vunpack.c.h.b16 %v1581
    %v2659 = vunpack.c.l.b16 %v1582
    %v2660 = vunpack.c.h.b16 %v1582
    %v2661 = vunpack.c.l.b16 %v1583
    %v2662 = vunpack.c.h.b16 %v1583
    %v2663 = vunpack.c.l.b16 %v1584
    %v2664 = vunpack.c.h.b16 %v1584
    %v2665 = vunpack.c.l.b16 %v1585
    %v2666 = vunpack.c.h.b16 %v1585
    %v2667 = vunpack.c.l.b16 %v1586
    %v2668 = vunpack.c.h.b16 %v1586
    %v2669 = vunpack.c.l.b16 %v1587
    %v2670 = vunpack.c.h.b16 %v1587
    %v2671 = vunpack.c.l.b16 %v1588
    %v2672 = vunpack.c.h.b16 %v1588
    %v2673 = vunpack.c.l.b16 %v1589
    %v2674 = vunpack.c.h.b16 %v1589
    %v2675 = vunpack.c.l.b16 %v1590
    %v2676 = vunpack.c.h.b16 %v1590
    %v2677 = vunpack.c.l.b16 %v1591
    %v2678 = vunpack.c.h.b16 %v1591
    %v2679 = vunpack.c.l.b16 %v1592
    %v2680 = vunpack.c.h.b16 %v1592
    %v2681 = vunpack.c.l.b16 %v1593
    %v2682 = vunpack.c.h.b16 %v1593
    %v2683 = vunpack.c.l.b16 %v1594
    %v2684 = vunpack.c.h.b16 %v1594
    %v2685 = vunpack.c.l.b16 %v1595
    %v2686 = vunpack.c.h.b16 %v1595
    %v2687 = vunpack.c.l.b16 %v1596
    %v2688 = vunpack.c.h.b16 %v1596
    %v2689 = vunpack.c.l.b16 %v1597
    %v2690 = vunpack.c.h.b16 %v1597
    %v2691 = vunpack.c.l.b16 %v1598
    %v2692 = vunpack.c.h.b16 %v1598
    %v2693 = vunpack.c.l.b16 %v1599
    %v2694 = vunpack.c.h.b16 %v1599
    %v2695 = vunpack.c.l.b16 %v1600
    %v2696 = vunpack.c.h.b16 %v1600
    %v2697 = vunpack.c.l.b16 %v1601
    %v2698 = vunpack.c.h.b16 %v1601
    %v2699 = vunpack.c.l.b16 %v1602
    %v2700 = vunpack.c.h.b16 %v1602
    %v2701 = vunpack.c.l.b16 %v1603
    %v2702 = vunpack.c.h.b16 %v1603
    %v2703 = vunpack.c.l.b16 %v1604
    %v2704 = vunpack.c.h.b16 %v1604
    %v2705 = vunpack.c.l.b16 %v1605
    %v2706 = vunpack.c.h.b16 %v1605
    %v2707 = vunpack.c.l.b16 %v1606
    %v2708 = vunpack.c.h.b16 %v1606
    %v2709 = vunpack.c.l.b16 %v1607
    %v2710 = vunpack.c.h.b16 %v1607
    %v2711 = vunpack.c.l.b16 %v1608
    %v2712 = vunpack.c.h.b16 %v1608
    %v2713 = vunpack.c.l.b16 %v1609
    %v2714 = vunpack.c.h.b16 %v1609
    %v2715 = vunpack.c.l.b16 %v1610
    %v2716 = vunpack.c.h.b16 %v1610
    %v2717 = vunpack.c.l.b16 %v1611
    %v2718 = vunpack.c.h.b16 %v1611
    %v2719 = vunpack.c.l.b16 %v1612
    %v2720 = vunpack.c.h.b16 %v1612
    %v2721 = vunpack.c.l.b16 %v1613
    %v2722 = vunpack.c.h.b16 %v1613
    %v2723 = vunpack.c.l.b16 %v1614
    %v2724 = vunpack.c.h.b16 %v1614
    %v2725 = vunpack.c.l.b16 %v1615
    %v2726 = vunpack.c.h.b16 %v1615
    %v2727 = vunpack.c.l.b16 %v1616
    %v2728 = vunpack.c.h.b16 %v1616
    %v2729 = vunpack.c.l.b16 %v1617
    %v2730 = vunpack.c.h.b16 %v1617
    %v2731 = vunpack.c.l.b16 %v1618
    %v2732 = vunpack.c.h.b16 %v1618
    %v2733 = vunpack.c.l.b16 %v1619
    %v2734 = vunpack.c.h.b16 %v1619
    %v2735 = vunpack.c.l.b16 %v1620
    %v2736 = vunpack.c.h.b16 %v1620
    %v2737 = vunpack.c.l.b16 %v1621
    %v2738 = vunpack.c.h.b16 %v1621
    %v2739 = vunpack.c.l.b16 %v1622
    %v2740 = vunpack.c.h.b16 %v1622
    %v2741 = vunpack.c.l.b16 %v1623
    %v2742 = vunpack.c.h.b16 %v1623
    %v2743 = vunpack.c.l.b16 %v1624
    %v2744 = vunpack.c.h.b16 %v1624
    %v2745 = vunpack.c.l.b16 %v1625
    %v2746 = vunpack.c.h.b16 %v1625
    %v2747 = vunpack.c.l.b16 %v1626
    %v2748 = vunpack.c.h.b16 %v1626
    %v2749 = vunpack.c.l.b16 %v1627
    %v2750 = vunpack.c.h.b16 %v1627
    %v2751 = vunpack.c.l.b16 %v1628
    %v2752 = vunpack.c.h.b16 %v1628
    %v2753 = vunpack.c.l.b16 %v1629
    %v2754 = vunpack.c.h.b16 %v1629
    %v2755 = vunpack.c.l.b16 %v1630
    %v2756 = vunpack.c.h.b16 %v1630
    %v2757 = vunpack.c.l.b16 %v1631
    %v2758 = vunpack.c.h.b16 %v1631
    %v2759 = vunpack.c.l.b16 %v1632
    %v2760 = vunpack.c.h.b16 %v1632
    %v2761 = vunpack.c.l.b16 %v1633
    %v2762 = vunpack.c.h.b16 %v1633
    %v2763 = vunpack.c.l.b16 %v1634
    %v2764 = vunpack.c.h.b16 %v1634
    %v2765 = vunpack.c.l.b16 %v1635
    %v2766 = vunpack.c.h.b16 %v1635
    %v2767 = vunpack.c.l.b16 %v1636
    %v2768 = vunpack.c.h.b16 %v1636
    %v2769 = vunpack.c.l.b16 %v1637
    %v2770 = vunpack.c.h.b16 %v1637
    %v2771 = vunpack.c.l.b16 %v1638
    %v2772 = vunpack.c.h.b16 %v1638
    %v2773 = vunpack.c.l.b16 %v1639
    %v2774 = vunpack.c.h.b16 %v1639
    %v2775 = vunpack.c.l.b16 %v1640
    %v2776 = vunpack.c.h.b16 %v1640
    %v2777 = vunpack.c.l.b16 %v1641
    %v2778 = vunpack.c.h.b16 %v1641
    %v2779 = vunpack.c.l.b16 %v1642
    %v2780 = vunpack.c.h.b16 %v1642
    %v2781 = vunpack.c.l.b16 %v1643
    %v2782 = vunpack.c.h.b16 %v1643
    %v2783 = vunpack.c.l.b16 %v1644
    %v2784 = vunpack.c.h.b16 %v1644
    %v2785 = vunpack.c.l.b16 %v1645
    %v2786 = vunpack.c.h.b16 %v1645
    %v2787 = vunpack.c.l.b16 %v1646
    %v2788 = vunpack.c.h.b16 %v1646
    %v2789 = vunpack.c.l.b16 %v1647
    %v2790 = vunpack.c.h.b16 %v1647
    %v2791 = vunpack.c.l.b16 %v1648
    %v2792 = vunpack.c.h.b16 %v1648
    %v2793 = vunpack.c.l.b16 %v1649
    %v2794 = vunpack.c.h.b16 %v1649
    %v2795 = vunpack.c.l.b16 %v1650
    %v2796 = vunpack.c.h.b16 %v1650
    %v2797 = vunpack.c.l.b16 %v1651
    %v2798 = vunpack.c.h.b16 %v1651
    %v2799 = vunpack.c.l.b16 %v1652
    %v2800 = vunpack.c.h.b16 %v1652
    %v2801 = vunpack.c.l.b16 %v1653
    %v2802 = vunpack.c.h.b16 %v1653
    %v2803 = vunpack.c.l.b16 %v1654
    %v2804 = vunpack.c.h.b16 %v1654
    %v2805 = vunpack.c.l.b16 %v1655
    %v2806 = vunpack.c.h.b16 %v1655
    %v2807 = vunpack.c.l.b16 %v1656
    %v2808 = vunpack.c.h.b16 %v1656
    %v2809 = vpack.c.b16 %v2053, %v2041
    %v2810 = vpack.c.b16 %v2054, %v2042
    %v2811 = vpack.c.b16 %v2055, %v2043
    %v2812 = vpack.c.b16 %v2056, %v2044
    %v2813 = vpack.c.b16 %v2057, %v2045
    %v2814 = vpack.c.b16 %v2058, %v2046
    %v2815 = vpack.c.b16 %v2059, %v2047
    %v2816 = vpack.c.b16 %v2060, %v2048
    %v2817 = vpack.c.b16 %v2061, %v2049
    %v2818 = vpack.c.b16 %v2062, %v2050
    %v2819 = vpack.c.b16 %v2063, %v2051
    %v2820 = vpack.c.b16 %v2064, %v2052
    %v2821 = vpack.c.b16 %v2077, %v2065
    %v2822 = vpack.c.b16 %v2078, %v2066
    %v2823 = vpack.c.b16 %v2079, %v2067
    %v2824 = vpack.c.b16 %v2080, %v2068
    %v2825 = vpack.c.b16 %v2081, %v2069
    %v2826 = vpack.c.b16 %v2082, %v2070
    %v2827 = vpack.c.b16 %v2083, %v2071
    %v2828 = vpack.c.b16 %v2084, %v2072
    %v2829 = vpack.c.b16 %v2085, %v2073
    %v2830 = vpack.c.b16 %v2086, %v2074
    %v2831 = vpack.c.b16 %v2087, %v2075
    %v2832 = vpack.c.b16 %v2088, %v2076
    %v2833 = vpack.c.b16 %v2101, %v2089
    %v2834 = vpack.c.b16 %v2102, %v2090
    %v2835 = vpack.c.b16 %v2103, %v2091
    %v2836 = vpack.c.b16 %v2104, %v2092
    %v2837 = vpack.c.b16 %v2105, %v2093
    %v2838 = vpack.c.b16 %v2106, %v2094
    %v2839 = vpack.c.b16 %v2107, %v2095
    %v2840 = vpack.c.b16 %v2108, %v2096
    %v2841 = vpack.c.b16 %v2109, %v2097
    %v2842 = vpack.c.b16 %v2110, %v2098
    %v2843 = vpack.c.b16 %v2111, %v2099
    %v2844 = vpack.c.b16 %v2112, %v2100
    %v2845 = vpack.c.b16 %v2125, %v2113
    %v2846 = vpack.c.b16 %v2126, %v2114
    %v2847 = vpack.c.b16 %v2127, %v2115
    %v2848 = vpack.c.b16 %v2128, %v2116
    %v2849 = vpack.c.b16 %v2129, %v2117
    %v2850 = vpack.c.b16 %v2130, %v2118
    %v2851 = vpack.c.b16 %v2131, %v2119
    %v2852 = vpack.c.b16 %v2132, %v2120
    %v2853 = vpack.c.b16 %v2133, %v2121
    %v2854 = vpack.c.b16 %v2134, %v2122
    %v2855 = vpack.c.b16 %v2135, %v2123
    %v2856 = vpack.c.b16 %v2136, %v2124
    %v2857 = vpack.c.b16 %v2149, %v2137
    %v2858 = vpack.c.b16 %v2150, %v2138
    %v2859 = vpack.c.b16 %v2151, %v2139
    %v2860 = vpack.c.b16 %v2152, %v2140
    %v2861 = vpack.c.b16 %v2153, %v2141
    %v2862 = vpack.c.b16 %v2154, %v2142
    %v2863 = vpack.c.b16 %v2155, %v2143
    %v2864 = vpack.c.b16 %v2156, %v2144
    %v2865 = vpack.c.b16 %v2157, %v2145
    %v2866 = vpack.c.b16 %v2158, %v2146
    %v2867 = vpack.c.b16 %v2159, %v2147
    %v2868 = vpack.c.b16 %v2160, %v2148
    %v2869 = vpack.c.b16 %v2173, %v2161
    %v2870 = vpack.c.b16 %v2174, %v2162
    %v2871 = vpack.c.b16 %v2175, %v2163
    %v2872 = vpack.c.b16 %v2176, %v2164
    %v2873 = vpack.c.b16 %v2177, %v2165
    %v2874 = vpack.c.b16 %v2178, %v2166
    %v2875 = vpack.c.b16 %v2179, %v2167
    %v2876 = vpack.c.b16 %v2180, %v2168
    %v2877 = vpack.c.b16 %v2181, %v2169
    %v2878 = vpack.c.b16 %v2182, %v2170
    %v2879 = vpack.c.b16 %v2183, %v2171
    %v2880 = vpack.c.b16 %v2184, %v2172
    %v2881 = vpack.c.b16 %v2197, %v2185
    %v2882 = vpack.c.b16 %v2198, %v2186
    %v2883 = vpack.c.b16 %v2199, %v2187
    %v2884 = vpack.c.b16 %v2200, %v2188
    %v2885 = vpack.c.b16 %v2201, %v2189
    %v2886 = vpack.c.b16 %v2202, %v2190
    %v2887 = vpack.c.b16 %v2203, %v2191
    %v2888 = vpack.c.b16 %v2204, %v2192
    %v2889 = vpack.c.b16 %v2205, %v2193
    %v2890 = vpack.c.b16 %v2206, %v2194
    %v2891 = vpack.c.b16 %v2207, %v2195
    %v2892 = vpack.c.b16 %v2208, %v2196
    %v2893 = vpack.c.b16 %v2221, %v2209
    %v2894 = vpack.c.b16 %v2222, %v2210
    %v2895 = vpack.c.b16 %v2223, %v2211
    %v2896 = vpack.c.b16 %v2224, %v2212
    %v2897 = vpack.c.b16 %v2225, %v2213
    %v2898 = vpack.c.b16 %v2226, %v2214
    %v2899 = vpack.c.b16 %v2227, %v2215
    %v2900 = vpack.c.b16 %v2228, %v2216
    %v2901 = vpack.c.b16 %v2229, %v2217
    %v2902 = vpack.c.b16 %v2230, %v2218
    %v2903 = vpack.c.b16 %v2231, %v2219
    %v2904 = vpack.c.b16 %v2232, %v2220
    %v2905 = vpack.c.b16 %v2245, %v2233
    %v2906 = vpack.c.b16 %v2246, %v2234
    %v2907 = vpack.c.b16 %v2247, %v2235
    %v2908 = vpack.c.b16 %v2248, %v2236
    %v2909 = vpack.c.b16 %v2249, %v2237
    %v2910 = vpack.c.b16 %v2250, %v2238
    %v2911 = vpack.c.b16 %v2251, %v2239
    %v2912 = vpack.c.b16 %v2252, %v2240
    %v2913 = vpack.c.b16 %v2253, %v2241
    %v2914 = vpack.c.b16 %v2254, %v2242
    %v2915 = vpack.c.b16 %v2255, %v2243
    %v2916 = vpack.c.b16 %v2256, %v2244
    %v2917 = vpack.c.b16 %v2269, %v2257
    %v2918 = vpack.c.b16 %v2270, %v2258
    %v2919 = vpack.c.b16 %v2271, %v2259
    %v2920 = vpack.c.b16 %v2272, %v2260
    %v2921 = vpack.c.b16 %v2273, %v2261
    %v2922 = vpack.c.b16 %v2274, %v2262
    %v2923 = vpack.c.b16 %v2275, %v2263
    %v2924 = vpack.c.b16 %v2276, %v2264
    %v2925 = vpack.c.b16 %v2277, %v2265
    %v2926 = vpack.c.b16 %v2278, %v2266
    %v2927 = vpack.c.b16 %v2279, %v2267
    %v2928 = vpack.c.b16 %v2280, %v2268
    %v2929 = vpack.c.b16 %v2293, %v2281
    %v2930 = vpack.c.b16 %v2294, %v2282
    %v2931 = vpack.c.b16 %v2295, %v2283
    %v2932 = vpack.c.b16 %v2296, %v2284
    %v2933 = vpack.c.b16 %v2297, %v2285
    %v2934 = vpack.c.b16 %v2298, %v2286
    %v2935 = vpack.c.b16 %v2299, %v2287
    %v2936 = vpack.c.b16 %v2300, %v2288
    %v2937 = vpack.c.b16 %v2301, %v2289
    %v2938 = vpack.c.b16 %v2302, %v2290
    %v2939 = vpack.c.b16 %v2303, %v2291
    %v2940 = vpack.c.b16 %v2304, %v2292
    %v2941 = vpack.c.b16 %v2317, %v2305
    %v2942 = vpack.c.b16 %v2318, %v2306
    %v2943 = vpack.c.b16 %v2319, %v2307
    %v2944 = vpack.c.b16 %v2320, %v2308
    %v2945 = vpack.c.b16 %v2321, %v2309
    %v2946 = vpack.c.b16 %v2322, %v2310
    %v2947 = vpack.c.b16 %v2323, %v2311
    %v2948 = vpack.c.b16 %v2324, %v2312
    %v2949 = vpack.c.b16 %v2325, %v2313
    %v2950 = vpack.c.b16 %v2326, %v2314
    %v2951 = vpack.c.b16 %v2327, %v2315
    %v2952 = vpack.c.b16 %v2328, %v2316
    %v2953 = vpack.c.b16 %v2341, %v2329
    %v2954 = vpack.c.b16 %v2342, %v2330
    %v2955 = vpack.c.b16 %v2343, %v2331
    %v2956 = vpack.c.b16 %v2344, %v2332
    %v2957 = vpack.c.b16 %v2345, %v2333
    %v2958 = vpack.c.b16 %v2346, %v2334
    %v2959 = vpack.c.b16 %v2347, %v2335
    %v2960 = vpack.c.b16 %v2348, %v2336
    %v2961 = vpack.c.b16 %v2349, %v2337
    %v2962 = vpack.c.b16 %v2350, %v2338
    %v2963 = vpack.c.b16 %v2351, %v2339
    %v2964 = vpack.c.b16 %v2352, %v2340
    %v2965 = vpack.c.b16 %v2365, %v2353
    %v2966 = vpack.c.b16 %v2366, %v2354
    %v2967 = vpack.c.b16 %v2367, %v2355
    %v2968 = vpack.c.b16 %v2368, %v2356
    %v2969 = vpack.c.b16 %v2369, %v2357
    %v2970 = vpack.c.b16 %v2370, %v2358
    %v2971 = vpack.c.b16 %v2371, %v2359
    %v2972 = vpack.c.b16 %v2372, %v2360
    %v2973 = vpack.c.b16 %v2373, %v2361
    %v2974 = vpack.c.b16 %v2374, %v2362
    %v2975 = vpack.c.b16 %v2375, %v2363
    %v2976 = vpack.c.b16 %v2376, %v2364
    %v2977 = vpack.c.b16 %v2389, %v2377
    %v2978 = vpack.c.b16 %v2390, %v2378
    %v2979 = vpack.c.b16 %v2391, %v2379
    %v2980 = vpack.c.b16 %v2392, %v2380
    %v2981 = vpack.c.b16 %v2393, %v2381
    %v2982 = vpack.c.b16 %v2394, %v2382
    %v2983 = vpack.c.b16 %v2395, %v2383
    %v2984 = vpack.c.b16 %v2396, %v2384
    %v2985 = vpack.c.b16 %v2397, %v2385
    %v2986 = vpack.c.b16 %v2398, %v2386
    %v2987 = vpack.c.b16 %v2399, %v2387
    %v2988 = vpack.c.b16 %v2400, %v2388
    %v2989 = vpack.c.b16 %v2413, %v2401
    %v2990 = vpack.c.b16 %v2414, %v2402
    %v2991 = vpack.c.b16 %v2415, %v2403
    %v2992 = vpack.c.b16 %v2416, %v2404
    %v2993 = vpack.c.b16 %v2417, %v2405
    %v2994 = vpack.c.b16 %v2418, %v2406
    %v2995 = vpack.c.b16 %v2419, %v2407
    %v2996 = vpack.c.b16 %v2420, %v2408
    %v2997 = vpack.c.b16 %v2421, %v2409
    %v2998 = vpack.c.b16 %v2422, %v2410
    %v2999 = vpack.c.b16 %v2423, %v2411
    %v3000 = vpack.c.b16 %v2424, %v2412
    %v3001 = vpack.c.b16 %v2437, %v2425
    %v3002 = vpack.c.b16 %v2438, %v2426
    %v3003 = vpack.c.b16 %v2439, %v2427
    %v3004 = vpack.c.b16 %v2440, %v2428
    %v3005 = vpack.c.b16 %v2441, %v2429
    %v3006 = vpack.c.b16 %v2442, %v2430
    %v3007 = vpack.c.b16 %v2443, %v2431
    %v3008 = vpack.c.b16 %v2444, %v2432
    %v3009 = vpack.c.b16 %v2445, %v2433
    %v3010 = vpack.c.b16 %v2446, %v2434
    %v3011 = vpack.c.b16 %v2447, %v2435
    %v3012 = vpack.c.b16 %v2448, %v2436
    %v3013 = vpack.c.b16 %v2461, %v2449
    %v3014 = vpack.c.b16 %v2462, %v2450
    %v3015 = vpack.c.b16 %v2463, %v2451
    %v3016 = vpack.c.b16 %v2464, %v2452
    %v3017 = vpack.c.b16 %v2465, %v2453
    %v3018 = vpack.c.b16 %v2466, %v2454
    %v3019 = vpack.c.b16 %v2467, %v2455
    %v3020 = vpack.c.b16 %v2468, %v2456
    %v3021 = vpack.c.b16 %v2469, %v2457
    %v3022 = vpack.c.b16 %v2470, %v2458
    %v3023 = vpack.c.b16 %v2471, %v2459
    %v3024 = vpack.c.b16 %v2472, %v2460
    %v3025 = vpack.c.b16 %v2485, %v2473
    %v3026 = vpack.c.b16 %v2486, %v2474
    %v3027 = vpack.c.b16 %v2487, %v2475
    %v3028 = vpack.c.b16 %v2488, %v2476
    %v3029 = vpack.c.b16 %v2489, %v2477
    %v3030 = vpack.c.b16 %v2490, %v2478
    %v3031 = vpack.c.b16 %v2491, %v2479
    %v3032 = vpack.c.b16 %v2492, %v2480
    %v3033 = vpack.c.b16 %v2493, %v2481
    %v3034 = vpack.c.b16 %v2494, %v2482
    %v3035 = vpack.c.b16 %v2495, %v2483
    %v3036 = vpack.c.b16 %v2496, %v2484
    %v3037 = vpack.c.b16 %v2509, %v2497
    %v3038 = vpack.c.b16 %v2510, %v2498
    %v3039 = vpack.c.b16 %v2511, %v2499
    %v3040 = vpack.c.b16 %v2512, %v2500
    %v3041 = vpack.c.b16 %v2513, %v2501
    %v3042 = vpack.c.b16 %v2514, %v2502
    %v3043 = vpack.c.b16 %v2515, %v2503
    %v3044 = vpack.c.b16 %v2516, %v2504
    %v3045 = vpack.c.b16 %v2517, %v2505
    %v3046 = vpack.c.b16 %v2518, %v2506
    %v3047 = vpack.c.b16 %v2519, %v2507
    %v3048 = vpack.c.b16 %v2520, %v2508
    %v3049 = vpack.c.b16 %v2533, %v2521
    %v3050 = vpack.c.b16 %v2534, %v2522
    %v3051 = vpack.c.b16 %v2535, %v2523
    %v3052 = vpack.c.b16 %v2536, %v2524
    %v3053 = vpack.c.b16 %v2537, %v2525
    %v3054 = vpack.c.b16 %v2538, %v2526
    %v3055 = vpack.c.b16 %v2539, %v2527
    %v3056 = vpack.c.b16 %v2540, %v2528
    %v3057 = vpack.c.b16 %v2541, %v2529
    %v3058 = vpack.c.b16 %v2542, %v2530
    %v3059 = vpack.c.b16 %v2543, %v2531
    %v3060 = vpack.c.b16 %v2544, %v2532
    %v3061 = vpack.c.b16 %v2557, %v2545
    %v3062 = vpack.c.b16 %v2558, %v2546
    %v3063 = vpack.c.b16 %v2559, %v2547
    %v3064 = vpack.c.b16 %v2560, %v2548
    %v3065 = vpack.c.b16 %v2561, %v2549
    %v3066 = vpack.c.b16 %v2562, %v2550
    %v3067 = vpack.c.b16 %v2563, %v2551
    %v3068 = vpack.c.b16 %v2564, %v2552
    %v3069 = vpack.c.b16 %v2565, %v2553
    %v3070 = vpack.c.b16 %v2566, %v2554
    %v3071 = vpack.c.b16 %v2567, %v2555
    %v3072 = vpack.c.b16 %v2568, %v2556
    %v3073 = vpack.c.b16 %v2581, %v2569
    %v3074 = vpack.c.b16 %v2582, %v2570
    %v3075 = vpack.c.b16 %v2583, %v2571
    %v3076 = vpack.c.b16 %v2584, %v2572
    %v3077 = vpack.c.b16 %v2585, %v2573
    %v3078 = vpack.c.b16 %v2586, %v2574
    %v3079 = vpack.c.b16 %v2587, %v2575
    %v3080 = vpack.c.b16 %v2588, %v2576
    %v3081 = vpack.c.b16 %v2589, %v2577
    %v3082 = vpack.c.b16 %v2590, %v2578
    %v3083 = vpack.c.b16 %v2591, %v2579
    %v3084 = vpack.c.b16 %v2592, %v2580
    %v3085 = vpack.c.b16 %v2605, %v2593
    %v3086 = vpack.c.b16 %v2606, %v2594
    %v3087 = vpack.c.b16 %v2607, %v2595
    %v3088 = vpack.c.b16 %v2608, %v2596
    %v3089 = vpack.c.b16 %v2609, %v2597
    %v3090 = vpack.c.b16 %v2610, %v2598
    %v3091 = vpack.c.b16 %v2611, %v2599
    %v3092 = vpack.c.b16 %v2612, %v2600
    %v3093 = vpack.c.b16 %v2613, %v2601
    %v3094 = vpack.c.b16 %v2614, %v2602
    %v3095 = vpack.c.b16 %v2615, %v2603
    %v3096 = vpack.c.b16 %v2616, %v2604
    %v3097 = vpack.c.b16 %v2629, %v2617
    %v3098 = vpack.c.b16 %v2630, %v2618
    %v3099 = vpack.c.b16 %v2631, %v2619
    %v3100 = vpack.c.b16 %v2632, %v2620
    %v3101 = vpack.c.b16 %v2633, %v2621
    %v3102 = vpack.c.b16 %v2634, %v2622
    %v3103 = vpack.c.b16 %v2635, %v2623
    %v3104 = vpack.c.b16 %v2636, %v2624
    %v3105 = vpack.c.b16 %v2637, %v2625
    %v3106 = vpack.c.b16 %v2638, %v2626
    %v3107 = vpack.c.b16 %v2639, %v2627
    %v3108 = vpack.c.b16 %v2640, %v2628
    %v3109 = vpack.c.b16 %v2653, %v2641
    %v3110 = vpack.c.b16 %v2654, %v2642
    %v3111 = vpack.c.b16 %v2655, %v2643
    %v3112 = vpack.c.b16 %v2656, %v2644
    %v3113 = vpack.c.b16 %v2657, %v2645
    %v3114 = vpack.c.b16 %v2658, %v2646
    %v3115 = vpack.c.b16 %v2659, %v2647
    %v3116 = vpack.c.b16 %v2660, %v2648
    %v3117 = vpack.c.b16 %v2661, %v2649
    %v3118 = vpack.c.b16 %v2662, %v2650
    %v3119 = vpack.c.b16 %v2663, %v2651
    %v3120 = vpack.c.b16 %v2664, %v2652
    %v3121 = vpack.c.b16 %v2677, %v2665
    %v3122 = vpack.c.b16 %v2678, %v2666
    %v3123 = vpack.c.b16 %v2679, %v2667
    %v3124 = vpack.c.b16 %v2680, %v2668
    %v3125 = vpack.c.b16 %v2681, %v2669
    %v3126 = vpack.c.b16 %v2682, %v2670
    %v3127 = vpack.c.b16 %v2683, %v2671
    %v3128 = vpack.c.b16 %v2684, %v2672
    %v3129 = vpack.c.b16 %v2685, %v2673
    %v3130 = vpack.c.b16 %v2686, %v2674
    %v3131 = vpack.c.b16 %v2687, %v2675
    %v3132 = vpack.c.b16 %v2688, %v2676
    %v3133 = vpack.c.b16 %v2701, %v2689
    %v3134 = vpack.c.b16 %v2702, %v2690
    %v3135 = vpack.c.b16 %v2703, %v2691
    %v3136 = vpack.c.b16 %v2704, %v2692
    %v3137 = vpack.c.b16 %v2705, %v2693
    %v3138 = vpack.c.b16 %v2706, %v2694
    %v3139 = vpack.c.b16 %v2707, %v2695
    %v3140 = vpack.c.b16 %v2708, %v2696
    %v3141 = vpack.c.b16 %v2709, %v2697
    %v3142 = vpack.c.b16 %v2710, %v2698
    %v3143 = vpack.c.b16 %v2711, %v2699
    %v3144 = vpack.c.b16 %v2712, %v2700
    %v3145 = vpack.c.b16 %v2725, %v2713
    %v3146 = vpack.c.b16 %v2726, %v2714
    %v3147 = vpack.c.b16 %v2727, %v2715
    %v3148 = vpack.c.b16 %v2728, %v2716
    %v3149 = vpack.c.b16 %v2729, %v2717
    %v3150 = vpack.c.b16 %v2730, %v2718
    %v3151 = vpack.c.b16 %v2731, %v2719
    %v3152 = vpack.c.b16 %v2732, %v2720
    %v3153 = vpack.c.b16 %v2733, %v2721
    %v3154 = vpack.c.b16 %v2734, %v2722
    %v3155 = vpack.c.b16 %v2735, %v2723
    %v3156 = vpack.c.b16 %v2736, %v2724
    %v3157 = vpack.c.b16 %v2749, %v2737
    %v3158 = vpack.c.b16 %v2750, %v2738
    %v3159 = vpack.c.b16 %v2751, %v2739
    %v3160 = vpack.c.b16 %v2752, %v2740
    %v3161 = vpack.c.b16 %v2753, %v2741
    %v3162 = vpack.c.b16 %v2754, %v2742
    %v3163 = vpack.c.b16 %v2755, %v2743
    %v3164 = vpack.c.b16 %v2756, %v2744
    %v3165 = vpack.c.b16 %v2757, %v2745
    %v3166 = vpack.c.b16 %v2758, %v2746
    %v3167 = vpack.c.b16 %v2759, %v2747
    %v3168 = vpack.c.b16 %v2760, %v2748
    %v3169 = vpack.c.b16 %v2773, %v2761
    %v3170 = vpack.c.b16 %v2774, %v2762
    %v3171 = vpack.c.b16 %v2775, %v2763
    %v3172 = vpack.c.b16 %v2776, %v2764
    %v3173 = vpack.c.b16 %v2777, %v2765
    %v3174 = vpack.c.b16 %v2778, %v2766
    %v3175 = vpack.c.b16 %v2779, %v2767
    %v3176 = vpack.c.b16 %v2780, %v2768
    %v3177 = vpack.c.b16 %v2781, %v2769
    %v3178 = vpack.c.b16 %v2782, %v2770
    %v3179 = vpack.c.b16 %v2783, %v2771
    %v3180 = vpack.c.b16 %v2784, %v2772
    %v3181 = vpack.c.b16 %v2797, %v2785
    %v3182 = vpack.c.b16 %v2798, %v2786
    %v3183 = vpack.c.b16 %v2799, %v2787
    %v3184 = vpack.c.b16 %v2800, %v2788
    %v3185 = vpack.c.b16 %v2801, %v2789
    %v3186 = vpack.c.b16 %v2802, %v2790
    %v3187 = vpack.c.b16 %v2803, %v2791
    %v3188 = vpack.c.b16 %v2804, %v2792
    %v3189 = vpack.c.b16 %v2805, %v2793
    %v3190 = vpack.c.b16 %v2806, %v2794
    %v3191 = vpack.c.b16 %v2807, %v2795
    %v3192 = vpack.c.b16 %v2808, %v2796
    %3577 = vmatprep.subr.bf16.mxu0 %v2810
    %3578 = vmatpush1.bf16.msra.mxu0 %v2809
    %3579 = vmatprep.subr.bf16.mxu0 %v2822
    %3580 = vmatpush1.bf16.msra.mxu0 %v2821
    %3581 = vmatprep.subr.bf16.mxu0 %v2834
    %3582 = vmatpush1.bf16.msra.mxu0 %v2833
    %3583 = vmatprep.subr.bf16.mxu0 %v2846
    %3584 = vmatpush1.bf16.msra.mxu0 %v2845
    %3585 = vmatprep.subr.bf16.mxu0 %v2858
    %3586 = vmatpush1.bf16.msra.mxu0 %v2857
    %3587 = vmatprep.subr.bf16.mxu0 %v2870
    %3588 = vmatpush1.bf16.msra.mxu0 %v2869
    %3589 = vmatprep.subr.bf16.mxu0 %v2882
    %3590 = vmatpush1.bf16.msra.mxu0 %v2881
    %3591 = vmatprep.subr.bf16.mxu0 %v2894
    %3592 = vmatpush1.bf16.msra.mxu0 %v2893
    %3593 = vmatprep.subr.bf16.mxu0 %v2906
    %3594 = vmatpush1.bf16.msra.mxu0 %v2905
    %3595 = vmatprep.subr.bf16.mxu0 %v2918
    %3596 = vmatpush1.bf16.msra.mxu0 %v2917
    %3597 = vmatprep.subr.bf16.mxu0 %v2930
    %3598 = vmatpush1.bf16.msra.mxu0 %v2929
    %3599 = vmatprep.subr.bf16.mxu0 %v2942
    %3600 = vmatpush1.bf16.msra.mxu0 %v2941
    %3601 = vmatprep.subr.bf16.mxu0 %v2954
    %3602 = vmatpush1.bf16.msra.mxu0 %v2953
    %3603 = vmatprep.subr.bf16.mxu0 %v2966
    %3604 = vmatpush1.bf16.msra.mxu0 %v2965
    %3605 = vmatprep.subr.bf16.mxu0 %v2978
    %3606 = vmatpush1.bf16.msra.mxu0 %v2977
    %3607 = vmatprep.subr.bf16.mxu0 %v2990
    %3608 = vmatpush1.bf16.msra.mxu0 %v2989
    %3609 = vmatprep.mubr.bf16.mxu0 %v1258
    %3610 = vmatmul.mubr.bf16.gmra.mrb[0].mxu0 %v1257
    %v3611 = vpop.f32.mrb[0].mxu0
    %v3612 = vadd.f32 0.0, %v3611
    %v3613 = vpop.f32.mrb[0].mxu0
    %v3614 = vadd.f32 0.0, %v3613
    %v3615 = vpop.f32.mrb[0].mxu0
    %v3616 = vadd.f32 0.0, %v3615
    %v3617 = vpop.f32.mrb[0].mxu0
    %v3618 = vadd.f32 0.0, %v3617
    %3619 = vmatprep.mubr.bf16.mxu0 %v1262
    %3620 = vmatmul.mubr.bf16.gmra.mrb[0].mxu0 %v1261
    %v3621 = vpop.f32.mrb[0].mxu0
    %v3622 = vadd.f32 0.0, %v3621
    %v3623 = vpop.f32.mrb[0].mxu0
    %v3624 = vadd.f32 0.0, %v3623
    %v3625 = vpop.f32.mrb[0].mxu0
    %v3626 = vadd.f32 0.0, %v3625
    %v3627 = vpop.f32.mrb[0].mxu0
    %v3628 = vadd.f32 0.0, %v3627
    %3629 = vmatprep.mubr.bf16.mxu0 %v1266
    %3630 = vmatmul.mubr.bf16.gmra.mrb[0].mxu0 %v1265
    %v3631 = vpop.f32.mrb[0].mxu0
    %v3632 = vadd.f32 0.0, %v3631
    %v3633 = vpop.f32.mrb[0].mxu0
    %v3634 = vadd.f32 0.0, %v3633
    %v3635 = vpop.f32.mrb[0].mxu0
    %v3636 = vadd.f32 0.0, %v3635
    %v3637 = vpop.f32.mrb[0].mxu0
    %v3638 = vadd.f32 0.0, %v3637
    %3639 = vmatprep.mubr.bf16.mxu0 %v1270
    %3640 = vmatmul.mubr.bf16.gmra.mrb[0].mxu0 %v1269
    %v3641 = vpop.f32.mrb[0].mxu0
    %v3642 = vadd.f32 0.0, %v3641
    %v3643 = vpop.f32.mrb[0].mxu0
    %v3644 = vadd.f32 0.0, %v3643
    %v3645 = vpop.f32.mrb[0].mxu0
    %v3646 = vpop.f32.mrb[0].mxu0
    %3647 = vdwg.mxu0
    %3648 = vmatprep.subr.bf16.mxu0 %v3002
    %3649 = vmatpush1.bf16.msra.mxu0 %v3001
    %3650 = vmatprep.subr.bf16.mxu0 %v3014
    %3651 = vmatpush1.bf16.msra.mxu0 %v3013
    %3652 = vmatprep.subr.bf16.mxu0 %v3026
    %3653 = vmatpush1.bf16.msra.mxu0 %v3025
    %3654 = vmatprep.subr.bf16.mxu0 %v3038
    %3655 = vmatpush1.bf16.msra.mxu0 %v3037
    %3656 = vmatprep.subr.bf16.mxu0 %v3050
    %3657 = vmatpush1.bf16.msra.mxu0 %v3049
    %3658 = vmatprep.subr.bf16.mxu0 %v3062
    %3659 = vmatpush1.bf16.msra.mxu0 %v3061
    %3660 = vmatprep.subr.bf16.mxu0 %v3074
    %3661 = vmatpush1.bf16.msra.mxu0 %v3073
    %3662 = vmatprep.subr.bf16.mxu0 %v3086
    %3663 = vmatpush1.bf16.msra.mxu0 %v3085
    %3664 = vmatprep.subr.bf16.mxu0 %v3098
    %3665 = vmatpush1.bf16.msra.mxu0 %v3097
    %3666 = vmatprep.subr.bf16.mxu0 %v3110
    %3667 = vmatpush1.bf16.msra.mxu0 %v3109
    %3668 = vmatprep.subr.bf16.mxu0 %v3122
    %3669 = vmatpush1.bf16.msra.mxu0 %v3121
    %3670 = vmatprep.subr.bf16.mxu0 %v3134
    %3671 = vmatpush1.bf16.msra.mxu0 %v3133
    %3672 = vmatprep.subr.bf16.mxu0 %v3146
    %3673 = vmatpush1.bf16.msra.mxu0 %v3145
    %3674 = vmatprep.subr.bf16.mxu0 %v3158
    %3675 = vmatpush1.bf16.msra.mxu0 %v3157
    %3676 = vmatprep.subr.bf16.mxu0 %v3170
    %3677 = vmatpush1.bf16.msra.mxu0 %v3169
    %3678 = vmatprep.subr.bf16.mxu0 %v3182
    %3679 = vmatpush1.bf16.msra.mxu0 %v3181
    %3680 = vmatprep.mubr.bf16.mxu0 %v1260
    %3681 = vmatmul.mubr.bf16.gmra.mrb[0].mxu0 %v1259
    %v3682 = vpop.f32.mrb[0].mxu0
    %v3683 = vadd.f32 %v3612, %v3682
    %v3684 = vpop.f32.mrb[0].mxu0
    %v3685 = vadd.f32 %v3614, %v3684
    %v3686 = vpop.f32.mrb[0].mxu0
    %v3687 = vadd.f32 %v3616, %v3686
    %v3688 = vpop.f32.mrb[0].mxu0
    %v3689 = vadd.f32 %v3618, %v3688
    %3690 = vmatprep.mubr.bf16.mxu0 %v1264
    %3691 = vmatmul.mubr.bf16.gmra.mrb[0].mxu0 %v1263
    %v3692 = vpop.f32.mrb[0].mxu0
    %v3693 = vadd.f32 %v3622, %v3692
    %v3694 = vpop.f32.mrb[0].mxu0
    %v3695 = vadd.f32 %v3624, %v3694
    %v3696 = vpop.f32.mrb[0].mxu0
    %v3697 = vadd.f32 %v3626, %v3696
    %v3698 = vpop.f32.mrb[0].mxu0
    %v3699 = vadd.f32 %v3628, %v3698
    %3700 = vmatprep.mubr.bf16.mxu0 %v1268
    %3701 = vmatmul.mubr.bf16.gmra.mrb[0].mxu0 %v1267
    %v3702 = vpop.f32.mrb[0].mxu0
    %v3703 = vadd.f32 %v3632, %v3702
    %v3704 = vpop.f32.mrb[0].mxu0
    %v3705 = vadd.f32 %v3634, %v3704
    %v3706 = vpop.f32.mrb[0].mxu0
    %v3707 = vadd.f32 %v3636, %v3706
    %v3708 = vpop.f32.mrb[0].mxu0
    %v3709 = vadd.f32 %v3638, %v3708
    %3710 = vmatprep.mubr.bf16.mxu0 %v1272
    %3711 = vmatmul.mubr.bf16.gmra.mrb[0].mxu0 %v1271
    %v3712 = vpop.f32.mrb[0].mxu0
    %v3713 = vadd.f32 %v3642, %v3712
    %v3714 = vpop.f32.mrb[0].mxu0
    %v3715 = vadd.f32 %v3644, %v3714
    %v3716 = vpop.f32.mrb[0].mxu0
    %v3717 = vpop.f32.mrb[0].mxu0
    %3718 = vdwg.mxu0
    %3719 = vmatprep.subr.bf16.mxu0 %v2812
    %3720 = vmatpush1.bf16.msra.mxu0 %v2811
    %3721 = vmatprep.subr.bf16.mxu0 %v2824
    %3722 = vmatpush1.bf16.msra.mxu0 %v2823
    %3723 = vmatprep.subr.bf16.mxu0 %v2836
    %3724 = vmatpush1.bf16.msra.mxu0 %v2835
    %3725 = vmatprep.subr.bf16.mxu0 %v2848
    %3726 = vmatpush1.bf16.msra.mxu0 %v2847
    %3727 = vmatprep.subr.bf16.mxu0 %v2860
    %3728 = vmatpush1.bf16.msra.mxu0 %v2859
    %3729 = vmatprep.subr.bf16.mxu0 %v2872
    %3730 = vmatpush1.bf16.msra.mxu0 %v2871
    %3731 = vmatprep.subr.bf16.mxu0 %v2884
    %3732 = vmatpush1.bf16.msra.mxu0 %v2883
    %3733 = vmatprep.subr.bf16.mxu0 %v2896
    %3734 = vmatpush1.bf16.msra.mxu0 %v2895
    %3735 = vmatprep.subr.bf16.mxu0 %v2908
    %3736 = vmatpush1.bf16.msra.mxu0 %v2907
    %3737 = vmatprep.subr.bf16.mxu0 %v2920
    %3738 = vmatpush1.bf16.msra.mxu0 %v2919
    %3739 = vmatprep.subr.bf16.mxu0 %v2932
    %3740 = vmatpush1.bf16.msra.mxu0 %v2931
    %3741 = vmatprep.subr.bf16.mxu0 %v2944
    %3742 = vmatpush1.bf16.msra.mxu0 %v2943
    %3743 = vmatprep.subr.bf16.mxu0 %v2956
    %3744 = vmatpush1.bf16.msra.mxu0 %v2955
    %3745 = vmatprep.subr.bf16.mxu0 %v2968
    %3746 = vmatpush1.bf16.msra.mxu0 %v2967
    %3747 = vmatprep.subr.bf16.mxu0 %v2980
    %3748 = vmatpush1.bf16.msra.mxu0 %v2979
    %3749 = vmatprep.subr.bf16.mxu0 %v2992
    %3750 = vmatpush1.bf16.msra.mxu0 %v2991
    %3751 = vmatprep.mubr.bf16.mxu0 %v1258
    %3752 = vmatmul.mubr.bf16.gmra.mrb[0].mxu0 %v1257
    %v3753 = vpop.f32.mrb[0].mxu0
    %v3754 = vadd.f32 0.0, %v3753
    %v3755 = vpop.f32.mrb[0].mxu0
    %v3756 = vadd.f32 0.0, %v3755
    %v3757 = vpop.f32.mrb[0].mxu0
    %v3758 = vadd.f32 0.0, %v3757
    %v3759 = vpop.f32.mrb[0].mxu0
    %v3760 = vadd.f32 0.0, %v3759
    %3761 = vmatprep.mubr.bf16.mxu0 %v1262
    %3762 = vmatmul.mubr.bf16.gmra.mrb[0].mxu0 %v1261
    %v3763 = vpop.f32.mrb[0].mxu0
    %v3764 = vadd.f32 0.0, %v3763
    %v3765 = vpop.f32.mrb[0].mxu0
    %v3766 = vadd.f32 0.0, %v3765
    %v3767 = vpop.f32.mrb[0].mxu0
    %v3768 = vadd.f32 0.0, %v3767
    %v3769 = vpop.f32.mrb[0].mxu0
    %v3770 = vadd.f32 0.0, %v3769
    %3771 = vmatprep.mubr.bf16.mxu0 %v1266
    %3772 = vmatmul.mubr.bf16.gmra.mrb[0].mxu0 %v1265
    %v3773 = vpop.f32.mrb[0].mxu0
    %v3774 = vadd.f32 0.0, %v3773
    %v3775 = vpop.f32.mrb[0].mxu0
    %v3776 = vadd.f32 0.0, %v3775
    %v3777 = vpop.f32.mrb[0].mxu0
    %v3778 = vadd.f32 0.0, %v3777
    %v3779 = vpop.f32.mrb[0].mxu0
    %v3780 = vadd.f32 0.0, %v3779
    %3781 = vmatprep.mubr.bf16.mxu0 %v1270
    %3782 = vmatmul.mubr.bf16.gmra.mrb[0].mxu0 %v1269
    %v3783 = vpop.f32.mrb[0].mxu0
    %v3784 = vadd.f32 0.0, %v3783
    %v3785 = vpop.f32.mrb[0].mxu0
    %v3786 = vadd.f32 0.0, %v3785
    %v3787 = vpop.f32.mrb[0].mxu0
    %v3788 = vpop.f32.mrb[0].mxu0
    %3789 = vdwg.mxu0
    %3790 = vmatprep.subr.bf16.mxu0 %v3004
    %3791 = vmatpush1.bf16.msra.mxu0 %v3003
    %3792 = vmatprep.subr.bf16.mxu0 %v3016
    %3793 = vmatpush1.bf16.msra.mxu0 %v3015
    %3794 = vmatprep.subr.bf16.mxu0 %v3028
    %3795 = vmatpush1.bf16.msra.mxu0 %v3027
    %3796 = vmatprep.subr.bf16.mxu0 %v3040
    %3797 = vmatpush1.bf16.msra.mxu0 %v3039
    %3798 = vmatprep.subr.bf16.mxu0 %v3052
    %3799 = vmatpush1.bf16.msra.mxu0 %v3051
    %3800 = vmatprep.subr.bf16.mxu0 %v3064
    %3801 = vmatpush1.bf16.msra.mxu0 %v3063
    %3802 = vmatprep.subr.bf16.mxu0 %v3076
    %3803 = vmatpush1.bf16.msra.mxu0 %v3075
    %3804 = vmatprep.subr.bf16.mxu0 %v3088
    %3805 = vmatpush1.bf16.msra.mxu0 %v3087
    %3806 = vmatprep.subr.bf16.mxu0 %v3100
    %3807 = vmatpush1.bf16.msra.mxu0 %v3099
    %3808 = vmatprep.subr.bf16.mxu0 %v3112
    %3809 = vmatpush1.bf16.msra.mxu0 %v3111
    %3810 = vmatprep.subr.bf16.mxu0 %v3124
    %3811 = vmatpush1.bf16.msra.mxu0 %v3123
    %3812 = vmatprep.subr.bf16.mxu0 %v3136
    %3813 = vmatpush1.bf16.msra.mxu0 %v3135
    %3814 = vmatprep.subr.bf16.mxu0 %v3148
    %3815 = vmatpush1.bf16.msra.mxu0 %v3147
    %3816 = vmatprep.subr.bf16.mxu0 %v3160
    %3817 = vmatpush1.bf16.msra.mxu0 %v3159
    %3818 = vmatprep.subr.bf16.mxu0 %v3172
    %3819 = vmatpush1.bf16.msra.mxu0 %v3171
    %3820 = vmatprep.subr.bf16.mxu0 %v3184
    %3821 = vmatpush1.bf16.msra.mxu0 %v3183
    %3822 = vmatprep.mubr.bf16.mxu0 %v1260
    %3823 = vmatmul.mubr.bf16.gmra.mrb[0].mxu0 %v1259
    %v3824 = vpop.f32.mrb[0].mxu0
    %v3825 = vadd.f32 %v3754, %v3824
    %v3826 = vpop.f32.mrb[0].mxu0
    %v3827 = vadd.f32 %v3756, %v3826
    %v3828 = vpop.f32.mrb[0].mxu0
    %v3829 = vadd.f32 %v3758, %v3828
    %v3830 = vpop.f32.mrb[0].mxu0
    %v3831 = vadd.f32 %v3760, %v3830
    %3832 = vmatprep.mubr.bf16.mxu0 %v1264
    %3833 = vmatmul.mubr.bf16.gmra.mrb[0].mxu0 %v1263
    %v3834 = vpop.f32.mrb[0].mxu0
    %v3835 = vadd.f32 %v3764, %v3834
    %v3836 = vpop.f32.mrb[0].mxu0
    %v3837 = vadd.f32 %v3766, %v3836
    %v3838 = vpop.f32.mrb[0].mxu0
    %v3839 = vadd.f32 %v3768, %v3838
    %v3840 = vpop.f32.mrb[0].mxu0
    %v3841 = vadd.f32 %v3770, %v3840
    %3842 = vmatprep.mubr.bf16.mxu0 %v1268
    %3843 = vmatmul.mubr.bf16.gmra.mrb[0].mxu0 %v1267
    %v3844 = vpop.f32.mrb[0].mxu0
    %v3845 = vadd.f32 %v3774, %v3844
    %v3846 = vpop.f32.mrb[0].mxu0
    %v3847 = vadd.f32 %v3776, %v3846
    %v3848 = vpop.f32.mrb[0].mxu0
    %v3849 = vadd.f32 %v3778, %v3848
    %v3850 = vpop.f32.mrb[0].mxu0
    %v3851 = vadd.f32 %v3780, %v3850
    %3852 = vmatprep.mubr.bf16.mxu0 %v1272
    %3853 = vmatmul.mubr.bf16.gmra.mrb[0].mxu0 %v1271
    %v3854 = vpop.f32.mrb[0].mxu0
    %v3855 = vadd.f32 %v3784, %v3854
    %v3856 = vpop.f32.mrb[0].mxu0
    %v3857 = vadd.f32 %v3786, %v3856
    %v3858 = vpop.f32.mrb[0].mxu0
    %v3859 = vpop.f32.mrb[0].mxu0
    %3860 = vdwg.mxu0
    %3861 = vmatprep.subr.bf16.mxu0 %v2814
    %3862 = vmatpush1.bf16.msra.mxu0 %v2813
    %3863 = vmatprep.subr.bf16.mxu0 %v2826
    %3864 = vmatpush1.bf16.msra.mxu0 %v2825
    %3865 = vmatprep.subr.bf16.mxu0 %v2838
    %3866 = vmatpush1.bf16.msra.mxu0 %v2837
    %3867 = vmatprep.subr.bf16.mxu0 %v2850
    %3868 = vmatpush1.bf16.msra.mxu0 %v2849
    %3869 = vmatprep.subr.bf16.mxu0 %v2862
    %3870 = vmatpush1.bf16.msra.mxu0 %v2861
    %3871 = vmatprep.subr.bf16.mxu0 %v2874
    %3872 = vmatpush1.bf16.msra.mxu0 %v2873
    %3873 = vmatprep.subr.bf16.mxu0 %v2886
    %3874 = vmatpush1.bf16.msra.mxu0 %v2885
    %3875 = vmatprep.subr.bf16.mxu0 %v2898
    %3876 = vmatpush1.bf16.msra.mxu0 %v2897
    %3877 = vmatprep.subr.bf16.mxu0 %v2910
    %3878 = vmatpush1.bf16.msra.mxu0 %v2909
    %3879 = vmatprep.subr.bf16.mxu0 %v2922
    %3880 = vmatpush1.bf16.msra.mxu0 %v2921
    %3881 = vmatprep.subr.bf16.mxu0 %v2934
    %3882 = vmatpush1.bf16.msra.mxu0 %v2933
    %3883 = vmatprep.subr.bf16.mxu0 %v2946
    %3884 = vmatpush1.bf16.msra.mxu0 %v2945
    %3885 = vmatprep.subr.bf16.mxu0 %v2958
    %3886 = vmatpush1.bf16.msra.mxu0 %v2957
    %3887 = vmatprep.subr.bf16.mxu0 %v2970
    %3888 = vmatpush1.bf16.msra.mxu0 %v2969
    %3889 = vmatprep.subr.bf16.mxu0 %v2982
    %3890 = vmatpush1.bf16.msra.mxu0 %v2981
    %3891 = vmatprep.subr.bf16.mxu0 %v2994
    %3892 = vmatpush1.bf16.msra.mxu0 %v2993
    %3893 = vmatprep.mubr.bf16.mxu0 %v1258
    %3894 = vmatmul.mubr.bf16.gmra.mrb[0].mxu0 %v1257
    %v3895 = vpop.f32.mrb[0].mxu0
    %v3896 = vadd.f32 0.0, %v3895
    %v3897 = vpop.f32.mrb[0].mxu0
    %v3898 = vadd.f32 0.0, %v3897
    %v3899 = vpop.f32.mrb[0].mxu0
    %v3900 = vadd.f32 0.0, %v3899
    %v3901 = vpop.f32.mrb[0].mxu0
    %v3902 = vadd.f32 0.0, %v3901
    %3903 = vmatprep.mubr.bf16.mxu0 %v1262
    %3904 = vmatmul.mubr.bf16.gmra.mrb[0].mxu0 %v1261
    %v3905 = vpop.f32.mrb[0].mxu0
    %v3906 = vadd.f32 0.0, %v3905
    %v3907 = vpop.f32.mrb[0].mxu0
    %v3908 = vadd.f32 0.0, %v3907
    %v3909 = vpop.f32.mrb[0].mxu0
    %v3910 = vadd.f32 0.0, %v3909
    %v3911 = vpop.f32.mrb[0].mxu0
    %v3912 = vadd.f32 0.0, %v3911
    %3913 = vmatprep.mubr.bf16.mxu0 %v1266
    %3914 = vmatmul.mubr.bf16.gmra.mrb[0].mxu0 %v1265
    %v3915 = vpop.f32.mrb[0].mxu0
    %v3916 = vadd.f32 0.0, %v3915
    %v3917 = vpop.f32.mrb[0].mxu0
    %v3918 = vadd.f32 0.0, %v3917
    %v3919 = vpop.f32.mrb[0].mxu0
    %v3920 = vadd.f32 0.0, %v3919
    %v3921 = vpop.f32.mrb[0].mxu0
    %v3922 = vadd.f32 0.0, %v3921
    %3923 = vmatprep.mubr.bf16.mxu0 %v1270
    %3924 = vmatmul.mubr.bf16.gmra.mrb[0].mxu0 %v1269
    %v3925 = vpop.f32.mrb[0].mxu0
    %v3926 = vadd.f32 0.0, %v3925
    %v3927 = vpop.f32.mrb[0].mxu0
    %v3928 = vadd.f32 0.0, %v3927
    %v3929 = vpop.f32.mrb[0].mxu0
    %v3930 = vpop.f32.mrb[0].mxu0
    %3931 = vdwg.mxu0
    %3932 = vmatprep.subr.bf16.mxu0 %v3006
    %3933 = vmatpush1.bf16.msra.mxu0 %v3005
    %3934 = vmatprep.subr.bf16.mxu0 %v3018
    %3935 = vmatpush1.bf16.msra.mxu0 %v3017
    %3936 = vmatprep.subr.bf16.mxu0 %v3030
    %3937 = vmatpush1.bf16.msra.mxu0 %v3029
    %3938 = vmatprep.subr.bf16.mxu0 %v3042
    %3939 = vmatpush1.bf16.msra.mxu0 %v3041
    %3940 = vmatprep.subr.bf16.mxu0 %v3054
    %3941 = vmatpush1.bf16.msra.mxu0 %v3053
    %3942 = vmatprep.subr.bf16.mxu0 %v3066
    %3943 = vmatpush1.bf16.msra.mxu0 %v3065
    %3944 = vmatprep.subr.bf16.mxu0 %v3078
    %3945 = vmatpush1.bf16.msra.mxu0 %v3077
    %3946 = vmatprep.subr.bf16.mxu0 %v3090
    %3947 = vmatpush1.bf16.msra.mxu0 %v3089
    %3948 = vmatprep.subr.bf16.mxu0 %v3102
    %3949 = vmatpush1.bf16.msra.mxu0 %v3101
    %3950 = vmatprep.subr.bf16.mxu0 %v3114
    %3951 = vmatpush1.bf16.msra.mxu0 %v3113
    %3952 = vmatprep.subr.bf16.mxu0 %v3126
    %3953 = vmatpush1.bf16.msra.mxu0 %v3125
    %3954 = vmatprep.subr.bf16.mxu0 %v3138
    %3955 = vmatpush1.bf16.msra.mxu0 %v3137
    %3956 = vmatprep.subr.bf16.mxu0 %v3150
    %3957 = vmatpush1.bf16.msra.mxu0 %v3149
    %3958 = vmatprep.subr.bf16.mxu0 %v3162
    %3959 = vmatpush1.bf16.msra.mxu0 %v3161
    %3960 = vmatprep.subr.bf16.mxu0 %v3174
    %3961 = vmatpush1.bf16.msra.mxu0 %v3173
    %3962 = vmatprep.subr.bf16.mxu0 %v3186
    %3963 = vmatpush1.bf16.msra.mxu0 %v3185
    %3964 = vmatprep.mubr.bf16.mxu0 %v1260
    %3965 = vmatmul.mubr.bf16.gmra.mrb[0].mxu0 %v1259
    %v3966 = vpop.f32.mrb[0].mxu0
    %v3967 = vadd.f32 %v3896, %v3966
    %v3968 = vpop.f32.mrb[0].mxu0
    %v3969 = vadd.f32 %v3898, %v3968
    %v3970 = vpop.f32.mrb[0].mxu0
    %v3971 = vadd.f32 %v3900, %v3970
    %v3972 = vpop.f32.mrb[0].mxu0
    %v3973 = vadd.f32 %v3902, %v3972
    %3974 = vmatprep.mubr.bf16.mxu0 %v1264
    %3975 = vmatmul.mubr.bf16.gmra.mrb[0].mxu0 %v1263
    %v3976 = vpop.f32.mrb[0].mxu0
    %v3977 = vadd.f32 %v3906, %v3976
    %v3978 = vpop.f32.mrb[0].mxu0
    %v3979 = vadd.f32 %v3908, %v3978
    %v3980 = vpop.f32.mrb[0].mxu0
    %v3981 = vadd.f32 %v3910, %v3980
    %v3982 = vpop.f32.mrb[0].mxu0
    %v3983 = vadd.f32 %v3912, %v3982
    %3984 = vmatprep.mubr.bf16.mxu0 %v1268
    %3985 = vmatmul.mubr.bf16.gmra.mrb[0].mxu0 %v1267
    %v3986 = vpop.f32.mrb[0].mxu0
    %v3987 = vadd.f32 %v3916, %v3986
    %v3988 = vpop.f32.mrb[0].mxu0
    %v3989 = vadd.f32 %v3918, %v3988
    %v3990 = vpop.f32.mrb[0].mxu0
    %v3991 = vadd.f32 %v3920, %v3990
    %v3992 = vpop.f32.mrb[0].mxu0
    %v3993 = vadd.f32 %v3922, %v3992
    %3994 = vmatprep.mubr.bf16.mxu0 %v1272
    %3995 = vmatmul.mubr.bf16.gmra.mrb[0].mxu0 %v1271
    %v3996 = vpop.f32.mrb[0].mxu0
    %v3997 = vadd.f32 %v3926, %v3996
    %v3998 = vpop.f32.mrb[0].mxu0
    %v3999 = vadd.f32 %v3928, %v3998
    %v4000 = vpop.f32.mrb[0].mxu0
    %v4001 = vpop.f32.mrb[0].mxu0
    %4002 = vdwg.mxu0
    %4003 = vmatprep.subr.bf16.mxu0 %v2816
    %4004 = vmatpush1.bf16.msra.mxu0 %v2815
    %4005 = vmatprep.subr.bf16.mxu0 %v2828
    %4006 = vmatpush1.bf16.msra.mxu0 %v2827
    %4007 = vmatprep.subr.bf16.mxu0 %v2840
    %4008 = vmatpush1.bf16.msra.mxu0 %v2839
    %4009 = vmatprep.subr.bf16.mxu0 %v2852
    %4010 = vmatpush1.bf16.msra.mxu0 %v2851
    %4011 = vmatprep.subr.bf16.mxu0 %v2864
    %4012 = vmatpush1.bf16.msra.mxu0 %v2863
    %4013 = vmatprep.subr.bf16.mxu0 %v2876
    %4014 = vmatpush1.bf16.msra.mxu0 %v2875
    %4015 = vmatprep.subr.bf16.mxu0 %v2888
    %4016 = vmatpush1.bf16.msra.mxu0 %v2887
    %4017 = vmatprep.subr.bf16.mxu0 %v2900
    %4018 = vmatpush1.bf16.msra.mxu0 %v2899
    %4019 = vmatprep.subr.bf16.mxu0 %v2912
    %4020 = vmatpush1.bf16.msra.mxu0 %v2911
    %4021 = vmatprep.subr.bf16.mxu0 %v2924
    %4022 = vmatpush1.bf16.msra.mxu0 %v2923
    %4023 = vmatprep.subr.bf16.mxu0 %v2936
    %4024 = vmatpush1.bf16.msra.mxu0 %v2935
    %4025 = vmatprep.subr.bf16.mxu0 %v2948
    %4026 = vmatpush1.bf16.msra.mxu0 %v2947
    %4027 = vmatprep.subr.bf16.mxu0 %v2960
    %4028 = vmatpush1.bf16.msra.mxu0 %v2959
    %4029 = vmatprep.subr.bf16.mxu0 %v2972
    %4030 = vmatpush1.bf16.msra.mxu0 %v2971
    %4031 = vmatprep.subr.bf16.mxu0 %v2984
    %4032 = vmatpush1.bf16.msra.mxu0 %v2983
    %4033 = vmatprep.subr.bf16.mxu0 %v2996
    %4034 = vmatpush1.bf16.msra.mxu0 %v2995
    %4035 = vmatprep.mubr.bf16.mxu0 %v1258
    %4036 = vmatmul.mubr.bf16.gmra.mrb[0].mxu0 %v1257
    %v4037 = vpop.f32.mrb[0].mxu0
    %v4038 = vadd.f32 0.0, %v4037
    %v4039 = vpop.f32.mrb[0].mxu0
    %v4040 = vadd.f32 0.0, %v4039
    %v4041 = vpop.f32.mrb[0].mxu0
    %v4042 = vadd.f32 0.0, %v4041
    %v4043 = vpop.f32.mrb[0].mxu0
    %v4044 = vadd.f32 0.0, %v4043
    %4045 = vmatprep.mubr.bf16.mxu0 %v1262
    %4046 = vmatmul.mubr.bf16.gmra.mrb[0].mxu0 %v1261
    %v4047 = vpop.f32.mrb[0].mxu0
    %v4048 = vadd.f32 0.0, %v4047
    %v4049 = vpop.f32.mrb[0].mxu0
    %v4050 = vadd.f32 0.0, %v4049
    %v4051 = vpop.f32.mrb[0].mxu0
    %v4052 = vadd.f32 0.0, %v4051
    %v4053 = vpop.f32.mrb[0].mxu0
    %v4054 = vadd.f32 0.0, %v4053
    %4055 = vmatprep.mubr.bf16.mxu0 %v1266
    %4056 = vmatmul.mubr.bf16.gmra.mrb[0].mxu0 %v1265
    %v4057 = vpop.f32.mrb[0].mxu0
    %v4058 = vadd.f32 0.0, %v4057
    %v4059 = vpop.f32.mrb[0].mxu0
    %v4060 = vadd.f32 0.0, %v4059
    %v4061 = vpop.f32.mrb[0].mxu0
    %v4062 = vadd.f32 0.0, %v4061
    %v4063 = vpop.f32.mrb[0].mxu0
    %v4064 = vadd.f32 0.0, %v4063
    %4065 = vmatprep.mubr.bf16.mxu0 %v1270
    %4066 = vmatmul.mubr.bf16.gmra.mrb[0].mxu0 %v1269
    %v4067 = vpop.f32.mrb[0].mxu0
    %v4068 = vadd.f32 0.0, %v4067
    %v4069 = vpop.f32.mrb[0].mxu0
    %v4070 = vadd.f32 0.0, %v4069
    %v4071 = vpop.f32.mrb[0].mxu0
    %v4072 = vpop.f32.mrb[0].mxu0
    %4073 = vdwg.mxu0
    %4074 = vmatprep.subr.bf16.mxu0 %v3008
    %4075 = vmatpush1.bf16.msra.mxu0 %v3007
    %4076 = vmatprep.subr.bf16.mxu0 %v3020
    %4077 = vmatpush1.bf16.msra.mxu0 %v3019
    %4078 = vmatprep.subr.bf16.mxu0 %v3032
    %4079 = vmatpush1.bf16.msra.mxu0 %v3031
    %4080 = vmatprep.subr.bf16.mxu0 %v3044
    %4081 = vmatpush1.bf16.msra.mxu0 %v3043
    %4082 = vmatprep.subr.bf16.mxu0 %v3056
    %4083 = vmatpush1.bf16.msra.mxu0 %v3055
    %4084 = vmatprep.subr.bf16.mxu0 %v3068
    %4085 = vmatpush1.bf16.msra.mxu0 %v3067
    %4086 = vmatprep.subr.bf16.mxu0 %v3080
    %4087 = vmatpush1.bf16.msra.mxu0 %v3079
    %4088 = vmatprep.subr.bf16.mxu0 %v3092
    %4089 = vmatpush1.bf16.msra.mxu0 %v3091
    %4090 = vmatprep.subr.bf16.mxu0 %v3104
    %4091 = vmatpush1.bf16.msra.mxu0 %v3103
    %4092 = vmatprep.subr.bf16.mxu0 %v3116
    %4093 = vmatpush1.bf16.msra.mxu0 %v3115
    %4094 = vmatprep.subr.bf16.mxu0 %v3128
    %4095 = vmatpush1.bf16.msra.mxu0 %v3127
    %4096 = vmatprep.subr.bf16.mxu0 %v3140
    %4097 = vmatpush1.bf16.msra.mxu0 %v3139
    %4098 = vmatprep.subr.bf16.mxu0 %v3152
    %4099 = vmatpush1.bf16.msra.mxu0 %v3151
    %4100 = vmatprep.subr.bf16.mxu0 %v3164
    %4101 = vmatpush1.bf16.msra.mxu0 %v3163
    %4102 = vmatprep.subr.bf16.mxu0 %v3176
    %4103 = vmatpush1.bf16.msra.mxu0 %v3175
    %4104 = vmatprep.subr.bf16.mxu0 %v3188
    %4105 = vmatpush1.bf16.msra.mxu0 %v3187
    %4106 = vmatprep.mubr.bf16.mxu0 %v1260
    %4107 = vmatmul.mubr.bf16.gmra.mrb[0].mxu0 %v1259
    %v4108 = vpop.f32.mrb[0].mxu0
    %v4109 = vadd.f32 %v4038, %v4108
    %v4110 = vpop.f32.mrb[0].mxu0
    %v4111 = vadd.f32 %v4040, %v4110
    %v4112 = vpop.f32.mrb[0].mxu0
    %v4113 = vadd.f32 %v4042, %v4112
    %v4114 = vpop.f32.mrb[0].mxu0
    %v4115 = vadd.f32 %v4044, %v4114
    %4116 = vmatprep.mubr.bf16.mxu0 %v1264
    %4117 = vmatmul.mubr.bf16.gmra.mrb[0].mxu0 %v1263
    %v4118 = vpop.f32.mrb[0].mxu0
    %v4119 = vadd.f32 %v4048, %v4118
    %v4120 = vpop.f32.mrb[0].mxu0
    %v4121 = vadd.f32 %v4050, %v4120
    %v4122 = vpop.f32.mrb[0].mxu0
    %v4123 = vadd.f32 %v4052, %v4122
    %v4124 = vpop.f32.mrb[0].mxu0
    %v4125 = vadd.f32 %v4054, %v4124
    %4126 = vmatprep.mubr.bf16.mxu0 %v1268
    %4127 = vmatmul.mubr.bf16.gmra.mrb[0].mxu0 %v1267
    %v4128 = vpop.f32.mrb[0].mxu0
    %v4129 = vadd.f32 %v4058, %v4128
    %v4130 = vpop.f32.mrb[0].mxu0
    %v4131 = vadd.f32 %v4060, %v4130
    %v4132 = vpop.f32.mrb[0].mxu0
    %v4133 = vadd.f32 %v4062, %v4132
    %v4134 = vpop.f32.mrb[0].mxu0
    %v4135 = vadd.f32 %v4064, %v4134
    %4136 = vmatprep.mubr.bf16.mxu0 %v1272
    %4137 = vmatmul.mubr.bf16.gmra.mrb[0].mxu0 %v1271
    %v4138 = vpop.f32.mrb[0].mxu0
    %v4139 = vadd.f32 %v4068, %v4138
    %v4140 = vpop.f32.mrb[0].mxu0
    %v4141 = vadd.f32 %v4070, %v4140
    %v4142 = vpop.f32.mrb[0].mxu0
    %v4143 = vpop.f32.mrb[0].mxu0
    %4144 = vdwg.mxu0
    %4145 = vmatprep.subr.bf16.mxu0 %v2818
    %4146 = vmatpush1.bf16.msra.mxu0 %v2817
    %4147 = vmatprep.subr.bf16.mxu0 %v2830
    %4148 = vmatpush1.bf16.msra.mxu0 %v2829
    %4149 = vmatprep.subr.bf16.mxu0 %v2842
    %4150 = vmatpush1.bf16.msra.mxu0 %v2841
    %4151 = vmatprep.subr.bf16.mxu0 %v2854
    %4152 = vmatpush1.bf16.msra.mxu0 %v2853
    %4153 = vmatprep.subr.bf16.mxu0 %v2866
    %4154 = vmatpush1.bf16.msra.mxu0 %v2865
    %4155 = vmatprep.subr.bf16.mxu0 %v2878
    %4156 = vmatpush1.bf16.msra.mxu0 %v2877
    %4157 = vmatprep.subr.bf16.mxu0 %v2890
    %4158 = vmatpush1.bf16.msra.mxu0 %v2889
    %4159 = vmatprep.subr.bf16.mxu0 %v2902
    %4160 = vmatpush1.bf16.msra.mxu0 %v2901
    %4161 = vmatprep.subr.bf16.mxu0 %v2914
    %4162 = vmatpush1.bf16.msra.mxu0 %v2913
    %4163 = vmatprep.subr.bf16.mxu0 %v2926
    %4164 = vmatpush1.bf16.msra.mxu0 %v2925
    %4165 = vmatprep.subr.bf16.mxu0 %v2938
    %4166 = vmatpush1.bf16.msra.mxu0 %v2937
    %4167 = vmatprep.subr.bf16.mxu0 %v2950
    %4168 = vmatpush1.bf16.msra.mxu0 %v2949
    %4169 = vmatprep.subr.bf16.mxu0 %v2962
    %4170 = vmatpush1.bf16.msra.mxu0 %v2961
    %4171 = vmatprep.subr.bf16.mxu0 %v2974
    %4172 = vmatpush1.bf16.msra.mxu0 %v2973
    %4173 = vmatprep.subr.bf16.mxu0 %v2986
    %4174 = vmatpush1.bf16.msra.mxu0 %v2985
    %4175 = vmatprep.subr.bf16.mxu0 %v2998
    %4176 = vmatpush1.bf16.msra.mxu0 %v2997
    %4177 = vmatprep.mubr.bf16.mxu0 %v1258
    %4178 = vmatmul.mubr.bf16.gmra.mrb[0].mxu0 %v1257
    %v4179 = vpop.f32.mrb[0].mxu0
    %v4180 = vadd.f32 0.0, %v4179
    %v4181 = vpop.f32.mrb[0].mxu0
    %v4182 = vadd.f32 0.0, %v4181
    %v4183 = vpop.f32.mrb[0].mxu0
    %v4184 = vadd.f32 0.0, %v4183
    %v4185 = vpop.f32.mrb[0].mxu0
    %v4186 = vadd.f32 0.0, %v4185
    %4187 = vmatprep.mubr.bf16.mxu0 %v1262
    %4188 = vmatmul.mubr.bf16.gmra.mrb[0].mxu0 %v1261
    %v4189 = vpop.f32.mrb[0].mxu0
    %v4190 = vadd.f32 0.0, %v4189
    %v4191 = vpop.f32.mrb[0].mxu0
    %v4192 = vadd.f32 0.0, %v4191
    %v4193 = vpop.f32.mrb[0].mxu0
    %v4194 = vadd.f32 0.0, %v4193
    %v4195 = vpop.f32.mrb[0].mxu0
    %v4196 = vadd.f32 0.0, %v4195
    %4197 = vmatprep.mubr.bf16.mxu0 %v1266
    %4198 = vmatmul.mubr.bf16.gmra.mrb[0].mxu0 %v1265
    %v4199 = vpop.f32.mrb[0].mxu0
    %v4200 = vadd.f32 0.0, %v4199
    %v4201 = vpop.f32.mrb[0].mxu0
    %v4202 = vadd.f32 0.0, %v4201
    %v4203 = vpop.f32.mrb[0].mxu0
    %v4204 = vadd.f32 0.0, %v4203
    %v4205 = vpop.f32.mrb[0].mxu0
    %v4206 = vadd.f32 0.0, %v4205
    %4207 = vmatprep.mubr.bf16.mxu0 %v1270
    %4208 = vmatmul.mubr.bf16.gmra.mrb[0].mxu0 %v1269
    %v4209 = vpop.f32.mrb[0].mxu0
    %v4210 = vadd.f32 0.0, %v4209
    %v4211 = vpop.f32.mrb[0].mxu0
    %v4212 = vadd.f32 0.0, %v4211
    %v4213 = vpop.f32.mrb[0].mxu0
    %v4214 = vpop.f32.mrb[0].mxu0
    %4215 = vdwg.mxu0
    %4216 = vmatprep.subr.bf16.mxu0 %v3010
    %4217 = vmatpush1.bf16.msra.mxu0 %v3009
    %4218 = vmatprep.subr.bf16.mxu0 %v3022
    %4219 = vmatpush1.bf16.msra.mxu0 %v3021
    %4220 = vmatprep.subr.bf16.mxu0 %v3034
    %4221 = vmatpush1.bf16.msra.mxu0 %v3033
    %4222 = vmatprep.subr.bf16.mxu0 %v3046
    %4223 = vmatpush1.bf16.msra.mxu0 %v3045
    %4224 = vmatprep.subr.bf16.mxu0 %v3058
    %4225 = vmatpush1.bf16.msra.mxu0 %v3057
    %4226 = vmatprep.subr.bf16.mxu0 %v3070
    %4227 = vmatpush1.bf16.msra.mxu0 %v3069
    %4228 = vmatprep.subr.bf16.mxu0 %v3082
    %4229 = vmatpush1.bf16.msra.mxu0 %v3081
    %4230 = vmatprep.subr.bf16.mxu0 %v3094
    %4231 = vmatpush1.bf16.msra.mxu0 %v3093
    %4232 = vmatprep.subr.bf16.mxu0 %v3106
    %4233 = vmatpush1.bf16.msra.mxu0 %v3105
    %4234 = vmatprep.subr.bf16.mxu0 %v3118
    %4235 = vmatpush1.bf16.msra.mxu0 %v3117
    %4236 = vmatprep.subr.bf16.mxu0 %v3130
    %4237 = vmatpush1.bf16.msra.mxu0 %v3129
    %4238 = vmatprep.subr.bf16.mxu0 %v3142
    %4239 = vmatpush1.bf16.msra.mxu0 %v3141
    %4240 = vmatprep.subr.bf16.mxu0 %v3154
    %4241 = vmatpush1.bf16.msra.mxu0 %v3153
    %4242 = vmatprep.subr.bf16.mxu0 %v3166
    %4243 = vmatpush1.bf16.msra.mxu0 %v3165
    %4244 = vmatprep.subr.bf16.mxu0 %v3178
    %4245 = vmatpush1.bf16.msra.mxu0 %v3177
    %4246 = vmatprep.subr.bf16.mxu0 %v3190
    %4247 = vmatpush1.bf16.msra.mxu0 %v3189
    %4248 = vmatprep.mubr.bf16.mxu0 %v1260
    %4249 = vmatmul.mubr.bf16.gmra.mrb[0].mxu0 %v1259
    %v4250 = vpop.f32.mrb[0].mxu0
    %v4251 = vadd.f32 %v4180, %v4250
    %v4252 = vpop.f32.mrb[0].mxu0
    %v4253 = vadd.f32 %v4182, %v4252
    %v4254 = vpop.f32.mrb[0].mxu0
    %v4255 = vadd.f32 %v4184, %v4254
    %v4256 = vpop.f32.mrb[0].mxu0
    %v4257 = vadd.f32 %v4186, %v4256
    %4258 = vmatprep.mubr.bf16.mxu0 %v1264
    %4259 = vmatmul.mubr.bf16.gmra.mrb[0].mxu0 %v1263
    %v4260 = vpop.f32.mrb[0].mxu0
    %v4261 = vadd.f32 %v4190, %v4260
    %v4262 = vpop.f32.mrb[0].mxu0
    %v4263 = vadd.f32 %v4192, %v4262
    %v4264 = vpop.f32.mrb[0].mxu0
    %v4265 = vadd.f32 %v4194, %v4264
    %v4266 = vpop.f32.mrb[0].mxu0
    %v4267 = vadd.f32 %v4196, %v4266
    %4268 = vmatprep.mubr.bf16.mxu0 %v1268
    %4269 = vmatmul.mubr.bf16.gmra.mrb[0].mxu0 %v1267
    %v4270 = vpop.f32.mrb[0].mxu0
    %v4271 = vadd.f32 %v4200, %v4270
    %v4272 = vpop.f32.mrb[0].mxu0
    %v4273 = vadd.f32 %v4202, %v4272
    %v4274 = vpop.f32.mrb[0].mxu0
    %v4275 = vadd.f32 %v4204, %v4274
    %v4276 = vpop.f32.mrb[0].mxu0
    %v4277 = vadd.f32 %v4206, %v4276
    %4278 = vmatprep.mubr.bf16.mxu0 %v1272
    %4279 = vmatmul.mubr.bf16.gmra.mrb[0].mxu0 %v1271
    %v4280 = vpop.f32.mrb[0].mxu0
    %v4281 = vadd.f32 %v4210, %v4280
    %v4282 = vpop.f32.mrb[0].mxu0
    %v4283 = vadd.f32 %v4212, %v4282
    %v4284 = vpop.f32.mrb[0].mxu0
    %v4285 = vpop.f32.mrb[0].mxu0
    %4286 = vdwg.mxu0
    %4287 = vmatprep.subr.bf16.mxu0 %v2820
    %4288 = vmatpush1.bf16.msra.mxu0 %v2819
    %4289 = vmatprep.subr.bf16.mxu0 %v2832
    %4290 = vmatpush1.bf16.msra.mxu0 %v2831
    %4291 = vmatprep.subr.bf16.mxu0 %v2844
    %4292 = vmatpush1.bf16.msra.mxu0 %v2843
    %4293 = vmatprep.subr.bf16.mxu0 %v2856
    %4294 = vmatpush1.bf16.msra.mxu0 %v2855
    %4295 = vmatprep.subr.bf16.mxu0 %v2868
    %4296 = vmatpush1.bf16.msra.mxu0 %v2867
    %4297 = vmatprep.subr.bf16.mxu0 %v2880
    %4298 = vmatpush1.bf16.msra.mxu0 %v2879
    %4299 = vmatprep.subr.bf16.mxu0 %v2892
    %4300 = vmatpush1.bf16.msra.mxu0 %v2891
    %4301 = vmatprep.subr.bf16.mxu0 %v2904
    %4302 = vmatpush1.bf16.msra.mxu0 %v2903
    %4303 = vmatprep.subr.bf16.mxu0 %v2916
    %4304 = vmatpush1.bf16.msra.mxu0 %v2915
    %4305 = vmatprep.subr.bf16.mxu0 %v2928
    %4306 = vmatpush1.bf16.msra.mxu0 %v2927
    %4307 = vmatprep.subr.bf16.mxu0 %v2940
    %4308 = vmatpush1.bf16.msra.mxu0 %v2939
    %4309 = vmatprep.subr.bf16.mxu0 %v2952
    %4310 = vmatpush1.bf16.msra.mxu0 %v2951
    %4311 = vmatprep.subr.bf16.mxu0 %v2964
    %4312 = vmatpush1.bf16.msra.mxu0 %v2963
    %4313 = vmatprep.subr.bf16.mxu0 %v2976
    %4314 = vmatpush1.bf16.msra.mxu0 %v2975
    %4315 = vmatprep.subr.bf16.mxu0 %v2988
    %4316 = vmatpush1.bf16.msra.mxu0 %v2987
    %4317 = vmatprep.subr.bf16.mxu0 %v3000
    %4318 = vmatpush1.bf16.msra.mxu0 %v2999
    %4319 = vmatprep.mubr.bf16.mxu0 %v1258
    %4320 = vmatmul.mubr.bf16.gmra.mrb[0].mxu0 %v1257
    %v4321 = vpop.f32.mrb[0].mxu0
    %v4322 = vadd.f32 0.0, %v4321
    %v4323 = vpop.f32.mrb[0].mxu0
    %v4324 = vadd.f32 0.0, %v4323
    %v4325 = vpop.f32.mrb[0].mxu0
    %v4326 = vadd.f32 0.0, %v4325
    %v4327 = vpop.f32.mrb[0].mxu0
    %v4328 = vadd.f32 0.0, %v4327
    %4329 = vmatprep.mubr.bf16.mxu0 %v1262
    %4330 = vmatmul.mubr.bf16.gmra.mrb[0].mxu0 %v1261
    %v4331 = vpop.f32.mrb[0].mxu0
    %v4332 = vadd.f32 0.0, %v4331
    %v4333 = vpop.f32.mrb[0].mxu0
    %v4334 = vadd.f32 0.0, %v4333
    %v4335 = vpop.f32.mrb[0].mxu0
    %v4336 = vadd.f32 0.0, %v4335
    %v4337 = vpop.f32.mrb[0].mxu0
    %v4338 = vadd.f32 0.0, %v4337
    %4339 = vmatprep.mubr.bf16.mxu0 %v1266
    %4340 = vmatmul.mubr.bf16.gmra.mrb[0].mxu0 %v1265
    %v4341 = vpop.f32.mrb[0].mxu0
    %v4342 = vadd.f32 0.0, %v4341
    %v4343 = vpop.f32.mrb[0].mxu0
    %v4344 = vadd.f32 0.0, %v4343
    %v4345 = vpop.f32.mrb[0].mxu0
    %v4346 = vadd.f32 0.0, %v4345
    %v4347 = vpop.f32.mrb[0].mxu0
    %v4348 = vadd.f32 0.0, %v4347
    %4349 = vmatprep.mubr.bf16.mxu0 %v1270
    %4350 = vmatmul.mubr.bf16.gmra.mrb[0].mxu0 %v1269
    %v4351 = vpop.f32.mrb[0].mxu0
    %v4352 = vadd.f32 0.0, %v4351
    %v4353 = vpop.f32.mrb[0].mxu0
    %v4354 = vadd.f32 0.0, %v4353
    %v4355 = vpop.f32.mrb[0].mxu0
    %v4356 = vpop.f32.mrb[0].mxu0
    %4357 = vdwg.mxu0
    %4358 = vmatprep.subr.bf16.mxu0 %v3012
    %4359 = vmatpush1.bf16.msra.mxu0 %v3011
    %4360 = vmatprep.subr.bf16.mxu0 %v3024
    %4361 = vmatpush1.bf16.msra.mxu0 %v3023
    %4362 = vmatprep.subr.bf16.mxu0 %v3036
    %4363 = vmatpush1.bf16.msra.mxu0 %v3035
    %4364 = vmatprep.subr.bf16.mxu0 %v3048
    %4365 = vmatpush1.bf16.msra.mxu0 %v3047
    %4366 = vmatprep.subr.bf16.mxu0 %v3060
    %4367 = vmatpush1.bf16.msra.mxu0 %v3059
    %4368 = vmatprep.subr.bf16.mxu0 %v3072
    %4369 = vmatpush1.bf16.msra.mxu0 %v3071
    %4370 = vmatprep.subr.bf16.mxu0 %v3084
    %4371 = vmatpush1.bf16.msra.mxu0 %v3083
    %4372 = vmatprep.subr.bf16.mxu0 %v3096
    %4373 = vmatpush1.bf16.msra.mxu0 %v3095
    %4374 = vmatprep.subr.bf16.mxu0 %v3108
    %4375 = vmatpush1.bf16.msra.mxu0 %v3107
    %4376 = vmatprep.subr.bf16.mxu0 %v3120
    %4377 = vmatpush1.bf16.msra.mxu0 %v3119
    %4378 = vmatprep.subr.bf16.mxu0 %v3132
    %4379 = vmatpush1.bf16.msra.mxu0 %v3131
    %4380 = vmatprep.subr.bf16.mxu0 %v3144
    %4381 = vmatpush1.bf16.msra.mxu0 %v3143
    %4382 = vmatprep.subr.bf16.mxu0 %v3156
    %4383 = vmatpush1.bf16.msra.mxu0 %v3155
    %4384 = vmatprep.subr.bf16.mxu0 %v3168
    %4385 = vmatpush1.bf16.msra.mxu0 %v3167
    %4386 = vmatprep.subr.bf16.mxu0 %v3180
    %4387 = vmatpush1.bf16.msra.mxu0 %v3179
    %4388 = vmatprep.subr.bf16.mxu0 %v3192
    %4389 = vmatpush1.bf16.msra.mxu0 %v3191
    %4390 = vmatprep.mubr.bf16.mxu0 %v1260
    %4391 = vmatmul.mubr.bf16.gmra.mrb[0].mxu0 %v1259
    %v4392 = vpop.f32.mrb[0].mxu0
    %v4393 = vadd.f32 %v4322, %v4392
    %v4394 = vpop.f32.mrb[0].mxu0
    %v4395 = vadd.f32 %v4324, %v4394
    %v4396 = vpop.f32.mrb[0].mxu0
    %v4397 = vadd.f32 %v4326, %v4396
    %v4398 = vpop.f32.mrb[0].mxu0
    %v4399 = vadd.f32 %v4328, %v4398
    %4400 = vmatprep.mubr.bf16.mxu0 %v1264
    %4401 = vmatmul.mubr.bf16.gmra.mrb[0].mxu0 %v1263
    %v4402 = vpop.f32.mrb[0].mxu0
    %v4403 = vadd.f32 %v4332, %v4402
    %v4404 = vpop.f32.mrb[0].mxu0
    %v4405 = vadd.f32 %v4334, %v4404
    %v4406 = vpop.f32.mrb[0].mxu0
    %v4407 = vadd.f32 %v4336, %v4406
    %v4408 = vpop.f32.mrb[0].mxu0
    %v4409 = vadd.f32 %v4338, %v4408
    %4410 = vmatprep.mubr.bf16.mxu0 %v1268
    %4411 = vmatmul.mubr.bf16.gmra.mrb[0].mxu0 %v1267
    %v4412 = vpop.f32.mrb[0].mxu0
    %v4413 = vadd.f32 %v4342, %v4412
    %v4414 = vpop.f32.mrb[0].mxu0
    %v4415 = vadd.f32 %v4344, %v4414
    %v4416 = vpop.f32.mrb[0].mxu0
    %v4417 = vadd.f32 %v4346, %v4416
    %v4418 = vpop.f32.mrb[0].mxu0
    %v4419 = vadd.f32 %v4348, %v4418
    %4420 = vmatprep.mubr.bf16.mxu0 %v1272
    %4421 = vmatmul.mubr.bf16.gmra.mrb[0].mxu0 %v1271
    %v4422 = vpop.f32.mrb[0].mxu0
    %v4423 = vadd.f32 %v4352, %v4422
    %v4424 = vpop.f32.mrb[0].mxu0
    %v4425 = vadd.f32 %v4354, %v4424
    %v4426 = vpop.f32.mrb[0].mxu0
    %v4427 = vpop.f32.mrb[0].mxu0
    %4428 = vdwg.mxu0
    %4429 = vst [vmem:[#allocation3] sm:$0xff] 0.0
    %4430 = vst [vmem:[#allocation3 + $0x8] sm:$0xff] 0.0
    %4431 = vst [vmem:[#allocation3 + $0x10] sm:$0xff] 0.0
    %4432 = vst [vmem:[#allocation3 + $0x18] sm:$0xff] 0.0
    %4433 = vst [vmem:[#allocation3 + $0x20] sm:$0xff] 0.0
    %4434 = vst [vmem:[#allocation3 + $0x28] sm:$0xff] 0.0
    %4435 = vst [vmem:[#allocation3 + $0x30] sm:$0xff] 0.0
    %4436 = vst [vmem:[#allocation3 + $0x38] sm:$0xff] 0.0
    %4437 = vst [vmem:[#allocation3 + $0x40] sm:$0xff] 0.0
    %4438 = vst [vmem:[#allocation3 + $0x48] sm:$0xff] 0.0
    %4439 = vst [vmem:[#allocation3 + $0x50] sm:$0xff] 0.0
    %4440 = vst [vmem:[#allocation3 + $0x58] sm:$0xff] 0.0
    %4441 = vst [vmem:[#allocation3 + $0x60] sm:$0xff] 0.0
    %4442 = vst [vmem:[#allocation3 + $0x68] sm:$0xff] 0.0
    %4443 = vst [vmem:[#allocation3 + $0x70] sm:$0xff] 0.0
    %4444 = vst [vmem:[#allocation3 + $0x78] sm:$0xff] 0.0
    %4445 = vst [vmem:[#allocation3 + $0x80] sm:$0xff] 0.0
    %4446 = vst [vmem:[#allocation3 + $0x88] sm:$0xff] 0.0
    %4447 = vst [vmem:[#allocation3 + $0x90] sm:$0xff] 0.0
    %4448 = vst [vmem:[#allocation3 + $0x98] sm:$0xff] 0.0
    %4449 = vst [vmem:[#allocation3 + $0xa0] sm:$0xff] 0.0
    %4450 = vst [vmem:[#allocation3 + $0xa8] sm:$0xff] 0.0
    %4451 = vst [vmem:[#allocation3 + $0xb0] sm:$0xff] 0.0
    %4452 = vst [vmem:[#allocation3 + $0xb8] sm:$0xff] 0.0
    %4453 = vst [vmem:[#allocation3 + $0xc0] sm:$0xff] 0.0
    %4454 = vst [vmem:[#allocation3 + $0xc8] sm:$0xff] 0.0
    %4455 = vst [vmem:[#allocation3 + $0xd0] sm:$0xff] 0.0
    %4456 = vst [vmem:[#allocation3 + $0xd8] sm:$0xff] 0.0
    %4457 = vst [vmem:[#allocation3 + $0xe0] sm:$0xff] 0.0
    %4458 = vst [vmem:[#allocation3 + $0xe8] sm:$0xff] 0.0
    %v4459 = vld [vmem:[#allocation3] sm:$0xff]
    %v4460 = vld [vmem:[#allocation3 + $0x8] sm:$0xff]
    %v4461 = vld [vmem:[#allocation3 + $0x10] sm:$0xff]
    %v4462 = vld [vmem:[#allocation3 + $0x18] sm:$0xff]
    %v4463 = vld [vmem:[#allocation3 + $0x20] sm:$0xff]
    %v4464 = vld [vmem:[#allocation3 + $0x28] sm:$0xff]
    %v4465 = vld [vmem:[#allocation3 + $0x30] sm:$0xff]
    %v4466 = vld [vmem:[#allocation3 + $0x38] sm:$0xff]
    %v4467 = vld [vmem:[#allocation3 + $0x40] sm:$0xff]
    %v4468 = vld [vmem:[#allocation3 + $0x48] sm:$0xff]
    %v4469 = vld [vmem:[#allocation3 + $0x50] sm:$0xff]
    %v4470 = vld [vmem:[#allocation3 + $0x58] sm:$0xff]
    %v4471 = vld [vmem:[#allocation3 + $0x60] sm:$0xff]
    %v4472 = vld [vmem:[#allocation3 + $0x68] sm:$0xff]
    %v4473 = vld [vmem:[#allocation3 + $0x70] sm:$0xff]
    %v4474 = vld [vmem:[#allocation3 + $0x78] sm:$0xff]
    %v4475 = vld [vmem:[#allocation3 + $0x80] sm:$0xff]
    %v4476 = vld [vmem:[#allocation3 + $0x88] sm:$0xff]
    %v4477 = vld [vmem:[#allocation3 + $0x90] sm:$0xff]
    %v4478 = vld [vmem:[#allocation3 + $0x98] sm:$0xff]
    %v4479 = vld [vmem:[#allocation3 + $0xa0] sm:$0xff]
    %v4480 = vadd.f32 %v4459, %v3683
    %v4481 = vadd.f32 %v4460, %v3685
    %v4482 = vadd.f32 %v4461, %v3825
    %v4483 = vadd.f32 %v4462, %v3687
    %v4484 = vadd.f32 %v4463, %v3689
    %v4485 = vadd.f32 %v4464, %v3829
    %v4486 = vadd.f32 %v4465, %v3693
    %v4487 = vadd.f32 %v4466, %v3695
    %v4488 = vadd.f32 %v4467, %v3835
    %v4489 = vadd.f32 %v4468, %v3697
    %v4490 = vadd.f32 %v4469, %v3699
    %v4491 = vadd.f32 %v4470, %v3839
    %v4492 = vadd.f32 %v4471, %v3703
    %v4493 = vadd.f32 %v4472, %v3705
    %v4494 = vadd.f32 %v4473, %v3845
    %v4495 = vadd.f32 %v4474, %v3707
    %v4496 = vadd.f32 %v4475, %v3709
    %v4497 = vadd.f32 %v4476, %v3849
    %v4498 = vadd.f32 %v4477, %v3713
    %v4499 = vadd.f32 %v4478, %v3715
    %v4500 = vadd.f32 %v4479, %v3855
    %4501 = vst [vmem:[#allocation3] sm:$0xff] %v4480
    %4502 = vst [vmem:[#allocation3 + $0x8] sm:$0xff] %v4481
    %4503 = vst [vmem:[#allocation3 + $0x10] sm:$0xff] %v4482
    %4504 = vst [vmem:[#allocation3 + $0x18] sm:$0xff] %v4483
    %4505 = vst [vmem:[#allocation3 + $0x20] sm:$0xff] %v4484
    %4506 = vst [vmem:[#allocation3 + $0x28] sm:$0xff] %v4485
    %4507 = vst [vmem:[#allocation3 + $0x30] sm:$0xff] %v4486
    %4508 = vst [vmem:[#allocation3 + $0x38] sm:$0xff] %v4487
    %4509 = vst [vmem:[#allocation3 + $0x40] sm:$0xff] %v4488
    %4510 = vst [vmem:[#allocation3 + $0x48] sm:$0xff] %v4489
    %4511 = vst [vmem:[#allocation3 + $0x50] sm:$0xff] %v4490
    %4512 = vst [vmem:[#allocation3 + $0x58] sm:$0xff] %v4491
    %4513 = vst [vmem:[#allocation3 + $0x60] sm:$0xff] %v4492
    %4514 = vst [vmem:[#allocation3 + $0x68] sm:$0xff] %v4493
    %4515 = vst [vmem:[#allocation3 + $0x70] sm:$0xff] %v4494
    %4516 = vst [vmem:[#allocation3 + $0x78] sm:$0xff] %v4495
    %4517 = vst [vmem:[#allocation3 + $0x80] sm:$0xff] %v4496
    %4518 = vst [vmem:[#allocation3 + $0x88] sm:$0xff] %v4497
    %4519 = vst [vmem:[#allocation3 + $0x90] sm:$0xff] %v4498
    %4520 = vst [vmem:[#allocation3 + $0x98] sm:$0xff] %v4499
    %4521 = vst [vmem:[#allocation3 + $0xa0] sm:$0xff] %v4500
    %v4522 = vld [vmem:[#allocation3 + $0x18] sm:$0xff]
    %v4523 = vld [vmem:[#allocation3 + $0x20] sm:$0xff]
    %v4524 = vld [vmem:[#allocation3 + $0x28] sm:$0xff]
    %v4525 = vld [vmem:[#allocation3 + $0x30] sm:$0xff]
    %v4526 = vld [vmem:[#allocation3 + $0x38] sm:$0xff]
    %v4527 = vld [vmem:[#allocation3 + $0x40] sm:$0xff]
    %v4528 = vld [vmem:[#allocation3 + $0x48] sm:$0xff]
    %v4529 = vld [vmem:[#allocation3 + $0x50] sm:$0xff]
    %v4530 = vld [vmem:[#allocation3 + $0x58] sm:$0xff]
    %v4531 = vld [vmem:[#allocation3 + $0x60] sm:$0xff]
    %v4532 = vld [vmem:[#allocation3 + $0x68] sm:$0xff]
    %v4533 = vld [vmem:[#allocation3 + $0x70] sm:$0xff]
    %v4534 = vld [vmem:[#allocation3 + $0x78] sm:$0xff]
    %v4535 = vld [vmem:[#allocation3 + $0x80] sm:$0xff]
    %v4536 = vld [vmem:[#allocation3 + $0x88] sm:$0xff]
    %v4537 = vld [vmem:[#allocation3 + $0x90] sm:$0xff]
    %v4538 = vld [vmem:[#allocation3 + $0x98] sm:$0xff]
    %v4539 = vld [vmem:[#allocation3 + $0xa0] sm:$0xff]
    %v4540 = vld [vmem:[#allocation3 + $0xa8] sm:$0xff]
    %v4541 = vld [vmem:[#allocation3 + $0xb0] sm:$0xff]
    %v4542 = vld [vmem:[#allocation3 + $0xb8] sm:$0xff]
    %v4543 = vadd.f32 %v4522, %v3827
    %v4544 = vadd.f32 %v4523, %v3967
    %v4545 = vadd.f32 %v4524, %v3969
    %v4546 = vadd.f32 %v4525, %v3831
    %v4547 = vadd.f32 %v4526, %v3971
    %v4548 = vadd.f32 %v4527, %v3973
    %v4549 = vadd.f32 %v4528, %v3837
    %v4550 = vadd.f32 %v4529, %v3977
    %v4551 = vadd.f32 %v4530, %v3979
    %v4552 = vadd.f32 %v4531, %v3841
    %v4553 = vadd.f32 %v4532, %v3981
    %v4554 = vadd.f32 %v4533, %v3983
    %v4555 = vadd.f32 %v4534, %v3847
    %v4556 = vadd.f32 %v4535, %v3987
    %v4557 = vadd.f32 %v4536, %v3989
    %v4558 = vadd.f32 %v4537, %v3851
    %v4559 = vadd.f32 %v4538, %v3991
    %v4560 = vadd.f32 %v4539, %v3993
    %v4561 = vadd.f32 %v4540, %v3857
    %v4562 = vadd.f32 %v4541, %v3997
    %v4563 = vadd.f32 %v4542, %v3999
    %4564 = vst [vmem:[#allocation3 + $0x18] sm:$0xff] %v4543
    %4565 = vst [vmem:[#allocation3 + $0x20] sm:$0xff] %v4544
    %4566 = vst [vmem:[#allocation3 + $0x28] sm:$0xff] %v4545
    %4567 = vst [vmem:[#allocation3 + $0x30] sm:$0xff] %v4546
    %4568 = vst [vmem:[#allocation3 + $0x38] sm:$0xff] %v4547
    %4569 = vst [vmem:[#allocation3 + $0x40] sm:$0xff] %v4548
    %4570 = vst [vmem:[#allocation3 + $0x48] sm:$0xff] %v4549
    %4571 = vst [vmem:[#allocation3 + $0x50] sm:$0xff] %v4550
    %4572 = vst [vmem:[#allocation3 + $0x58] sm:$0xff] %v4551
    %4573 = vst [vmem:[#allocation3 + $0x60] sm:$0xff] %v4552
    %4574 = vst [vmem:[#allocation3 + $0x68] sm:$0xff] %v4553
    %4575 = vst [vmem:[#allocation3 + $0x70] sm:$0xff] %v4554
    %4576 = vst [vmem:[#allocation3 + $0x78] sm:$0xff] %v4555
    %4577 = vst [vmem:[#allocation3 + $0x80] sm:$0xff] %v4556
    %4578 = vst [vmem:[#allocation3 + $0x88] sm:$0xff] %v4557
    %4579 = vst [vmem:[#allocation3 + $0x90] sm:$0xff] %v4558
    %4580 = vst [vmem:[#allocation3 + $0x98] sm:$0xff] %v4559
    %4581 = vst [vmem:[#allocation3 + $0xa0] sm:$0xff] %v4560
    %4582 = vst [vmem:[#allocation3 + $0xa8] sm:$0xff] %v4561
    %4583 = vst [vmem:[#allocation3 + $0xb0] sm:$0xff] %v4562
    %4584 = vst [vmem:[#allocation3 + $0xb8] sm:$0xff] %v4563
    %v4585 = vld [vmem:[#allocation3 + $0x30] sm:$0xff]
    %v4586 = vld [vmem:[#allocation3 + $0x38] sm:$0xff]
    %v4587 = vld [vmem:[#allocation3 + $0x40] sm:$0xff]
    %v4588 = vld [vmem:[#allocation3 + $0x48] sm:$0xff]
    %v4589 = vld [vmem:[#allocation3 + $0x50] sm:$0xff]
    %v4590 = vld [vmem:[#allocation3 + $0x58] sm:$0xff]
    %v4591 = vld [vmem:[#allocation3 + $0x60] sm:$0xff]
    %v4592 = vld [vmem:[#allocation3 + $0x68] sm:$0xff]
    %v4593 = vld [vmem:[#allocation3 + $0x70] sm:$0xff]
    %v4594 = vld [vmem:[#allocation3 + $0x78] sm:$0xff]
    %v4595 = vld [vmem:[#allocation3 + $0x80] sm:$0xff]
    %v4596 = vld [vmem:[#allocation3 + $0x88] sm:$0xff]
    %v4597 = vld [vmem:[#allocation3 + $0x90] sm:$0xff]
    %v4598 = vld [vmem:[#allocation3 + $0x98] sm:$0xff]
    %v4599 = vld [vmem:[#allocation3 + $0xa0] sm:$0xff]
    %v4600 = vld [vmem:[#allocation3 + $0xa8] sm:$0xff]
    %v4601 = vld [vmem:[#allocation3 + $0xb0] sm:$0xff]
    %v4602 = vld [vmem:[#allocation3 + $0xb8] sm:$0xff]
    %v4603 = vld [vmem:[#allocation3 + $0xc0] sm:$0xff]
    %v4604 = vld [vmem:[#allocation3 + $0xc8] sm:$0xff]
    %v4605 = vld [vmem:[#allocation3 + $0xd0] sm:$0xff]
    %v4606 = vadd.f32 %v4585, %v4109
    %v4607 = vadd.f32 %v4586, %v4111
    %v4608 = vadd.f32 %v4587, %v4251
    %v4609 = vadd.f32 %v4588, %v4113
    %v4610 = vadd.f32 %v4589, %v4115
    %v4611 = vadd.f32 %v4590, %v4255
    %v4612 = vadd.f32 %v4591, %v4119
    %v4613 = vadd.f32 %v4592, %v4121
    %v4614 = vadd.f32 %v4593, %v4261
    %v4615 = vadd.f32 %v4594, %v4123
    %v4616 = vadd.f32 %v4595, %v4125
    %v4617 = vadd.f32 %v4596, %v4265
    %v4618 = vadd.f32 %v4597, %v4129
    %v4619 = vadd.f32 %v4598, %v4131
    %v4620 = vadd.f32 %v4599, %v4271
    %v4621 = vadd.f32 %v4600, %v4133
    %v4622 = vadd.f32 %v4601, %v4135
    %v4623 = vadd.f32 %v4602, %v4275
    %v4624 = vadd.f32 %v4603, %v4139
    %v4625 = vadd.f32 %v4604, %v4141
    %v4626 = vadd.f32 %v4605, %v4281
    %4627 = vst [vmem:[#allocation3 + $0x30] sm:$0xff] %v4606
    %4628 = vst [vmem:[#allocation3 + $0x38] sm:$0xff] %v4607
    %4629 = vst [vmem:[#allocation3 + $0x40] sm:$0xff] %v4608
    %4630 = vst [vmem:[#allocation3 + $0x48] sm:$0xff] %v4609
    %4631 = vst [vmem:[#allocation3 + $0x50] sm:$0xff] %v4610
    %4632 = vst [vmem:[#allocation3 + $0x58] sm:$0xff] %v4611
    %4633 = vst [vmem:[#allocation3 + $0x60] sm:$0xff] %v4612
    %4634 = vst [vmem:[#allocation3 + $0x68] sm:$0xff] %v4613
    %4635 = vst [vmem:[#allocation3 + $0x70] sm:$0xff] %v4614
    %4636 = vst [vmem:[#allocation3 + $0x78] sm:$0xff] %v4615
    %4637 = vst [vmem:[#allocation3 + $0x80] sm:$0xff] %v4616
    %4638 = vst [vmem:[#allocation3 + $0x88] sm:$0xff] %v4617
    %4639 = vst [vmem:[#allocation3 + $0x90] sm:$0xff] %v4618
    %4640 = vst [vmem:[#allocation3 + $0x98] sm:$0xff] %v4619
    %4641 = vst [vmem:[#allocation3 + $0xa0] sm:$0xff] %v4620
    %4642 = vst [vmem:[#allocation3 + $0xa8] sm:$0xff] %v4621
    %4643 = vst [vmem:[#allocation3 + $0xb0] sm:$0xff] %v4622
    %4644 = vst [vmem:[#allocation3 + $0xb8] sm:$0xff] %v4623
    %4645 = vst [vmem:[#allocation3 + $0xc0] sm:$0xff] %v4624
    %4646 = vst [vmem:[#allocation3 + $0xc8] sm:$0xff] %v4625
    %4647 = vst [vmem:[#allocation3 + $0xd0] sm:$0xff] %v4626
    %v4648 = vld [vmem:[#allocation3 + $0x48] sm:$0xff]
    %v4649 = vld [vmem:[#allocation3 + $0x50] sm:$0xff]
    %v4650 = vld [vmem:[#allocation3 + $0x58] sm:$0xff]
    %v4651 = vld [vmem:[#allocation3 + $0x60] sm:$0xff]
    %v4652 = vld [vmem:[#allocation3 + $0x68] sm:$0xff]
    %v4653 = vld [vmem:[#allocation3 + $0x70] sm:$0xff]
    %v4654 = vld [vmem:[#allocation3 + $0x78] sm:$0xff]
    %v4655 = vld [vmem:[#allocation3 + $0x80] sm:$0xff]
    %v4656 = vld [vmem:[#allocation3 + $0x88] sm:$0xff]
    %v4657 = vld [vmem:[#allocation3 + $0x90] sm:$0xff]
    %v4658 = vld [vmem:[#allocation3 + $0x98] sm:$0xff]
    %v4659 = vld [vmem:[#allocation3 + $0xa0] sm:$0xff]
    %v4660 = vld [vmem:[#allocation3 + $0xa8] sm:$0xff]
    %v4661 = vld [vmem:[#allocation3 + $0xb0] sm:$0xff]
    %v4662 = vld [vmem:[#allocation3 + $0xb8] sm:$0xff]
    %v4663 = vld [vmem:[#allocation3 + $0xc0] sm:$0xff]
    %v4664 = vld [vmem:[#allocation3 + $0xc8] sm:$0xff]
    %v4665 = vld [vmem:[#allocation3 + $0xd0] sm:$0xff]
    %v4666 = vld [vmem:[#allocation3 + $0xd8] sm:$0xff]
    %v4667 = vld [vmem:[#allocation3 + $0xe0] sm:$0xff]
    %v4668 = vld [vmem:[#allocation3 + $0xe8] sm:$0xff]
    %v4669 = vadd.f32 %v4648, %v4253
    %v4670 = vadd.f32 %v4649, %v4393
    %v4671 = vadd.f32 %v4650, %v4395
    %v4672 = vadd.f32 %v4651, %v4257
    %v4673 = vadd.f32 %v4652, %v4397
    %v4674 = vadd.f32 %v4653, %v4399
    %v4675 = vadd.f32 %v4654, %v4263
    %v4676 = vadd.f32 %v4655, %v4403
    %v4677 = vadd.f32 %v4656, %v4405
    %v4678 = vadd.f32 %v4657, %v4267
    %v4679 = vadd.f32 %v4658, %v4407
    %v4680 = vadd.f32 %v4659, %v4409
    %v4681 = vadd.f32 %v4660, %v4273
    %v4682 = vadd.f32 %v4661, %v4413
    %v4683 = vadd.f32 %v4662, %v4415
    %v4684 = vadd.f32 %v4663, %v4277
    %v4685 = vadd.f32 %v4664, %v4417
    %v4686 = vadd.f32 %v4665, %v4419
    %v4687 = vadd.f32 %v4666, %v4283
    %v4688 = vadd.f32 %v4667, %v4423
    %v4689 = vadd.f32 %v4668, %v4425
    %4690 = vst [vmem:[#allocation3 + $0x48] sm:$0xff] %v4669
    %4691 = vst [vmem:[#allocation3 + $0x50] sm:$0xff] %v4670
    %4692 = vst [vmem:[#allocation3 + $0x58] sm:$0xff] %v4671
    %4693 = vst [vmem:[#allocation3 + $0x60] sm:$0xff] %v4672
    %4694 = vst [vmem:[#allocation3 + $0x68] sm:$0xff] %v4673
    %4695 = vst [vmem:[#allocation3 + $0x70] sm:$0xff] %v4674
    %4696 = vst [vmem:[#allocation3 + $0x78] sm:$0xff] %v4675
    %4697 = vst [vmem:[#allocation3 + $0x80] sm:$0xff] %v4676
    %4698 = vst [vmem:[#allocation3 + $0x88] sm:$0xff] %v4677
    %4699 = vst [vmem:[#allocation3 + $0x90] sm:$0xff] %v4678
    %4700 = vst [vmem:[#allocation3 + $0x98] sm:$0xff] %v4679
    %4701 = vst [vmem:[#allocation3 + $0xa0] sm:$0xff] %v4680
    %4702 = vst [vmem:[#allocation3 + $0xa8] sm:$0xff] %v4681
    %4703 = vst [vmem:[#allocation3 + $0xb0] sm:$0xff] %v4682
    %4704 = vst [vmem:[#allocation3 + $0xb8] sm:$0xff] %v4683
    %4705 = vst [vmem:[#allocation3 + $0xc0] sm:$0xff] %v4684
    %4706 = vst [vmem:[#allocation3 + $0xc8] sm:$0xff] %v4685
    %4707 = vst [vmem:[#allocation3 + $0xd0] sm:$0xff] %v4686
    %4708 = vst [vmem:[#allocation3 + $0xd8] sm:$0xff] %v4687
    %4709 = vst [vmem:[#allocation3 + $0xe0] sm:$0xff] %v4688
    %4710 = vst [vmem:[#allocation3 + $0xe8] sm:$0xff] %v4689
    %v4711 = vld [vmem:[#allocation3] sm:$0xff]
    %v4712 = vld [vmem:[#allocation3 + $0x8] sm:$0xff]
    %v4713 = vld [vmem:[#allocation3 + $0x10] sm:$0xff]
    %v4714 = vld [vmem:[#allocation3 + $0x18] sm:$0xff]
    %v4715 = vld [vmem:[#allocation3 + $0x20] sm:$0xff]
    %v4716 = vld [vmem:[#allocation3 + $0x28] sm:$0xff]
    %v4717 = vld [vmem:[#allocation3 + $0x30] sm:$0xff]
    %v4718 = vld [vmem:[#allocation3 + $0x38] sm:$0xff]
    %v4719 = vld [vmem:[#allocation3 + $0x40] sm:$0xff]
    %v4720 = vld [vmem:[#allocation3 + $0x48] sm:$0xff]
    %v4721 = vld [vmem:[#allocation3 + $0x50] sm:$0xff]
    %v4722 = vld [vmem:[#allocation3 + $0x58] sm:$0xff]
    %v4723 = vld [vmem:[#allocation3 + $0x60] sm:$0xff]
    %v4724 = vld [vmem:[#allocation3 + $0x68] sm:$0xff]
    %v4725 = vld [vmem:[#allocation3 + $0x70] sm:$0xff]
    %v4726 = vld [vmem:[#allocation3 + $0x78] sm:$0xff]
    %v4727 = vld [vmem:[#allocation3 + $0x80] sm:$0xff]
    %v4728 = vld [vmem:[#allocation3 + $0x88] sm:$0xff]
    %v4729 = vld [vmem:[#allocation3 + $0x90] sm:$0xff]
    %v4730 = vld [vmem:[#allocation3 + $0x98] sm:$0xff]
    %v4731 = vld [vmem:[#allocation3 + $0xa0] sm:$0xff]
    %v4732 = vld [vmem:[#allocation3 + $0xa8] sm:$0xff]
    %v4733 = vld [vmem:[#allocation3 + $0xb0] sm:$0xff]
    %v4734 = vld [vmem:[#allocation3 + $0xb8] sm:$0xff]
    %v4735 = vld [vmem:[#allocation3 + $0xc0] sm:$0xff]
    %v4736 = vld [vmem:[#allocation3 + $0xc8] sm:$0xff]
    %v4737 = vld [vmem:[#allocation3 + $0xd0] sm:$0xff]
    %v4738 = vld [vmem:[#allocation3 + $0xd8] sm:$0xff]
    %v4739 = vld [vmem:[#allocation3 + $0xe0] sm:$0xff]
    %v4740 = vld [vmem:[#allocation3 + $0xe8] sm:$0xff]
    %v4741 = vld [vmem:[#allocation15] sm:$0x1]
    %v4742 = vld [vmem:[#allocation15 + $0x1] sm:$0x1]
    %v4743 = vlaneseq
    %v4744 = vshrl.u32 %v4743, 7
    %v4745 = vadd.s32 %v4744, 8
    %v4746 = vadd.s32 %v4744, 16
    %v4747 = vadd.s32 %v4744, 24
    %v4748 = vadd.s32 %v4744, 32
    %v4749 = vadd.s32 %v4744, 40
    %v4750 = vadd.s32 %v4744, 48
    %v4751 = vadd.s32 %v4744, 56
    %v4752 = vadd.s32 %v4744, 64
    %v4753 = vadd.s32 %v4744, 72
    %vm4754 = vcmp.lt.s32.totalorder %v4744, 0
    %v4755 = vsub.s32 0, %v4744
    %v4756 = vsel %vm4754, %v4755, %v4744
    %v4757 = vshrl.u32 %v4756, 3
    %v4758 = vand.u32 %v4756, 7
    %v4759 = vsub.s32 0, %v4758
    %v4760 = vsel %vm4754, %v4759, %v4758
    %vm4761 = vcmp.lt.s32.totalorder %v4745, 0
    %v4762 = vsub.s32 0, %v4745
    %v4763 = vsel %vm4761, %v4762, %v4745
    %v4764 = vshrl.u32 %v4763, 3
    %v4765 = vand.u32 %v4763, 7
    %v4766 = vsub.s32 0, %v4765
    %v4767 = vsel %vm4761, %v4766, %v4765
    %vm4768 = vcmp.lt.s32.totalorder %v4746, 0
    %v4769 = vsub.s32 0, %v4746
    %v4770 = vsel %vm4768, %v4769, %v4746
    %v4771 = vshrl.u32 %v4770, 3
    %v4772 = vand.u32 %v4770, 7
    %v4773 = vsub.s32 0, %v4772
    %v4774 = vsel %vm4768, %v4773, %v4772
    %vm4775 = vcmp.lt.s32.totalorder %v4747, 0
    %v4776 = vsub.s32 0, %v4747
    %v4777 = vsel %vm4775, %v4776, %v4747
    %v4778 = vshrl.u32 %v4777, 3
    %v4779 = vand.u32 %v4777, 7
    %v4780 = vsub.s32 0, %v4779
    %v4781 = vsel %vm4775, %v4780, %v4779
    %vm4782 = vcmp.lt.s32.totalorder %v4748, 0
    %v4783 = vsub.s32 0, %v4748
    %v4784 = vsel %vm4782, %v4783, %v4748
    %v4785 = vshrl.u32 %v4784, 3
    %v4786 = vand.u32 %v4784, 7
    %v4787 = vsub.s32 0, %v4786
    %v4788 = vsel %vm4782, %v4787, %v4786
    %vm4789 = vcmp.lt.s32.totalorder %v4749, 0
    %v4790 = vsub.s32 0, %v4749
    %v4791 = vsel %vm4789, %v4790, %v4749
    %v4792 = vshrl.u32 %v4791, 3
    %v4793 = vand.u32 %v4791, 7
    %v4794 = vsub.s32 0, %v4793
    %v4795 = vsel %vm4789, %v4794, %v4793
    %vm4796 = vcmp.lt.s32.totalorder %v4750, 0
    %v4797 = vsub.s32 0, %v4750
    %v4798 = vsel %vm4796, %v4797, %v4750
    %v4799 = vshrl.u32 %v4798, 3
    %v4800 = vand.u32 %v4798, 7
    %v4801 = vsub.s32 0, %v4800
    %v4802 = vsel %vm4796, %v4801, %v4800
    %vm4803 = vcmp.lt.s32.totalorder %v4751, 0
    %v4804 = vsub.s32 0, %v4751
    %v4805 = vsel %vm4803, %v4804, %v4751
    %v4806 = vshrl.u32 %v4805, 3
    %v4807 = vand.u32 %v4805, 7
    %v4808 = vsub.s32 0, %v4807
    %v4809 = vsel %vm4803, %v4808, %v4807
    %vm4810 = vcmp.lt.s32.totalorder %v4752, 0
    %v4811 = vsub.s32 0, %v4752
    %v4812 = vsel %vm4810, %v4811, %v4752
    %v4813 = vshrl.u32 %v4812, 3
    %v4814 = vand.u32 %v4812, 7
    %v4815 = vsub.s32 0, %v4814
    %v4816 = vsel %vm4810, %v4815, %v4814
    %vm4817 = vcmp.lt.s32.totalorder %v4753, 0
    %v4818 = vsub.s32 0, %v4753
    %v4819 = vsel %vm4817, %v4818, %v4753
    %v4820 = vshrl.u32 %v4819, 3
    %v4821 = vand.u32 %v4819, 7
    %v4822 = vsub.s32 0, %v4821
    %v4823 = vsel %vm4817, %v4822, %v4821
    %vm4824 = vcmp.ne.s32.totalorder %v4760, 0
    %vm4825 = vcmp.ne.s32.totalorder %v4767, 0
    %vm4826 = vcmp.ne.s32.totalorder %v4774, 0
    %vm4827 = vcmp.ne.s32.totalorder %v4781, 0
    %vm4828 = vcmp.ne.s32.totalorder %v4788, 0
    %vm4829 = vcmp.ne.s32.totalorder %v4795, 0
    %vm4830 = vcmp.ne.s32.totalorder %v4802, 0
    %vm4831 = vcmp.ne.s32.totalorder %v4809, 0
    %vm4832 = vcmp.ne.s32.totalorder %v4816, 0
    %vm4833 = vcmp.ne.s32.totalorder %v4823, 0
    %vm4834 = vcmp.lt.s32.totalorder %v4760, 0
    %vm4835 = vcmp.lt.s32.totalorder %v4767, 0
    %vm4836 = vcmp.lt.s32.totalorder %v4774, 0
    %vm4837 = vcmp.lt.s32.totalorder %v4781, 0
    %vm4838 = vcmp.lt.s32.totalorder %v4788, 0
    %vm4839 = vcmp.lt.s32.totalorder %v4795, 0
    %vm4840 = vcmp.lt.s32.totalorder %v4802, 0
    %vm4841 = vcmp.lt.s32.totalorder %v4809, 0
    %vm4842 = vcmp.lt.s32.totalorder %v4816, 0
    %vm4843 = vcmp.lt.s32.totalorder %v4823, 0
    %vm4844 = vmand %vm4834, %vm4824
    %vm4845 = vmand %vm4835, %vm4825
    %vm4846 = vmand %vm4836, %vm4826
    %vm4847 = vmand %vm4837, %vm4827
    %vm4848 = vmand %vm4838, %vm4828
    %vm4849 = vmand %vm4839, %vm4829
    %vm4850 = vmand %vm4840, %vm4830
    %vm4851 = vmand %vm4841, %vm4831
    %vm4852 = vmand %vm4842, %vm4832
    %vm4853 = vmand %vm4843, %vm4833
    %v4854 = vadd.s32 %v4760, 8
    %v4855 = vadd.s32 %v4767, 8
    %v4856 = vadd.s32 %v4774, 8
    %v4857 = vadd.s32 %v4781, 8
    %v4858 = vadd.s32 %v4788, 8
    %v4859 = vadd.s32 %v4795, 8
    %v4860 = vadd.s32 %v4802, 8
    %v4861 = vadd.s32 %v4809, 8
    %v4862 = vadd.s32 %v4816, 8
    %v4863 = vadd.s32 %v4823, 8
    %v4864 = vsel %vm4844, %v4854, %v4760
    %v4865 = vsel %vm4845, %v4855, %v4767
    %v4866 = vsel %vm4846, %v4856, %v4774
    %v4867 = vsel %vm4847, %v4857, %v4781
    %v4868 = vsel %vm4848, %v4858, %v4788
    %v4869 = vsel %vm4849, %v4859, %v4795
    %v4870 = vsel %vm4850, %v4860, %v4802
    %v4871 = vsel %vm4851, %v4861, %v4809
    %v4872 = vsel %vm4852, %v4862, %v4816
    %v4873 = vsel %vm4853, %v4863, %v4823
    %v4874 = vstv %s108
    %vm4875 = vcmp.lt.s32.totalorder %v4864, %v4874
    %vm4876 = vcmp.lt.s32.totalorder %v4865, %v4874
    %vm4877 = vcmp.lt.s32.totalorder %v4866, %v4874
    %vm4878 = vcmp.lt.s32.totalorder %v4867, %v4874
    %vm4879 = vcmp.lt.s32.totalorder %v4868, %v4874
    %vm4880 = vcmp.lt.s32.totalorder %v4869, %v4874
    %vm4881 = vcmp.lt.s32.totalorder %v4870, %v4874
    %vm4882 = vcmp.lt.s32.totalorder %v4871, %v4874
    %vm4883 = vcmp.lt.s32.totalorder %v4872, %v4874
    %vm4884 = vcmp.lt.s32.totalorder %v4873, %v4874
    %v4885 = vsel %vm4875, %v4711, 0.0
    %v4886 = vsel %vm4875, %v4712, 0.0
    %v4887 = vsel %vm4875, %v4713, 0.0
    %v4888 = vsel %vm4876, %v4714, 0.0
    %v4889 = vsel %vm4876, %v4715, 0.0
    %v4890 = vsel %vm4876, %v4716, 0.0
    %v4891 = vsel %vm4877, %v4717, 0.0
    %v4892 = vsel %vm4877, %v4718, 0.0
    %v4893 = vsel %vm4877, %v4719, 0.0
    %v4894 = vsel %vm4878, %v4720, 0.0
    %v4895 = vsel %vm4878, %v4721, 0.0
    %v4896 = vsel %vm4878, %v4722, 0.0
    %v4897 = vsel %vm4879, %v4723, 0.0
    %v4898 = vsel %vm4879, %v4724, 0.0
    %v4899 = vsel %vm4879, %v4725, 0.0
    %v4900 = vsel %vm4880, %v4726, 0.0
    %v4901 = vsel %vm4880, %v4727, 0.0
    %v4902 = vsel %vm4880, %v4728, 0.0
    %v4903 = vsel %vm4881, %v4729, 0.0
    %v4904 = vsel %vm4881, %v4730, 0.0
    %v4905 = vsel %vm4881, %v4731, 0.0
    %v4906 = vsel %vm4882, %v4732, 0.0
    %v4907 = vsel %vm4882, %v4733, 0.0
    %v4908 = vsel %vm4882, %v4734, 0.0
    %v4909 = vsel %vm4883, %v4735, 0.0
    %v4910 = vsel %vm4883, %v4736, 0.0
    %v4911 = vsel %vm4883, %v4737, 0.0
    %v4912 = vsel %vm4884, %v4738, 0.0
    %v4913 = vsel %vm4884, %v4739, 0.0
    %v4914 = vsel %vm4884, %v4740, 0.0
    %v4915 = vadd.f32 %v4885, %v4888
    %v4916 = vadd.f32 %v4915, %v4891
    %v4917 = vadd.f32 %v4916, %v4894
    %v4918 = vadd.f32 %v4917, %v4897
    %v4919 = vadd.f32 %v4918, %v4900
    %v4920 = vadd.f32 %v4919, %v4903
    %v4921 = vadd.f32 %v4920, %v4906
    %v4922 = vadd.f32 %v4921, %v4909
    %v4923 = vadd.f32 %v4922, %v4912
    %v4924 = vrot.slane %v4923, 4
    %v4925 = vadd.f32 %v4923, %v4924
    %v4926 = vrot.slane %v4925, 2
    %v4927 = vadd.f32 %v4925, %v4926
    %v4928 = vrot.slane %v4927, 1
    %v4929 = vadd.f32 %v4927, %v4928
    %v4930 = vadd.f32 %v4886, %v4889
    %v4931 = vadd.f32 %v4930, %v4892
    %v4932 = vadd.f32 %v4931, %v4895
    %v4933 = vadd.f32 %v4932, %v4898
    %v4934 = vadd.f32 %v4933, %v4901
    %v4935 = vadd.f32 %v4934, %v4904
    %v4936 = vadd.f32 %v4935, %v4907
    %v4937 = vadd.f32 %v4936, %v4910
    %v4938 = vadd.f32 %v4937, %v4913
    %v4939 = vrot.slane %v4938, 4
    %v4940 = vadd.f32 %v4938, %v4939
    %v4941 = vrot.slane %v4940, 2
    %v4942 = vadd.f32 %v4940, %v4941
    %v4943 = vrot.slane %v4942, 1
    %v4944 = vadd.f32 %v4942, %v4943
    %v4945 = vadd.f32 %v4887, %v4890
    %v4946 = vadd.f32 %v4945, %v4893
    %v4947 = vadd.f32 %v4946, %v4896
    %v4948 = vadd.f32 %v4947, %v4899
    %v4949 = vadd.f32 %v4948, %v4902
    %v4950 = vadd.f32 %v4949, %v4905
    %v4951 = vadd.f32 %v4950, %v4908
    %v4952 = vadd.f32 %v4951, %v4911
    %v4953 = vadd.f32 %v4952, %v4914
    %v4954 = vrot.slane %v4953, 4
    %v4955 = vadd.f32 %v4953, %v4954
    %v4956 = vrot.slane %v4955, 2
    %v4957 = vadd.f32 %v4955, %v4956
    %v4958 = vrot.slane %v4957, 1
    %v4959 = vadd.f32 %v4957, %v4958
    %v4960 = vmul.f32 %v4885, %v4711
    %v4961 = vmul.f32 %v4886, %v4712
    %v4962 = vmul.f32 %v4887, %v4713
    %v4963 = vmul.f32 %v4888, %v4714
    %v4964 = vmul.f32 %v4889, %v4715
    %v4965 = vmul.f32 %v4890, %v4716
    %v4966 = vmul.f32 %v4891, %v4717
    %v4967 = vmul.f32 %v4892, %v4718
    %v4968 = vmul.f32 %v4893, %v4719
    %v4969 = vmul.f32 %v4894, %v4720
    %v4970 = vmul.f32 %v4895, %v4721
    %v4971 = vmul.f32 %v4896, %v4722
    %v4972 = vmul.f32 %v4897, %v4723
    %v4973 = vmul.f32 %v4898, %v4724
    %v4974 = vmul.f32 %v4899, %v4725
    %v4975 = vmul.f32 %v4900, %v4726
    %v4976 = vmul.f32 %v4901, %v4727
    %v4977 = vmul.f32 %v4902, %v4728
    %v4978 = vmul.f32 %v4903, %v4729
    %v4979 = vmul.f32 %v4904, %v4730
    %v4980 = vmul.f32 %v4905, %v4731
    %v4981 = vmul.f32 %v4906, %v4732
    %v4982 = vmul.f32 %v4907, %v4733
    %v4983 = vmul.f32 %v4908, %v4734
    %v4984 = vmul.f32 %v4909, %v4735
    %v4985 = vmul.f32 %v4910, %v4736
    %v4986 = vmul.f32 %v4911, %v4737
    %v4987 = vmul.f32 %v4912, %v4738
    %v4988 = vmul.f32 %v4913, %v4739
    %v4989 = vmul.f32 %v4914, %v4740
    %v4990 = vadd.f32 %v4960, %v4963
    %v4991 = vadd.f32 %v4990, %v4966
    %v4992 = vadd.f32 %v4991, %v4969
    %v4993 = vadd.f32 %v4992, %v4972
    %v4994 = vadd.f32 %v4993, %v4975
    %v4995 = vadd.f32 %v4994, %v4978
    %v4996 = vadd.f32 %v4995, %v4981
    %v4997 = vadd.f32 %v4996, %v4984
    %v4998 = vadd.f32 %v4997, %v4987
    %v4999 = vrot.slane %v4998, 4
    %v5000 = vadd.f32 %v4998, %v4999
    %v5001 = vrot.slane %v5000, 2
    %v5002 = vadd.f32 %v5000, %v5001
    %v5003 = vrot.slane %v5002, 1
    %v5004 = vadd.f32 %v5002, %v5003
    %v5005 = vadd.f32 %v4961, %v4964
    %v5006 = vadd.f32 %v5005, %v4967
    %v5007 = vadd.f32 %v5006, %v4970
    %v5008 = vadd.f32 %v5007, %v4973
    %v5009 = vadd.f32 %v5008, %v4976
    %v5010 = vadd.f32 %v5009, %v4979
    %v5011 = vadd.f32 %v5010, %v4982
    %v5012 = vadd.f32 %v5011, %v4985
    %v5013 = vadd.f32 %v5012, %v4988
    %v5014 = vrot.slane %v5013, 4
    %v5015 = vadd.f32 %v5013, %v5014
    %v5016 = vrot.slane %v5015, 2
    %v5017 = vadd.f32 %v5015, %v5016
    %v5018 = vrot.slane %v5017, 1
    %v5019 = vadd.f32 %v5017, %v5018
    %v5020 = vadd.f32 %v4962, %v4965
    %v5021 = vadd.f32 %v5020, %v4968
    %v5022 = vadd.f32 %v5021, %v4971
    %v5023 = vadd.f32 %v5022, %v4974
    %v5024 = vadd.f32 %v5023, %v4977
    %v5025 = vadd.f32 %v5024, %v4980
    %v5026 = vadd.f32 %v5025, %v4983
    %v5027 = vadd.f32 %v5026, %v4986
    %v5028 = vadd.f32 %v5027, %v4989
    %v5029 = vrot.slane %v5028, 4
    %v5030 = vadd.f32 %v5028, %v5029
    %v5031 = vrot.slane %v5030, 2
    %v5032 = vadd.f32 %v5030, %v5031
    %v5033 = vrot.slane %v5032, 1
    %v5034 = vadd.f32 %v5032, %v5033
    %vm5035 = vcmask 1040384
    %v5036 = vsel %vm5035, %v4929, %v5004
    %v5037 = vsel %vm5035, %v4944, %v5019
    %v5038 = vsel %vm5035, %v4959, %v5034
    %v5039 = vadd.s32 %v4744, 80
    %v5040 = vadd.s32 %v4744, 88
    %v5041 = vadd.s32 %v4744, 96
    %v5042 = vadd.s32 %v4744, 104
    %v5043 = vadd.s32 %v4744, 112
    %v5044 = vadd.s32 %v4744, 120
    %v5045 = vadd.s32 %v4744, 128
    %v5046 = vadd.s32 %v4744, 136
    %v5047 = vadd.s32 %v4744, 144
    %v5048 = vadd.s32 %v4744, 152
    %v5049 = vadd.s32 %v4744, 160
    %v5050 = vadd.s32 %v4744, 168
    %v5051 = vadd.s32 %v4744, 176
    %v5052 = vadd.s32 %v4744, 184
    %v5053 = vadd.s32 %v4744, 192
    %v5054 = vadd.s32 %v4744, 200
    %v5055 = vadd.s32 %v4744, 208
    %v5056 = vadd.s32 %v4744, 216
    %v5057 = vadd.s32 %v4744, 224
    %v5058 = vadd.s32 %v4744, 232
    %v5059 = vadd.s32 %v4744, 240
    %v5060 = vadd.s32 %v4744, 248
    %v5061 = vadd.s32 %v4744, 256
    %v5062 = vadd.s32 %v4744, 264
    %v5063 = vadd.s32 %v4744, 272
    %v5064 = vadd.s32 %v4744, 280
    %v5065 = vadd.s32 %v4744, 288
    %v5066 = vadd.s32 %v4744, 296
    %v5067 = vadd.s32 %v4744, 304
    %v5068 = vadd.s32 %v4744, 312
    %v5069 = vadd.s32 %v4744, 320
    %v5070 = vadd.s32 %v4744, 328
    %v5071 = vadd.s32 %v4744, 336
    %v5072 = vadd.s32 %v4744, 344
    %v5073 = vadd.s32 %v4744, 352
    %v5074 = vadd.s32 %v4744, 360
    %v5075 = vadd.s32 %v4744, 368
    %v5076 = vadd.s32 %v4744, 376
    %v5077 = vlaneseq
    %v5078 = vand.u32 %v5077, 127
    %vm5079 = vcmp.lt.s32.totalorder %v4744, 0
    %v5080 = vsub.s32 0, %v4744
    %v5081 = vsel %vm5079, %v5080, %v4744
    %v5082 = vshrl.u32 %v5081, 5
    %v5083 = vand.u32 %v5081, 31
    %v5084 = vsub.s32 0, %v5083
    %v5085 = vsel %vm5079, %v5084, %v5083
    %vm5086 = vcmp.lt.s32.totalorder %v4745, 0
    %v5087 = vsub.s32 0, %v4745
    %v5088 = vsel %vm5086, %v5087, %v4745
    %v5089 = vshrl.u32 %v5088, 5
    %v5090 = vand.u32 %v5088, 31
    %v5091 = vsub.s32 0, %v5090
    %v5092 = vsel %vm5086, %v5091, %v5090
    %vm5093 = vcmp.lt.s32.totalorder %v4746, 0
    %v5094 = vsub.s32 0, %v4746
    %v5095 = vsel %vm5093, %v5094, %v4746
    %v5096 = vshrl.u32 %v5095, 5
    %v5097 = vand.u32 %v5095, 31
    %v5098 = vsub.s32 0, %v5097
    %v5099 = vsel %vm5093, %v5098, %v5097
    %vm5100 = vcmp.lt.s32.totalorder %v4747, 0
    %v5101 = vsub.s32 0, %v4747
    %v5102 = vsel %vm5100, %v5101, %v4747
    %v5103 = vshrl.u32 %v5102, 5
    %v5104 = vand.u32 %v5102, 31
    %v5105 = vsub.s32 0, %v5104
    %v5106 = vsel %vm5100, %v5105, %v5104
    %vm5107 = vcmp.lt.s32.totalorder %v4748, 0
    %v5108 = vsub.s32 0, %v4748
    %v5109 = vsel %vm5107, %v5108, %v4748
    %v5110 = vshrl.u32 %v5109, 5
    %v5111 = vand.u32 %v5109, 31
    %v5112 = vsub.s32 0, %v5111
    %v5113 = vsel %vm5107, %v5112, %v5111
    %vm5114 = vcmp.lt.s32.totalorder %v4749, 0
    %v5115 = vsub.s32 0, %v4749
    %v5116 = vsel %vm5114, %v5115, %v4749
    %v5117 = vshrl.u32 %v5116, 5
    %v5118 = vand.u32 %v5116, 31
    %v5119 = vsub.s32 0, %v5118
    %v5120 = vsel %vm5114, %v5119, %v5118
    %vm5121 = vcmp.lt.s32.totalorder %v4750, 0
    %v5122 = vsub.s32 0, %v4750
    %v5123 = vsel %vm5121, %v5122, %v4750
    %v5124 = vshrl.u32 %v5123, 5
    %v5125 = vand.u32 %v5123, 31
    %v5126 = vsub.s32 0, %v5125
    %v5127 = vsel %vm5121, %v5126, %v5125
    %vm5128 = vcmp.lt.s32.totalorder %v4751, 0
    %v5129 = vsub.s32 0, %v4751
    %v5130 = vsel %vm5128, %v5129, %v4751
    %v5131 = vshrl.u32 %v5130, 5
    %v5132 = vand.u32 %v5130, 31
    %v5133 = vsub.s32 0, %v5132
    %v5134 = vsel %vm5128, %v5133, %v5132
    %vm5135 = vcmp.lt.s32.totalorder %v4752, 0
    %v5136 = vsub.s32 0, %v4752
    %v5137 = vsel %vm5135, %v5136, %v4752
    %v5138 = vshrl.u32 %v5137, 5
    %v5139 = vand.u32 %v5137, 31
    %v5140 = vsub.s32 0, %v5139
    %v5141 = vsel %vm5135, %v5140, %v5139
    %vm5142 = vcmp.lt.s32.totalorder %v4753, 0
    %v5143 = vsub.s32 0, %v4753
    %v5144 = vsel %vm5142, %v5143, %v4753
    %v5145 = vshrl.u32 %v5144, 5
    %v5146 = vand.u32 %v5144, 31
    %v5147 = vsub.s32 0, %v5146
    %v5148 = vsel %vm5142, %v5147, %v5146
    %vm5149 = vcmp.lt.s32.totalorder %v5039, 0
    %v5150 = vsub.s32 0, %v5039
    %v5151 = vsel %vm5149, %v5150, %v5039
    %v5152 = vshrl.u32 %v5151, 5
    %v5153 = vand.u32 %v5151, 31
    %v5154 = vsub.s32 0, %v5153
    %v5155 = vsel %vm5149, %v5154, %v5153
    %vm5156 = vcmp.lt.s32.totalorder %v5040, 0
    %v5157 = vsub.s32 0, %v5040
    %v5158 = vsel %vm5156, %v5157, %v5040
    %v5159 = vshrl.u32 %v5158, 5
    %v5160 = vand.u32 %v5158, 31
    %v5161 = vsub.s32 0, %v5160
    %v5162 = vsel %vm5156, %v5161, %v5160
    %vm5163 = vcmp.lt.s32.totalorder %v5041, 0
    %v5164 = vsub.s32 0, %v5041
    %v5165 = vsel %vm5163, %v5164, %v5041
    %v5166 = vshrl.u32 %v5165, 5
    %v5167 = vand.u32 %v5165, 31
    %v5168 = vsub.s32 0, %v5167
    %v5169 = vsel %vm5163, %v5168, %v5167
    %vm5170 = vcmp.lt.s32.totalorder %v5042, 0
    %v5171 = vsub.s32 0, %v5042
    %v5172 = vsel %vm5170, %v5171, %v5042
    %v5173 = vshrl.u32 %v5172, 5
    %v5174 = vand.u32 %v5172, 31
    %v5175 = vsub.s32 0, %v5174
    %v5176 = vsel %vm5170, %v5175, %v5174
    %vm5177 = vcmp.lt.s32.totalorder %v5043, 0
    %v5178 = vsub.s32 0, %v5043
    %v5179 = vsel %vm5177, %v5178, %v5043
    %v5180 = vshrl.u32 %v5179, 5
    %v5181 = vand.u32 %v5179, 31
    %v5182 = vsub.s32 0, %v5181
    %v5183 = vsel %vm5177, %v5182, %v5181
    %vm5184 = vcmp.lt.s32.totalorder %v5044, 0
    %v5185 = vsub.s32 0, %v5044
    %v5186 = vsel %vm5184, %v5185, %v5044
    %v5187 = vshrl.u32 %v5186, 5
    %v5188 = vand.u32 %v5186, 31
    %v5189 = vsub.s32 0, %v5188
    %v5190 = vsel %vm5184, %v5189, %v5188
    %vm5191 = vcmp.lt.s32.totalorder %v5045, 0
    %v5192 = vsub.s32 0, %v5045
    %v5193 = vsel %vm5191, %v5192, %v5045
    %v5194 = vshrl.u32 %v5193, 5
    %v5195 = vand.u32 %v5193, 31
    %v5196 = vsub.s32 0, %v5195
    %v5197 = vsel %vm5191, %v5196, %v5195
    %vm5198 = vcmp.lt.s32.totalorder %v5046, 0
    %v5199 = vsub.s32 0, %v5046
    %v5200 = vsel %vm5198, %v5199, %v5046
    %v5201 = vshrl.u32 %v5200, 5
    %v5202 = vand.u32 %v5200, 31
    %v5203 = vsub.s32 0, %v5202
    %v5204 = vsel %vm5198, %v5203, %v5202
    %vm5205 = vcmp.lt.s32.totalorder %v5047, 0
    %v5206 = vsub.s32 0, %v5047
    %v5207 = vsel %vm5205, %v5206, %v5047
    %v5208 = vshrl.u32 %v5207, 5
    %v5209 = vand.u32 %v5207, 31
    %v5210 = vsub.s32 0, %v5209
    %v5211 = vsel %vm5205, %v5210, %v5209
    %vm5212 = vcmp.lt.s32.totalorder %v5048, 0
    %v5213 = vsub.s32 0, %v5048
    %v5214 = vsel %vm5212, %v5213, %v5048
    %v5215 = vshrl.u32 %v5214, 5
    %v5216 = vand.u32 %v5214, 31
    %v5217 = vsub.s32 0, %v5216
    %v5218 = vsel %vm5212, %v5217, %v5216
    %vm5219 = vcmp.lt.s32.totalorder %v5049, 0
    %v5220 = vsub.s32 0, %v5049
    %v5221 = vsel %vm5219, %v5220, %v5049
    %v5222 = vshrl.u32 %v5221, 5
    %v5223 = vand.u32 %v5221, 31
    %v5224 = vsub.s32 0, %v5223
    %v5225 = vsel %vm5219, %v5224, %v5223
    %vm5226 = vcmp.lt.s32.totalorder %v5050, 0
    %v5227 = vsub.s32 0, %v5050
    %v5228 = vsel %vm5226, %v5227, %v5050
    %v5229 = vshrl.u32 %v5228, 5
    %v5230 = vand.u32 %v5228, 31
    %v5231 = vsub.s32 0, %v5230
    %v5232 = vsel %vm5226, %v5231, %v5230
    %vm5233 = vcmp.lt.s32.totalorder %v5051, 0
    %v5234 = vsub.s32 0, %v5051
    %v5235 = vsel %vm5233, %v5234, %v5051
    %v5236 = vshrl.u32 %v5235, 5
    %v5237 = vand.u32 %v5235, 31
    %v5238 = vsub.s32 0, %v5237
    %v5239 = vsel %vm5233, %v5238, %v5237
    %vm5240 = vcmp.lt.s32.totalorder %v5052, 0
    %v5241 = vsub.s32 0, %v5052
    %v5242 = vsel %vm5240, %v5241, %v5052
    %v5243 = vshrl.u32 %v5242, 5
    %v5244 = vand.u32 %v5242, 31
    %v5245 = vsub.s32 0, %v5244
    %v5246 = vsel %vm5240, %v5245, %v5244
    %vm5247 = vcmp.lt.s32.totalorder %v5053, 0
    %v5248 = vsub.s32 0, %v5053
    %v5249 = vsel %vm5247, %v5248, %v5053
    %v5250 = vshrl.u32 %v5249, 5
    %v5251 = vand.u32 %v5249, 31
    %v5252 = vsub.s32 0, %v5251
    %v5253 = vsel %vm5247, %v5252, %v5251
    %vm5254 = vcmp.lt.s32.totalorder %v5054, 0
    %v5255 = vsub.s32 0, %v5054
    %v5256 = vsel %vm5254, %v5255, %v5054
    %v5257 = vshrl.u32 %v5256, 5
    %v5258 = vand.u32 %v5256, 31
    %v5259 = vsub.s32 0, %v5258
    %v5260 = vsel %vm5254, %v5259, %v5258
    %vm5261 = vcmp.lt.s32.totalorder %v5055, 0
    %v5262 = vsub.s32 0, %v5055
    %v5263 = vsel %vm5261, %v5262, %v5055
    %v5264 = vshrl.u32 %v5263, 5
    %v5265 = vand.u32 %v5263, 31
    %v5266 = vsub.s32 0, %v5265
    %v5267 = vsel %vm5261, %v5266, %v5265
    %vm5268 = vcmp.lt.s32.totalorder %v5056, 0
    %v5269 = vsub.s32 0, %v5056
    %v5270 = vsel %vm5268, %v5269, %v5056
    %v5271 = vshrl.u32 %v5270, 5
    %v5272 = vand.u32 %v5270, 31
    %v5273 = vsub.s32 0, %v5272
    %v5274 = vsel %vm5268, %v5273, %v5272
    %vm5275 = vcmp.lt.s32.totalorder %v5057, 0
    %v5276 = vsub.s32 0, %v5057
    %v5277 = vsel %vm5275, %v5276, %v5057
    %v5278 = vshrl.u32 %v5277, 5
    %v5279 = vand.u32 %v5277, 31
    %v5280 = vsub.s32 0, %v5279
    %v5281 = vsel %vm5275, %v5280, %v5279
    %vm5282 = vcmp.lt.s32.totalorder %v5058, 0
    %v5283 = vsub.s32 0, %v5058
    %v5284 = vsel %vm5282, %v5283, %v5058
    %v5285 = vshrl.u32 %v5284, 5
    %v5286 = vand.u32 %v5284, 31
    %v5287 = vsub.s32 0, %v5286
    %v5288 = vsel %vm5282, %v5287, %v5286
    %vm5289 = vcmp.lt.s32.totalorder %v5059, 0
    %v5290 = vsub.s32 0, %v5059
    %v5291 = vsel %vm5289, %v5290, %v5059
    %v5292 = vshrl.u32 %v5291, 5
    %v5293 = vand.u32 %v5291, 31
    %v5294 = vsub.s32 0, %v5293
    %v5295 = vsel %vm5289, %v5294, %v5293
    %vm5296 = vcmp.lt.s32.totalorder %v5060, 0
    %v5297 = vsub.s32 0, %v5060
    %v5298 = vsel %vm5296, %v5297, %v5060
    %v5299 = vshrl.u32 %v5298, 5
    %v5300 = vand.u32 %v5298, 31
    %v5301 = vsub.s32 0, %v5300
    %v5302 = vsel %vm5296, %v5301, %v5300
    %vm5303 = vcmp.lt.s32.totalorder %v5061, 0
    %v5304 = vsub.s32 0, %v5061
    %v5305 = vsel %vm5303, %v5304, %v5061
    %v5306 = vshrl.u32 %v5305, 5
    %v5307 = vand.u32 %v5305, 31
    %v5308 = vsub.s32 0, %v5307
    %v5309 = vsel %vm5303, %v5308, %v5307
    %vm5310 = vcmp.lt.s32.totalorder %v5062, 0
    %v5311 = vsub.s32 0, %v5062
    %v5312 = vsel %vm5310, %v5311, %v5062
    %v5313 = vshrl.u32 %v5312, 5
    %v5314 = vand.u32 %v5312, 31
    %v5315 = vsub.s32 0, %v5314
    %v5316 = vsel %vm5310, %v5315, %v5314
    %vm5317 = vcmp.lt.s32.totalorder %v5063, 0
    %v5318 = vsub.s32 0, %v5063
    %v5319 = vsel %vm5317, %v5318, %v5063
    %v5320 = vshrl.u32 %v5319, 5
    %v5321 = vand.u32 %v5319, 31
    %v5322 = vsub.s32 0, %v5321
    %v5323 = vsel %vm5317, %v5322, %v5321
    %vm5324 = vcmp.lt.s32.totalorder %v5064, 0
    %v5325 = vsub.s32 0, %v5064
    %v5326 = vsel %vm5324, %v5325, %v5064
    %v5327 = vshrl.u32 %v5326, 5
    %v5328 = vand.u32 %v5326, 31
    %v5329 = vsub.s32 0, %v5328
    %v5330 = vsel %vm5324, %v5329, %v5328
    %vm5331 = vcmp.lt.s32.totalorder %v5065, 0
    %v5332 = vsub.s32 0, %v5065
    %v5333 = vsel %vm5331, %v5332, %v5065
    %v5334 = vshrl.u32 %v5333, 5
    %v5335 = vand.u32 %v5333, 31
    %v5336 = vsub.s32 0, %v5335
    %v5337 = vsel %vm5331, %v5336, %v5335
    %vm5338 = vcmp.lt.s32.totalorder %v5066, 0
    %v5339 = vsub.s32 0, %v5066
    %v5340 = vsel %vm5338, %v5339, %v5066
    %v5341 = vshrl.u32 %v5340, 5
    %v5342 = vand.u32 %v5340, 31
    %v5343 = vsub.s32 0, %v5342
    %v5344 = vsel %vm5338, %v5343, %v5342
    %vm5345 = vcmp.lt.s32.totalorder %v5067, 0
    %v5346 = vsub.s32 0, %v5067
    %v5347 = vsel %vm5345, %v5346, %v5067
    %v5348 = vshrl.u32 %v5347, 5
    %v5349 = vand.u32 %v5347, 31
    %v5350 = vsub.s32 0, %v5349
    %v5351 = vsel %vm5345, %v5350, %v5349
    %vm5352 = vcmp.lt.s32.totalorder %v5068, 0
    %v5353 = vsub.s32 0, %v5068
    %v5354 = vsel %vm5352, %v5353, %v5068
    %v5355 = vshrl.u32 %v5354, 5
    %v5356 = vand.u32 %v5354, 31
    %v5357 = vsub.s32 0, %v5356
    %v5358 = vsel %vm5352, %v5357, %v5356
    %vm5359 = vcmp.lt.s32.totalorder %v5069, 0
    %v5360 = vsub.s32 0, %v5069
    %v5361 = vsel %vm5359, %v5360, %v5069
    %v5362 = vshrl.u32 %v5361, 5
    %v5363 = vand.u32 %v5361, 31
    %v5364 = vsub.s32 0, %v5363
    %v5365 = vsel %vm5359, %v5364, %v5363
    %vm5366 = vcmp.lt.s32.totalorder %v5070, 0
    %v5367 = vsub.s32 0, %v5070
    %v5368 = vsel %vm5366, %v5367, %v5070
    %v5369 = vshrl.u32 %v5368, 5
    %v5370 = vand.u32 %v5368, 31
    %v5371 = vsub.s32 0, %v5370
    %v5372 = vsel %vm5366, %v5371, %v5370
    %vm5373 = vcmp.lt.s32.totalorder %v5071, 0
    %v5374 = vsub.s32 0, %v5071
    %v5375 = vsel %vm5373, %v5374, %v5071
    %v5376 = vshrl.u32 %v5375, 5
    %v5377 = vand.u32 %v5375, 31
    %v5378 = vsub.s32 0, %v5377
    %v5379 = vsel %vm5373, %v5378, %v5377
    %vm5380 = vcmp.lt.s32.totalorder %v5072, 0
    %v5381 = vsub.s32 0, %v5072
    %v5382 = vsel %vm5380, %v5381, %v5072
    %v5383 = vshrl.u32 %v5382, 5
    %v5384 = vand.u32 %v5382, 31
    %v5385 = vsub.s32 0, %v5384
    %v5386 = vsel %vm5380, %v5385, %v5384
    %vm5387 = vcmp.lt.s32.totalorder %v5073, 0
    %v5388 = vsub.s32 0, %v5073
    %v5389 = vsel %vm5387, %v5388, %v5073
    %v5390 = vshrl.u32 %v5389, 5
    %v5391 = vand.u32 %v5389, 31
    %v5392 = vsub.s32 0, %v5391
    %v5393 = vsel %vm5387, %v5392, %v5391
    %vm5394 = vcmp.lt.s32.totalorder %v5074, 0
    %v5395 = vsub.s32 0, %v5074
    %v5396 = vsel %vm5394, %v5395, %v5074
    %v5397 = vshrl.u32 %v5396, 5
    %v5398 = vand.u32 %v5396, 31
    %v5399 = vsub.s32 0, %v5398
    %v5400 = vsel %vm5394, %v5399, %v5398
    %vm5401 = vcmp.lt.s32.totalorder %v5075, 0
    %v5402 = vsub.s32 0, %v5075
    %v5403 = vsel %vm5401, %v5402, %v5075
    %v5404 = vshrl.u32 %v5403, 5
    %v5405 = vand.u32 %v5403, 31
    %v5406 = vsub.s32 0, %v5405
    %v5407 = vsel %vm5401, %v5406, %v5405
    %vm5408 = vcmp.lt.s32.totalorder %v5076, 0
    %v5409 = vsub.s32 0, %v5076
    %v5410 = vsel %vm5408, %v5409, %v5076
    %v5411 = vshrl.u32 %v5410, 5
    %v5412 = vand.u32 %v5410, 31
    %v5413 = vsub.s32 0, %v5412
    %v5414 = vsel %vm5408, %v5413, %v5412
    %vm5415 = vcmp.ne.s32.totalorder %v5085, 0
    %vm5416 = vcmp.ne.s32.totalorder %v5092, 0
    %vm5417 = vcmp.ne.s32.totalorder %v5099, 0
    %vm5418 = vcmp.ne.s32.totalorder %v5106, 0
    %vm5419 = vcmp.ne.s32.totalorder %v5113, 0
    %vm5420 = vcmp.ne.s32.totalorder %v5120, 0
    %vm5421 = vcmp.ne.s32.totalorder %v5127, 0
    %vm5422 = vcmp.ne.s32.totalorder %v5134, 0
    %vm5423 = vcmp.ne.s32.totalorder %v5141, 0
    %vm5424 = vcmp.ne.s32.totalorder %v5148, 0
    %vm5425 = vcmp.ne.s32.totalorder %v5155, 0
    %vm5426 = vcmp.ne.s32.totalorder %v5162, 0
    %vm5427 = vcmp.ne.s32.totalorder %v5169, 0
    %vm5428 = vcmp.ne.s32.totalorder %v5176, 0
    %vm5429 = vcmp.ne.s32.totalorder %v5183, 0
    %vm5430 = vcmp.ne.s32.totalorder %v5190, 0
    %vm5431 = vcmp.ne.s32.totalorder %v5197, 0
    %vm5432 = vcmp.ne.s32.totalorder %v5204, 0
    %vm5433 = vcmp.ne.s32.totalorder %v5211, 0
    %vm5434 = vcmp.ne.s32.totalorder %v5218, 0
    %vm5435 = vcmp.ne.s32.totalorder %v5225, 0
    %vm5436 = vcmp.ne.s32.totalorder %v5232, 0
    %vm5437 = vcmp.ne.s32.totalorder %v5239, 0
    %vm5438 = vcmp.ne.s32.totalorder %v5246, 0
    %vm5439 = vcmp.ne.s32.totalorder %v5253, 0
    %vm5440 = vcmp.ne.s32.totalorder %v5260, 0
    %vm5441 = vcmp.ne.s32.totalorder %v5267, 0
    %vm5442 = vcmp.ne.s32.totalorder %v5274, 0
    %vm5443 = vcmp.ne.s32.totalorder %v5281, 0
    %vm5444 = vcmp.ne.s32.totalorder %v5288, 0
    %vm5445 = vcmp.ne.s32.totalorder %v5295, 0
    %vm5446 = vcmp.ne.s32.totalorder %v5302, 0
    %vm5447 = vcmp.ne.s32.totalorder %v5309, 0
    %vm5448 = vcmp.ne.s32.totalorder %v5316, 0
    %vm5449 = vcmp.ne.s32.totalorder %v5323, 0
    %vm5450 = vcmp.ne.s32.totalorder %v5330, 0
    %vm5451 = vcmp.ne.s32.totalorder %v5337, 0
    %vm5452 = vcmp.ne.s32.totalorder %v5344, 0
    %vm5453 = vcmp.ne.s32.totalorder %v5351, 0
    %vm5454 = vcmp.ne.s32.totalorder %v5358, 0
    %vm5455 = vcmp.ne.s32.totalorder %v5365, 0
    %vm5456 = vcmp.ne.s32.totalorder %v5372, 0
    %vm5457 = vcmp.ne.s32.totalorder %v5379, 0
    %vm5458 = vcmp.ne.s32.totalorder %v5386, 0
    %vm5459 = vcmp.ne.s32.totalorder %v5393, 0
    %vm5460 = vcmp.ne.s32.totalorder %v5400, 0
    %vm5461 = vcmp.ne.s32.totalorder %v5407, 0
    %vm5462 = vcmp.ne.s32.totalorder %v5414, 0
    %vm5463 = vcmp.lt.s32.totalorder %v5085, 0
    %vm5464 = vcmp.lt.s32.totalorder %v5092, 0
    %vm5465 = vcmp.lt.s32.totalorder %v5099, 0
    %vm5466 = vcmp.lt.s32.totalorder %v5106, 0
    %vm5467 = vcmp.lt.s32.totalorder %v5113, 0
    %vm5468 = vcmp.lt.s32.totalorder %v5120, 0
    %vm5469 = vcmp.lt.s32.totalorder %v5127, 0
    %vm5470 = vcmp.lt.s32.totalorder %v5134, 0
    %vm5471 = vcmp.lt.s32.totalorder %v5141, 0
    %vm5472 = vcmp.lt.s32.totalorder %v5148, 0
    %vm5473 = vcmp.lt.s32.totalorder %v5155, 0
    %vm5474 = vcmp.lt.s32.totalorder %v5162, 0
    %vm5475 = vcmp.lt.s32.totalorder %v5169, 0
    %vm5476 = vcmp.lt.s32.totalorder %v5176, 0
    %vm5477 = vcmp.lt.s32.totalorder %v5183, 0
    %vm5478 = vcmp.lt.s32.totalorder %v5190, 0
    %vm5479 = vcmp.lt.s32.totalorder %v5197, 0
    %vm5480 = vcmp.lt.s32.totalorder %v5204, 0
    %vm5481 = vcmp.lt.s32.totalorder %v5211, 0
    %vm5482 = vcmp.lt.s32.totalorder %v5218, 0
    %vm5483 = vcmp.lt.s32.totalorder %v5225, 0
    %vm5484 = vcmp.lt.s32.totalorder %v5232, 0
    %vm5485 = vcmp.lt.s32.totalorder %v5239, 0
    %vm5486 = vcmp.lt.s32.totalorder %v5246, 0
    %vm5487 = vcmp.lt.s32.totalorder %v5253, 0
    %vm5488 = vcmp.lt.s32.totalorder %v5260, 0
    %vm5489 = vcmp.lt.s32.totalorder %v5267, 0
    %vm5490 = vcmp.lt.s32.totalorder %v5274, 0
    %vm5491 = vcmp.lt.s32.totalorder %v5281, 0
    %vm5492 = vcmp.lt.s32.totalorder %v5288, 0
    %vm5493 = vcmp.lt.s32.totalorder %v5295, 0
    %vm5494 = vcmp.lt.s32.totalorder %v5302, 0
    %vm5495 = vcmp.lt.s32.totalorder %v5309, 0
    %vm5496 = vcmp.lt.s32.totalorder %v5316, 0
    %vm5497 = vcmp.lt.s32.totalorder %v5323, 0
    %vm5498 = vcmp.lt.s32.totalorder %v5330, 0
    %vm5499 = vcmp.lt.s32.totalorder %v5337, 0
    %vm5500 = vcmp.lt.s32.totalorder %v5344, 0
    %vm5501 = vcmp.lt.s32.totalorder %v5351, 0
    %vm5502 = vcmp.lt.s32.totalorder %v5358, 0
    %vm5503 = vcmp.lt.s32.totalorder %v5365, 0
    %vm5504 = vcmp.lt.s32.totalorder %v5372, 0
    %vm5505 = vcmp.lt.s32.totalorder %v5379, 0
    %vm5506 = vcmp.lt.s32.totalorder %v5386, 0
    %vm5507 = vcmp.lt.s32.totalorder %v5393, 0
    %vm5508 = vcmp.lt.s32.totalorder %v5400, 0
    %vm5509 = vcmp.lt.s32.totalorder %v5407, 0
    %vm5510 = vcmp.lt.s32.totalorder %v5414, 0
    %vm5511 = vmand %vm5463, %vm5415
    %vm5512 = vmand %vm5464, %vm5416
    %vm5513 = vmand %vm5465, %vm5417
    %vm5514 = vmand %vm5466, %vm5418
    %vm5515 = vmand %vm5467, %vm5419
    %vm5516 = vmand %vm5468, %vm5420
    %vm5517 = vmand %vm5469, %vm5421
    %vm5518 = vmand %vm5470, %vm5422
    %vm5519 = vmand %vm5471, %vm5423
    %vm5520 = vmand %vm5472, %vm5424
    %vm5521 = vmand %vm5473, %vm5425
    %vm5522 = vmand %vm5474, %vm5426
    %vm5523 = vmand %vm5475, %vm5427
    %vm5524 = vmand %vm5476, %vm5428
    %vm5525 = vmand %vm5477, %vm5429
    %vm5526 = vmand %vm5478, %vm5430
    %vm5527 = vmand %vm5479, %vm5431
    %vm5528 = vmand %vm5480, %vm5432
    %vm5529 = vmand %vm5481, %vm5433
    %vm5530 = vmand %vm5482, %vm5434
    %vm5531 = vmand %vm5483, %vm5435
    %vm5532 = vmand %vm5484, %vm5436
    %vm5533 = vmand %vm5485, %vm5437
    %vm5534 = vmand %vm5486, %vm5438
    %vm5535 = vmand %vm5487, %vm5439
    %vm5536 = vmand %vm5488, %vm5440
    %vm5537 = vmand %vm5489, %vm5441
    %vm5538 = vmand %vm5490, %vm5442
    %vm5539 = vmand %vm5491, %vm5443
    %vm5540 = vmand %vm5492, %vm5444
    %vm5541 = vmand %vm5493, %vm5445
    %vm5542 = vmand %vm5494, %vm5446
    %vm5543 = vmand %vm5495, %vm5447
    %vm5544 = vmand %vm5496, %vm5448
    %vm5545 = vmand %vm5497, %vm5449
    %vm5546 = vmand %vm5498, %vm5450
    %vm5547 = vmand %vm5499, %vm5451
    %vm5548 = vmand %vm5500, %vm5452
    %vm5549 = vmand %vm5501, %vm5453
    %vm5550 = vmand %vm5502, %vm5454
    %vm5551 = vmand %vm5503, %vm5455
    %vm5552 = vmand %vm5504, %vm5456
    %vm5553 = vmand %vm5505, %vm5457
    %vm5554 = vmand %vm5506, %vm5458
    %vm5555 = vmand %vm5507, %vm5459
    %vm5556 = vmand %vm5508, %vm5460
    %vm5557 = vmand %vm5509, %vm5461
    %vm5558 = vmand %vm5510, %vm5462
    %v5559 = vadd.s32 %v5085, 32
    %v5560 = vadd.s32 %v5092, 32
    %v5561 = vadd.s32 %v5099, 32
    %v5562 = vadd.s32 %v5106, 32
    %v5563 = vadd.s32 %v5113, 32
    %v5564 = vadd.s32 %v5120, 32
    %v5565 = vadd.s32 %v5127, 32
    %v5566 = vadd.s32 %v5134, 32
    %v5567 = vadd.s32 %v5141, 32
    %v5568 = vadd.s32 %v5148, 32
    %v5569 = vadd.s32 %v5155, 32
    %v5570 = vadd.s32 %v5162, 32
    %v5571 = vadd.s32 %v5169, 32
    %v5572 = vadd.s32 %v5176, 32
    %v5573 = vadd.s32 %v5183, 32
    %v5574 = vadd.s32 %v5190, 32
    %v5575 = vadd.s32 %v5197, 32
    %v5576 = vadd.s32 %v5204, 32
    %v5577 = vadd.s32 %v5211, 32
    %v5578 = vadd.s32 %v5218, 32
    %v5579 = vadd.s32 %v5225, 32
    %v5580 = vadd.s32 %v5232, 32
    %v5581 = vadd.s32 %v5239, 32
    %v5582 = vadd.s32 %v5246, 32
    %v5583 = vadd.s32 %v5253, 32
    %v5584 = vadd.s32 %v5260, 32
    %v5585 = vadd.s32 %v5267, 32
    %v5586 = vadd.s32 %v5274, 32
    %v5587 = vadd.s32 %v5281, 32
    %v5588 = vadd.s32 %v5288, 32
    %v5589 = vadd.s32 %v5295, 32
    %v5590 = vadd.s32 %v5302, 32
    %v5591 = vadd.s32 %v5309, 32
    %v5592 = vadd.s32 %v5316, 32
    %v5593 = vadd.s32 %v5323, 32
    %v5594 = vadd.s32 %v5330, 32
    %v5595 = vadd.s32 %v5337, 32
    %v5596 = vadd.s32 %v5344, 32
    %v5597 = vadd.s32 %v5351, 32
    %v5598 = vadd.s32 %v5358, 32
    %v5599 = vadd.s32 %v5365, 32
    %v5600 = vadd.s32 %v5372, 32
    %v5601 = vadd.s32 %v5379, 32
    %v5602 = vadd.s32 %v5386, 32
    %v5603 = vadd.s32 %v5393, 32
    %v5604 = vadd.s32 %v5400, 32
    %v5605 = vadd.s32 %v5407, 32
    %v5606 = vadd.s32 %v5414, 32
    %v5607 = vsel %vm5511, %v5559, %v5085
    %v5608 = vsel %vm5512, %v5560, %v5092
    %v5609 = vsel %vm5513, %v5561, %v5099
    %v5610 = vsel %vm5514, %v5562, %v5106
    %v5611 = vsel %vm5515, %v5563, %v5113
    %v5612 = vsel %vm5516, %v5564, %v5120
    %v5613 = vsel %vm5517, %v5565, %v5127
    %v5614 = vsel %vm5518, %v5566, %v5134
    %v5615 = vsel %vm5519, %v5567, %v5141
    %v5616 = vsel %vm5520, %v5568, %v5148
    %v5617 = vsel %vm5521, %v5569, %v5155
    %v5618 = vsel %vm5522, %v5570, %v5162
    %v5619 = vsel %vm5523, %v5571, %v5169
    %v5620 = vsel %vm5524, %v5572, %v5176
    %v5621 = vsel %vm5525, %v5573, %v5183
    %v5622 = vsel %vm5526, %v5574, %v5190
    %v5623 = vsel %vm5527, %v5575, %v5197
    %v5624 = vsel %vm5528, %v5576, %v5204
    %v5625 = vsel %vm5529, %v5577, %v5211
    %v5626 = vsel %vm5530, %v5578, %v5218
    %v5627 = vsel %vm5531, %v5579, %v5225
    %v5628 = vsel %vm5532, %v5580, %v5232
    %v5629 = vsel %vm5533, %v5581, %v5239
    %v5630 = vsel %vm5534, %v5582, %v5246
    %v5631 = vsel %vm5535, %v5583, %v5253
    %v5632 = vsel %vm5536, %v5584, %v5260
    %v5633 = vsel %vm5537, %v5585, %v5267
    %v5634 = vsel %vm5538, %v5586, %v5274
    %v5635 = vsel %vm5539, %v5587, %v5281
    %v5636 = vsel %vm5540, %v5588, %v5288
    %v5637 = vsel %vm5541, %v5589, %v5295
    %v5638 = vsel %vm5542, %v5590, %v5302
    %v5639 = vsel %vm5543, %v5591, %v5309
    %v5640 = vsel %vm5544, %v5592, %v5316
    %v5641 = vsel %vm5545, %v5593, %v5323
    %v5642 = vsel %vm5546, %v5594, %v5330
    %v5643 = vsel %vm5547, %v5595, %v5337
    %v5644 = vsel %vm5548, %v5596, %v5344
    %v5645 = vsel %vm5549, %v5597, %v5351
    %v5646 = vsel %vm5550, %v5598, %v5358
    %v5647 = vsel %vm5551, %v5599, %v5365
    %v5648 = vsel %vm5552, %v5600, %v5372
    %v5649 = vsel %vm5553, %v5601, %v5379
    %v5650 = vsel %vm5554, %v5602, %v5386
    %v5651 = vsel %vm5555, %v5603, %v5393
    %v5652 = vsel %vm5556, %v5604, %v5400
    %v5653 = vsel %vm5557, %v5605, %v5407
    %v5654 = vsel %vm5558, %v5606, %v5414
    %vm5655 = vcmp.eq.s32.totalorder %v5607, %v5078
    %vm5656 = vcmp.eq.s32.totalorder %v5608, %v5078
    %vm5657 = vcmp.eq.s32.totalorder %v5609, %v5078
    %vm5658 = vcmp.eq.s32.totalorder %v5610, %v5078
    %vm5659 = vcmp.eq.s32.totalorder %v5611, %v5078
    %vm5660 = vcmp.eq.s32.totalorder %v5612, %v5078
    %vm5661 = vcmp.eq.s32.totalorder %v5613, %v5078
    %vm5662 = vcmp.eq.s32.totalorder %v5614, %v5078
    %vm5663 = vcmp.eq.s32.totalorder %v5615, %v5078
    %vm5664 = vcmp.eq.s32.totalorder %v5616, %v5078
    %vm5665 = vcmp.eq.s32.totalorder %v5617, %v5078
    %vm5666 = vcmp.eq.s32.totalorder %v5618, %v5078
    %vm5667 = vcmp.eq.s32.totalorder %v5619, %v5078
    %vm5668 = vcmp.eq.s32.totalorder %v5620, %v5078
    %vm5669 = vcmp.eq.s32.totalorder %v5621, %v5078
    %vm5670 = vcmp.eq.s32.totalorder %v5622, %v5078
    %vm5671 = vcmp.eq.s32.totalorder %v5623, %v5078
    %vm5672 = vcmp.eq.s32.totalorder %v5624, %v5078
    %vm5673 = vcmp.eq.s32.totalorder %v5625, %v5078
    %vm5674 = vcmp.eq.s32.totalorder %v5626, %v5078
    %vm5675 = vcmp.eq.s32.totalorder %v5627, %v5078
    %vm5676 = vcmp.eq.s32.totalorder %v5628, %v5078
    %vm5677 = vcmp.eq.s32.totalorder %v5629, %v5078
    %vm5678 = vcmp.eq.s32.totalorder %v5630, %v5078
    %vm5679 = vcmp.eq.s32.totalorder %v5631, %v5078
    %vm5680 = vcmp.eq.s32.totalorder %v5632, %v5078
    %vm5681 = vcmp.eq.s32.totalorder %v5633, %v5078
    %vm5682 = vcmp.eq.s32.totalorder %v5634, %v5078
    %vm5683 = vcmp.eq.s32.totalorder %v5635, %v5078
    %vm5684 = vcmp.eq.s32.totalorder %v5636, %v5078
    %vm5685 = vcmp.eq.s32.totalorder %v5637, %v5078
    %vm5686 = vcmp.eq.s32.totalorder %v5638, %v5078
    %vm5687 = vcmp.eq.s32.totalorder %v5639, %v5078
    %vm5688 = vcmp.eq.s32.totalorder %v5640, %v5078
    %vm5689 = vcmp.eq.s32.totalorder %v5641, %v5078
    %vm5690 = vcmp.eq.s32.totalorder %v5642, %v5078
    %vm5691 = vcmp.eq.s32.totalorder %v5643, %v5078
    %vm5692 = vcmp.eq.s32.totalorder %v5644, %v5078
    %vm5693 = vcmp.eq.s32.totalorder %v5645, %v5078
    %vm5694 = vcmp.eq.s32.totalorder %v5646, %v5078
    %vm5695 = vcmp.eq.s32.totalorder %v5647, %v5078
    %vm5696 = vcmp.eq.s32.totalorder %v5648, %v5078
    %vm5697 = vcmp.eq.s32.totalorder %v5649, %v5078
    %vm5698 = vcmp.eq.s32.totalorder %v5650, %v5078
    %vm5699 = vcmp.eq.s32.totalorder %v5651, %v5078
    %vm5700 = vcmp.eq.s32.totalorder %v5652, %v5078
    %vm5701 = vcmp.eq.s32.totalorder %v5653, %v5078
    %vm5702 = vcmp.eq.s32.totalorder %v5654, %v5078
    %vm5703 = vcmp.lt.s32.totalorder %v4744, 320
    %vm5704 = vcmp.lt.s32.totalorder %v4745, 320
    %vm5705 = vcmp.lt.s32.totalorder %v4746, 320
    %vm5706 = vcmp.lt.s32.totalorder %v4747, 320
    %vm5707 = vcmp.lt.s32.totalorder %v4748, 320
    %vm5708 = vcmp.lt.s32.totalorder %v4749, 320
    %vm5709 = vcmp.lt.s32.totalorder %v4750, 320
    %vm5710 = vcmp.lt.s32.totalorder %v4751, 320
    %vm5711 = vcmp.lt.s32.totalorder %v4752, 320
    %vm5712 = vcmp.lt.s32.totalorder %v4753, 320
    %vm5713 = vcmp.lt.s32.totalorder %v5039, 320
    %vm5714 = vcmp.lt.s32.totalorder %v5040, 320
    %vm5715 = vcmp.lt.s32.totalorder %v5041, 320
    %vm5716 = vcmp.lt.s32.totalorder %v5042, 320
    %vm5717 = vcmp.lt.s32.totalorder %v5043, 320
    %vm5718 = vcmp.lt.s32.totalorder %v5044, 320
    %vm5719 = vcmp.lt.s32.totalorder %v5045, 320
    %vm5720 = vcmp.lt.s32.totalorder %v5046, 320
    %vm5721 = vcmp.lt.s32.totalorder %v5047, 320
    %vm5722 = vcmp.lt.s32.totalorder %v5048, 320
    %vm5723 = vcmp.lt.s32.totalorder %v5049, 320
    %vm5724 = vcmp.lt.s32.totalorder %v5050, 320
    %vm5725 = vcmp.lt.s32.totalorder %v5051, 320
    %vm5726 = vcmp.lt.s32.totalorder %v5052, 320
    %vm5727 = vcmp.lt.s32.totalorder %v5053, 320
    %vm5728 = vcmp.lt.s32.totalorder %v5054, 320
    %vm5729 = vcmp.lt.s32.totalorder %v5055, 320
    %vm5730 = vcmp.lt.s32.totalorder %v5056, 320
    %vm5731 = vcmp.lt.s32.totalorder %v5057, 320
    %vm5732 = vcmp.lt.s32.totalorder %v5058, 320
    %vm5733 = vcmp.lt.s32.totalorder %v5059, 320
    %vm5734 = vcmp.lt.s32.totalorder %v5060, 320
    %vm5735 = vcmp.lt.s32.totalorder %v5061, 320
    %vm5736 = vcmp.lt.s32.totalorder %v5062, 320
    %vm5737 = vcmp.lt.s32.totalorder %v5063, 320
    %vm5738 = vcmp.lt.s32.totalorder %v5064, 320
    %vm5739 = vcmp.lt.s32.totalorder %v5065, 320
    %vm5740 = vcmp.lt.s32.totalorder %v5066, 320
    %vm5741 = vcmp.lt.s32.totalorder %v5067, 320
    %vm5742 = vcmp.lt.s32.totalorder %v5068, 320
    %vm5743 = vcmp.lt.s32.totalorder %v5069, 320
    %vm5744 = vcmp.lt.s32.totalorder %v5070, 320
    %vm5745 = vcmp.lt.s32.totalorder %v5071, 320
    %vm5746 = vcmp.lt.s32.totalorder %v5072, 320
    %vm5747 = vcmp.lt.s32.totalorder %v5073, 320
    %vm5748 = vcmp.lt.s32.totalorder %v5074, 320
    %vm5749 = vcmp.lt.s32.totalorder %v5075, 320
    %vm5750 = vcmp.lt.s32.totalorder %v5076, 320
    %vm5751 = vmand %vm5655, %vm5703
    %vm5752 = vmand %vm5656, %vm5704
    %vm5753 = vmand %vm5657, %vm5705
    %vm5754 = vmand %vm5658, %vm5706
    %vm5755 = vmand %vm5659, %vm5707
    %vm5756 = vmand %vm5660, %vm5708
    %vm5757 = vmand %vm5661, %vm5709
    %vm5758 = vmand %vm5662, %vm5710
    %vm5759 = vmand %vm5663, %vm5711
    %vm5760 = vmand %vm5664, %vm5712
    %vm5761 = vmand %vm5665, %vm5713
    %vm5762 = vmand %vm5666, %vm5714
    %vm5763 = vmand %vm5667, %vm5715
    %vm5764 = vmand %vm5668, %vm5716
    %vm5765 = vmand %vm5669, %vm5717
    %vm5766 = vmand %vm5670, %vm5718
    %vm5767 = vmand %vm5671, %vm5719
    %vm5768 = vmand %vm5672, %vm5720
    %vm5769 = vmand %vm5673, %vm5721
    %vm5770 = vmand %vm5674, %vm5722
    %vm5771 = vmand %vm5675, %vm5723
    %vm5772 = vmand %vm5676, %vm5724
    %vm5773 = vmand %vm5677, %vm5725
    %vm5774 = vmand %vm5678, %vm5726
    %vm5775 = vmand %vm5679, %vm5727
    %vm5776 = vmand %vm5680, %vm5728
    %vm5777 = vmand %vm5681, %vm5729
    %vm5778 = vmand %vm5682, %vm5730
    %vm5779 = vmand %vm5683, %vm5731
    %vm5780 = vmand %vm5684, %vm5732
    %vm5781 = vmand %vm5685, %vm5733
    %vm5782 = vmand %vm5686, %vm5734
    %vm5783 = vmand %vm5687, %vm5735
    %vm5784 = vmand %vm5688, %vm5736
    %vm5785 = vmand %vm5689, %vm5737
    %vm5786 = vmand %vm5690, %vm5738
    %vm5787 = vmand %vm5691, %vm5739
    %vm5788 = vmand %vm5692, %vm5740
    %vm5789 = vmand %vm5693, %vm5741
    %vm5790 = vmand %vm5694, %vm5742
    %vm5791 = vmand %vm5695, %vm5743
    %vm5792 = vmand %vm5696, %vm5744
    %vm5793 = vmand %vm5697, %vm5745
    %vm5794 = vmand %vm5698, %vm5746
    %vm5795 = vmand %vm5699, %vm5747
    %vm5796 = vmand %vm5700, %vm5748
    %vm5797 = vmand %vm5701, %vm5749
    %vm5798 = vmand %vm5702, %vm5750
    %v5799 = vsel %vm5751, 1.0, 0.0
    %v5800 = vsel %vm5752, 1.0, 0.0
    %v5801 = vsel %vm5753, 1.0, 0.0
    %v5802 = vsel %vm5754, 1.0, 0.0
    %v5803 = vsel %vm5755, 1.0, 0.0
    %v5804 = vsel %vm5756, 1.0, 0.0
    %v5805 = vsel %vm5757, 1.0, 0.0
    %v5806 = vsel %vm5758, 1.0, 0.0
    %v5807 = vsel %vm5759, 1.0, 0.0
    %v5808 = vsel %vm5760, 1.0, 0.0
    %v5809 = vsel %vm5761, 1.0, 0.0
    %v5810 = vsel %vm5762, 1.0, 0.0
    %v5811 = vsel %vm5763, 1.0, 0.0
    %v5812 = vsel %vm5764, 1.0, 0.0
    %v5813 = vsel %vm5765, 1.0, 0.0
    %v5814 = vsel %vm5766, 1.0, 0.0
    %v5815 = vsel %vm5767, 1.0, 0.0
    %v5816 = vsel %vm5768, 1.0, 0.0
    %v5817 = vsel %vm5769, 1.0, 0.0
    %v5818 = vsel %vm5770, 1.0, 0.0
    %v5819 = vsel %vm5771, 1.0, 0.0
    %v5820 = vsel %vm5772, 1.0, 0.0
    %v5821 = vsel %vm5773, 1.0, 0.0
    %v5822 = vsel %vm5774, 1.0, 0.0
    %v5823 = vsel %vm5775, 1.0, 0.0
    %v5824 = vsel %vm5776, 1.0, 0.0
    %v5825 = vsel %vm5777, 1.0, 0.0
    %v5826 = vsel %vm5778, 1.0, 0.0
    %v5827 = vsel %vm5779, 1.0, 0.0
    %v5828 = vsel %vm5780, 1.0, 0.0
    %v5829 = vsel %vm5781, 1.0, 0.0
    %v5830 = vsel %vm5782, 1.0, 0.0
    %v5831 = vsel %vm5783, 1.0, 0.0
    %v5832 = vsel %vm5784, 1.0, 0.0
    %v5833 = vsel %vm5785, 1.0, 0.0
    %v5834 = vsel %vm5786, 1.0, 0.0
    %v5835 = vsel %vm5787, 1.0, 0.0
    %v5836 = vsel %vm5788, 1.0, 0.0
    %v5837 = vsel %vm5789, 1.0, 0.0
    %v5838 = vsel %vm5790, 1.0, 0.0
    %v5839 = vsel %vm5791, 1.0, 0.0
    %v5840 = vsel %vm5792, 1.0, 0.0
    %v5841 = vsel %vm5793, 1.0, 0.0
    %v5842 = vsel %vm5794, 1.0, 0.0
    %v5843 = vsel %vm5795, 1.0, 0.0
    %v5844 = vsel %vm5796, 1.0, 0.0
    %v5845 = vsel %vm5797, 1.0, 0.0
    %v5846 = vsel %vm5798, 1.0, 0.0
    %5847 = vmatprep.subr.mxu0 0.0
    %5848 = vmatpush1.msra.mxu0 %v5799
    %5849 = vmatprep.subr.mxu0 0.0
    %5850 = vmatpush1.msra.mxu0 %v5800
    %5851 = vmatprep.subr.mxu0 0.0
    %5852 = vmatpush1.msra.mxu0 %v5801
    %5853 = vmatprep.subr.mxu0 0.0
    %5854 = vmatpush1.msra.mxu0 %v5802
    %5855 = vmatprep.subr.mxu0 0.0
    %5856 = vmatpush1.msra.mxu0 %v5803
    %5857 = vmatprep.subr.mxu0 0.0
    %5858 = vmatpush1.msra.mxu0 %v5804
    %5859 = vmatprep.subr.mxu0 0.0
    %5860 = vmatpush1.msra.mxu0 %v5805
    %5861 = vmatprep.subr.mxu0 0.0
    %5862 = vmatpush1.msra.mxu0 %v5806
    %5863 = vmatprep.subr.mxu0 0.0
    %5864 = vmatpush1.msra.mxu0 %v5807
    %5865 = vmatprep.subr.mxu0 0.0
    %5866 = vmatpush1.msra.mxu0 %v5808
    %5867 = vmatprep.subr.mxu0 0.0
    %5868 = vmatpush1.msra.mxu0 %v5809
    %5869 = vmatprep.subr.mxu0 0.0
    %5870 = vmatpush1.msra.mxu0 %v5810
    %5871 = vmatprep.subr.mxu0 0.0
    %5872 = vmatpush1.msra.mxu0 %v5811
    %5873 = vmatprep.subr.mxu0 0.0
    %5874 = vmatpush1.msra.mxu0 %v5812
    %5875 = vmatprep.subr.mxu0 0.0
    %5876 = vmatpush1.msra.mxu0 %v5813
    %5877 = vmatprep.subr.mxu0 0.0
    %5878 = vmatpush1.msra.mxu0 %v5814
    %5879 = vmatprep.subr.mxu0 0.0
    %5880 = vmatpush1.msra.mxu0 %v5815
    %5881 = vmatprep.subr.mxu0 0.0
    %5882 = vmatpush1.msra.mxu0 %v5816
    %5883 = vmatprep.subr.mxu0 0.0
    %5884 = vmatpush1.msra.mxu0 %v5817
    %5885 = vmatprep.subr.mxu0 0.0
    %5886 = vmatpush1.msra.mxu0 %v5818
    %5887 = vmatprep.subr.mxu0 0.0
    %5888 = vmatpush1.msra.mxu0 %v5819
    %5889 = vmatprep.subr.mxu0 0.0
    %5890 = vmatpush1.msra.mxu0 %v5820
    %5891 = vmatprep.subr.mxu0 0.0
    %5892 = vmatpush1.msra.mxu0 %v5821
    %5893 = vmatprep.subr.mxu0 0.0
    %5894 = vmatpush1.msra.mxu0 %v5822
    %5895 = vmatprep.subr.mxu0 0.0
    %5896 = vmatpush1.msra.mxu0 %v5823
    %5897 = vmatprep.subr.mxu0 0.0
    %5898 = vmatpush1.msra.mxu0 %v5824
    %5899 = vmatprep.subr.mxu0 0.0
    %5900 = vmatpush1.msra.mxu0 %v5825
    %5901 = vmatprep.subr.mxu0 0.0
    %5902 = vmatpush1.msra.mxu0 %v5826
    %5903 = vmatprep.subr.mxu0 0.0
    %5904 = vmatpush1.msra.mxu0 %v5827
    %5905 = vmatprep.subr.mxu0 0.0
    %5906 = vmatpush1.msra.mxu0 %v5828
    %5907 = vmatprep.subr.mxu0 0.0
    %5908 = vmatpush1.msra.mxu0 %v5829
    %5909 = vmatprep.subr.mxu0 0.0
    %5910 = vmatpush1.msra.mxu0 %v5830
    %5911 = vmatprep.mubr.f32.mxu0 %v5037
    %5912 = vmatmul.mubr.f32.gmra.mrb[0].mxu0 %v5036
    %v5913 = vpop.f32.mrb[0].mxu0
    %v5914 = vadd.f32 0.0, %v5913
    %v5915 = vpop.f32.mrb[0].mxu0
    %5916 = vdwg.mxu0
    %5917 = vmatprep.subr.mxu0 0.0
    %5918 = vmatpush1.msra.mxu0 %v5831
    %5919 = vmatprep.subr.mxu0 0.0
    %5920 = vmatpush1.msra.mxu0 %v5832
    %5921 = vmatprep.subr.mxu0 0.0
    %5922 = vmatpush1.msra.mxu0 %v5833
    %5923 = vmatprep.subr.mxu0 0.0
    %5924 = vmatpush1.msra.mxu0 %v5834
    %5925 = vmatprep.subr.mxu0 0.0
    %5926 = vmatpush1.msra.mxu0 %v5835
    %5927 = vmatprep.subr.mxu0 0.0
    %5928 = vmatpush1.msra.mxu0 %v5836
    %5929 = vmatprep.subr.mxu0 0.0
    %5930 = vmatpush1.msra.mxu0 %v5837
    %5931 = vmatprep.subr.mxu0 0.0
    %5932 = vmatpush1.msra.mxu0 %v5838
    %5933 = vmatprep.subr.mxu0 0.0
    %5934 = vmatpush1.msra.mxu0 %v5839
    %5935 = vmatprep.subr.mxu0 0.0
    %5936 = vmatpush1.msra.mxu0 %v5840
    %5937 = vmatprep.subr.mxu0 0.0
    %5938 = vmatpush1.msra.mxu0 %v5841
    %5939 = vmatprep.subr.mxu0 0.0
    %5940 = vmatpush1.msra.mxu0 %v5842
    %5941 = vmatprep.subr.mxu0 0.0
    %5942 = vmatpush1.msra.mxu0 %v5843
    %5943 = vmatprep.subr.mxu0 0.0
    %5944 = vmatpush1.msra.mxu0 %v5844
    %5945 = vmatprep.subr.mxu0 0.0
    %5946 = vmatpush1.msra.mxu0 %v5845
    %5947 = vmatprep.subr.mxu0 0.0
    %5948 = vmatpush1.msra.mxu0 %v5846
    %5949 = vmatprep.subr.mxu0 0.0
    %5950 = vmatpush1.msra.mxu0 0.0
    %5951 = vmatprep.subr.mxu0 0.0
    %5952 = vmatpush1.msra.mxu0 0.0
    %5953 = vmatprep.subr.mxu0 0.0
    %5954 = vmatpush1.msra.mxu0 0.0
    %5955 = vmatprep.subr.mxu0 0.0
    %5956 = vmatpush1.msra.mxu0 0.0
    %5957 = vmatprep.subr.mxu0 0.0
    %5958 = vmatpush1.msra.mxu0 0.0
    %5959 = vmatprep.subr.mxu0 0.0
    %5960 = vmatpush1.msra.mxu0 0.0
    %5961 = vmatprep.subr.mxu0 0.0
    %5962 = vmatpush1.msra.mxu0 0.0
    %5963 = vmatprep.subr.mxu0 0.0
    %5964 = vmatpush1.msra.mxu0 0.0
    %5965 = vmatprep.subr.mxu0 0.0
    %5966 = vmatpush1.msra.mxu0 0.0
    %5967 = vmatprep.subr.mxu0 0.0
    %5968 = vmatpush1.msra.mxu0 0.0
    %5969 = vmatprep.subr.mxu0 0.0
    %5970 = vmatpush1.msra.mxu0 0.0
    %5971 = vmatprep.subr.mxu0 0.0
    %5972 = vmatpush1.msra.mxu0 0.0
    %5973 = vmatprep.subr.mxu0 0.0
    %5974 = vmatpush1.msra.mxu0 0.0
    %5975 = vmatprep.subr.mxu0 0.0
    %5976 = vmatpush1.msra.mxu0 0.0
    %5977 = vmatprep.subr.mxu0 0.0
    %5978 = vmatpush1.msra.mxu0 0.0
    %5979 = vmatprep.subr.mxu0 0.0
    %5980 = vmatpush1.msra.mxu0 0.0
    %5981 = vmatprep.mubr.f32.mxu0 0.0
    %5982 = vmatmul.mubr.f32.gmra.mrb[0].mxu0 %v5038
    %v5983 = vpop.f32.mrb[0].mxu0
    %v5984 = vadd.f32 %v5914, %v5983
    %v5985 = vpop.f32.mrb[0].mxu0
    %5986 = vdwg.mxu0
    %s5987 = scvt.s32.f32 %s108
    %s5988 = smul.f32 %s5987, 100.0
    %v5989 = vstv %s5988
    %v5990 = vrcp.pop %v5989
    %s5991 = vtos %v5990
    %v5992 = vstv %s5991
    %v5993 = vmul.f32 %v5984, %v5992
    %v5994 = vmul.f32 %v5993, %v5993
    %v5996 = vrot.slane %v5994, 7
    %v5998 = vsub.f32 %v5993, %v5996
    %v5999 = vadd.f32 %v5998, 1e-05
    %v6000 = vrsqrt.pop %v5999
    %v6002 = vrot.slane %v6000, 1
    %v6004 = vmul.f32 %v4741, %v6002
    %v6005 = vmul.f32 %v5993, %v6004
    %v6006 = vsub.f32 %v4742, %v6005
    %v6007 = vadd.s32 %v5078, 128
    %v6008 = vadd.s32 %v5078, 256
    %vm6009 = vcmp.lt.s32.totalorder %v5078, 0
    %v6010 = vsub.s32 0, %v5078
    %v6011 = vsel %vm6009, %v6010, %v5078
    %v6012 = vshrl.u32 %v6011, 5
    %v6013 = vand.u32 %v6011, 31
    %v6014 = vsub.s32 0, %v6013
    %v6015 = vsel %vm6009, %v6014, %v6013
    %vm6016 = vcmp.lt.s32.totalorder %v6007, 0
    %v6017 = vsub.s32 0, %v6007
    %v6018 = vsel %vm6016, %v6017, %v6007
    %v6019 = vshrl.u32 %v6018, 5
    %v6020 = vand.u32 %v6018, 31
    %v6021 = vsub.s32 0, %v6020
    %v6022 = vsel %vm6016, %v6021, %v6020
    %vm6023 = vcmp.lt.s32.totalorder %v6008, 0
    %v6024 = vsub.s32 0, %v6008
    %v6025 = vsel %vm6023, %v6024, %v6008
    %v6026 = vshrl.u32 %v6025, 5
    %v6027 = vand.u32 %v6025, 31
    %v6028 = vsub.s32 0, %v6027
    %v6029 = vsel %vm6023, %v6028, %v6027
    %vm6030 = vcmp.ne.s32.totalorder %v6015, 0
    %vm6031 = vcmp.ne.s32.totalorder %v6022, 0
    %vm6032 = vcmp.ne.s32.totalorder %v6029, 0
    %vm6033 = vcmp.lt.s32.totalorder %v6015, 0
    %vm6034 = vcmp.lt.s32.totalorder %v6022, 0
    %vm6035 = vcmp.lt.s32.totalorder %v6029, 0
    %vm6036 = vmand %vm6033, %vm6030
    %vm6037 = vmand %vm6034, %vm6031
    %vm6038 = vmand %vm6035, %vm6032
    %v6039 = vadd.s32 %v6015, 32
    %v6040 = vadd.s32 %v6022, 32
    %v6041 = vadd.s32 %v6029, 32
    %v6042 = vsel %vm6036, %v6039, %v6015
    %v6043 = vsel %vm6037, %v6040, %v6022
    %v6044 = vsel %vm6038, %v6041, %v6029
    %vm6045 = vcmp.eq.s32.totalorder %v6042, %v4744
    %vm6046 = vcmp.eq.s32.totalorder %v6043, %v4744
    %vm6047 = vcmp.eq.s32.totalorder %v6044, %v4744
    %vm6048 = vcmp.eq.s32.totalorder %v6042, %v4745
    %vm6049 = vcmp.eq.s32.totalorder %v6043, %v4745
    %vm6050 = vcmp.eq.s32.totalorder %v6044, %v4745
    %vm6051 = vcmp.eq.s32.totalorder %v6042, %v4746
    %vm6052 = vcmp.eq.s32.totalorder %v6043, %v4746
    %vm6053 = vcmp.eq.s32.totalorder %v6044, %v4746
    %vm6054 = vcmp.eq.s32.totalorder %v6042, %v4747
    %vm6055 = vcmp.eq.s32.totalorder %v6043, %v4747
    %vm6056 = vcmp.eq.s32.totalorder %v6044, %v4747
    %vm6057 = vcmp.eq.s32.totalorder %v6042, %v4748
    %vm6058 = vcmp.eq.s32.totalorder %v6043, %v4748
    %vm6059 = vcmp.eq.s32.totalorder %v6044, %v4748
    %vm6060 = vcmp.eq.s32.totalorder %v6042, %v4749
    %vm6061 = vcmp.eq.s32.totalorder %v6043, %v4749
    %vm6062 = vcmp.eq.s32.totalorder %v6044, %v4749
    %vm6063 = vcmp.eq.s32.totalorder %v6042, %v4750
    %vm6064 = vcmp.eq.s32.totalorder %v6043, %v4750
    %vm6065 = vcmp.eq.s32.totalorder %v6044, %v4750
    %vm6066 = vcmp.eq.s32.totalorder %v6042, %v4751
    %vm6067 = vcmp.eq.s32.totalorder %v6043, %v4751
    %vm6068 = vcmp.eq.s32.totalorder %v6044, %v4751
    %vm6069 = vcmp.eq.s32.totalorder %v6042, %v4752
    %vm6070 = vcmp.eq.s32.totalorder %v6043, %v4752
    %vm6071 = vcmp.eq.s32.totalorder %v6044, %v4752
    %vm6072 = vcmp.eq.s32.totalorder %v6042, %v4753
    %vm6073 = vcmp.eq.s32.totalorder %v6043, %v4753
    %vm6074 = vcmp.eq.s32.totalorder %v6044, %v4753
    %vm6075 = vcmp.eq.s32.totalorder %v6042, %v5039
    %vm6076 = vcmp.eq.s32.totalorder %v6043, %v5039
    %vm6077 = vcmp.eq.s32.totalorder %v6044, %v5039
    %vm6078 = vcmp.eq.s32.totalorder %v6042, %v5040
    %vm6079 = vcmp.eq.s32.totalorder %v6043, %v5040
    %vm6080 = vcmp.eq.s32.totalorder %v6044, %v5040
    %vm6081 = vcmp.eq.s32.totalorder %v6042, %v5041
    %vm6082 = vcmp.eq.s32.totalorder %v6043, %v5041
    %vm6083 = vcmp.eq.s32.totalorder %v6044, %v5041
    %vm6084 = vcmp.eq.s32.totalorder %v6042, %v5042
    %vm6085 = vcmp.eq.s32.totalorder %v6043, %v5042
    %vm6086 = vcmp.eq.s32.totalorder %v6044, %v5042
    %vm6087 = vcmp.eq.s32.totalorder %v6042, %v5043
    %vm6088 = vcmp.eq.s32.totalorder %v6043, %v5043
    %vm6089 = vcmp.eq.s32.totalorder %v6044, %v5043
    %vm6090 = vcmp.eq.s32.totalorder %v6042, %v5044
    %vm6091 = vcmp.eq.s32.totalorder %v6043, %v5044
    %vm6092 = vcmp.eq.s32.totalorder %v6044, %v5044
    %v6093 = vsel %vm6045, 1.0, 0.0
    %v6094 = vsel %vm6046, 1.0, 0.0
    %v6095 = vsel %vm6047, 1.0, 0.0
    %v6096 = vsel %vm6048, 1.0, 0.0
    %v6097 = vsel %vm6049, 1.0, 0.0
    %v6098 = vsel %vm6050, 1.0, 0.0
    %v6099 = vsel %vm6051, 1.0, 0.0
    %v6100 = vsel %vm6052, 1.0, 0.0
    %v6101 = vsel %vm6053, 1.0, 0.0
    %v6102 = vsel %vm6054, 1.0, 0.0
    %v6103 = vsel %vm6055, 1.0, 0.0
    %v6104 = vsel %vm6056, 1.0, 0.0
    %v6105 = vsel %vm6057, 1.0, 0.0
    %v6106 = vsel %vm6058, 1.0, 0.0
    %v6107 = vsel %vm6059, 1.0, 0.0
    %v6108 = vsel %vm6060, 1.0, 0.0
    %v6109 = vsel %vm6061, 1.0, 0.0
    %v6110 = vsel %vm6062, 1.0, 0.0
    %v6111 = vsel %vm6063, 1.0, 0.0
    %v6112 = vsel %vm6064, 1.0, 0.0
    %v6113 = vsel %vm6065, 1.0, 0.0
    %v6114 = vsel %vm6066, 1.0, 0.0
    %v6115 = vsel %vm6067, 1.0, 0.0
    %v6116 = vsel %vm6068, 1.0, 0.0
    %v6117 = vsel %vm6069, 1.0, 0.0
    %v6118 = vsel %vm6070, 1.0, 0.0
    %v6119 = vsel %vm6071, 1.0, 0.0
    %v6120 = vsel %vm6072, 1.0, 0.0
    %v6121 = vsel %vm6073, 1.0, 0.0
    %v6122 = vsel %vm6074, 1.0, 0.0
    %v6123 = vsel %vm6075, 1.0, 0.0
    %v6124 = vsel %vm6076, 1.0, 0.0
    %v6125 = vsel %vm6077, 1.0, 0.0
    %v6126 = vsel %vm6078, 1.0, 0.0
    %v6127 = vsel %vm6079, 1.0, 0.0
    %v6128 = vsel %vm6080, 1.0, 0.0
    %v6129 = vsel %vm6081, 1.0, 0.0
    %v6130 = vsel %vm6082, 1.0, 0.0
    %v6131 = vsel %vm6083, 1.0, 0.0
    %v6132 = vsel %vm6084, 1.0, 0.0
    %v6133 = vsel %vm6085, 1.0, 0.0
    %v6134 = vsel %vm6086, 1.0, 0.0
    %v6135 = vsel %vm6087, 1.0, 0.0
    %v6136 = vsel %vm6088, 1.0, 0.0
    %v6137 = vsel %vm6089, 1.0, 0.0
    %v6138 = vsel %vm6090, 1.0, 0.0
    %v6139 = vsel %vm6091, 1.0, 0.0
    %v6140 = vsel %vm6092, 1.0, 0.0
    %v6142 = vrot.slane %v6006, 7
    %v6144 = vsel %vm5035, %v6004, %v6142
    %6145 = vmatprep.subr.mxu0 %v6094
    %6146 = vmatpush1.msra.mxu0 %v6093
    %6147 = vmatprep.subr.mxu0 %v6097
    %6148 = vmatpush1.msra.mxu0 %v6096
    %6149 = vmatprep.subr.mxu0 %v6100
    %6150 = vmatpush1.msra.mxu0 %v6099
    %6151 = vmatprep.subr.mxu0 %v6103
    %6152 = vmatpush1.msra.mxu0 %v6102
    %6153 = vmatprep.subr.mxu0 %v6106
    %6154 = vmatpush1.msra.mxu0 %v6105
    %6155 = vmatprep.subr.mxu0 %v6109
    %6156 = vmatpush1.msra.mxu0 %v6108
    %6157 = vmatprep.subr.mxu0 %v6112
    %6158 = vmatpush1.msra.mxu0 %v6111
    %6159 = vmatprep.subr.mxu0 %v6115
    %6160 = vmatpush1.msra.mxu0 %v6114
    %6161 = vmatprep.subr.mxu0 %v6118
    %6162 = vmatpush1.msra.mxu0 %v6117
    %6163 = vmatprep.subr.mxu0 %v6121
    %6164 = vmatpush1.msra.mxu0 %v6120
    %6165 = vmatprep.subr.mxu0 %v6124
    %6166 = vmatpush1.msra.mxu0 %v6123
    %6167 = vmatprep.subr.mxu0 %v6127
    %6168 = vmatpush1.msra.mxu0 %v6126
    %6169 = vmatprep.subr.mxu0 %v6130
    %6170 = vmatpush1.msra.mxu0 %v6129
    %6171 = vmatprep.subr.mxu0 %v6133
    %6172 = vmatpush1.msra.mxu0 %v6132
    %6173 = vmatprep.subr.mxu0 %v6136
    %6174 = vmatpush1.msra.mxu0 %v6135
    %6175 = vmatprep.subr.mxu0 %v6139
    %6176 = vmatpush1.msra.mxu0 %v6138
    %6177 = vmatprep.subr.mxu0 0.0
    %6178 = vmatpush1.msra.mxu0 0.0
    %6179 = vmatprep.subr.mxu0 0.0
    %6180 = vmatpush1.msra.mxu0 0.0
    %6181 = vmatprep.subr.mxu0 0.0
    %6182 = vmatpush1.msra.mxu0 0.0
    %6183 = vmatprep.subr.mxu0 0.0
    %6184 = vmatpush1.msra.mxu0 0.0
    %6185 = vmatprep.subr.mxu0 0.0
    %6186 = vmatpush1.msra.mxu0 0.0
    %6187 = vmatprep.subr.mxu0 0.0
    %6188 = vmatpush1.msra.mxu0 0.0
    %6189 = vmatprep.subr.mxu0 0.0
    %6190 = vmatpush1.msra.mxu0 0.0
    %6191 = vmatprep.subr.mxu0 0.0
    %6192 = vmatpush1.msra.mxu0 0.0
    %6193 = vmatprep.subr.mxu0 0.0
    %6194 = vmatpush1.msra.mxu0 0.0
    %6195 = vmatprep.subr.mxu0 0.0
    %6196 = vmatpush1.msra.mxu0 0.0
    %6197 = vmatprep.subr.mxu0 0.0
    %6198 = vmatpush1.msra.mxu0 0.0
    %6199 = vmatprep.subr.mxu0 0.0
    %6200 = vmatpush1.msra.mxu0 0.0
    %6201 = vmatprep.subr.mxu0 0.0
    %6202 = vmatpush1.msra.mxu0 0.0
    %6203 = vmatprep.subr.mxu0 0.0
    %6204 = vmatpush1.msra.mxu0 0.0
    %6205 = vmatprep.subr.mxu0 0.0
    %6206 = vmatpush1.msra.mxu0 0.0
    %6207 = vmatprep.subr.mxu0 0.0
    %6208 = vmatpush1.msra.mxu0 0.0
    %6209 = vmatprep.mubr.f32.mxu0 0.0
    %6210 = vmatmul.mubr.f32.gmra.mrb[0].mxu0 %v6144
    %v6211 = vpop.f32.mrb[0].mxu0
    %v6212 = vadd.f32 0.0, %v6211
    %v6213 = vpop.f32.mrb[0].mxu0
    %v6214 = vadd.f32 0.0, %v6213
    %6215 = vdwg.mxu0
    %6216 = vmatprep.subr.mxu0 0.0
    %6217 = vmatpush1.msra.mxu0 %v6095
    %6218 = vmatprep.subr.mxu0 0.0
    %6219 = vmatpush1.msra.mxu0 %v6098
    %6220 = vmatprep.subr.mxu0 0.0
    %6221 = vmatpush1.msra.mxu0 %v6101
    %6222 = vmatprep.subr.mxu0 0.0
    %6223 = vmatpush1.msra.mxu0 %v6104
    %6224 = vmatprep.subr.mxu0 0.0
    %6225 = vmatpush1.msra.mxu0 %v6107
    %6226 = vmatprep.subr.mxu0 0.0
    %6227 = vmatpush1.msra.mxu0 %v6110
    %6228 = vmatprep.subr.mxu0 0.0
    %6229 = vmatpush1.msra.mxu0 %v6113
    %6230 = vmatprep.subr.mxu0 0.0
    %6231 = vmatpush1.msra.mxu0 %v6116
    %6232 = vmatprep.subr.mxu0 0.0
    %6233 = vmatpush1.msra.mxu0 %v6119
    %6234 = vmatprep.subr.mxu0 0.0
    %6235 = vmatpush1.msra.mxu0 %v6122
    %6236 = vmatprep.subr.mxu0 0.0
    %6237 = vmatpush1.msra.mxu0 %v6125
    %6238 = vmatprep.subr.mxu0 0.0
    %6239 = vmatpush1.msra.mxu0 %v6128
    %6240 = vmatprep.subr.mxu0 0.0
    %6241 = vmatpush1.msra.mxu0 %v6131
    %6242 = vmatprep.subr.mxu0 0.0
    %6243 = vmatpush1.msra.mxu0 %v6134
    %6244 = vmatprep.subr.mxu0 0.0
    %6245 = vmatpush1.msra.mxu0 %v6137
    %6246 = vmatprep.subr.mxu0 0.0
    %6247 = vmatpush1.msra.mxu0 %v6140
    %6248 = vmatprep.subr.mxu0 0.0
    %6249 = vmatpush1.msra.mxu0 0.0
    %6250 = vmatprep.subr.mxu0 0.0
    %6251 = vmatpush1.msra.mxu0 0.0
    %6252 = vmatprep.subr.mxu0 0.0
    %6253 = vmatpush1.msra.mxu0 0.0
    %6254 = vmatprep.subr.mxu0 0.0
    %6255 = vmatpush1.msra.mxu0 0.0
    %6256 = vmatprep.subr.mxu0 0.0
    %6257 = vmatpush1.msra.mxu0 0.0
    %6258 = vmatprep.subr.mxu0 0.0
    %6259 = vmatpush1.msra.mxu0 0.0
    %6260 = vmatprep.subr.mxu0 0.0
    %6261 = vmatpush1.msra.mxu0 0.0
    %6262 = vmatprep.subr.mxu0 0.0
    %6263 = vmatpush1.msra.mxu0 0.0
    %6264 = vmatprep.subr.mxu0 0.0
    %6265 = vmatpush1.msra.mxu0 0.0
    %6266 = vmatprep.subr.mxu0 0.0
    %6267 = vmatpush1.msra.mxu0 0.0
    %6268 = vmatprep.subr.mxu0 0.0
    %6269 = vmatpush1.msra.mxu0 0.0
    %6270 = vmatprep.subr.mxu0 0.0
    %6271 = vmatpush1.msra.mxu0 0.0
    %6272 = vmatprep.subr.mxu0 0.0
    %6273 = vmatpush1.msra.mxu0 0.0
    %6274 = vmatprep.subr.mxu0 0.0
    %6275 = vmatpush1.msra.mxu0 0.0
    %6276 = vmatprep.subr.mxu0 0.0
    %6277 = vmatpush1.msra.mxu0 0.0
    %6278 = vmatprep.subr.mxu0 0.0
    %6279 = vmatpush1.msra.mxu0 0.0
    %6280 = vmatprep.mubr.f32.mxu0 0.0
    %6281 = vmatmul.mubr.f32.gmra.mrb[0].mxu0 %v6144
    %v6282 = vpop.f32.mrb[0].mxu0
    %v6283 = vadd.f32 0.0, %v6282
    %v6284 = vpop.f32.mrb[0].mxu0
    %6285 = vdwg.mxu0
    %v6286 = vlaneseq
    %v6287 = vshrl.u32 %v6286, 7
    %v6288 = vsub.s32 0, %v6287
    %v6289 = vrot.slane %v6212, %v6288
    %v6290 = vlaneseq
    %v6291 = vshrl.u32 %v6290, 7
    %v6292 = vsub.s32 0, %v6291
    %v6293 = vrot.slane %v6214, %v6292
    %v6294 = vlaneseq
    %v6295 = vshrl.u32 %v6294, 7
    %v6296 = vsub.s32 0, %v6295
    %v6297 = vrot.slane %v6283, %v6296
    %v6298 = vmul.f32 %v4711, %v6289
    %v6299 = vmul.f32 %v4712, %v6293
    %v6300 = vmul.f32 %v4713, %v6297
    %v6301 = vmul.f32 %v4714, %v6289
    %v6302 = vmul.f32 %v4715, %v6293
    %v6303 = vmul.f32 %v4716, %v6297
    %v6304 = vmul.f32 %v4717, %v6289
    %v6305 = vmul.f32 %v4718, %v6293
    %v6306 = vmul.f32 %v4719, %v6297
    %v6307 = vmul.f32 %v4720, %v6289
    %v6308 = vmul.f32 %v4721, %v6293
    %v6309 = vmul.f32 %v4722, %v6297
    %v6310 = vmul.f32 %v4723, %v6289
    %v6311 = vmul.f32 %v4724, %v6293
    %v6312 = vmul.f32 %v4725, %v6297
    %v6313 = vmul.f32 %v4726, %v6289
    %v6314 = vmul.f32 %v4727, %v6293
    %v6315 = vmul.f32 %v4728, %v6297
    %v6316 = vmul.f32 %v4729, %v6289
    %v6317 = vmul.f32 %v4730, %v6293
    %v6318 = vmul.f32 %v4731, %v6297
    %v6319 = vmul.f32 %v4732, %v6289
    %v6320 = vmul.f32 %v4733, %v6293
    %v6321 = vmul.f32 %v4734, %v6297
    %v6322 = vmul.f32 %v4735, %v6289
    %v6323 = vmul.f32 %v4736, %v6293
    %v6324 = vmul.f32 %v4737, %v6297
    %v6325 = vmul.f32 %v4738, %v6289
    %v6326 = vmul.f32 %v4739, %v6293
    %v6327 = vmul.f32 %v4740, %v6297
    %v6328 = vlaneseq
    %v6329 = vshrl.u32 %v6328, 7
    %v6330 = vsub.s32 1, %v6329
    %v6331 = vrot.slane %v6212, %v6330
    %v6332 = vlaneseq
    %v6333 = vshrl.u32 %v6332, 7
    %v6334 = vsub.s32 1, %v6333
    %v6335 = vrot.slane %v6214, %v6334
    %v6336 = vlaneseq
    %v6337 = vshrl.u32 %v6336, 7
    %v6338 = vsub.s32 1, %v6337
    %v6339 = vrot.slane %v6283, %v6338
    %v6340 = vadd.f32 %v6298, %v6331
    %v6341 = vadd.f32 %v6299, %v6335
    %v6342 = vadd.f32 %v6300, %v6339
    %v6343 = vadd.f32 %v6301, %v6331
    %v6344 = vadd.f32 %v6302, %v6335
    %v6345 = vadd.f32 %v6303, %v6339
    %v6346 = vadd.f32 %v6304, %v6331
    %v6347 = vadd.f32 %v6305, %v6335
    %v6348 = vadd.f32 %v6306, %v6339
    %v6349 = vadd.f32 %v6307, %v6331
    %v6350 = vadd.f32 %v6308, %v6335
    %v6351 = vadd.f32 %v6309, %v6339
    %v6352 = vadd.f32 %v6310, %v6331
    %v6353 = vadd.f32 %v6311, %v6335
    %v6354 = vadd.f32 %v6312, %v6339
    %v6355 = vadd.f32 %v6313, %v6331
    %v6356 = vadd.f32 %v6314, %v6335
    %v6357 = vadd.f32 %v6315, %v6339
    %v6358 = vadd.f32 %v6316, %v6331
    %v6359 = vadd.f32 %v6317, %v6335
    %v6360 = vadd.f32 %v6318, %v6339
    %v6361 = vadd.f32 %v6319, %v6331
    %v6362 = vadd.f32 %v6320, %v6335
    %v6363 = vadd.f32 %v6321, %v6339
    %v6364 = vadd.f32 %v6322, %v6331
    %v6365 = vadd.f32 %v6323, %v6335
    %v6366 = vadd.f32 %v6324, %v6339
    %v6367 = vadd.f32 %v6325, %v6331
    %v6368 = vadd.f32 %v6326, %v6335
    %v6369 = vadd.f32 %v6327, %v6339
    %v6370 = vmax.f32 %v6340, 0.0
    %v6371 = vmax.f32 %v6341, 0.0
    %v6372 = vmax.f32 %v6342, 0.0
    %v6373 = vmax.f32 %v6343, 0.0
    %v6374 = vmax.f32 %v6344, 0.0
    %v6375 = vmax.f32 %v6345, 0.0
    %v6376 = vmax.f32 %v6346, 0.0
    %v6377 = vmax.f32 %v6347, 0.0
    %v6378 = vmax.f32 %v6348, 0.0
    %v6379 = vmax.f32 %v6349, 0.0
    %v6380 = vmax.f32 %v6350, 0.0
    %v6381 = vmax.f32 %v6351, 0.0
    %v6382 = vmax.f32 %v6352, 0.0
    %v6383 = vmax.f32 %v6353, 0.0
    %v6384 = vmax.f32 %v6354, 0.0
    %v6385 = vmax.f32 %v6355, 0.0
    %v6386 = vmax.f32 %v6356, 0.0
    %v6387 = vmax.f32 %v6357, 0.0
    %v6388 = vmax.f32 %v6358, 0.0
    %v6389 = vmax.f32 %v6359, 0.0
    %v6390 = vmax.f32 %v6360, 0.0
    %v6391 = vmax.f32 %v6361, 0.0
    %v6392 = vmax.f32 %v6362, 0.0
    %v6393 = vmax.f32 %v6363, 0.0
    %v6394 = vmax.f32 %v6364, 0.0
    %v6395 = vmax.f32 %v6365, 0.0
    %v6396 = vmax.f32 %v6366, 0.0
    %v6397 = vmax.f32 %v6367, 0.0
    %v6398 = vmax.f32 %v6368, 0.0
    %v6399 = vmax.f32 %v6369, 0.0
    %v6400 = vpack.c.bf16 %v6373, %v6370
    %v6401 = vpack.c.bf16 %v6374, %v6371
    %v6402 = vpack.c.bf16 %v6375, %v6372
    %v6403 = vpack.c.bf16 %v6379, %v6376
    %v6404 = vpack.c.bf16 %v6380, %v6377
    %v6405 = vpack.c.bf16 %v6381, %v6378
    %v6406 = vpack.c.bf16 %v6385, %v6382
    %v6407 = vpack.c.bf16 %v6386, %v6383
    %v6408 = vpack.c.bf16 %v6387, %v6384
    %v6409 = vpack.c.bf16 %v6391, %v6388
    %v6410 = vpack.c.bf16 %v6392, %v6389
    %v6411 = vpack.c.bf16 %v6393, %v6390
    %v6412 = vpack.c.bf16 %v6397, %v6394
    %v6413 = vpack.c.bf16 %v6398, %v6395
    %v6414 = vpack.c.bf16 %v6399, %v6396
    %v6415 = vld [vmem:[#allocation12] sm:$0xff]
    %v6416 = vld [vmem:[#allocation12 + $0x8] sm:$0xff]
    %v6417 = vld [vmem:[#allocation12 + $0x10] sm:$0xff]
    %v6418 = vld [vmem:[#allocation12 + $0x18] sm:$0xff]
    %v6419 = vld [vmem:[#allocation12 + $0x20] sm:$0xff]
    %v6420 = vld [vmem:[#allocation12 + $0x28] sm:$0xff]
    %v6421 = vld [vmem:[#allocation12 + $0x30] sm:$0xff]
    %v6422 = vld [vmem:[#allocation12 + $0x38] sm:$0xff]
    %v6423 = vld [vmem:[#allocation12 + $0x40] sm:$0xff]
    %v6424 = vld [vmem:[#allocation12 + $0x48] sm:$0xff]
    %v6425 = vld [vmem:[#allocation12 + $0x50] sm:$0xff]
    %v6426 = vld [vmem:[#allocation12 + $0x58] sm:$0xff]
    %v6427 = vld [vmem:[#allocation12 + $0x60] sm:$0xff]
    %v6428 = vld [vmem:[#allocation12 + $0x68] sm:$0xff]
    %v6429 = vld [vmem:[#allocation12 + $0x70] sm:$0xff]
    %v6430 = vld [vmem:[#allocation12 + $0x78] sm:$0xff]
    %v6431 = vld [vmem:[#allocation12 + $0x80] sm:$0xff]
    %v6432 = vld [vmem:[#allocation12 + $0x88] sm:$0xff]
    %v6433 = vld [vmem:[#allocation12 + $0x90] sm:$0xff]
    %v6434 = vld [vmem:[#allocation12 + $0x98] sm:$0xff]
    %v6435 = vld [vmem:[#allocation12 + $0xa0] sm:$0xff]
    %v6436 = vld [vmem:[#allocation12 + $0xa8] sm:$0xff]
    %v6437 = vld [vmem:[#allocation12 + $0xb0] sm:$0xff]
    %v6438 = vld [vmem:[#allocation12 + $0xb8] sm:$0xff]
    %v6439 = vld [vmem:[#allocation12 + $0xc0] sm:$0xff]
    %v6440 = vld [vmem:[#allocation12 + $0xc8] sm:$0xff]
    %v6441 = vld [vmem:[#allocation12 + $0xd0] sm:$0xff]
    %v6442 = vld [vmem:[#allocation12 + $0xd8] sm:$0xff]
    %v6443 = vld [vmem:[#allocation12 + $0xe0] sm:$0xff]
    %v6444 = vld [vmem:[#allocation12 + $0xe8] sm:$0xff]
    %v6445 = vld [vmem:[#allocation12 + $0xf0] sm:$0xff]
    %v6446 = vld [vmem:[#allocation12 + $0xf8] sm:$0xff]
    %v6447 = vld [vmem:[#allocation12 + $0x100] sm:$0xff]
    %v6448 = vld [vmem:[#allocation12 + $0x108] sm:$0xff]
    %v6449 = vld [vmem:[#allocation12 + $0x110] sm:$0xff]
    %v6450 = vld [vmem:[#allocation12 + $0x118] sm:$0xff]
    %v6451 = vld [vmem:[#allocation12 + $0x120] sm:$0xff]
    %v6452 = vld [vmem:[#allocation12 + $0x128] sm:$0xff]
    %v6453 = vld [vmem:[#allocation12 + $0x130] sm:$0xff]
    %v6454 = vld [vmem:[#allocation12 + $0x138] sm:$0xff]
    %v6455 = vld [vmem:[#allocation12 + $0x140] sm:$0xff]
    %v6456 = vld [vmem:[#allocation12 + $0x148] sm:$0xff]
    %v6457 = vld [vmem:[#allocation12 + $0x150] sm:$0xff]
    %v6458 = vld [vmem:[#allocation12 + $0x158] sm:$0xff]
    %v6459 = vld [vmem:[#allocation12 + $0x160] sm:$0xff]
    %v6460 = vld [vmem:[#allocation12 + $0x168] sm:$0xff]
    %v6461 = vld [vmem:[#allocation12 + $0x170] sm:$0xff]
    %v6462 = vld [vmem:[#allocation12 + $0x178] sm:$0xff]
    %v6463 = vld [vmem:[#allocation12 + $0x180] sm:$0xff]
    %v6464 = vld [vmem:[#allocation12 + $0x188] sm:$0xff]
    %v6465 = vld [vmem:[#allocation12 + $0x190] sm:$0xff]
    %v6466 = vld [vmem:[#allocation12 + $0x198] sm:$0xff]
    %v6467 = vld [vmem:[#allocation12 + $0x1a0] sm:$0xff]
    %v6468 = vld [vmem:[#allocation12 + $0x1a8] sm:$0xff]
    %v6469 = vld [vmem:[#allocation12 + $0x1b0] sm:$0xff]
    %v6470 = vld [vmem:[#allocation12 + $0x1b8] sm:$0xff]
    %v6471 = vld [vmem:[#allocation12 + $0x1c0] sm:$0xff]
    %v6472 = vld [vmem:[#allocation12 + $0x1c8] sm:$0xff]
    %v6473 = vld [vmem:[#allocation12 + $0x1d0] sm:$0xff]
    %v6474 = vld [vmem:[#allocation12 + $0x1d8] sm:$0xff]
    %v6475 = vld [vmem:[#allocation12 + $0x1e0] sm:$0xff]
    %v6476 = vld [vmem:[#allocation12 + $0x1e8] sm:$0xff]
    %v6477 = vld [vmem:[#allocation12 + $0x1f0] sm:$0xff]
    %v6478 = vld [vmem:[#allocation12 + $0x1f8] sm:$0xff]
    %v6479 = vld [vmem:[#allocation12 + $0x200] sm:$0xff]
    %v6480 = vld [vmem:[#allocation12 + $0x208] sm:$0xff]
    %v6481 = vld [vmem:[#allocation12 + $0x210] sm:$0xff]
    %v6482 = vld [vmem:[#allocation12 + $0x218] sm:$0xff]
    %v6483 = vld [vmem:[#allocation12 + $0x220] sm:$0xff]
    %v6484 = vld [vmem:[#allocation12 + $0x228] sm:$0xff]
    %v6485 = vld [vmem:[#allocation12 + $0x230] sm:$0xff]
    %v6486 = vld [vmem:[#allocation12 + $0x238] sm:$0xff]
    %v6487 = vld [vmem:[#allocation12 + $0x240] sm:$0xff]
    %v6488 = vld [vmem:[#allocation12 + $0x248] sm:$0xff]
    %v6489 = vld [vmem:[#allocation12 + $0x250] sm:$0xff]
    %v6490 = vld [vmem:[#allocation12 + $0x258] sm:$0xff]
    %v6491 = vld [vmem:[#allocation12 + $0x260] sm:$0xff]
    %v6492 = vld [vmem:[#allocation12 + $0x268] sm:$0xff]
    %v6493 = vld [vmem:[#allocation12 + $0x270] sm:$0xff]
    %v6494 = vld [vmem:[#allocation12 + $0x278] sm:$0xff]
    %v6495 = vld [vmem:[#allocation12 + $0x280] sm:$0xff]
    %v6496 = vld [vmem:[#allocation12 + $0x288] sm:$0xff]
    %v6497 = vld [vmem:[#allocation12 + $0x290] sm:$0xff]
    %v6498 = vld [vmem:[#allocation12 + $0x298] sm:$0xff]
    %v6499 = vld [vmem:[#allocation12 + $0x2a0] sm:$0xff]
    %v6500 = vld [vmem:[#allocation12 + $0x2a8] sm:$0xff]
    %v6501 = vld [vmem:[#allocation12 + $0x2b0] sm:$0xff]
    %v6502 = vld [vmem:[#allocation12 + $0x2b8] sm:$0xff]
    %v6503 = vld [vmem:[#allocation12 + $0x2c0] sm:$0xff]
    %v6504 = vld [vmem:[#allocation12 + $0x2c8] sm:$0xff]
    %v6505 = vld [vmem:[#allocation12 + $0x2d0] sm:$0xff]
    %v6506 = vld [vmem:[#allocation12 + $0x2d8] sm:$0xff]
    %v6507 = vld [vmem:[#allocation12 + $0x2e0] sm:$0xff]
    %v6508 = vld [vmem:[#allocation12 + $0x2e8] sm:$0xff]
    %v6509 = vld [vmem:[#allocation12 + $0x2f0] sm:$0xff]
    %v6510 = vld [vmem:[#allocation12 + $0x2f8] sm:$0xff]
    %v6511 = vld [vmem:[#allocation12 + $0x300] sm:$0xff]
    %v6512 = vld [vmem:[#allocation12 + $0x308] sm:$0xff]
    %v6513 = vld [vmem:[#allocation12 + $0x310] sm:$0xff]
    %v6514 = vld [vmem:[#allocation12 + $0x318] sm:$0xff]
    %v6515 = vld [vmem:[#allocation12 + $0x320] sm:$0xff]
    %v6516 = vld [vmem:[#allocation12 + $0x328] sm:$0xff]
    %v6517 = vld [vmem:[#allocation12 + $0x330] sm:$0xff]
    %v6518 = vld [vmem:[#allocation12 + $0x338] sm:$0xff]
    %v6519 = vld [vmem:[#allocation12 + $0x340] sm:$0xff]
    %v6520 = vld [vmem:[#allocation12 + $0x348] sm:$0xff]
    %v6521 = vld [vmem:[#allocation12 + $0x350] sm:$0xff]
    %v6522 = vld [vmem:[#allocation12 + $0x358] sm:$0xff]
    %v6523 = vld [vmem:[#allocation12 + $0x360] sm:$0xff]
    %v6524 = vld [vmem:[#allocation12 + $0x368] sm:$0xff]
    %v6525 = vld [vmem:[#allocation12 + $0x370] sm:$0xff]
    %v6526 = vld [vmem:[#allocation12 + $0x378] sm:$0xff]
    %v6527 = vld [vmem:[#allocation12 + $0x380] sm:$0xff]
    %v6528 = vld [vmem:[#allocation12 + $0x388] sm:$0xff]
    %v6529 = vld [vmem:[#allocation12 + $0x390] sm:$0xff]
    %v6530 = vld [vmem:[#allocation12 + $0x398] sm:$0xff]
    %v6531 = vld [vmem:[#allocation12 + $0x3a0] sm:$0xff]
    %v6532 = vld [vmem:[#allocation12 + $0x3a8] sm:$0xff]
    %v6533 = vld [vmem:[#allocation12 + $0x3b0] sm:$0xff]
    %v6534 = vld [vmem:[#allocation12 + $0x3b8] sm:$0xff]
    %v6535 = vld [vmem:[#allocation12 + $0x3c0] sm:$0xff]
    %v6536 = vld [vmem:[#allocation12 + $0x3c8] sm:$0xff]
    %v6537 = vld [vmem:[#allocation12 + $0x3d0] sm:$0xff]
    %v6538 = vld [vmem:[#allocation12 + $0x3d8] sm:$0xff]
    %v6539 = vld [vmem:[#allocation12 + $0x3e0] sm:$0xff]
    %v6540 = vld [vmem:[#allocation12 + $0x3e8] sm:$0xff]
    %v6541 = vld [vmem:[#allocation12 + $0x3f0] sm:$0xff]
    %v6542 = vld [vmem:[#allocation12 + $0x3f8] sm:$0xff]
    %v6543 = vld [vmem:[#allocation12 + $0x400] sm:$0xff]
    %v6544 = vld [vmem:[#allocation12 + $0x408] sm:$0xff]
    %v6545 = vld [vmem:[#allocation12 + $0x410] sm:$0xff]
    %v6546 = vld [vmem:[#allocation12 + $0x418] sm:$0xff]
    %v6547 = vld [vmem:[#allocation12 + $0x420] sm:$0xff]
    %v6548 = vld [vmem:[#allocation12 + $0x428] sm:$0xff]
    %v6549 = vld [vmem:[#allocation12 + $0x430] sm:$0xff]
    %v6550 = vld [vmem:[#allocation12 + $0x438] sm:$0xff]
    %v6551 = vld [vmem:[#allocation12 + $0x440] sm:$0xff]
    %v6552 = vld [vmem:[#allocation12 + $0x448] sm:$0xff]
    %v6553 = vld [vmem:[#allocation12 + $0x450] sm:$0xff]
    %v6554 = vld [vmem:[#allocation12 + $0x458] sm:$0xff]
    %v6555 = vld [vmem:[#allocation12 + $0x460] sm:$0xff]
    %v6556 = vld [vmem:[#allocation12 + $0x468] sm:$0xff]
    %v6557 = vld [vmem:[#allocation12 + $0x470] sm:$0xff]
    %v6558 = vld [vmem:[#allocation12 + $0x478] sm:$0xff]
    %v6559 = vld [vmem:[#allocation12 + $0x480] sm:$0xff]
    %v6560 = vld [vmem:[#allocation12 + $0x488] sm:$0xff]
    %v6561 = vld [vmem:[#allocation12 + $0x490] sm:$0xff]
    %v6562 = vld [vmem:[#allocation12 + $0x498] sm:$0xff]
    %v6563 = vld [vmem:[#allocation12 + $0x4a0] sm:$0xff]
    %v6564 = vld [vmem:[#allocation12 + $0x4a8] sm:$0xff]
    %v6565 = vld [vmem:[#allocation12 + $0x4b0] sm:$0xff]
    %v6566 = vld [vmem:[#allocation12 + $0x4b8] sm:$0xff]
    %v6567 = vld [vmem:[#allocation12 + $0x4c0] sm:$0xff]
    %v6568 = vld [vmem:[#allocation12 + $0x4c8] sm:$0xff]
    %v6569 = vld [vmem:[#allocation12 + $0x4d0] sm:$0xff]
    %v6570 = vld [vmem:[#allocation12 + $0x4d8] sm:$0xff]
    %v6571 = vld [vmem:[#allocation12 + $0x4e0] sm:$0xff]
    %v6572 = vld [vmem:[#allocation12 + $0x4e8] sm:$0xff]
    %v6573 = vld [vmem:[#allocation12 + $0x4f0] sm:$0xff]
    %v6574 = vld [vmem:[#allocation12 + $0x4f8] sm:$0xff]
    %v6575 = vld [vmem:[#allocation12 + $0x500] sm:$0xff]
    %v6576 = vld [vmem:[#allocation12 + $0x508] sm:$0xff]
    %v6577 = vld [vmem:[#allocation12 + $0x510] sm:$0xff]
    %v6578 = vld [vmem:[#allocation12 + $0x518] sm:$0xff]
    %v6579 = vld [vmem:[#allocation12 + $0x520] sm:$0xff]
    %v6580 = vld [vmem:[#allocation12 + $0x528] sm:$0xff]
    %v6581 = vld [vmem:[#allocation12 + $0x530] sm:$0xff]
    %v6582 = vld [vmem:[#allocation12 + $0x538] sm:$0xff]
    %v6583 = vld [vmem:[#allocation12 + $0x540] sm:$0xff]
    %v6584 = vld [vmem:[#allocation12 + $0x548] sm:$0xff]
    %v6585 = vld [vmem:[#allocation12 + $0x550] sm:$0xff]
    %v6586 = vld [vmem:[#allocation12 + $0x558] sm:$0xff]
    %v6587 = vld [vmem:[#allocation12 + $0x560] sm:$0xff]
    %v6588 = vld [vmem:[#allocation12 + $0x568] sm:$0xff]
    %v6589 = vld [vmem:[#allocation12 + $0x570] sm:$0xff]
    %v6590 = vld [vmem:[#allocation12 + $0x578] sm:$0xff]
    %v6591 = vld [vmem:[#allocation12 + $0x580] sm:$0xff]
    %v6592 = vld [vmem:[#allocation12 + $0x588] sm:$0xff]
    %v6593 = vld [vmem:[#allocation12 + $0x590] sm:$0xff]
    %v6594 = vld [vmem:[#allocation12 + $0x598] sm:$0xff]
    %v6595 = vld [vmem:[#allocation12 + $0x5a0] sm:$0xff]
    %v6596 = vld [vmem:[#allocation12 + $0x5a8] sm:$0xff]
    %v6597 = vld [vmem:[#allocation12 + $0x5b0] sm:$0xff]
    %v6598 = vld [vmem:[#allocation12 + $0x5b8] sm:$0xff]
    %v6599 = vld [vmem:[#allocation12 + $0x5c0] sm:$0xff]
    %v6600 = vld [vmem:[#allocation12 + $0x5c8] sm:$0xff]
    %v6601 = vld [vmem:[#allocation12 + $0x5d0] sm:$0xff]
    %v6602 = vld [vmem:[#allocation12 + $0x5d8] sm:$0xff]
    %v6603 = vld [vmem:[#allocation12 + $0x5e0] sm:$0xff]
    %v6604 = vld [vmem:[#allocation12 + $0x5e8] sm:$0xff]
    %v6605 = vld [vmem:[#allocation12 + $0x5f0] sm:$0xff]
    %v6606 = vld [vmem:[#allocation12 + $0x5f8] sm:$0xff]
    %v6799 = vunpack.c.l.b16 %v6415
    %v6800 = vunpack.c.h.b16 %v6415
    %v6801 = vunpack.c.l.b16 %v6416
    %v6802 = vunpack.c.h.b16 %v6416
    %v6803 = vunpack.c.l.b16 %v6417
    %v6804 = vunpack.c.h.b16 %v6417
    %v6805 = vunpack.c.l.b16 %v6418
    %v6806 = vunpack.c.h.b16 %v6418
    %v6807 = vunpack.c.l.b16 %v6419
    %v6808 = vunpack.c.h.b16 %v6419
    %v6809 = vunpack.c.l.b16 %v6420
    %v6810 = vunpack.c.h.b16 %v6420
    %v6811 = vunpack.c.l.b16 %v6421
    %v6812 = vunpack.c.h.b16 %v6421
    %v6813 = vunpack.c.l.b16 %v6422
    %v6814 = vunpack.c.h.b16 %v6422
    %v6815 = vunpack.c.l.b16 %v6423
    %v6816 = vunpack.c.h.b16 %v6423
    %v6817 = vunpack.c.l.b16 %v6424
    %v6818 = vunpack.c.h.b16 %v6424
    %v6819 = vunpack.c.l.b16 %v6425
    %v6820 = vunpack.c.h.b16 %v6425
    %v6821 = vunpack.c.l.b16 %v6426
    %v6822 = vunpack.c.h.b16 %v6426
    %v6823 = vunpack.c.l.b16 %v6427
    %v6824 = vunpack.c.h.b16 %v6427
    %v6825 = vunpack.c.l.b16 %v6428
    %v6826 = vunpack.c.h.b16 %v6428
    %v6827 = vunpack.c.l.b16 %v6429
    %v6828 = vunpack.c.h.b16 %v6429
    %v6829 = vunpack.c.l.b16 %v6430
    %v6830 = vunpack.c.h.b16 %v6430
    %v6831 = vunpack.c.l.b16 %v6431
    %v6832 = vunpack.c.h.b16 %v6431
    %v6833 = vunpack.c.l.b16 %v6432
    %v6834 = vunpack.c.h.b16 %v6432
    %v6835 = vunpack.c.l.b16 %v6433
    %v6836 = vunpack.c.h.b16 %v6433
    %v6837 = vunpack.c.l.b16 %v6434
    %v6838 = vunpack.c.h.b16 %v6434
    %v6839 = vunpack.c.l.b16 %v6435
    %v6840 = vunpack.c.h.b16 %v6435
    %v6841 = vunpack.c.l.b16 %v6436
    %v6842 = vunpack.c.h.b16 %v6436
    %v6843 = vunpack.c.l.b16 %v6437
    %v6844 = vunpack.c.h.b16 %v6437
    %v6845 = vunpack.c.l.b16 %v6438
    %v6846 = vunpack.c.h.b16 %v6438
    %v6847 = vunpack.c.l.b16 %v6439
    %v6848 = vunpack.c.h.b16 %v6439
    %v6849 = vunpack.c.l.b16 %v6440
    %v6850 = vunpack.c.h.b16 %v6440
    %v6851 = vunpack.c.l.b16 %v6441
    %v6852 = vunpack.c.h.b16 %v6441
    %v6853 = vunpack.c.l.b16 %v6442
    %v6854 = vunpack.c.h.b16 %v6442
    %v6855 = vunpack.c.l.b16 %v6443
    %v6856 = vunpack.c.h.b16 %v6443
    %v6857 = vunpack.c.l.b16 %v6444
    %v6858 = vunpack.c.h.b16 %v6444
    %v6859 = vunpack.c.l.b16 %v6445
    %v6860 = vunpack.c.h.b16 %v6445
    %v6861 = vunpack.c.l.b16 %v6446
    %v6862 = vunpack.c.h.b16 %v6446
    %v6863 = vunpack.c.l.b16 %v6447
    %v6864 = vunpack.c.h.b16 %v6447
    %v6865 = vunpack.c.l.b16 %v6448
    %v6866 = vunpack.c.h.b16 %v6448
    %v6867 = vunpack.c.l.b16 %v6449
    %v6868 = vunpack.c.h.b16 %v6449
    %v6869 = vunpack.c.l.b16 %v6450
    %v6870 = vunpack.c.h.b16 %v6450
    %v6871 = vunpack.c.l.b16 %v6451
    %v6872 = vunpack.c.h.b16 %v6451
    %v6873 = vunpack.c.l.b16 %v6452
    %v6874 = vunpack.c.h.b16 %v6452
    %v6875 = vunpack.c.l.b16 %v6453
    %v6876 = vunpack.c.h.b16 %v6453
    %v6877 = vunpack.c.l.b16 %v6454
    %v6878 = vunpack.c.h.b16 %v6454
    %v6879 = vunpack.c.l.b16 %v6455
    %v6880 = vunpack.c.h.b16 %v6455
    %v6881 = vunpack.c.l.b16 %v6456
    %v6882 = vunpack.c.h.b16 %v6456
    %v6883 = vunpack.c.l.b16 %v6457
    %v6884 = vunpack.c.h.b16 %v6457
    %v6885 = vunpack.c.l.b16 %v6458
    %v6886 = vunpack.c.h.b16 %v6458
    %v6887 = vunpack.c.l.b16 %v6459
    %v6888 = vunpack.c.h.b16 %v6459
    %v6889 = vunpack.c.l.b16 %v6460
    %v6890 = vunpack.c.h.b16 %v6460
    %v6891 = vunpack.c.l.b16 %v6461
    %v6892 = vunpack.c.h.b16 %v6461
    %v6893 = vunpack.c.l.b16 %v6462
    %v6894 = vunpack.c.h.b16 %v6462
    %v6895 = vunpack.c.l.b16 %v6463
    %v6896 = vunpack.c.h.b16 %v6463
    %v6897 = vunpack.c.l.b16 %v6464
    %v6898 = vunpack.c.h.b16 %v6464
    %v6899 = vunpack.c.l.b16 %v6465
    %v6900 = vunpack.c.h.b16 %v6465
    %v6901 = vunpack.c.l.b16 %v6466
    %v6902 = vunpack.c.h.b16 %v6466
    %v6903 = vunpack.c.l.b16 %v6467
    %v6904 = vunpack.c.h.b16 %v6467
    %v6905 = vunpack.c.l.b16 %v6468
    %v6906 = vunpack.c.h.b16 %v6468
    %v6907 = vunpack.c.l.b16 %v6469
    %v6908 = vunpack.c.h.b16 %v6469
    %v6909 = vunpack.c.l.b16 %v6470
    %v6910 = vunpack.c.h.b16 %v6470
    %v6911 = vunpack.c.l.b16 %v6471
    %v6912 = vunpack.c.h.b16 %v6471
    %v6913 = vunpack.c.l.b16 %v6472
    %v6914 = vunpack.c.h.b16 %v6472
    %v6915 = vunpack.c.l.b16 %v6473
    %v6916 = vunpack.c.h.b16 %v6473
    %v6917 = vunpack.c.l.b16 %v6474
    %v6918 = vunpack.c.h.b16 %v6474
    %v6919 = vunpack.c.l.b16 %v6475
    %v6920 = vunpack.c.h.b16 %v6475
    %v6921 = vunpack.c.l.b16 %v6476
    %v6922 = vunpack.c.h.b16 %v6476
    %v6923 = vunpack.c.l.b16 %v6477
    %v6924 = vunpack.c.h.b16 %v6477
    %v6925 = vunpack.c.l.b16 %v6478
    %v6926 = vunpack.c.h.b16 %v6478
    %v6927 = vunpack.c.l.b16 %v6479
    %v6928 = vunpack.c.h.b16 %v6479
    %v6929 = vunpack.c.l.b16 %v6480
    %v6930 = vunpack.c.h.b16 %v6480
    %v6931 = vunpack.c.l.b16 %v6481
    %v6932 = vunpack.c.h.b16 %v6481
    %v6933 = vunpack.c.l.b16 %v6482
    %v6934 = vunpack.c.h.b16 %v6482
    %v6935 = vunpack.c.l.b16 %v6483
    %v6936 = vunpack.c.h.b16 %v6483
    %v6937 = vunpack.c.l.b16 %v6484
    %v6938 = vunpack.c.h.b16 %v6484
    %v6939 = vunpack.c.l.b16 %v6485
    %v6940 = vunpack.c.h.b16 %v6485
    %v6941 = vunpack.c.l.b16 %v6486
    %v6942 = vunpack.c.h.b16 %v6486
    %v6943 = vunpack.c.l.b16 %v6487
    %v6944 = vunpack.c.h.b16 %v6487
    %v6945 = vunpack.c.l.b16 %v6488
    %v6946 = vunpack.c.h.b16 %v6488
    %v6947 = vunpack.c.l.b16 %v6489
    %v6948 = vunpack.c.h.b16 %v6489
    %v6949 = vunpack.c.l.b16 %v6490
    %v6950 = vunpack.c.h.b16 %v6490
    %v6951 = vunpack.c.l.b16 %v6491
    %v6952 = vunpack.c.h.b16 %v6491
    %v6953 = vunpack.c.l.b16 %v6492
    %v6954 = vunpack.c.h.b16 %v6492
    %v6955 = vunpack.c.l.b16 %v6493
    %v6956 = vunpack.c.h.b16 %v6493
    %v6957 = vunpack.c.l.b16 %v6494
    %v6958 = vunpack.c.h.b16 %v6494
    %v6959 = vunpack.c.l.b16 %v6495
    %v6960 = vunpack.c.h.b16 %v6495
    %v6961 = vunpack.c.l.b16 %v6496
    %v6962 = vunpack.c.h.b16 %v6496
    %v6963 = vunpack.c.l.b16 %v6497
    %v6964 = vunpack.c.h.b16 %v6497
    %v6965 = vunpack.c.l.b16 %v6498
    %v6966 = vunpack.c.h.b16 %v6498
    %v6967 = vunpack.c.l.b16 %v6499
    %v6968 = vunpack.c.h.b16 %v6499
    %v6969 = vunpack.c.l.b16 %v6500
    %v6970 = vunpack.c.h.b16 %v6500
    %v6971 = vunpack.c.l.b16 %v6501
    %v6972 = vunpack.c.h.b16 %v6501
    %v6973 = vunpack.c.l.b16 %v6502
    %v6974 = vunpack.c.h.b16 %v6502
    %v6975 = vunpack.c.l.b16 %v6503
    %v6976 = vunpack.c.h.b16 %v6503
    %v6977 = vunpack.c.l.b16 %v6504
    %v6978 = vunpack.c.h.b16 %v6504
    %v6979 = vunpack.c.l.b16 %v6505
    %v6980 = vunpack.c.h.b16 %v6505
    %v6981 = vunpack.c.l.b16 %v6506
    %v6982 = vunpack.c.h.b16 %v6506
    %v6983 = vunpack.c.l.b16 %v6507
    %v6984 = vunpack.c.h.b16 %v6507
    %v6985 = vunpack.c.l.b16 %v6508
    %v6986 = vunpack.c.h.b16 %v6508
    %v6987 = vunpack.c.l.b16 %v6509
    %v6988 = vunpack.c.h.b16 %v6509
    %v6989 = vunpack.c.l.b16 %v6510
    %v6990 = vunpack.c.h.b16 %v6510
    %v6991 = vunpack.c.l.b16 %v6511
    %v6992 = vunpack.c.h.b16 %v6511
    %v6993 = vunpack.c.l.b16 %v6512
    %v6994 = vunpack.c.h.b16 %v6512
    %v6995 = vunpack.c.l.b16 %v6513
    %v6996 = vunpack.c.h.b16 %v6513
    %v6997 = vunpack.c.l.b16 %v6514
    %v6998 = vunpack.c.h.b16 %v6514
    %v6999 = vunpack.c.l.b16 %v6515
    %v7000 = vunpack.c.h.b16 %v6515
    %v7001 = vunpack.c.l.b16 %v6516
    %v7002 = vunpack.c.h.b16 %v6516
    %v7003 = vunpack.c.l.b16 %v6517
    %v7004 = vunpack.c.h.b16 %v6517
    %v7005 = vunpack.c.l.b16 %v6518
    %v7006 = vunpack.c.h.b16 %v6518
    %v7007 = vunpack.c.l.b16 %v6519
    %v7008 = vunpack.c.h.b16 %v6519
    %v7009 = vunpack.c.l.b16 %v6520
    %v7010 = vunpack.c.h.b16 %v6520
    %v7011 = vunpack.c.l.b16 %v6521
    %v7012 = vunpack.c.h.b16 %v6521
    %v7013 = vunpack.c.l.b16 %v6522
    %v7014 = vunpack.c.h.b16 %v6522
    %v7015 = vunpack.c.l.b16 %v6523
    %v7016 = vunpack.c.h.b16 %v6523
    %v7017 = vunpack.c.l.b16 %v6524
    %v7018 = vunpack.c.h.b16 %v6524
    %v7019 = vunpack.c.l.b16 %v6525
    %v7020 = vunpack.c.h.b16 %v6525
    %v7021 = vunpack.c.l.b16 %v6526
    %v7022 = vunpack.c.h.b16 %v6526
    %v7023 = vunpack.c.l.b16 %v6527
    %v7024 = vunpack.c.h.b16 %v6527
    %v7025 = vunpack.c.l.b16 %v6528
    %v7026 = vunpack.c.h.b16 %v6528
    %v7027 = vunpack.c.l.b16 %v6529
    %v7028 = vunpack.c.h.b16 %v6529
    %v7029 = vunpack.c.l.b16 %v6530
    %v7030 = vunpack.c.h.b16 %v6530
    %v7031 = vunpack.c.l.b16 %v6531
    %v7032 = vunpack.c.h.b16 %v6531
    %v7033 = vunpack.c.l.b16 %v6532
    %v7034 = vunpack.c.h.b16 %v6532
    %v7035 = vunpack.c.l.b16 %v6533
    %v7036 = vunpack.c.h.b16 %v6533
    %v7037 = vunpack.c.l.b16 %v6534
    %v7038 = vunpack.c.h.b16 %v6534
    %v7039 = vunpack.c.l.b16 %v6535
    %v7040 = vunpack.c.h.b16 %v6535
    %v7041 = vunpack.c.l.b16 %v6536
    %v7042 = vunpack.c.h.b16 %v6536
    %v7043 = vunpack.c.l.b16 %v6537
    %v7044 = vunpack.c.h.b16 %v6537
    %v7045 = vunpack.c.l.b16 %v6538
    %v7046 = vunpack.c.h.b16 %v6538
    %v7047 = vunpack.c.l.b16 %v6539
    %v7048 = vunpack.c.h.b16 %v6539
    %v7049 = vunpack.c.l.b16 %v6540
    %v7050 = vunpack.c.h.b16 %v6540
    %v7051 = vunpack.c.l.b16 %v6541
    %v7052 = vunpack.c.h.b16 %v6541
    %v7053 = vunpack.c.l.b16 %v6542
    %v7054 = vunpack.c.h.b16 %v6542
    %v7055 = vunpack.c.l.b16 %v6543
    %v7056 = vunpack.c.h.b16 %v6543
    %v7057 = vunpack.c.l.b16 %v6544
    %v7058 = vunpack.c.h.b16 %v6544
    %v7059 = vunpack.c.l.b16 %v6545
    %v7060 = vunpack.c.h.b16 %v6545
    %v7061 = vunpack.c.l.b16 %v6546
    %v7062 = vunpack.c.h.b16 %v6546
    %v7063 = vunpack.c.l.b16 %v6547
    %v7064 = vunpack.c.h.b16 %v6547
    %v7065 = vunpack.c.l.b16 %v6548
    %v7066 = vunpack.c.h.b16 %v6548
    %v7067 = vunpack.c.l.b16 %v6549
    %v7068 = vunpack.c.h.b16 %v6549
    %v7069 = vunpack.c.l.b16 %v6550
    %v7070 = vunpack.c.h.b16 %v6550
    %v7071 = vunpack.c.l.b16 %v6551
    %v7072 = vunpack.c.h.b16 %v6551
    %v7073 = vunpack.c.l.b16 %v6552
    %v7074 = vunpack.c.h.b16 %v6552
    %v7075 = vunpack.c.l.b16 %v6553
    %v7076 = vunpack.c.h.b16 %v6553
    %v7077 = vunpack.c.l.b16 %v6554
    %v7078 = vunpack.c.h.b16 %v6554
    %v7079 = vunpack.c.l.b16 %v6555
    %v7080 = vunpack.c.h.b16 %v6555
    %v7081 = vunpack.c.l.b16 %v6556
    %v7082 = vunpack.c.h.b16 %v6556
    %v7083 = vunpack.c.l.b16 %v6557
    %v7084 = vunpack.c.h.b16 %v6557
    %v7085 = vunpack.c.l.b16 %v6558
    %v7086 = vunpack.c.h.b16 %v6558
    %v7087 = vunpack.c.l.b16 %v6559
    %v7088 = vunpack.c.h.b16 %v6559
    %v7089 = vunpack.c.l.b16 %v6560
    %v7090 = vunpack.c.h.b16 %v6560
    %v7091 = vunpack.c.l.b16 %v6561
    %v7092 = vunpack.c.h.b16 %v6561
    %v7093 = vunpack.c.l.b16 %v6562
    %v7094 = vunpack.c.h.b16 %v6562
    %v7095 = vunpack.c.l.b16 %v6563
    %v7096 = vunpack.c.h.b16 %v6563
    %v7097 = vunpack.c.l.b16 %v6564
    %v7098 = vunpack.c.h.b16 %v6564
    %v7099 = vunpack.c.l.b16 %v6565
    %v7100 = vunpack.c.h.b16 %v6565
    %v7101 = vunpack.c.l.b16 %v6566
    %v7102 = vunpack.c.h.b16 %v6566
    %v7103 = vunpack.c.l.b16 %v6567
    %v7104 = vunpack.c.h.b16 %v6567
    %v7105 = vunpack.c.l.b16 %v6568
    %v7106 = vunpack.c.h.b16 %v6568
    %v7107 = vunpack.c.l.b16 %v6569
    %v7108 = vunpack.c.h.b16 %v6569
    %v7109 = vunpack.c.l.b16 %v6570
    %v7110 = vunpack.c.h.b16 %v6570
    %v7111 = vunpack.c.l.b16 %v6571
    %v7112 = vunpack.c.h.b16 %v6571
    %v7113 = vunpack.c.l.b16 %v6572
    %v7114 = vunpack.c.h.b16 %v6572
    %v7115 = vunpack.c.l.b16 %v6573
    %v7116 = vunpack.c.h.b16 %v6573
    %v7117 = vunpack.c.l.b16 %v6574
    %v7118 = vunpack.c.h.b16 %v6574
    %v7119 = vunpack.c.l.b16 %v6575
    %v7120 = vunpack.c.h.b16 %v6575
    %v7121 = vunpack.c.l.b16 %v6576
    %v7122 = vunpack.c.h.b16 %v6576
    %v7123 = vunpack.c.l.b16 %v6577
    %v7124 = vunpack.c.h.b16 %v6577
    %v7125 = vunpack.c.l.b16 %v6578
    %v7126 = vunpack.c.h.b16 %v6578
    %v7127 = vunpack.c.l.b16 %v6579
    %v7128 = vunpack.c.h.b16 %v6579
    %v7129 = vunpack.c.l.b16 %v6580
    %v7130 = vunpack.c.h.b16 %v6580
    %v7131 = vunpack.c.l.b16 %v6581
    %v7132 = vunpack.c.h.b16 %v6581
    %v7133 = vunpack.c.l.b16 %v6582
    %v7134 = vunpack.c.h.b16 %v6582
    %v7135 = vunpack.c.l.b16 %v6583
    %v7136 = vunpack.c.h.b16 %v6583
    %v7137 = vunpack.c.l.b16 %v6584
    %v7138 = vunpack.c.h.b16 %v6584
    %v7139 = vunpack.c.l.b16 %v6585
    %v7140 = vunpack.c.h.b16 %v6585
    %v7141 = vunpack.c.l.b16 %v6586
    %v7142 = vunpack.c.h.b16 %v6586
    %v7143 = vunpack.c.l.b16 %v6587
    %v7144 = vunpack.c.h.b16 %v6587
    %v7145 = vunpack.c.l.b16 %v6588
    %v7146 = vunpack.c.h.b16 %v6588
    %v7147 = vunpack.c.l.b16 %v6589
    %v7148 = vunpack.c.h.b16 %v6589
    %v7149 = vunpack.c.l.b16 %v6590
    %v7150 = vunpack.c.h.b16 %v6590
    %v7151 = vunpack.c.l.b16 %v6591
    %v7152 = vunpack.c.h.b16 %v6591
    %v7153 = vunpack.c.l.b16 %v6592
    %v7154 = vunpack.c.h.b16 %v6592
    %v7155 = vunpack.c.l.b16 %v6593
    %v7156 = vunpack.c.h.b16 %v6593
    %v7157 = vunpack.c.l.b16 %v6594
    %v7158 = vunpack.c.h.b16 %v6594
    %v7159 = vunpack.c.l.b16 %v6595
    %v7160 = vunpack.c.h.b16 %v6595
    %v7161 = vunpack.c.l.b16 %v6596
    %v7162 = vunpack.c.h.b16 %v6596
    %v7163 = vunpack.c.l.b16 %v6597
    %v7164 = vunpack.c.h.b16 %v6597
    %v7165 = vunpack.c.l.b16 %v6598
    %v7166 = vunpack.c.h.b16 %v6598
    %v7167 = vunpack.c.l.b16 %v6599
    %v7168 = vunpack.c.h.b16 %v6599
    %v7169 = vunpack.c.l.b16 %v6600
    %v7170 = vunpack.c.h.b16 %v6600
    %v7171 = vunpack.c.l.b16 %v6601
    %v7172 = vunpack.c.h.b16 %v6601
    %v7173 = vunpack.c.l.b16 %v6602
    %v7174 = vunpack.c.h.b16 %v6602
    %v7175 = vunpack.c.l.b16 %v6603
    %v7176 = vunpack.c.h.b16 %v6603
    %v7177 = vunpack.c.l.b16 %v6604
    %v7178 = vunpack.c.h.b16 %v6604
    %v7179 = vunpack.c.l.b16 %v6605
    %v7180 = vunpack.c.h.b16 %v6605
    %v7181 = vunpack.c.l.b16 %v6606
    %v7182 = vunpack.c.h.b16 %v6606
    %v7183 = vpack.c.b16 %v6807, %v6799
    %v7184 = vpack.c.b16 %v6808, %v6800
    %v7185 = vpack.c.b16 %v6809, %v6801
    %v7186 = vpack.c.b16 %v6810, %v6802
    %v7187 = vpack.c.b16 %v6811, %v6803
    %v7188 = vpack.c.b16 %v6812, %v6804
    %v7189 = vpack.c.b16 %v6813, %v6805
    %v7190 = vpack.c.b16 %v6814, %v6806
    %v7191 = vpack.c.b16 %v6823, %v6815
    %v7192 = vpack.c.b16 %v6824, %v6816
    %v7193 = vpack.c.b16 %v6825, %v6817
    %v7194 = vpack.c.b16 %v6826, %v6818
    %v7195 = vpack.c.b16 %v6827, %v6819
    %v7196 = vpack.c.b16 %v6828, %v6820
    %v7197 = vpack.c.b16 %v6829, %v6821
    %v7198 = vpack.c.b16 %v6830, %v6822
    %v7199 = vpack.c.b16 %v6839, %v6831
    %v7200 = vpack.c.b16 %v6840, %v6832
    %v7201 = vpack.c.b16 %v6841, %v6833
    %v7202 = vpack.c.b16 %v6842, %v6834
    %v7203 = vpack.c.b16 %v6843, %v6835
    %v7204 = vpack.c.b16 %v6844, %v6836
    %v7205 = vpack.c.b16 %v6845, %v6837
    %v7206 = vpack.c.b16 %v6846, %v6838
    %v7207 = vpack.c.b16 %v6855, %v6847
    %v7208 = vpack.c.b16 %v6856, %v6848
    %v7209 = vpack.c.b16 %v6857, %v6849
    %v7210 = vpack.c.b16 %v6858, %v6850
    %v7211 = vpack.c.b16 %v6859, %v6851
    %v7212 = vpack.c.b16 %v6860, %v6852
    %v7213 = vpack.c.b16 %v6861, %v6853
    %v7214 = vpack.c.b16 %v6862, %v6854
    %v7215 = vpack.c.b16 %v6871, %v6863
    %v7216 = vpack.c.b16 %v6872, %v6864
    %v7217 = vpack.c.b16 %v6873, %v6865
    %v7218 = vpack.c.b16 %v6874, %v6866
    %v7219 = vpack.c.b16 %v6875, %v6867
    %v7220 = vpack.c.b16 %v6876, %v6868
    %v7221 = vpack.c.b16 %v6877, %v6869
    %v7222 = vpack.c.b16 %v6878, %v6870
    %v7223 = vpack.c.b16 %v6887, %v6879
    %v7224 = vpack.c.b16 %v6888, %v6880
    %v7225 = vpack.c.b16 %v6889, %v6881
    %v7226 = vpack.c.b16 %v6890, %v6882
    %v7227 = vpack.c.b16 %v6891, %v6883
    %v7228 = vpack.c.b16 %v6892, %v6884
    %v7229 = vpack.c.b16 %v6893, %v6885
    %v7230 = vpack.c.b16 %v6894, %v6886
    %v7231 = vpack.c.b16 %v6903, %v6895
    %v7232 = vpack.c.b16 %v6904, %v6896
    %v7233 = vpack.c.b16 %v6905, %v6897
    %v7234 = vpack.c.b16 %v6906, %v6898
    %v7235 = vpack.c.b16 %v6907, %v6899
    %v7236 = vpack.c.b16 %v6908, %v6900
    %v7237 = vpack.c.b16 %v6909, %v6901
    %v7238 = vpack.c.b16 %v6910, %v6902
    %v7239 = vpack.c.b16 %v6919, %v6911
    %v7240 = vpack.c.b16 %v6920, %v6912
    %v7241 = vpack.c.b16 %v6921, %v6913
    %v7242 = vpack.c.b16 %v6922, %v6914
    %v7243 = vpack.c.b16 %v6923, %v6915
    %v7244 = vpack.c.b16 %v6924, %v6916
    %v7245 = vpack.c.b16 %v6925, %v6917
    %v7246 = vpack.c.b16 %v6926, %v6918
    %v7247 = vpack.c.b16 %v6935, %v6927
    %v7248 = vpack.c.b16 %v6936, %v6928
    %v7249 = vpack.c.b16 %v6937, %v6929
    %v7250 = vpack.c.b16 %v6938, %v6930
    %v7251 = vpack.c.b16 %v6939, %v6931
    %v7252 = vpack.c.b16 %v6940, %v6932
    %v7253 = vpack.c.b16 %v6941, %v6933
    %v7254 = vpack.c.b16 %v6942, %v6934
    %v7255 = vpack.c.b16 %v6951, %v6943
    %v7256 = vpack.c.b16 %v6952, %v6944
    %v7257 = vpack.c.b16 %v6953, %v6945
    %v7258 = vpack.c.b16 %v6954, %v6946
    %v7259 = vpack.c.b16 %v6955, %v6947
    %v7260 = vpack.c.b16 %v6956, %v6948
    %v7261 = vpack.c.b16 %v6957, %v6949
    %v7262 = vpack.c.b16 %v6958, %v6950
    %v7263 = vpack.c.b16 %v6967, %v6959
    %v7264 = vpack.c.b16 %v6968, %v6960
    %v7265 = vpack.c.b16 %v6969, %v6961
    %v7266 = vpack.c.b16 %v6970, %v6962
    %v7267 = vpack.c.b16 %v6971, %v6963
    %v7268 = vpack.c.b16 %v6972, %v6964
    %v7269 = vpack.c.b16 %v6973, %v6965
    %v7270 = vpack.c.b16 %v6974, %v6966
    %v7271 = vpack.c.b16 %v6983, %v6975
    %v7272 = vpack.c.b16 %v6984, %v6976
    %v7273 = vpack.c.b16 %v6985, %v6977
    %v7274 = vpack.c.b16 %v6986, %v6978
    %v7275 = vpack.c.b16 %v6987, %v6979
    %v7276 = vpack.c.b16 %v6988, %v6980
    %v7277 = vpack.c.b16 %v6989, %v6981
    %v7278 = vpack.c.b16 %v6990, %v6982
    %v7279 = vpack.c.b16 %v6999, %v6991
    %v7280 = vpack.c.b16 %v7000, %v6992
    %v7281 = vpack.c.b16 %v7001, %v6993
    %v7282 = vpack.c.b16 %v7002, %v6994
    %v7283 = vpack.c.b16 %v7003, %v6995
    %v7284 = vpack.c.b16 %v7004, %v6996
    %v7285 = vpack.c.b16 %v7005, %v6997
    %v7286 = vpack.c.b16 %v7006, %v6998
    %v7287 = vpack.c.b16 %v7015, %v7007
    %v7288 = vpack.c.b16 %v7016, %v7008
    %v7289 = vpack.c.b16 %v7017, %v7009
    %v7290 = vpack.c.b16 %v7018, %v7010
    %v7291 = vpack.c.b16 %v7019, %v7011
    %v7292 = vpack.c.b16 %v7020, %v7012
    %v7293 = vpack.c.b16 %v7021, %v7013
    %v7294 = vpack.c.b16 %v7022, %v7014
    %v7295 = vpack.c.b16 %v7031, %v7023
    %v7296 = vpack.c.b16 %v7032, %v7024
    %v7297 = vpack.c.b16 %v7033, %v7025
    %v7298 = vpack.c.b16 %v7034, %v7026
    %v7299 = vpack.c.b16 %v7035, %v7027
    %v7300 = vpack.c.b16 %v7036, %v7028
    %v7301 = vpack.c.b16 %v7037, %v7029
    %v7302 = vpack.c.b16 %v7038, %v7030
    %v7303 = vpack.c.b16 %v7047, %v7039
    %v7304 = vpack.c.b16 %v7048, %v7040
    %v7305 = vpack.c.b16 %v7049, %v7041
    %v7306 = vpack.c.b16 %v7050, %v7042
    %v7307 = vpack.c.b16 %v7051, %v7043
    %v7308 = vpack.c.b16 %v7052, %v7044
    %v7309 = vpack.c.b16 %v7053, %v7045
    %v7310 = vpack.c.b16 %v7054, %v7046
    %v7311 = vpack.c.b16 %v7063, %v7055
    %v7312 = vpack.c.b16 %v7064, %v7056
    %v7313 = vpack.c.b16 %v7065, %v7057
    %v7314 = vpack.c.b16 %v7066, %v7058
    %v7315 = vpack.c.b16 %v7067, %v7059
    %v7316 = vpack.c.b16 %v7068, %v7060
    %v7317 = vpack.c.b16 %v7069, %v7061
    %v7318 = vpack.c.b16 %v7070, %v7062
    %v7319 = vpack.c.b16 %v7079, %v7071
    %v7320 = vpack.c.b16 %v7080, %v7072
    %v7321 = vpack.c.b16 %v7081, %v7073
    %v7322 = vpack.c.b16 %v7082, %v7074
    %v7323 = vpack.c.b16 %v7083, %v7075
    %v7324 = vpack.c.b16 %v7084, %v7076
    %v7325 = vpack.c.b16 %v7085, %v7077
    %v7326 = vpack.c.b16 %v7086, %v7078
    %v7327 = vpack.c.b16 %v7095, %v7087
    %v7328 = vpack.c.b16 %v7096, %v7088
    %v7329 = vpack.c.b16 %v7097, %v7089
    %v7330 = vpack.c.b16 %v7098, %v7090
    %v7331 = vpack.c.b16 %v7099, %v7091
    %v7332 = vpack.c.b16 %v7100, %v7092
    %v7333 = vpack.c.b16 %v7101, %v7093
    %v7334 = vpack.c.b16 %v7102, %v7094
    %v7335 = vpack.c.b16 %v7111, %v7103
    %v7336 = vpack.c.b16 %v7112, %v7104
    %v7337 = vpack.c.b16 %v7113, %v7105
    %v7338 = vpack.c.b16 %v7114, %v7106
    %v7339 = vpack.c.b16 %v7115, %v7107
    %v7340 = vpack.c.b16 %v7116, %v7108
    %v7341 = vpack.c.b16 %v7117, %v7109
    %v7342 = vpack.c.b16 %v7118, %v7110
    %v7343 = vpack.c.b16 %v7127, %v7119
    %v7344 = vpack.c.b16 %v7128, %v7120
    %v7345 = vpack.c.b16 %v7129, %v7121
    %v7346 = vpack.c.b16 %v7130, %v7122
    %v7347 = vpack.c.b16 %v7131, %v7123
    %v7348 = vpack.c.b16 %v7132, %v7124
    %v7349 = vpack.c.b16 %v7133, %v7125
    %v7350 = vpack.c.b16 %v7134, %v7126
    %v7351 = vpack.c.b16 %v7143, %v7135
    %v7352 = vpack.c.b16 %v7144, %v7136
    %v7353 = vpack.c.b16 %v7145, %v7137
    %v7354 = vpack.c.b16 %v7146, %v7138
    %v7355 = vpack.c.b16 %v7147, %v7139
    %v7356 = vpack.c.b16 %v7148, %v7140
    %v7357 = vpack.c.b16 %v7149, %v7141
    %v7358 = vpack.c.b16 %v7150, %v7142
    %v7359 = vpack.c.b16 %v7159, %v7151
    %v7360 = vpack.c.b16 %v7160, %v7152
    %v7361 = vpack.c.b16 %v7161, %v7153
    %v7362 = vpack.c.b16 %v7162, %v7154
    %v7363 = vpack.c.b16 %v7163, %v7155
    %v7364 = vpack.c.b16 %v7164, %v7156
    %v7365 = vpack.c.b16 %v7165, %v7157
    %v7366 = vpack.c.b16 %v7166, %v7158
    %v7367 = vpack.c.b16 %v7175, %v7167
    %v7368 = vpack.c.b16 %v7176, %v7168
    %v7369 = vpack.c.b16 %v7177, %v7169
    %v7370 = vpack.c.b16 %v7178, %v7170
    %v7371 = vpack.c.b16 %v7179, %v7171
    %v7372 = vpack.c.b16 %v7180, %v7172
    %v7373 = vpack.c.b16 %v7181, %v7173
    %v7374 = vpack.c.b16 %v7182, %v7174
    %7567 = vmatprep.subr.bf16.mxu0 %v7184
    %7568 = vmatpush1.bf16.msra.mxu0 %v7183
    %7569 = vmatprep.subr.bf16.mxu0 %v7192
    %7570 = vmatpush1.bf16.msra.mxu0 %v7191
    %7571 = vmatprep.subr.bf16.mxu0 %v7200
    %7572 = vmatpush1.bf16.msra.mxu0 %v7199
    %7573 = vmatprep.subr.bf16.mxu0 %v7208
    %7574 = vmatpush1.bf16.msra.mxu0 %v7207
    %7575 = vmatprep.subr.bf16.mxu0 %v7216
    %7576 = vmatpush1.bf16.msra.mxu0 %v7215
    %7577 = vmatprep.subr.bf16.mxu0 %v7224
    %7578 = vmatpush1.bf16.msra.mxu0 %v7223
    %7579 = vmatprep.subr.bf16.mxu0 %v7232
    %7580 = vmatpush1.bf16.msra.mxu0 %v7231
    %7581 = vmatprep.subr.bf16.mxu0 %v7240
    %7582 = vmatpush1.bf16.msra.mxu0 %v7239
    %7583 = vmatprep.subr.bf16.mxu0 %v7248
    %7584 = vmatpush1.bf16.msra.mxu0 %v7247
    %7585 = vmatprep.subr.bf16.mxu0 %v7256
    %7586 = vmatpush1.bf16.msra.mxu0 %v7255
    %7587 = vmatprep.subr.bf16.mxu0 %v7264
    %7588 = vmatpush1.bf16.msra.mxu0 %v7263
    %7589 = vmatprep.subr.bf16.mxu0 %v7272
    %7590 = vmatpush1.bf16.msra.mxu0 %v7271
    %7591 = vmatprep.subr.bf16.mxu0 %v7280
    %7592 = vmatpush1.bf16.msra.mxu0 %v7279
    %7593 = vmatprep.subr.bf16.mxu0 %v7288
    %7594 = vmatpush1.bf16.msra.mxu0 %v7287
    %7595 = vmatprep.subr.bf16.mxu0 %v7296
    %7596 = vmatpush1.bf16.msra.mxu0 %v7295
    %7597 = vmatprep.subr.bf16.mxu0 %v7304
    %7598 = vmatpush1.bf16.msra.mxu0 %v7303
    %7599 = vmatprep.mubr.bf16.mxu0 %v6401
    %7600 = vmatmul.mubr.bf16.gmra.mrb[0].mxu0 %v6400
    %v7601 = vpop.f32.mrb[0].mxu0
    %v7602 = vadd.f32 0.0, %v7601
    %v7603 = vpop.f32.mrb[0].mxu0
    %v7604 = vadd.f32 0.0, %v7603
    %v7605 = vpop.f32.mrb[0].mxu0
    %v7606 = vadd.f32 0.0, %v7605
    %v7607 = vpop.f32.mrb[0].mxu0
    %v7608 = vadd.f32 0.0, %v7607
    %7609 = vmatprep.mubr.bf16.mxu0 %v6404
    %7610 = vmatmul.mubr.bf16.gmra.mrb[0].mxu0 %v6403
    %v7611 = vpop.f32.mrb[0].mxu0
    %v7612 = vadd.f32 0.0, %v7611
    %v7613 = vpop.f32.mrb[0].mxu0
    %v7614 = vadd.f32 0.0, %v7613
    %v7615 = vpop.f32.mrb[0].mxu0
    %v7616 = vadd.f32 0.0, %v7615
    %v7617 = vpop.f32.mrb[0].mxu0
    %v7618 = vadd.f32 0.0, %v7617
    %7619 = vmatprep.mubr.bf16.mxu0 %v6407
    %7620 = vmatmul.mubr.bf16.gmra.mrb[0].mxu0 %v6406
    %v7621 = vpop.f32.mrb[0].mxu0
    %v7622 = vadd.f32 0.0, %v7621
    %v7623 = vpop.f32.mrb[0].mxu0
    %v7624 = vadd.f32 0.0, %v7623
    %v7625 = vpop.f32.mrb[0].mxu0
    %v7626 = vadd.f32 0.0, %v7625
    %v7627 = vpop.f32.mrb[0].mxu0
    %v7628 = vadd.f32 0.0, %v7627
    %7629 = vmatprep.mubr.bf16.mxu0 %v6410
    %7630 = vmatmul.mubr.bf16.gmra.mrb[0].mxu0 %v6409
    %v7631 = vpop.f32.mrb[0].mxu0
    %v7632 = vadd.f32 0.0, %v7631
    %v7633 = vpop.f32.mrb[0].mxu0
    %v7634 = vadd.f32 0.0, %v7633
    %v7635 = vpop.f32.mrb[0].mxu0
    %v7636 = vadd.f32 0.0, %v7635
    %v7637 = vpop.f32.mrb[0].mxu0
    %v7638 = vadd.f32 0.0, %v7637
    %7639 = vmatprep.mubr.bf16.mxu0 %v6413
    %7640 = vmatmul.mubr.bf16.gmra.mrb[0].mxu0 %v6412
    %v7641 = vpop.f32.mrb[0].mxu0
    %v7642 = vadd.f32 0.0, %v7641
    %v7643 = vpop.f32.mrb[0].mxu0
    %v7644 = vadd.f32 0.0, %v7643
    %v7645 = vpop.f32.mrb[0].mxu0
    %v7646 = vadd.f32 0.0, %v7645
    %v7647 = vpop.f32.mrb[0].mxu0
    %v7648 = vadd.f32 0.0, %v7647
    %7649 = vdwg.mxu0
    %7650 = vmatprep.subr.bf16.mxu0 %v7312
    %7651 = vmatpush1.bf16.msra.mxu0 %v7311
    %7652 = vmatprep.subr.bf16.mxu0 %v7320
    %7653 = vmatpush1.bf16.msra.mxu0 %v7319
    %7654 = vmatprep.subr.bf16.mxu0 %v7328
    %7655 = vmatpush1.bf16.msra.mxu0 %v7327
    %7656 = vmatprep.subr.bf16.mxu0 %v7336
    %7657 = vmatpush1.bf16.msra.mxu0 %v7335
    %7658 = vmatprep.subr.bf16.mxu0 %v7344
    %7659 = vmatpush1.bf16.msra.mxu0 %v7343
    %7660 = vmatprep.subr.bf16.mxu0 %v7352
    %7661 = vmatpush1.bf16.msra.mxu0 %v7351
    %7662 = vmatprep.subr.bf16.mxu0 %v7360
    %7663 = vmatpush1.bf16.msra.mxu0 %v7359
    %7664 = vmatprep.subr.bf16.mxu0 %v7368
    %7665 = vmatpush1.bf16.msra.mxu0 %v7367
    %7666 = vmatprep.subr.bf16.mxu0 0
    %7667 = vmatpush1.bf16.msra.mxu0 0
    %7668 = vmatprep.subr.bf16.mxu0 0
    %7669 = vmatpush1.bf16.msra.mxu0 0
    %7670 = vmatprep.subr.bf16.mxu0 0
    %7671 = vmatpush1.bf16.msra.mxu0 0
    %7672 = vmatprep.subr.bf16.mxu0 0
    %7673 = vmatpush1.bf16.msra.mxu0 0
    %7674 = vmatprep.subr.bf16.mxu0 0
    %7675 = vmatpush1.bf16.msra.mxu0 0
    %7676 = vmatprep.subr.bf16.mxu0 0
    %7677 = vmatpush1.bf16.msra.mxu0 0
    %7678 = vmatprep.subr.bf16.mxu0 0
    %7679 = vmatpush1.bf16.msra.mxu0 0
    %7680 = vmatprep.subr.bf16.mxu0 0
    %7681 = vmatpush1.bf16.msra.mxu0 0
    %7682 = vmatprep.mubr.bf16.mxu0 0
    %7683 = vmatmul.mubr.bf16.gmra.mrb[0].mxu0 %v6402
    %v7684 = vpop.f32.mrb[0].mxu0
    %v7685 = vadd.f32 %v7602, %v7684
    %v7686 = vpop.f32.mrb[0].mxu0
    %v7687 = vadd.f32 %v7604, %v7686
    %v7688 = vpop.f32.mrb[0].mxu0
    %v7689 = vadd.f32 %v7606, %v7688
    %v7690 = vpop.f32.mrb[0].mxu0
    %v7691 = vadd.f32 %v7608, %v7690
    %7692 = vmatprep.mubr.bf16.mxu0 0
    %7693 = vmatmul.mubr.bf16.gmra.mrb[0].mxu0 %v6405
    %v7694 = vpop.f32.mrb[0].mxu0
    %v7695 = vadd.f32 %v7612, %v7694
    %v7696 = vpop.f32.mrb[0].mxu0
    %v7697 = vadd.f32 %v7614, %v7696
    %v7698 = vpop.f32.mrb[0].mxu0
    %v7699 = vadd.f32 %v7616, %v7698
    %v7700 = vpop.f32.mrb[0].mxu0
    %v7701 = vadd.f32 %v7618, %v7700
    %7702 = vmatprep.mubr.bf16.mxu0 0
    %7703 = vmatmul.mubr.bf16.gmra.mrb[0].mxu0 %v6408
    %v7704 = vpop.f32.mrb[0].mxu0
    %v7705 = vadd.f32 %v7622, %v7704
    %v7706 = vpop.f32.mrb[0].mxu0
    %v7707 = vadd.f32 %v7624, %v7706
    %v7708 = vpop.f32.mrb[0].mxu0
    %v7709 = vadd.f32 %v7626, %v7708
    %v7710 = vpop.f32.mrb[0].mxu0
    %v7711 = vadd.f32 %v7628, %v7710
    %7712 = vmatprep.mubr.bf16.mxu0 0
    %7713 = vmatmul.mubr.bf16.gmra.mrb[0].mxu0 %v6411
    %v7714 = vpop.f32.mrb[0].mxu0
    %v7715 = vadd.f32 %v7632, %v7714
    %v7716 = vpop.f32.mrb[0].mxu0
    %v7717 = vadd.f32 %v7634, %v7716
    %v7718 = vpop.f32.mrb[0].mxu0
    %v7719 = vadd.f32 %v7636, %v7718
    %v7720 = vpop.f32.mrb[0].mxu0
    %v7721 = vadd.f32 %v7638, %v7720
    %7722 = vmatprep.mubr.bf16.mxu0 0
    %7723 = vmatmul.mubr.bf16.gmra.mrb[0].mxu0 %v6414
    %v7724 = vpop.f32.mrb[0].mxu0
    %v7725 = vadd.f32 %v7642, %v7724
    %v7726 = vpop.f32.mrb[0].mxu0
    %v7727 = vadd.f32 %v7644, %v7726
    %v7728 = vpop.f32.mrb[0].mxu0
    %v7729 = vadd.f32 %v7646, %v7728
    %v7730 = vpop.f32.mrb[0].mxu0
    %v7731 = vadd.f32 %v7648, %v7730
    %7732 = vdwg.mxu0
    %7733 = vmatprep.subr.bf16.mxu0 %v7186
    %7734 = vmatpush1.bf16.msra.mxu0 %v7185
    %7735 = vmatprep.subr.bf16.mxu0 %v7194
    %7736 = vmatpush1.bf16.msra.mxu0 %v7193
    %7737 = vmatprep.subr.bf16.mxu0 %v7202
    %7738 = vmatpush1.bf16.msra.mxu0 %v7201
    %7739 = vmatprep.subr.bf16.mxu0 %v7210
    %7740 = vmatpush1.bf16.msra.mxu0 %v7209
    %7741 = vmatprep.subr.bf16.mxu0 %v7218
    %7742 = vmatpush1.bf16.msra.mxu0 %v7217
    %7743 = vmatprep.subr.bf16.mxu0 %v7226
    %7744 = vmatpush1.bf16.msra.mxu0 %v7225
    %7745 = vmatprep.subr.bf16.mxu0 %v7234
    %7746 = vmatpush1.bf16.msra.mxu0 %v7233
    %7747 = vmatprep.subr.bf16.mxu0 %v7242
    %7748 = vmatpush1.bf16.msra.mxu0 %v7241
    %7749 = vmatprep.subr.bf16.mxu0 %v7250
    %7750 = vmatpush1.bf16.msra.mxu0 %v7249
    %7751 = vmatprep.subr.bf16.mxu0 %v7258
    %7752 = vmatpush1.bf16.msra.mxu0 %v7257
    %7753 = vmatprep.subr.bf16.mxu0 %v7266
    %7754 = vmatpush1.bf16.msra.mxu0 %v7265
    %7755 = vmatprep.subr.bf16.mxu0 %v7274
    %7756 = vmatpush1.bf16.msra.mxu0 %v7273
    %7757 = vmatprep.subr.bf16.mxu0 %v7282
    %7758 = vmatpush1.bf16.msra.mxu0 %v7281
    %7759 = vmatprep.subr.bf16.mxu0 %v7290
    %7760 = vmatpush1.bf16.msra.mxu0 %v7289
    %7761 = vmatprep.subr.bf16.mxu0 %v7298
    %7762 = vmatpush1.bf16.msra.mxu0 %v7297
    %7763 = vmatprep.subr.bf16.mxu0 %v7306
    %7764 = vmatpush1.bf16.msra.mxu0 %v7305
    %7765 = vmatprep.mubr.bf16.mxu0 %v6401
    %7766 = vmatmul.mubr.bf16.gmra.mrb[0].mxu0 %v6400
    %v7767 = vpop.f32.mrb[0].mxu0
    %v7768 = vadd.f32 0.0, %v7767
    %v7769 = vpop.f32.mrb[0].mxu0
    %v7770 = vadd.f32 0.0, %v7769
    %v7771 = vpop.f32.mrb[0].mxu0
    %v7772 = vadd.f32 0.0, %v7771
    %v7773 = vpop.f32.mrb[0].mxu0
    %v7774 = vadd.f32 0.0, %v7773
    %7775 = vmatprep.mubr.bf16.mxu0 %v6404
    %7776 = vmatmul.mubr.bf16.gmra.mrb[0].mxu0 %v6403
    %v7777 = vpop.f32.mrb[0].mxu0
    %v7778 = vadd.f32 0.0, %v7777
    %v7779 = vpop.f32.mrb[0].mxu0
    %v7780 = vadd.f32 0.0, %v7779
    %v7781 = vpop.f32.mrb[0].mxu0
    %v7782 = vadd.f32 0.0, %v7781
    %v7783 = vpop.f32.mrb[0].mxu0
    %v7784 = vadd.f32 0.0, %v7783
    %7785 = vmatprep.mubr.bf16.mxu0 %v6407
    %7786 = vmatmul.mubr.bf16.gmra.mrb[0].mxu0 %v6406
    %v7787 = vpop.f32.mrb[0].mxu0
    %v7788 = vadd.f32 0.0, %v7787
    %v7789 = vpop.f32.mrb[0].mxu0
    %v7790 = vadd.f32 0.0, %v7789
    %v7791 = vpop.f32.mrb[0].mxu0
    %v7792 = vadd.f32 0.0, %v7791
    %v7793 = vpop.f32.mrb[0].mxu0
    %v7794 = vadd.f32 0.0, %v7793
    %7795 = vmatprep.mubr.bf16.mxu0 %v6410
    %7796 = vmatmul.mubr.bf16.gmra.mrb[0].mxu0 %v6409
    %v7797 = vpop.f32.mrb[0].mxu0
    %v7798 = vadd.f32 0.0, %v7797
    %v7799 = vpop.f32.mrb[0].mxu0
    %v7800 = vadd.f32 0.0, %v7799
    %v7801 = vpop.f32.mrb[0].mxu0
    %v7802 = vadd.f32 0.0, %v7801
    %v7803 = vpop.f32.mrb[0].mxu0
    %v7804 = vadd.f32 0.0, %v7803
    %7805 = vmatprep.mubr.bf16.mxu0 %v6413
    %7806 = vmatmul.mubr.bf16.gmra.mrb[0].mxu0 %v6412
    %v7807 = vpop.f32.mrb[0].mxu0
    %v7808 = vadd.f32 0.0, %v7807
    %v7809 = vpop.f32.mrb[0].mxu0
    %v7810 = vadd.f32 0.0, %v7809
    %v7811 = vpop.f32.mrb[0].mxu0
    %v7812 = vadd.f32 0.0, %v7811
    %v7813 = vpop.f32.mrb[0].mxu0
    %v7814 = vadd.f32 0.0, %v7813
    %7815 = vdwg.mxu0
    %7816 = vmatprep.subr.bf16.mxu0 %v7314
    %7817 = vmatpush1.bf16.msra.mxu0 %v7313
    %7818 = vmatprep.subr.bf16.mxu0 %v7322
    %7819 = vmatpush1.bf16.msra.mxu0 %v7321
    %7820 = vmatprep.subr.bf16.mxu0 %v7330
    %7821 = vmatpush1.bf16.msra.mxu0 %v7329
    %7822 = vmatprep.subr.bf16.mxu0 %v7338
    %7823 = vmatpush1.bf16.msra.mxu0 %v7337
    %7824 = vmatprep.subr.bf16.mxu0 %v7346
    %7825 = vmatpush1.bf16.msra.mxu0 %v7345
    %7826 = vmatprep.subr.bf16.mxu0 %v7354
    %7827 = vmatpush1.bf16.msra.mxu0 %v7353
    %7828 = vmatprep.subr.bf16.mxu0 %v7362
    %7829 = vmatpush1.bf16.msra.mxu0 %v7361
    %7830 = vmatprep.subr.bf16.mxu0 %v7370
    %7831 = vmatpush1.bf16.msra.mxu0 %v7369
    %7832 = vmatprep.subr.bf16.mxu0 0
    %7833 = vmatpush1.bf16.msra.mxu0 0
    %7834 = vmatprep.subr.bf16.mxu0 0
    %7835 = vmatpush1.bf16.msra.mxu0 0
    %7836 = vmatprep.subr.bf16.mxu0 0
    %7837 = vmatpush1.bf16.msra.mxu0 0
    %7838 = vmatprep.subr.bf16.mxu0 0
    %7839 = vmatpush1.bf16.msra.mxu0 0
    %7840 = vmatprep.subr.bf16.mxu0 0
    %7841 = vmatpush1.bf16.msra.mxu0 0
    %7842 = vmatprep.subr.bf16.mxu0 0
    %7843 = vmatpush1.bf16.msra.mxu0 0
    %7844 = vmatprep.subr.bf16.mxu0 0
    %7845 = vmatpush1.bf16.msra.mxu0 0
    %7846 = vmatprep.subr.bf16.mxu0 0
    %7847 = vmatpush1.bf16.msra.mxu0 0
    %7848 = vmatprep.mubr.bf16.mxu0 0
    %7849 = vmatmul.mubr.bf16.gmra.mrb[0].mxu0 %v6402
    %v7850 = vpop.f32.mrb[0].mxu0
    %v7851 = vadd.f32 %v7768, %v7850
    %v7852 = vpop.f32.mrb[0].mxu0
    %v7853 = vadd.f32 %v7770, %v7852
    %v7854 = vpop.f32.mrb[0].mxu0
    %v7855 = vadd.f32 %v7772, %v7854
    %v7856 = vpop.f32.mrb[0].mxu0
    %v7857 = vadd.f32 %v7774, %v7856
    %7858 = vmatprep.mubr.bf16.mxu0 0
    %7859 = vmatmul.mubr.bf16.gmra.mrb[0].mxu0 %v6405
    %v7860 = vpop.f32.mrb[0].mxu0
    %v7861 = vadd.f32 %v7778, %v7860
    %v7862 = vpop.f32.mrb[0].mxu0
    %v7863 = vadd.f32 %v7780, %v7862
    %v7864 = vpop.f32.mrb[0].mxu0
    %v7865 = vadd.f32 %v7782, %v7864
    %v7866 = vpop.f32.mrb[0].mxu0
    %v7867 = vadd.f32 %v7784, %v7866
    %7868 = vmatprep.mubr.bf16.mxu0 0
    %7869 = vmatmul.mubr.bf16.gmra.mrb[0].mxu0 %v6408
    %v7870 = vpop.f32.mrb[0].mxu0
    %v7871 = vadd.f32 %v7788, %v7870
    %v7872 = vpop.f32.mrb[0].mxu0
    %v7873 = vadd.f32 %v7790, %v7872
    %v7874 = vpop.f32.mrb[0].mxu0
    %v7875 = vadd.f32 %v7792, %v7874
    %v7876 = vpop.f32.mrb[0].mxu0
    %v7877 = vadd.f32 %v7794, %v7876
    %7878 = vmatprep.mubr.bf16.mxu0 0
    %7879 = vmatmul.mubr.bf16.gmra.mrb[0].mxu0 %v6411
    %v7880 = vpop.f32.mrb[0].mxu0
    %v7881 = vadd.f32 %v7798, %v7880
    %v7882 = vpop.f32.mrb[0].mxu0
    %v7883 = vadd.f32 %v7800, %v7882
    %v7884 = vpop.f32.mrb[0].mxu0
    %v7885 = vadd.f32 %v7802, %v7884
    %v7886 = vpop.f32.mrb[0].mxu0
    %v7887 = vadd.f32 %v7804, %v7886
    %7888 = vmatprep.mubr.bf16.mxu0 0
    %7889 = vmatmul.mubr.bf16.gmra.mrb[0].mxu0 %v6414
    %v7890 = vpop.f32.mrb[0].mxu0
    %v7891 = vadd.f32 %v7808, %v7890
    %v7892 = vpop.f32.mrb[0].mxu0
    %v7893 = vadd.f32 %v7810, %v7892
    %v7894 = vpop.f32.mrb[0].mxu0
    %v7895 = vadd.f32 %v7812, %v7894
    %v7896 = vpop.f32.mrb[0].mxu0
    %v7897 = vadd.f32 %v7814, %v7896
    %7898 = vdwg.mxu0
    %7899 = vmatprep.subr.bf16.mxu0 %v7188
    %7900 = vmatpush1.bf16.msra.mxu0 %v7187
    %7901 = vmatprep.subr.bf16.mxu0 %v7196
    %7902 = vmatpush1.bf16.msra.mxu0 %v7195
    %7903 = vmatprep.subr.bf16.mxu0 %v7204
    %7904 = vmatpush1.bf16.msra.mxu0 %v7203
    %7905 = vmatprep.subr.bf16.mxu0 %v7212
    %7906 = vmatpush1.bf16.msra.mxu0 %v7211
    %7907 = vmatprep.subr.bf16.mxu0 %v7220
    %7908 = vmatpush1.bf16.msra.mxu0 %v7219
    %7909 = vmatprep.subr.bf16.mxu0 %v7228
    %7910 = vmatpush1.bf16.msra.mxu0 %v7227
    %7911 = vmatprep.subr.bf16.mxu0 %v7236
    %7912 = vmatpush1.bf16.msra.mxu0 %v7235
    %7913 = vmatprep.subr.bf16.mxu0 %v7244
    %7914 = vmatpush1.bf16.msra.mxu0 %v7243
    %7915 = vmatprep.subr.bf16.mxu0 %v7252
    %7916 = vmatpush1.bf16.msra.mxu0 %v7251
    %7917 = vmatprep.subr.bf16.mxu0 %v7260
    %7918 = vmatpush1.bf16.msra.mxu0 %v7259
    %7919 = vmatprep.subr.bf16.mxu0 %v7268
    %7920 = vmatpush1.bf16.msra.mxu0 %v7267
    %7921 = vmatprep.subr.bf16.mxu0 %v7276
    %7922 = vmatpush1.bf16.msra.mxu0 %v7275
    %7923 = vmatprep.subr.bf16.mxu0 %v7284
    %7924 = vmatpush1.bf16.msra.mxu0 %v7283
    %7925 = vmatprep.subr.bf16.mxu0 %v7292
    %7926 = vmatpush1.bf16.msra.mxu0 %v7291
    %7927 = vmatprep.subr.bf16.mxu0 %v7300
    %7928 = vmatpush1.bf16.msra.mxu0 %v7299
    %7929 = vmatprep.subr.bf16.mxu0 %v7308
    %7930 = vmatpush1.bf16.msra.mxu0 %v7307
    %7931 = vmatprep.mubr.bf16.mxu0 %v6401
    %7932 = vmatmul.mubr.bf16.gmra.mrb[0].mxu0 %v6400
    %v7933 = vpop.f32.mrb[0].mxu0
    %v7934 = vadd.f32 0.0, %v7933
    %v7935 = vpop.f32.mrb[0].mxu0
    %v7936 = vadd.f32 0.0, %v7935
    %v7937 = vpop.f32.mrb[0].mxu0
    %v7938 = vadd.f32 0.0, %v7937
    %v7939 = vpop.f32.mrb[0].mxu0
    %v7940 = vadd.f32 0.0, %v7939
    %7941 = vmatprep.mubr.bf16.mxu0 %v6404
    %7942 = vmatmul.mubr.bf16.gmra.mrb[0].mxu0 %v6403
    %v7943 = vpop.f32.mrb[0].mxu0
    %v7944 = vadd.f32 0.0, %v7943
    %v7945 = vpop.f32.mrb[0].mxu0
    %v7946 = vadd.f32 0.0, %v7945
    %v7947 = vpop.f32.mrb[0].mxu0
    %v7948 = vadd.f32 0.0, %v7947
    %v7949 = vpop.f32.mrb[0].mxu0
    %v7950 = vadd.f32 0.0, %v7949
    %7951 = vmatprep.mubr.bf16.mxu0 %v6407
    %7952 = vmatmul.mubr.bf16.gmra.mrb[0].mxu0 %v6406
    %v7953 = vpop.f32.mrb[0].mxu0
    %v7954 = vadd.f32 0.0, %v7953
    %v7955 = vpop.f32.mrb[0].mxu0
    %v7956 = vadd.f32 0.0, %v7955
    %v7957 = vpop.f32.mrb[0].mxu0
    %v7958 = vadd.f32 0.0, %v7957
    %v7959 = vpop.f32.mrb[0].mxu0
    %v7960 = vadd.f32 0.0, %v7959
    %7961 = vmatprep.mubr.bf16.mxu0 %v6410
    %7962 = vmatmul.mubr.bf16.gmra.mrb[0].mxu0 %v6409
    %v7963 = vpop.f32.mrb[0].mxu0
    %v7964 = vadd.f32 0.0, %v7963
    %v7965 = vpop.f32.mrb[0].mxu0
    %v7966 = vadd.f32 0.0, %v7965
    %v7967 = vpop.f32.mrb[0].mxu0
    %v7968 = vadd.f32 0.0, %v7967
    %v7969 = vpop.f32.mrb[0].mxu0
    %v7970 = vadd.f32 0.0, %v7969
    %7971 = vmatprep.mubr.bf16.mxu0 %v6413
    %7972 = vmatmul.mubr.bf16.gmra.mrb[0].mxu0 %v6412
    %v7973 = vpop.f32.mrb[0].mxu0
    %v7974 = vadd.f32 0.0, %v7973
    %v7975 = vpop.f32.mrb[0].mxu0
    %v7976 = vadd.f32 0.0, %v7975
    %v7977 = vpop.f32.mrb[0].mxu0
    %v7978 = vadd.f32 0.0, %v7977
    %v7979 = vpop.f32.mrb[0].mxu0
    %v7980 = vadd.f32 0.0, %v7979
    %7981 = vdwg.mxu0
    %7982 = vmatprep.subr.bf16.mxu0 %v7316
    %7983 = vmatpush1.bf16.msra.mxu0 %v7315
    %7984 = vmatprep.subr.bf16.mxu0 %v7324
    %7985 = vmatpush1.bf16.msra.mxu0 %v7323
    %7986 = vmatprep.subr.bf16.mxu0 %v7332
    %7987 = vmatpush1.bf16.msra.mxu0 %v7331
    %7988 = vmatprep.subr.bf16.mxu0 %v7340
    %7989 = vmatpush1.bf16.msra.mxu0 %v7339
    %7990 = vmatprep.subr.bf16.mxu0 %v7348
    %7991 = vmatpush1.bf16.msra.mxu0 %v7347
    %7992 = vmatprep.subr.bf16.mxu0 %v7356
    %7993 = vmatpush1.bf16.msra.mxu0 %v7355
    %7994 = vmatprep.subr.bf16.mxu0 %v7364
    %7995 = vmatpush1.bf16.msra.mxu0 %v7363
    %7996 = vmatprep.subr.bf16.mxu0 %v7372
    %7997 = vmatpush1.bf16.msra.mxu0 %v7371
    %7998 = vmatprep.subr.bf16.mxu0 0
    %7999 = vmatpush1.bf16.msra.mxu0 0
    %8000 = vmatprep.subr.bf16.mxu0 0
    %8001 = vmatpush1.bf16.msra.mxu0 0
    %8002 = vmatprep.subr.bf16.mxu0 0
    %8003 = vmatpush1.bf16.msra.mxu0 0
    %8004 = vmatprep.subr.bf16.mxu0 0
    %8005 = vmatpush1.bf16.msra.mxu0 0
    %8006 = vmatprep.subr.bf16.mxu0 0
    %8007 = vmatpush1.bf16.msra.mxu0 0
    %8008 = vmatprep.subr.bf16.mxu0 0
    %8009 = vmatpush1.bf16.msra.mxu0 0
    %8010 = vmatprep.subr.bf16.mxu0 0
    %8011 = vmatpush1.bf16.msra.mxu0 0
    %8012 = vmatprep.subr.bf16.mxu0 0
    %8013 = vmatpush1.bf16.msra.mxu0 0
    %8014 = vmatprep.mubr.bf16.mxu0 0
    %8015 = vmatmul.mubr.bf16.gmra.mrb[0].mxu0 %v6402
    %v8016 = vpop.f32.mrb[0].mxu0
    %v8017 = vadd.f32 %v7934, %v8016
    %v8018 = vpop.f32.mrb[0].mxu0
    %v8019 = vadd.f32 %v7936, %v8018
    %v8020 = vpop.f32.mrb[0].mxu0
    %v8021 = vadd.f32 %v7938, %v8020
    %v8022 = vpop.f32.mrb[0].mxu0
    %v8023 = vadd.f32 %v7940, %v8022
    %8024 = vmatprep.mubr.bf16.mxu0 0
    %8025 = vmatmul.mubr.bf16.gmra.mrb[0].mxu0 %v6405
    %v8026 = vpop.f32.mrb[0].mxu0
    %v8027 = vadd.f32 %v7944, %v8026
    %v8028 = vpop.f32.mrb[0].mxu0
    %v8029 = vadd.f32 %v7946, %v8028
    %v8030 = vpop.f32.mrb[0].mxu0
    %v8031 = vadd.f32 %v7948, %v8030
    %v8032 = vpop.f32.mrb[0].mxu0
    %v8033 = vadd.f32 %v7950, %v8032
    %8034 = vmatprep.mubr.bf16.mxu0 0
    %8035 = vmatmul.mubr.bf16.gmra.mrb[0].mxu0 %v6408
    %v8036 = vpop.f32.mrb[0].mxu0
    %v8037 = vadd.f32 %v7954, %v8036
    %v8038 = vpop.f32.mrb[0].mxu0
    %v8039 = vadd.f32 %v7956, %v8038
    %v8040 = vpop.f32.mrb[0].mxu0
    %v8041 = vadd.f32 %v7958, %v8040
    %v8042 = vpop.f32.mrb[0].mxu0
    %v8043 = vadd.f32 %v7960, %v8042
    %8044 = vmatprep.mubr.bf16.mxu0 0
    %8045 = vmatmul.mubr.bf16.gmra.mrb[0].mxu0 %v6411
    %v8046 = vpop.f32.mrb[0].mxu0
    %v8047 = vadd.f32 %v7964, %v8046
    %v8048 = vpop.f32.mrb[0].mxu0
    %v8049 = vadd.f32 %v7966, %v8048
    %v8050 = vpop.f32.mrb[0].mxu0
    %v8051 = vadd.f32 %v7968, %v8050
    %v8052 = vpop.f32.mrb[0].mxu0
    %v8053 = vadd.f32 %v7970, %v8052
    %8054 = vmatprep.mubr.bf16.mxu0 0
    %8055 = vmatmul.mubr.bf16.gmra.mrb[0].mxu0 %v6414
    %v8056 = vpop.f32.mrb[0].mxu0
    %v8057 = vadd.f32 %v7974, %v8056
    %v8058 = vpop.f32.mrb[0].mxu0
    %v8059 = vadd.f32 %v7976, %v8058
    %v8060 = vpop.f32.mrb[0].mxu0
    %v8061 = vadd.f32 %v7978, %v8060
    %v8062 = vpop.f32.mrb[0].mxu0
    %v8063 = vadd.f32 %v7980, %v8062
    %8064 = vdwg.mxu0
    %8065 = vmatprep.subr.bf16.mxu0 %v7190
    %8066 = vmatpush1.bf16.msra.mxu0 %v7189
    %8067 = vmatprep.subr.bf16.mxu0 %v7198
    %8068 = vmatpush1.bf16.msra.mxu0 %v7197
    %8069 = vmatprep.subr.bf16.mxu0 %v7206
    %8070 = vmatpush1.bf16.msra.mxu0 %v7205
    %8071 = vmatprep.subr.bf16.mxu0 %v7214
    %8072 = vmatpush1.bf16.msra.mxu0 %v7213
    %8073 = vmatprep.subr.bf16.mxu0 %v7222
    %8074 = vmatpush1.bf16.msra.mxu0 %v7221
    %8075 = vmatprep.subr.bf16.mxu0 %v7230
    %8076 = vmatpush1.bf16.msra.mxu0 %v7229
    %8077 = vmatprep.subr.bf16.mxu0 %v7238
    %8078 = vmatpush1.bf16.msra.mxu0 %v7237
    %8079 = vmatprep.subr.bf16.mxu0 %v7246
    %8080 = vmatpush1.bf16.msra.mxu0 %v7245
    %8081 = vmatprep.subr.bf16.mxu0 %v7254
    %8082 = vmatpush1.bf16.msra.mxu0 %v7253
    %8083 = vmatprep.subr.bf16.mxu0 %v7262
    %8084 = vmatpush1.bf16.msra.mxu0 %v7261
    %8085 = vmatprep.subr.bf16.mxu0 %v7270
    %8086 = vmatpush1.bf16.msra.mxu0 %v7269
    %8087 = vmatprep.subr.bf16.mxu0 %v7278
    %8088 = vmatpush1.bf16.msra.mxu0 %v7277
    %8089 = vmatprep.subr.bf16.mxu0 %v7286
    %8090 = vmatpush1.bf16.msra.mxu0 %v7285
    %8091 = vmatprep.subr.bf16.mxu0 %v7294
    %8092 = vmatpush1.bf16.msra.mxu0 %v7293
    %8093 = vmatprep.subr.bf16.mxu0 %v7302
    %8094 = vmatpush1.bf16.msra.mxu0 %v7301
    %8095 = vmatprep.subr.bf16.mxu0 %v7310
    %8096 = vmatpush1.bf16.msra.mxu0 %v7309
    %8097 = vmatprep.mubr.bf16.mxu0 %v6401
    %8098 = vmatmul.mubr.bf16.gmra.mrb[0].mxu0 %v6400
    %v8099 = vpop.f32.mrb[0].mxu0
    %v8100 = vadd.f32 0.0, %v8099
    %v8101 = vpop.f32.mrb[0].mxu0
    %v8102 = vadd.f32 0.0, %v8101
    %v8103 = vpop.f32.mrb[0].mxu0
    %v8104 = vadd.f32 0.0, %v8103
    %v8105 = vpop.f32.mrb[0].mxu0
    %v8106 = vadd.f32 0.0, %v8105
    %8107 = vmatprep.mubr.bf16.mxu0 %v6404
    %8108 = vmatmul.mubr.bf16.gmra.mrb[0].mxu0 %v6403
    %v8109 = vpop.f32.mrb[0].mxu0
    %v8110 = vadd.f32 0.0, %v8109
    %v8111 = vpop.f32.mrb[0].mxu0
    %v8112 = vadd.f32 0.0, %v8111
    %v8113 = vpop.f32.mrb[0].mxu0
    %v8114 = vadd.f32 0.0, %v8113
    %v8115 = vpop.f32.mrb[0].mxu0
    %v8116 = vadd.f32 0.0, %v8115
    %8117 = vmatprep.mubr.bf16.mxu0 %v6407
    %8118 = vmatmul.mubr.bf16.gmra.mrb[0].mxu0 %v6406
    %v8119 = vpop.f32.mrb[0].mxu0
    %v8120 = vadd.f32 0.0, %v8119
    %v8121 = vpop.f32.mrb[0].mxu0
    %v8122 = vadd.f32 0.0, %v8121
    %v8123 = vpop.f32.mrb[0].mxu0
    %v8124 = vadd.f32 0.0, %v8123
    %v8125 = vpop.f32.mrb[0].mxu0
    %v8126 = vadd.f32 0.0, %v8125
    %8127 = vmatprep.mubr.bf16.mxu0 %v6410
    %8128 = vmatmul.mubr.bf16.gmra.mrb[0].mxu0 %v6409
    %v8129 = vpop.f32.mrb[0].mxu0
    %v8130 = vadd.f32 0.0, %v8129
    %v8131 = vpop.f32.mrb[0].mxu0
    %v8132 = vadd.f32 0.0, %v8131
    %v8133 = vpop.f32.mrb[0].mxu0
    %v8134 = vadd.f32 0.0, %v8133
    %v8135 = vpop.f32.mrb[0].mxu0
    %v8136 = vadd.f32 0.0, %v8135
    %8137 = vmatprep.mubr.bf16.mxu0 %v6413
    %8138 = vmatmul.mubr.bf16.gmra.mrb[0].mxu0 %v6412
    %v8139 = vpop.f32.mrb[0].mxu0
    %v8140 = vadd.f32 0.0, %v8139
    %v8141 = vpop.f32.mrb[0].mxu0
    %v8142 = vadd.f32 0.0, %v8141
    %v8143 = vpop.f32.mrb[0].mxu0
    %v8144 = vadd.f32 0.0, %v8143
    %v8145 = vpop.f32.mrb[0].mxu0
    %v8146 = vadd.f32 0.0, %v8145
    %8147 = vdwg.mxu0
    %8148 = vmatprep.subr.bf16.mxu0 %v7318
    %8149 = vmatpush1.bf16.msra.mxu0 %v7317
    %8150 = vmatprep.subr.bf16.mxu0 %v7326
    %8151 = vmatpush1.bf16.msra.mxu0 %v7325
    %8152 = vmatprep.subr.bf16.mxu0 %v7334
    %8153 = vmatpush1.bf16.msra.mxu0 %v7333
    %8154 = vmatprep.subr.bf16.mxu0 %v7342
    %8155 = vmatpush1.bf16.msra.mxu0 %v7341
    %8156 = vmatprep.subr.bf16.mxu0 %v7350
    %8157 = vmatpush1.bf16.msra.mxu0 %v7349
    %8158 = vmatprep.subr.bf16.mxu0 %v7358
    %8159 = vmatpush1.bf16.msra.mxu0 %v7357
    %8160 = vmatprep.subr.bf16.mxu0 %v7366
    %8161 = vmatpush1.bf16.msra.mxu0 %v7365
    %8162 = vmatprep.subr.bf16.mxu0 %v7374
    %8163 = vmatpush1.bf16.msra.mxu0 %v7373
    %8164 = vmatprep.subr.bf16.mxu0 0
    %8165 = vmatpush1.bf16.msra.mxu0 0
    %8166 = vmatprep.subr.bf16.mxu0 0
    %8167 = vmatpush1.bf16.msra.mxu0 0
    %8168 = vmatprep.subr.bf16.mxu0 0
    %8169 = vmatpush1.bf16.msra.mxu0 0
    %8170 = vmatprep.subr.bf16.mxu0 0
    %8171 = vmatpush1.bf16.msra.mxu0 0
    %8172 = vmatprep.subr.bf16.mxu0 0
    %8173 = vmatpush1.bf16.msra.mxu0 0
    %8174 = vmatprep.subr.bf16.mxu0 0
    %8175 = vmatpush1.bf16.msra.mxu0 0
    %8176 = vmatprep.subr.bf16.mxu0 0
    %8177 = vmatpush1.bf16.msra.mxu0 0
    %8178 = vmatprep.subr.bf16.mxu0 0
    %8179 = vmatpush1.bf16.msra.mxu0 0
    %8180 = vmatprep.mubr.bf16.mxu0 0
    %8181 = vmatmul.mubr.bf16.gmra.mrb[0].mxu0 %v6402
    %v8182 = vpop.f32.mrb[0].mxu0
    %v8183 = vadd.f32 %v8100, %v8182
    %v8184 = vpop.f32.mrb[0].mxu0
    %v8185 = vadd.f32 %v8102, %v8184
    %v8186 = vpop.f32.mrb[0].mxu0
    %v8187 = vadd.f32 %v8104, %v8186
    %v8188 = vpop.f32.mrb[0].mxu0
    %v8189 = vadd.f32 %v8106, %v8188
    %8190 = vmatprep.mubr.bf16.mxu0 0
    %8191 = vmatmul.mubr.bf16.gmra.mrb[0].mxu0 %v6405
    %v8192 = vpop.f32.mrb[0].mxu0
    %v8193 = vadd.f32 %v8110, %v8192
    %v8194 = vpop.f32.mrb[0].mxu0
    %v8195 = vadd.f32 %v8112, %v8194
    %v8196 = vpop.f32.mrb[0].mxu0
    %v8197 = vadd.f32 %v8114, %v8196
    %v8198 = vpop.f32.mrb[0].mxu0
    %v8199 = vadd.f32 %v8116, %v8198
    %8200 = vmatprep.mubr.bf16.mxu0 0
    %8201 = vmatmul.mubr.bf16.gmra.mrb[0].mxu0 %v6408
    %v8202 = vpop.f32.mrb[0].mxu0
    %v8203 = vadd.f32 %v8120, %v8202
    %v8204 = vpop.f32.mrb[0].mxu0
    %v8205 = vadd.f32 %v8122, %v8204
    %v8206 = vpop.f32.mrb[0].mxu0
    %v8207 = vadd.f32 %v8124, %v8206
    %v8208 = vpop.f32.mrb[0].mxu0
    %v8209 = vadd.f32 %v8126, %v8208
    %8210 = vmatprep.mubr.bf16.mxu0 0
    %8211 = vmatmul.mubr.bf16.gmra.mrb[0].mxu0 %v6411
    %v8212 = vpop.f32.mrb[0].mxu0
    %v8213 = vadd.f32 %v8130, %v8212
    %v8214 = vpop.f32.mrb[0].mxu0
    %v8215 = vadd.f32 %v8132, %v8214
    %v8216 = vpop.f32.mrb[0].mxu0
    %v8217 = vadd.f32 %v8134, %v8216
    %v8218 = vpop.f32.mrb[0].mxu0
    %v8219 = vadd.f32 %v8136, %v8218
    %8220 = vmatprep.mubr.bf16.mxu0 0
    %8221 = vmatmul.mubr.bf16.gmra.mrb[0].mxu0 %v6414
    %v8222 = vpop.f32.mrb[0].mxu0
    %v8223 = vadd.f32 %v8140, %v8222
    %v8224 = vpop.f32.mrb[0].mxu0
    %v8225 = vadd.f32 %v8142, %v8224
    %v8226 = vpop.f32.mrb[0].mxu0
    %v8227 = vadd.f32 %v8144, %v8226
    %v8228 = vpop.f32.mrb[0].mxu0
    %v8229 = vadd.f32 %v8146, %v8228
    %8230 = vdwg.mxu0
    %8231 = vst [vmem:[#allocation4] sm:$0xff] 0.0
    %8232 = vst [vmem:[#allocation4 + $0x8] sm:$0xff] 0.0
    %8233 = vst [vmem:[#allocation4 + $0x10] sm:$0xff] 0.0
    %8234 = vst [vmem:[#allocation4 + $0x18] sm:$0xff] 0.0
    %8235 = vst [vmem:[#allocation4 + $0x20] sm:$0xff] 0.0
    %8236 = vst [vmem:[#allocation4 + $0x28] sm:$0xff] 0.0
    %8237 = vst [vmem:[#allocation4 + $0x30] sm:$0xff] 0.0
    %8238 = vst [vmem:[#allocation4 + $0x38] sm:$0xff] 0.0
    %8239 = vst [vmem:[#allocation4 + $0x40] sm:$0xff] 0.0
    %8240 = vst [vmem:[#allocation4 + $0x48] sm:$0xff] 0.0
    %8241 = vst [vmem:[#allocation4 + $0x50] sm:$0xff] 0.0
    %8242 = vst [vmem:[#allocation4 + $0x58] sm:$0xff] 0.0
    %8243 = vst [vmem:[#allocation4 + $0x60] sm:$0xff] 0.0
    %8244 = vst [vmem:[#allocation4 + $0x68] sm:$0xff] 0.0
    %8245 = vst [vmem:[#allocation4 + $0x70] sm:$0xff] 0.0
    %8246 = vst [vmem:[#allocation4 + $0x78] sm:$0xff] 0.0
    %8247 = vst [vmem:[#allocation4 + $0x80] sm:$0xff] 0.0
    %8248 = vst [vmem:[#allocation4 + $0x88] sm:$0xff] 0.0
    %8249 = vst [vmem:[#allocation4 + $0x90] sm:$0xff] 0.0
    %8250 = vst [vmem:[#allocation4 + $0x98] sm:$0xff] 0.0
    %8251 = vst [vmem:[#allocation4 + $0xa0] sm:$0xff] 0.0
    %8252 = vst [vmem:[#allocation4 + $0xa8] sm:$0xff] 0.0
    %8253 = vst [vmem:[#allocation4 + $0xb0] sm:$0xff] 0.0
    %8254 = vst [vmem:[#allocation4 + $0xb8] sm:$0xff] 0.0
    %8255 = vst [vmem:[#allocation4 + $0xc0] sm:$0xff] 0.0
    %8256 = vst [vmem:[#allocation4 + $0xc8] sm:$0xff] 0.0
    %v8257 = vld [vmem:[#allocation4] sm:$0xff]
    %v8258 = vld [vmem:[#allocation4 + $0x8] sm:$0xff]
    %v8259 = vld [vmem:[#allocation4 + $0x10] sm:$0xff]
    %v8260 = vld [vmem:[#allocation4 + $0x18] sm:$0xff]
    %v8261 = vld [vmem:[#allocation4 + $0x20] sm:$0xff]
    %v8262 = vld [vmem:[#allocation4 + $0x28] sm:$0xff]
    %v8263 = vld [vmem:[#allocation4 + $0x30] sm:$0xff]
    %v8264 = vld [vmem:[#allocation4 + $0x38] sm:$0xff]
    %v8265 = vld [vmem:[#allocation4 + $0x40] sm:$0xff]
    %v8266 = vld [vmem:[#allocation4 + $0x48] sm:$0xff]
    %v8267 = vld [vmem:[#allocation4 + $0x50] sm:$0xff]
    %v8268 = vld [vmem:[#allocation4 + $0x58] sm:$0xff]
    %v8269 = vld [vmem:[#allocation4 + $0x60] sm:$0xff]
    %v8270 = vld [vmem:[#allocation4 + $0x68] sm:$0xff]
    %v8271 = vld [vmem:[#allocation4 + $0x70] sm:$0xff]
    %v8272 = vld [vmem:[#allocation4 + $0x78] sm:$0xff]
    %v8273 = vld [vmem:[#allocation4 + $0x80] sm:$0xff]
    %v8274 = vld [vmem:[#allocation4 + $0x88] sm:$0xff]
    %v8275 = vld [vmem:[#allocation4 + $0x90] sm:$0xff]
    %v8276 = vld [vmem:[#allocation4 + $0x98] sm:$0xff]
    %v8277 = vadd.f32 %v8257, %v7685
    %v8278 = vadd.f32 %v8258, %v7687
    %v8279 = vadd.f32 %v8259, %v7689
    %v8280 = vadd.f32 %v8260, %v7691
    %v8281 = vadd.f32 %v8261, %v7695
    %v8282 = vadd.f32 %v8262, %v7697
    %v8283 = vadd.f32 %v8263, %v7699
    %v8284 = vadd.f32 %v8264, %v7701
    %v8285 = vadd.f32 %v8265, %v7705
    %v8286 = vadd.f32 %v8266, %v7707
    %v8287 = vadd.f32 %v8267, %v7709
    %v8288 = vadd.f32 %v8268, %v7711
    %v8289 = vadd.f32 %v8269, %v7715
    %v8290 = vadd.f32 %v8270, %v7717
    %v8291 = vadd.f32 %v8271, %v7719
    %v8292 = vadd.f32 %v8272, %v7721
    %v8293 = vadd.f32 %v8273, %v7725
    %v8294 = vadd.f32 %v8274, %v7727
    %v8295 = vadd.f32 %v8275, %v7729
    %v8296 = vadd.f32 %v8276, %v7731
    %8297 = vst [vmem:[#allocation4] sm:$0xff] %v8277
    %8298 = vst [vmem:[#allocation4 + $0x8] sm:$0xff] %v8278
    %8299 = vst [vmem:[#allocation4 + $0x10] sm:$0xff] %v8279
    %8300 = vst [vmem:[#allocation4 + $0x18] sm:$0xff] %v8280
    %8301 = vst [vmem:[#allocation4 + $0x20] sm:$0xff] %v8281
    %8302 = vst [vmem:[#allocation4 + $0x28] sm:$0xff] %v8282
    %8303 = vst [vmem:[#allocation4 + $0x30] sm:$0xff] %v8283
    %8304 = vst [vmem:[#allocation4 + $0x38] sm:$0xff] %v8284
    %8305 = vst [vmem:[#allocation4 + $0x40] sm:$0xff] %v8285
    %8306 = vst [vmem:[#allocation4 + $0x48] sm:$0xff] %v8286
    %8307 = vst [vmem:[#allocation4 + $0x50] sm:$0xff] %v8287
    %8308 = vst [vmem:[#allocation4 + $0x58] sm:$0xff] %v8288
    %8309 = vst [vmem:[#allocation4 + $0x60] sm:$0xff] %v8289
    %8310 = vst [vmem:[#allocation4 + $0x68] sm:$0xff] %v8290
    %8311 = vst [vmem:[#allocation4 + $0x70] sm:$0xff] %v8291
    %8312 = vst [vmem:[#allocation4 + $0x78] sm:$0xff] %v8292
    %8313 = vst [vmem:[#allocation4 + $0x80] sm:$0xff] %v8293
    %8314 = vst [vmem:[#allocation4 + $0x88] sm:$0xff] %v8294
    %8315 = vst [vmem:[#allocation4 + $0x90] sm:$0xff] %v8295
    %8316 = vst [vmem:[#allocation4 + $0x98] sm:$0xff] %v8296
    %v8317 = vld [vmem:[#allocation4 + $0x10] sm:$0xff]
    %v8318 = vld [vmem:[#allocation4 + $0x18] sm:$0xff]
    %v8319 = vld [vmem:[#allocation4 + $0x20] sm:$0xff]
    %v8320 = vld [vmem:[#allocation4 + $0x28] sm:$0xff]
    %v8321 = vld [vmem:[#allocation4 + $0x30] sm:$0xff]
    %v8322 = vld [vmem:[#allocation4 + $0x38] sm:$0xff]
    %v8323 = vld [vmem:[#allocation4 + $0x40] sm:$0xff]
    %v8324 = vld [vmem:[#allocation4 + $0x48] sm:$0xff]
    %v8325 = vld [vmem:[#allocation4 + $0x50] sm:$0xff]
    %v8326 = vld [vmem:[#allocation4 + $0x58] sm:$0xff]
    %v8327 = vld [vmem:[#allocation4 + $0x60] sm:$0xff]
    %v8328 = vld [vmem:[#allocation4 + $0x68] sm:$0xff]
    %v8329 = vld [vmem:[#allocation4 + $0x70] sm:$0xff]
    %v8330 = vld [vmem:[#allocation4 + $0x78] sm:$0xff]
    %v8331 = vld [vmem:[#allocation4 + $0x80] sm:$0xff]
    %v8332 = vld [vmem:[#allocation4 + $0x88] sm:$0xff]
    %v8333 = vld [vmem:[#allocation4 + $0x90] sm:$0xff]
    %v8334 = vld [vmem:[#allocation4 + $0x98] sm:$0xff]
    %v8335 = vld [vmem:[#allocation4 + $0xa0] sm:$0xff]
    %v8336 = vld [vmem:[#allocation4 + $0xa8] sm:$0xff]
    %v8337 = vadd.f32 %v8317, %v7851
    %v8338 = vadd.f32 %v8318, %v7853
    %v8339 = vadd.f32 %v8319, %v7855
    %v8340 = vadd.f32 %v8320, %v7857
    %v8341 = vadd.f32 %v8321, %v7861
    %v8342 = vadd.f32 %v8322, %v7863
    %v8343 = vadd.f32 %v8323, %v7865
    %v8344 = vadd.f32 %v8324, %v7867
    %v8345 = vadd.f32 %v8325, %v7871
    %v8346 = vadd.f32 %v8326, %v7873
    %v8347 = vadd.f32 %v8327, %v7875
    %v8348 = vadd.f32 %v8328, %v7877
    %v8349 = vadd.f32 %v8329, %v7881
    %v8350 = vadd.f32 %v8330, %v7883
    %v8351 = vadd.f32 %v8331, %v7885
    %v8352 = vadd.f32 %v8332, %v7887
    %v8353 = vadd.f32 %v8333, %v7891
    %v8354 = vadd.f32 %v8334, %v7893
    %v8355 = vadd.f32 %v8335, %v7895
    %v8356 = vadd.f32 %v8336, %v7897
    %8357 = vst [vmem:[#allocation4 + $0x10] sm:$0xff] %v8337
    %8358 = vst [vmem:[#allocation4 + $0x18] sm:$0xff] %v8338
    %8359 = vst [vmem:[#allocation4 + $0x20] sm:$0xff] %v8339
    %8360 = vst [vmem:[#allocation4 + $0x28] sm:$0xff] %v8340
    %8361 = vst [vmem:[#allocation4 + $0x30] sm:$0xff] %v8341
    %8362 = vst [vmem:[#allocation4 + $0x38] sm:$0xff] %v8342
    %8363 = vst [vmem:[#allocation4 + $0x40] sm:$0xff] %v8343
    %8364 = vst [vmem:[#allocation4 + $0x48] sm:$0xff] %v8344
    %8365 = vst [vmem:[#allocation4 + $0x50] sm:$0xff] %v8345
    %8366 = vst [vmem:[#allocation4 + $0x58] sm:$0xff] %v8346
    %8367 = vst [vmem:[#allocation4 + $0x60] sm:$0xff] %v8347
    %8368 = vst [vmem:[#allocation4 + $0x68] sm:$0xff] %v8348
    %8369 = vst [vmem:[#allocation4 + $0x70] sm:$0xff] %v8349
    %8370 = vst [vmem:[#allocation4 + $0x78] sm:$0xff] %v8350
    %8371 = vst [vmem:[#allocation4 + $0x80] sm:$0xff] %v8351
    %8372 = vst [vmem:[#allocation4 + $0x88] sm:$0xff] %v8352
    %8373 = vst [vmem:[#allocation4 + $0x90] sm:$0xff] %v8353
    %8374 = vst [vmem:[#allocation4 + $0x98] sm:$0xff] %v8354
    %8375 = vst [vmem:[#allocation4 + $0xa0] sm:$0xff] %v8355
    %8376 = vst [vmem:[#allocation4 + $0xa8] sm:$0xff] %v8356
    %v8377 = vld [vmem:[#allocation4 + $0x20] sm:$0xff]
    %v8378 = vld [vmem:[#allocation4 + $0x28] sm:$0xff]
    %v8379 = vld [vmem:[#allocation4 + $0x30] sm:$0xff]
    %v8380 = vld [vmem:[#allocation4 + $0x38] sm:$0xff]
    %v8381 = vld [vmem:[#allocation4 + $0x40] sm:$0xff]
    %v8382 = vld [vmem:[#allocation4 + $0x48] sm:$0xff]
    %v8383 = vld [vmem:[#allocation4 + $0x50] sm:$0xff]
    %v8384 = vld [vmem:[#allocation4 + $0x58] sm:$0xff]
    %v8385 = vld [vmem:[#allocation4 + $0x60] sm:$0xff]
    %v8386 = vld [vmem:[#allocation4 + $0x68] sm:$0xff]
    %v8387 = vld [vmem:[#allocation4 + $0x70] sm:$0xff]
    %v8388 = vld [vmem:[#allocation4 + $0x78] sm:$0xff]
    %v8389 = vld [vmem:[#allocation4 + $0x80] sm:$0xff]
    %v8390 = vld [vmem:[#allocation4 + $0x88] sm:$0xff]
    %v8391 = vld [vmem:[#allocation4 + $0x90] sm:$0xff]
    %v8392 = vld [vmem:[#allocation4 + $0x98] sm:$0xff]
    %v8393 = vld [vmem:[#allocation4 + $0xa0] sm:$0xff]
    %v8394 = vld [vmem:[#allocation4 + $0xa8] sm:$0xff]
    %v8395 = vld [vmem:[#allocation4 + $0xb0] sm:$0xff]
    %v8396 = vld [vmem:[#allocation4 + $0xb8] sm:$0xff]
    %v8397 = vadd.f32 %v8377, %v8017
    %v8398 = vadd.f32 %v8378, %v8019
    %v8399 = vadd.f32 %v8379, %v8021
    %v8400 = vadd.f32 %v8380, %v8023
    %v8401 = vadd.f32 %v8381, %v8027
    %v8402 = vadd.f32 %v8382, %v8029
    %v8403 = vadd.f32 %v8383, %v8031
    %v8404 = vadd.f32 %v8384, %v8033
    %v8405 = vadd.f32 %v8385, %v8037
    %v8406 = vadd.f32 %v8386, %v8039
    %v8407 = vadd.f32 %v8387, %v8041
    %v8408 = vadd.f32 %v8388, %v8043
    %v8409 = vadd.f32 %v8389, %v8047
    %v8410 = vadd.f32 %v8390, %v8049
    %v8411 = vadd.f32 %v8391, %v8051
    %v8412 = vadd.f32 %v8392, %v8053
    %v8413 = vadd.f32 %v8393, %v8057
    %v8414 = vadd.f32 %v8394, %v8059
    %v8415 = vadd.f32 %v8395, %v8061
    %v8416 = vadd.f32 %v8396, %v8063
    %8417 = vst [vmem:[#allocation4 + $0x20] sm:$0xff] %v8397
    %8418 = vst [vmem:[#allocation4 + $0x28] sm:$0xff] %v8398
    %8419 = vst [vmem:[#allocation4 + $0x30] sm:$0xff] %v8399
    %8420 = vst [vmem:[#allocation4 + $0x38] sm:$0xff] %v8400
    %8421 = vst [vmem:[#allocation4 + $0x40] sm:$0xff] %v8401
    %8422 = vst [vmem:[#allocation4 + $0x48] sm:$0xff] %v8402
    %8423 = vst [vmem:[#allocation4 + $0x50] sm:$0xff] %v8403
    %8424 = vst [vmem:[#allocation4 + $0x58] sm:$0xff] %v8404
    %8425 = vst [vmem:[#allocation4 + $0x60] sm:$0xff] %v8405
    %8426 = vst [vmem:[#allocation4 + $0x68] sm:$0xff] %v8406
    %8427 = vst [vmem:[#allocation4 + $0x70] sm:$0xff] %v8407
    %8428 = vst [vmem:[#allocation4 + $0x78] sm:$0xff] %v8408
    %8429 = vst [vmem:[#allocation4 + $0x80] sm:$0xff] %v8409
    %8430 = vst [vmem:[#allocation4 + $0x88] sm:$0xff] %v8410
    %8431 = vst [vmem:[#allocation4 + $0x90] sm:$0xff] %v8411
    %8432 = vst [vmem:[#allocation4 + $0x98] sm:$0xff] %v8412
    %8433 = vst [vmem:[#allocation4 + $0xa0] sm:$0xff] %v8413
    %8434 = vst [vmem:[#allocation4 + $0xa8] sm:$0xff] %v8414
    %8435 = vst [vmem:[#allocation4 + $0xb0] sm:$0xff] %v8415
    %8436 = vst [vmem:[#allocation4 + $0xb8] sm:$0xff] %v8416
    %v8437 = vld [vmem:[#allocation4 + $0x30] sm:$0xff]
    %v8438 = vld [vmem:[#allocation4 + $0x38] sm:$0xff]
    %v8439 = vld [vmem:[#allocation4 + $0x40] sm:$0xff]
    %v8440 = vld [vmem:[#allocation4 + $0x48] sm:$0xff]
    %v8441 = vld [vmem:[#allocation4 + $0x50] sm:$0xff]
    %v8442 = vld [vmem:[#allocation4 + $0x58] sm:$0xff]
    %v8443 = vld [vmem:[#allocation4 + $0x60] sm:$0xff]
    %v8444 = vld [vmem:[#allocation4 + $0x68] sm:$0xff]
    %v8445 = vld [vmem:[#allocation4 + $0x70] sm:$0xff]
    %v8446 = vld [vmem:[#allocation4 + $0x78] sm:$0xff]
    %v8447 = vld [vmem:[#allocation4 + $0x80] sm:$0xff]
    %v8448 = vld [vmem:[#allocation4 + $0x88] sm:$0xff]
    %v8449 = vld [vmem:[#allocation4 + $0x90] sm:$0xff]
    %v8450 = vld [vmem:[#allocation4 + $0x98] sm:$0xff]
    %v8451 = vld [vmem:[#allocation4 + $0xa0] sm:$0xff]
    %v8452 = vld [vmem:[#allocation4 + $0xa8] sm:$0xff]
    %v8453 = vld [vmem:[#allocation4 + $0xb0] sm:$0xff]
    %v8454 = vld [vmem:[#allocation4 + $0xb8] sm:$0xff]
    %v8455 = vld [vmem:[#allocation4 + $0xc0] sm:$0xff]
    %v8456 = vld [vmem:[#allocation4 + $0xc8] sm:$0xff]
    %v8457 = vadd.f32 %v8437, %v8183
    %v8458 = vadd.f32 %v8438, %v8185
    %v8459 = vadd.f32 %v8439, %v8187
    %v8460 = vadd.f32 %v8440, %v8189
    %v8461 = vadd.f32 %v8441, %v8193
    %v8462 = vadd.f32 %v8442, %v8195
    %v8463 = vadd.f32 %v8443, %v8197
    %v8464 = vadd.f32 %v8444, %v8199
    %v8465 = vadd.f32 %v8445, %v8203
    %v8466 = vadd.f32 %v8446, %v8205
    %v8467 = vadd.f32 %v8447, %v8207
    %v8468 = vadd.f32 %v8448, %v8209
    %v8469 = vadd.f32 %v8449, %v8213
    %v8470 = vadd.f32 %v8450, %v8215
    %v8471 = vadd.f32 %v8451, %v8217
    %v8472 = vadd.f32 %v8452, %v8219
    %v8473 = vadd.f32 %v8453, %v8223
    %v8474 = vadd.f32 %v8454, %v8225
    %v8475 = vadd.f32 %v8455, %v8227
    %v8476 = vadd.f32 %v8456, %v8229
    %8477 = vst [vmem:[#allocation4 + $0x30] sm:$0xff] %v8457
    %8478 = vst [vmem:[#allocation4 + $0x38] sm:$0xff] %v8458
    %8479 = vst [vmem:[#allocation4 + $0x40] sm:$0xff] %v8459
    %8480 = vst [vmem:[#allocation4 + $0x48] sm:$0xff] %v8460
    %8481 = vst [vmem:[#allocation4 + $0x50] sm:$0xff] %v8461
    %8482 = vst [vmem:[#allocation4 + $0x58] sm:$0xff] %v8462
    %8483 = vst [vmem:[#allocation4 + $0x60] sm:$0xff] %v8463
    %8484 = vst [vmem:[#allocation4 + $0x68] sm:$0xff] %v8464
    %8485 = vst [vmem:[#allocation4 + $0x70] sm:$0xff] %v8465
    %8486 = vst [vmem:[#allocation4 + $0x78] sm:$0xff] %v8466
    %8487 = vst [vmem:[#allocation4 + $0x80] sm:$0xff] %v8467
    %8488 = vst [vmem:[#allocation4 + $0x88] sm:$0xff] %v8468
    %8489 = vst [vmem:[#allocation4 + $0x90] sm:$0xff] %v8469
    %8490 = vst [vmem:[#allocation4 + $0x98] sm:$0xff] %v8470
    %8491 = vst [vmem:[#allocation4 + $0xa0] sm:$0xff] %v8471
    %8492 = vst [vmem:[#allocation4 + $0xa8] sm:$0xff] %v8472
    %8493 = vst [vmem:[#allocation4 + $0xb0] sm:$0xff] %v8473
    %8494 = vst [vmem:[#allocation4 + $0xb8] sm:$0xff] %v8474
    %8495 = vst [vmem:[#allocation4 + $0xc0] sm:$0xff] %v8475
    %8496 = vst [vmem:[#allocation4 + $0xc8] sm:$0xff] %v8476
    %v8497 = vld [vmem:[#allocation4] sm:$0xff]
    %v8498 = vld [vmem:[#allocation4 + $0x8] sm:$0xff]
    %v8499 = vld [vmem:[#allocation4 + $0x10] sm:$0xff]
    %v8500 = vld [vmem:[#allocation4 + $0x18] sm:$0xff]
    %v8501 = vld [vmem:[#allocation4 + $0x20] sm:$0xff]
    %v8502 = vld [vmem:[#allocation4 + $0x28] sm:$0xff]
    %v8503 = vld [vmem:[#allocation4 + $0x30] sm:$0xff]
    %v8504 = vld [vmem:[#allocation4 + $0x38] sm:$0xff]
    %v8505 = vld [vmem:[#allocation4 + $0x40] sm:$0xff]
    %v8506 = vld [vmem:[#allocation4 + $0x48] sm:$0xff]
    %v8507 = vld [vmem:[#allocation4 + $0x50] sm:$0xff]
    %v8508 = vld [vmem:[#allocation4 + $0x58] sm:$0xff]
    %v8509 = vld [vmem:[#allocation4 + $0x60] sm:$0xff]
    %v8510 = vld [vmem:[#allocation4 + $0x68] sm:$0xff]
    %v8511 = vld [vmem:[#allocation4 + $0x70] sm:$0xff]
    %v8512 = vld [vmem:[#allocation4 + $0x78] sm:$0xff]
    %v8513 = vld [vmem:[#allocation4 + $0x80] sm:$0xff]
    %v8514 = vld [vmem:[#allocation4 + $0x88] sm:$0xff]
    %v8515 = vld [vmem:[#allocation4 + $0x90] sm:$0xff]
    %v8516 = vld [vmem:[#allocation4 + $0x98] sm:$0xff]
    %v8517 = vld [vmem:[#allocation4 + $0xa0] sm:$0xff]
    %v8518 = vld [vmem:[#allocation4 + $0xa8] sm:$0xff]
    %v8519 = vld [vmem:[#allocation4 + $0xb0] sm:$0xff]
    %v8520 = vld [vmem:[#allocation4 + $0xb8] sm:$0xff]
    %v8521 = vld [vmem:[#allocation4 + $0xc0] sm:$0xff]
    %v8522 = vld [vmem:[#allocation4 + $0xc8] sm:$0xff]
    %v8523 = vld [vmem:[#allocation15 + $0x2] sm:$0x1]
    %v8524 = vld [vmem:[#allocation15 + $0x3] sm:$0x1]
    %vm8525 = vcmp.lt.s32.totalorder %v5039, 0
    %v8526 = vsub.s32 0, %v5039
    %v8527 = vsel %vm8525, %v8526, %v5039
    %v8528 = vshrl.u32 %v8527, 3
    %v8529 = vand.u32 %v8527, 7
    %v8530 = vsub.s32 0, %v8529
    %v8531 = vsel %vm8525, %v8530, %v8529
    %vm8532 = vcmp.lt.s32.totalorder %v5040, 0
    %v8533 = vsub.s32 0, %v5040
    %v8534 = vsel %vm8532, %v8533, %v5040
    %v8535 = vshrl.u32 %v8534, 3
    %v8536 = vand.u32 %v8534, 7
    %v8537 = vsub.s32 0, %v8536
    %v8538 = vsel %vm8532, %v8537, %v8536
    %vm8539 = vcmp.lt.s32.totalorder %v5041, 0
    %v8540 = vsub.s32 0, %v5041
    %v8541 = vsel %vm8539, %v8540, %v5041
    %v8542 = vshrl.u32 %v8541, 3
    %v8543 = vand.u32 %v8541, 7
    %v8544 = vsub.s32 0, %v8543
    %v8545 = vsel %vm8539, %v8544, %v8543
    %vm8546 = vcmp.ne.s32.totalorder %v8531, 0
    %vm8547 = vcmp.ne.s32.totalorder %v8538, 0
    %vm8548 = vcmp.ne.s32.totalorder %v8545, 0
    %vm8549 = vcmp.lt.s32.totalorder %v8531, 0
    %vm8550 = vcmp.lt.s32.totalorder %v8538, 0
    %vm8551 = vcmp.lt.s32.totalorder %v8545, 0
    %vm8552 = vmand %vm8549, %vm8546
    %vm8553 = vmand %vm8550, %vm8547
    %vm8554 = vmand %vm8551, %vm8548
    %v8555 = vadd.s32 %v8531, 8
    %v8556 = vadd.s32 %v8538, 8
    %v8557 = vadd.s32 %v8545, 8
    %v8558 = vsel %vm8552, %v8555, %v8531
    %v8559 = vsel %vm8553, %v8556, %v8538
    %v8560 = vsel %vm8554, %v8557, %v8545
    %vm8561 = vcmp.lt.s32.totalorder %v8558, %v4874
    %vm8562 = vcmp.lt.s32.totalorder %v8559, %v4874
    %vm8563 = vcmp.lt.s32.totalorder %v8560, %v4874
    %v8564 = vsel %vm4875, %v8497, 0.0
    %v8565 = vsel %vm4875, %v8498, 0.0
    %v8566 = vsel %vm4876, %v8499, 0.0
    %v8567 = vsel %vm4876, %v8500, 0.0
    %v8568 = vsel %vm4877, %v8501, 0.0
    %v8569 = vsel %vm4877, %v8502, 0.0
    %v8570 = vsel %vm4878, %v8503, 0.0
    %v8571 = vsel %vm4878, %v8504, 0.0
    %v8572 = vsel %vm4879, %v8505, 0.0
    %v8573 = vsel %vm4879, %v8506, 0.0
    %v8574 = vsel %vm4880, %v8507, 0.0
    %v8575 = vsel %vm4880, %v8508, 0.0
    %v8576 = vsel %vm4881, %v8509, 0.0
    %v8577 = vsel %vm4881, %v8510, 0.0
    %v8578 = vsel %vm4882, %v8511, 0.0
    %v8579 = vsel %vm4882, %v8512, 0.0
    %v8580 = vsel %vm4883, %v8513, 0.0
    %v8581 = vsel %vm4883, %v8514, 0.0
    %v8582 = vsel %vm4884, %v8515, 0.0
    %v8583 = vsel %vm4884, %v8516, 0.0
    %v8584 = vsel %vm8561, %v8517, 0.0
    %v8585 = vsel %vm8561, %v8518, 0.0
    %v8586 = vsel %vm8562, %v8519, 0.0
    %v8587 = vsel %vm8562, %v8520, 0.0
    %v8588 = vsel %vm8563, %v8521, 0.0
    %v8589 = vsel %vm8563, %v8522, 0.0
    %v8590 = vadd.f32 %v8564, %v8566
    %v8591 = vadd.f32 %v8590, %v8568
    %v8592 = vadd.f32 %v8591, %v8570
    %v8593 = vadd.f32 %v8592, %v8572
    %v8594 = vadd.f32 %v8593, %v8574
    %v8595 = vadd.f32 %v8594, %v8576
    %v8596 = vadd.f32 %v8595, %v8578
    %v8597 = vadd.f32 %v8596, %v8580
    %v8598 = vadd.f32 %v8597, %v8582
    %v8599 = vadd.f32 %v8598, %v8584
    %v8600 = vadd.f32 %v8599, %v8586
    %v8601 = vadd.f32 %v8600, %v8588
    %v8602 = vrot.slane %v8601, 4
    %v8603 = vadd.f32 %v8601, %v8602
    %v8604 = vrot.slane %v8603, 2
    %v8605 = vadd.f32 %v8603, %v8604
    %v8606 = vrot.slane %v8605, 1
    %v8607 = vadd.f32 %v8605, %v8606
    %v8608 = vadd.f32 %v8565, %v8567
    %v8609 = vadd.f32 %v8608, %v8569
    %v8610 = vadd.f32 %v8609, %v8571
    %v8611 = vadd.f32 %v8610, %v8573
    %v8612 = vadd.f32 %v8611, %v8575
    %v8613 = vadd.f32 %v8612, %v8577
    %v8614 = vadd.f32 %v8613, %v8579
    %v8615 = vadd.f32 %v8614, %v8581
    %v8616 = vadd.f32 %v8615, %v8583
    %v8617 = vadd.f32 %v8616, %v8585
    %v8618 = vadd.f32 %v8617, %v8587
    %v8619 = vadd.f32 %v8618, %v8589
    %v8620 = vrot.slane %v8619, 4
    %v8621 = vadd.f32 %v8619, %v8620
    %v8622 = vrot.slane %v8621, 2
    %v8623 = vadd.f32 %v8621, %v8622
    %v8624 = vrot.slane %v8623, 1
    %v8625 = vadd.f32 %v8623, %v8624
    %v8626 = vmul.f32 %v8564, %v8497
    %v8627 = vmul.f32 %v8565, %v8498
    %v8628 = vmul.f32 %v8566, %v8499
    %v8629 = vmul.f32 %v8567, %v8500
    %v8630 = vmul.f32 %v8568, %v8501
    %v8631 = vmul.f32 %v8569, %v8502
    %v8632 = vmul.f32 %v8570, %v8503
    %v8633 = vmul.f32 %v8571, %v8504
    %v8634 = vmul.f32 %v8572, %v8505
    %v8635 = vmul.f32 %v8573, %v8506
    %v8636 = vmul.f32 %v8574, %v8507
    %v8637 = vmul.f32 %v8575, %v8508
    %v8638 = vmul.f32 %v8576, %v8509
    %v8639 = vmul.f32 %v8577, %v8510
    %v8640 = vmul.f32 %v8578, %v8511
    %v8641 = vmul.f32 %v8579, %v8512
    %v8642 = vmul.f32 %v8580, %v8513
    %v8643 = vmul.f32 %v8581, %v8514
    %v8644 = vmul.f32 %v8582, %v8515
    %v8645 = vmul.f32 %v8583, %v8516
    %v8646 = vmul.f32 %v8584, %v8517
    %v8647 = vmul.f32 %v8585, %v8518
    %v8648 = vmul.f32 %v8586, %v8519
    %v8649 = vmul.f32 %v8587, %v8520
    %v8650 = vmul.f32 %v8588, %v8521
    %v8651 = vmul.f32 %v8589, %v8522
    %v8652 = vadd.f32 %v8626, %v8628
    %v8653 = vadd.f32 %v8652, %v8630
    %v8654 = vadd.f32 %v8653, %v8632
    %v8655 = vadd.f32 %v8654, %v8634
    %v8656 = vadd.f32 %v8655, %v8636
    %v8657 = vadd.f32 %v8656, %v8638
    %v8658 = vadd.f32 %v8657, %v8640
    %v8659 = vadd.f32 %v8658, %v8642
    %v8660 = vadd.f32 %v8659, %v8644
    %v8661 = vadd.f32 %v8660, %v8646
    %v8662 = vadd.f32 %v8661, %v8648
    %v8663 = vadd.f32 %v8662, %v8650
    %v8664 = vrot.slane %v8663, 4
    %v8665 = vadd.f32 %v8663, %v8664
    %v8666 = vrot.slane %v8665, 2
    %v8667 = vadd.f32 %v8665, %v8666
    %v8668 = vrot.slane %v8667, 1
    %v8669 = vadd.f32 %v8667, %v8668
    %v8670 = vadd.f32 %v8627, %v8629
    %v8671 = vadd.f32 %v8670, %v8631
    %v8672 = vadd.f32 %v8671, %v8633
    %v8673 = vadd.f32 %v8672, %v8635
    %v8674 = vadd.f32 %v8673, %v8637
    %v8675 = vadd.f32 %v8674, %v8639
    %v8676 = vadd.f32 %v8675, %v8641
    %v8677 = vadd.f32 %v8676, %v8643
    %v8678 = vadd.f32 %v8677, %v8645
    %v8679 = vadd.f32 %v8678, %v8647
    %v8680 = vadd.f32 %v8679, %v8649
    %v8681 = vadd.f32 %v8680, %v8651
    %v8682 = vrot.slane %v8681, 4
    %v8683 = vadd.f32 %v8681, %v8682
    %v8684 = vrot.slane %v8683, 2
    %v8685 = vadd.f32 %v8683, %v8684
    %v8686 = vrot.slane %v8685, 1
    %v8687 = vadd.f32 %v8685, %v8686
    %v8688 = vsel %vm5035, %v8607, %v8669
    %v8689 = vsel %vm5035, %v8625, %v8687
    %vm8690 = vcmp.lt.s32.totalorder %v4744, 0
    %v8691 = vsub.s32 0, %v4744
    %v8692 = vsel %vm8690, %v8691, %v4744
    %v8693 = vshrl.u32 %v8692, 4
    %v8694 = vand.u32 %v8692, 15
    %v8695 = vsub.s32 0, %v8694
    %v8696 = vsel %vm8690, %v8695, %v8694
    %vm8697 = vcmp.lt.s32.totalorder %v4745, 0
    %v8698 = vsub.s32 0, %v4745
    %v8699 = vsel %vm8697, %v8698, %v4745
    %v8700 = vshrl.u32 %v8699, 4
    %v8701 = vand.u32 %v8699, 15
    %v8702 = vsub.s32 0, %v8701
    %v8703 = vsel %vm8697, %v8702, %v8701
    %vm8704 = vcmp.lt.s32.totalorder %v4746, 0
    %v8705 = vsub.s32 0, %v4746
    %v8706 = vsel %vm8704, %v8705, %v4746
    %v8707 = vshrl.u32 %v8706, 4
    %v8708 = vand.u32 %v8706, 15
    %v8709 = vsub.s32 0, %v8708
    %v8710 = vsel %vm8704, %v8709, %v8708
    %vm8711 = vcmp.lt.s32.totalorder %v4747, 0
    %v8712 = vsub.s32 0, %v4747
    %v8713 = vsel %vm8711, %v8712, %v4747
    %v8714 = vshrl.u32 %v8713, 4
    %v8715 = vand.u32 %v8713, 15
    %v8716 = vsub.s32 0, %v8715
    %v8717 = vsel %vm8711, %v8716, %v8715
    %vm8718 = vcmp.lt.s32.totalorder %v4748, 0
    %v8719 = vsub.s32 0, %v4748
    %v8720 = vsel %vm8718, %v8719, %v4748
    %v8721 = vshrl.u32 %v8720, 4
    %v8722 = vand.u32 %v8720, 15
    %v8723 = vsub.s32 0, %v8722
    %v8724 = vsel %vm8718, %v8723, %v8722
    %vm8725 = vcmp.lt.s32.totalorder %v4749, 0
    %v8726 = vsub.s32 0, %v4749
    %v8727 = vsel %vm8725, %v8726, %v4749
    %v8728 = vshrl.u32 %v8727, 4
    %v8729 = vand.u32 %v8727, 15
    %v8730 = vsub.s32 0, %v8729
    %v8731 = vsel %vm8725, %v8730, %v8729
    %vm8732 = vcmp.lt.s32.totalorder %v4750, 0
    %v8733 = vsub.s32 0, %v4750
    %v8734 = vsel %vm8732, %v8733, %v4750
    %v8735 = vshrl.u32 %v8734, 4
    %v8736 = vand.u32 %v8734, 15
    %v8737 = vsub.s32 0, %v8736
    %v8738 = vsel %vm8732, %v8737, %v8736
    %vm8739 = vcmp.lt.s32.totalorder %v4751, 0
    %v8740 = vsub.s32 0, %v4751
    %v8741 = vsel %vm8739, %v8740, %v4751
    %v8742 = vshrl.u32 %v8741, 4
    %v8743 = vand.u32 %v8741, 15
    %v8744 = vsub.s32 0, %v8743
    %v8745 = vsel %vm8739, %v8744, %v8743
    %vm8746 = vcmp.lt.s32.totalorder %v4752, 0
    %v8747 = vsub.s32 0, %v4752
    %v8748 = vsel %vm8746, %v8747, %v4752
    %v8749 = vshrl.u32 %v8748, 4
    %v8750 = vand.u32 %v8748, 15
    %v8751 = vsub.s32 0, %v8750
    %v8752 = vsel %vm8746, %v8751, %v8750
    %vm8753 = vcmp.lt.s32.totalorder %v4753, 0
    %v8754 = vsub.s32 0, %v4753
    %v8755 = vsel %vm8753, %v8754, %v4753
    %v8756 = vshrl.u32 %v8755, 4
    %v8757 = vand.u32 %v8755, 15
    %v8758 = vsub.s32 0, %v8757
    %v8759 = vsel %vm8753, %v8758, %v8757
    %vm8760 = vcmp.lt.s32.totalorder %v5039, 0
    %v8761 = vsub.s32 0, %v5039
    %v8762 = vsel %vm8760, %v8761, %v5039
    %v8763 = vshrl.u32 %v8762, 4
    %v8764 = vand.u32 %v8762, 15
    %v8765 = vsub.s32 0, %v8764
    %v8766 = vsel %vm8760, %v8765, %v8764
    %vm8767 = vcmp.lt.s32.totalorder %v5040, 0
    %v8768 = vsub.s32 0, %v5040
    %v8769 = vsel %vm8767, %v8768, %v5040
    %v8770 = vshrl.u32 %v8769, 4
    %v8771 = vand.u32 %v8769, 15
    %v8772 = vsub.s32 0, %v8771
    %v8773 = vsel %vm8767, %v8772, %v8771
    %vm8774 = vcmp.lt.s32.totalorder %v5041, 0
    %v8775 = vsub.s32 0, %v5041
    %v8776 = vsel %vm8774, %v8775, %v5041
    %v8777 = vshrl.u32 %v8776, 4
    %v8778 = vand.u32 %v8776, 15
    %v8779 = vsub.s32 0, %v8778
    %v8780 = vsel %vm8774, %v8779, %v8778
    %vm8781 = vcmp.lt.s32.totalorder %v5042, 0
    %v8782 = vsub.s32 0, %v5042
    %v8783 = vsel %vm8781, %v8782, %v5042
    %v8784 = vshrl.u32 %v8783, 4
    %v8785 = vand.u32 %v8783, 15
    %v8786 = vsub.s32 0, %v8785
    %v8787 = vsel %vm8781, %v8786, %v8785
    %vm8788 = vcmp.lt.s32.totalorder %v5043, 0
    %v8789 = vsub.s32 0, %v5043
    %v8790 = vsel %vm8788, %v8789, %v5043
    %v8791 = vshrl.u32 %v8790, 4
    %v8792 = vand.u32 %v8790, 15
    %v8793 = vsub.s32 0, %v8792
    %v8794 = vsel %vm8788, %v8793, %v8792
    %vm8795 = vcmp.lt.s32.totalorder %v5044, 0
    %v8796 = vsub.s32 0, %v5044
    %v8797 = vsel %vm8795, %v8796, %v5044
    %v8798 = vshrl.u32 %v8797, 4
    %v8799 = vand.u32 %v8797, 15
    %v8800 = vsub.s32 0, %v8799
    %v8801 = vsel %vm8795, %v8800, %v8799
    %vm8802 = vcmp.lt.s32.totalorder %v5045, 0
    %v8803 = vsub.s32 0, %v5045
    %v8804 = vsel %vm8802, %v8803, %v5045
    %v8805 = vshrl.u32 %v8804, 4
    %v8806 = vand.u32 %v8804, 15
    %v8807 = vsub.s32 0, %v8806
    %v8808 = vsel %vm8802, %v8807, %v8806
    %vm8809 = vcmp.lt.s32.totalorder %v5046, 0
    %v8810 = vsub.s32 0, %v5046
    %v8811 = vsel %vm8809, %v8810, %v5046
    %v8812 = vshrl.u32 %v8811, 4
    %v8813 = vand.u32 %v8811, 15
    %v8814 = vsub.s32 0, %v8813
    %v8815 = vsel %vm8809, %v8814, %v8813
    %vm8816 = vcmp.lt.s32.totalorder %v5047, 0
    %v8817 = vsub.s32 0, %v5047
    %v8818 = vsel %vm8816, %v8817, %v5047
    %v8819 = vshrl.u32 %v8818, 4
    %v8820 = vand.u32 %v8818, 15
    %v8821 = vsub.s32 0, %v8820
    %v8822 = vsel %vm8816, %v8821, %v8820
    %vm8823 = vcmp.lt.s32.totalorder %v5048, 0
    %v8824 = vsub.s32 0, %v5048
    %v8825 = vsel %vm8823, %v8824, %v5048
    %v8826 = vshrl.u32 %v8825, 4
    %v8827 = vand.u32 %v8825, 15
    %v8828 = vsub.s32 0, %v8827
    %v8829 = vsel %vm8823, %v8828, %v8827
    %vm8830 = vcmp.lt.s32.totalorder %v5049, 0
    %v8831 = vsub.s32 0, %v5049
    %v8832 = vsel %vm8830, %v8831, %v5049
    %v8833 = vshrl.u32 %v8832, 4
    %v8834 = vand.u32 %v8832, 15
    %v8835 = vsub.s32 0, %v8834
    %v8836 = vsel %vm8830, %v8835, %v8834
    %vm8837 = vcmp.lt.s32.totalorder %v5050, 0
    %v8838 = vsub.s32 0, %v5050
    %v8839 = vsel %vm8837, %v8838, %v5050
    %v8840 = vshrl.u32 %v8839, 4
    %v8841 = vand.u32 %v8839, 15
    %v8842 = vsub.s32 0, %v8841
    %v8843 = vsel %vm8837, %v8842, %v8841
    %vm8844 = vcmp.lt.s32.totalorder %v5051, 0
    %v8845 = vsub.s32 0, %v5051
    %v8846 = vsel %vm8844, %v8845, %v5051
    %v8847 = vshrl.u32 %v8846, 4
    %v8848 = vand.u32 %v8846, 15
    %v8849 = vsub.s32 0, %v8848
    %v8850 = vsel %vm8844, %v8849, %v8848
    %vm8851 = vcmp.lt.s32.totalorder %v5052, 0
    %v8852 = vsub.s32 0, %v5052
    %v8853 = vsel %vm8851, %v8852, %v5052
    %v8854 = vshrl.u32 %v8853, 4
    %v8855 = vand.u32 %v8853, 15
    %v8856 = vsub.s32 0, %v8855
    %v8857 = vsel %vm8851, %v8856, %v8855
    %vm8858 = vcmp.lt.s32.totalorder %v5053, 0
    %v8859 = vsub.s32 0, %v5053
    %v8860 = vsel %vm8858, %v8859, %v5053
    %v8861 = vshrl.u32 %v8860, 4
    %v8862 = vand.u32 %v8860, 15
    %v8863 = vsub.s32 0, %v8862
    %v8864 = vsel %vm8858, %v8863, %v8862
    %vm8865 = vcmp.lt.s32.totalorder %v5054, 0
    %v8866 = vsub.s32 0, %v5054
    %v8867 = vsel %vm8865, %v8866, %v5054
    %v8868 = vshrl.u32 %v8867, 4
    %v8869 = vand.u32 %v8867, 15
    %v8870 = vsub.s32 0, %v8869
    %v8871 = vsel %vm8865, %v8870, %v8869
    %vm8872 = vcmp.lt.s32.totalorder %v5055, 0
    %v8873 = vsub.s32 0, %v5055
    %v8874 = vsel %vm8872, %v8873, %v5055
    %v8875 = vshrl.u32 %v8874, 4
    %v8876 = vand.u32 %v8874, 15
    %v8877 = vsub.s32 0, %v8876
    %v8878 = vsel %vm8872, %v8877, %v8876
    %vm8879 = vcmp.lt.s32.totalorder %v5056, 0
    %v8880 = vsub.s32 0, %v5056
    %v8881 = vsel %vm8879, %v8880, %v5056
    %v8882 = vshrl.u32 %v8881, 4
    %v8883 = vand.u32 %v8881, 15
    %v8884 = vsub.s32 0, %v8883
    %v8885 = vsel %vm8879, %v8884, %v8883
    %vm8886 = vcmp.lt.s32.totalorder %v5057, 0
    %v8887 = vsub.s32 0, %v5057
    %v8888 = vsel %vm8886, %v8887, %v5057
    %v8889 = vshrl.u32 %v8888, 4
    %v8890 = vand.u32 %v8888, 15
    %v8891 = vsub.s32 0, %v8890
    %v8892 = vsel %vm8886, %v8891, %v8890
    %vm8893 = vcmp.lt.s32.totalorder %v5058, 0
    %v8894 = vsub.s32 0, %v5058
    %v8895 = vsel %vm8893, %v8894, %v5058
    %v8896 = vshrl.u32 %v8895, 4
    %v8897 = vand.u32 %v8895, 15
    %v8898 = vsub.s32 0, %v8897
    %v8899 = vsel %vm8893, %v8898, %v8897
    %vm8900 = vcmp.lt.s32.totalorder %v5059, 0
    %v8901 = vsub.s32 0, %v5059
    %v8902 = vsel %vm8900, %v8901, %v5059
    %v8903 = vshrl.u32 %v8902, 4
    %v8904 = vand.u32 %v8902, 15
    %v8905 = vsub.s32 0, %v8904
    %v8906 = vsel %vm8900, %v8905, %v8904
    %vm8907 = vcmp.lt.s32.totalorder %v5060, 0
    %v8908 = vsub.s32 0, %v5060
    %v8909 = vsel %vm8907, %v8908, %v5060
    %v8910 = vshrl.u32 %v8909, 4
    %v8911 = vand.u32 %v8909, 15
    %v8912 = vsub.s32 0, %v8911
    %v8913 = vsel %vm8907, %v8912, %v8911
    %vm8914 = vcmp.ne.s32.totalorder %v8696, 0
    %vm8915 = vcmp.ne.s32.totalorder %v8703, 0
    %vm8916 = vcmp.ne.s32.totalorder %v8710, 0
    %vm8917 = vcmp.ne.s32.totalorder %v8717, 0
    %vm8918 = vcmp.ne.s32.totalorder %v8724, 0
    %vm8919 = vcmp.ne.s32.totalorder %v8731, 0
    %vm8920 = vcmp.ne.s32.totalorder %v8738, 0
    %vm8921 = vcmp.ne.s32.totalorder %v8745, 0
    %vm8922 = vcmp.ne.s32.totalorder %v8752, 0
    %vm8923 = vcmp.ne.s32.totalorder %v8759, 0
    %vm8924 = vcmp.ne.s32.totalorder %v8766, 0
    %vm8925 = vcmp.ne.s32.totalorder %v8773, 0
    %vm8926 = vcmp.ne.s32.totalorder %v8780, 0
    %vm8927 = vcmp.ne.s32.totalorder %v8787, 0
    %vm8928 = vcmp.ne.s32.totalorder %v8794, 0
    %vm8929 = vcmp.ne.s32.totalorder %v8801, 0
    %vm8930 = vcmp.ne.s32.totalorder %v8808, 0
    %vm8931 = vcmp.ne.s32.totalorder %v8815, 0
    %vm8932 = vcmp.ne.s32.totalorder %v8822, 0
    %vm8933 = vcmp.ne.s32.totalorder %v8829, 0
    %vm8934 = vcmp.ne.s32.totalorder %v8836, 0
    %vm8935 = vcmp.ne.s32.totalorder %v8843, 0
    %vm8936 = vcmp.ne.s32.totalorder %v8850, 0
    %vm8937 = vcmp.ne.s32.totalorder %v8857, 0
    %vm8938 = vcmp.ne.s32.totalorder %v8864, 0
    %vm8939 = vcmp.ne.s32.totalorder %v8871, 0
    %vm8940 = vcmp.ne.s32.totalorder %v8878, 0
    %vm8941 = vcmp.ne.s32.totalorder %v8885, 0
    %vm8942 = vcmp.ne.s32.totalorder %v8892, 0
    %vm8943 = vcmp.ne.s32.totalorder %v8899, 0
    %vm8944 = vcmp.ne.s32.totalorder %v8906, 0
    %vm8945 = vcmp.ne.s32.totalorder %v8913, 0
    %vm8946 = vcmp.lt.s32.totalorder %v8696, 0
    %vm8947 = vcmp.lt.s32.totalorder %v8703, 0
    %vm8948 = vcmp.lt.s32.totalorder %v8710, 0
    %vm8949 = vcmp.lt.s32.totalorder %v8717, 0
    %vm8950 = vcmp.lt.s32.totalorder %v8724, 0
    %vm8951 = vcmp.lt.s32.totalorder %v8731, 0
    %vm8952 = vcmp.lt.s32.totalorder %v8738, 0
    %vm8953 = vcmp.lt.s32.totalorder %v8745, 0
    %vm8954 = vcmp.lt.s32.totalorder %v8752, 0
    %vm8955 = vcmp.lt.s32.totalorder %v8759, 0
    %vm8956 = vcmp.lt.s32.totalorder %v8766, 0
    %vm8957 = vcmp.lt.s32.totalorder %v8773, 0
    %vm8958 = vcmp.lt.s32.totalorder %v8780, 0
    %vm8959 = vcmp.lt.s32.totalorder %v8787, 0
    %vm8960 = vcmp.lt.s32.totalorder %v8794, 0
    %vm8961 = vcmp.lt.s32.totalorder %v8801, 0
    %vm8962 = vcmp.lt.s32.totalorder %v8808, 0
    %vm8963 = vcmp.lt.s32.totalorder %v8815, 0
    %vm8964 = vcmp.lt.s32.totalorder %v8822, 0
    %vm8965 = vcmp.lt.s32.totalorder %v8829, 0
    %vm8966 = vcmp.lt.s32.totalorder %v8836, 0
    %vm8967 = vcmp.lt.s32.totalorder %v8843, 0
    %vm8968 = vcmp.lt.s32.totalorder %v8850, 0
    %vm8969 = vcmp.lt.s32.totalorder %v8857, 0
    %vm8970 = vcmp.lt.s32.totalorder %v8864, 0
    %vm8971 = vcmp.lt.s32.totalorder %v8871, 0
    %vm8972 = vcmp.lt.s32.totalorder %v8878, 0
    %vm8973 = vcmp.lt.s32.totalorder %v8885, 0
    %vm8974 = vcmp.lt.s32.totalorder %v8892, 0
    %vm8975 = vcmp.lt.s32.totalorder %v8899, 0
    %vm8976 = vcmp.lt.s32.totalorder %v8906, 0
    %vm8977 = vcmp.lt.s32.totalorder %v8913, 0
    %vm8978 = vmand %vm8946, %vm8914
    %vm8979 = vmand %vm8947, %vm8915
    %vm8980 = vmand %vm8948, %vm8916
    %vm8981 = vmand %vm8949, %vm8917
    %vm8982 = vmand %vm8950, %vm8918
    %vm8983 = vmand %vm8951, %vm8919
    %vm8984 = vmand %vm8952, %vm8920
    %vm8985 = vmand %vm8953, %vm8921
    %vm8986 = vmand %vm8954, %vm8922
    %vm8987 = vmand %vm8955, %vm8923
    %vm8988 = vmand %vm8956, %vm8924
    %vm8989 = vmand %vm8957, %vm8925
    %vm8990 = vmand %vm8958, %vm8926
    %vm8991 = vmand %vm8959, %vm8927
    %vm8992 = vmand %vm8960, %vm8928
    %vm8993 = vmand %vm8961, %vm8929
    %vm8994 = vmand %vm8962, %vm8930
    %vm8995 = vmand %vm8963, %vm8931
    %vm8996 = vmand %vm8964, %vm8932
    %vm8997 = vmand %vm8965, %vm8933
    %vm8998 = vmand %vm8966, %vm8934
    %vm8999 = vmand %vm8967, %vm8935
    %vm9000 = vmand %vm8968, %vm8936
    %vm9001 = vmand %vm8969, %vm8937
    %vm9002 = vmand %vm8970, %vm8938
    %vm9003 = vmand %vm8971, %vm8939
    %vm9004 = vmand %vm8972, %vm8940
    %vm9005 = vmand %vm8973, %vm8941
    %vm9006 = vmand %vm8974, %vm8942
    %vm9007 = vmand %vm8975, %vm8943
    %vm9008 = vmand %vm8976, %vm8944
    %vm9009 = vmand %vm8977, %vm8945
    %v9010 = vadd.s32 %v8696, 16
    %v9011 = vadd.s32 %v8703, 16
    %v9012 = vadd.s32 %v8710, 16
    %v9013 = vadd.s32 %v8717, 16
    %v9014 = vadd.s32 %v8724, 16
    %v9015 = vadd.s32 %v8731, 16
    %v9016 = vadd.s32 %v8738, 16
    %v9017 = vadd.s32 %v8745, 16
    %v9018 = vadd.s32 %v8752, 16
    %v9019 = vadd.s32 %v8759, 16
    %v9020 = vadd.s32 %v8766, 16
    %v9021 = vadd.s32 %v8773, 16
    %v9022 = vadd.s32 %v8780, 16
    %v9023 = vadd.s32 %v8787, 16
    %v9024 = vadd.s32 %v8794, 16
    %v9025 = vadd.s32 %v8801, 16
    %v9026 = vadd.s32 %v8808, 16
    %v9027 = vadd.s32 %v8815, 16
    %v9028 = vadd.s32 %v8822, 16
    %v9029 = vadd.s32 %v8829, 16
    %v9030 = vadd.s32 %v8836, 16
    %v9031 = vadd.s32 %v8843, 16
    %v9032 = vadd.s32 %v8850, 16
    %v9033 = vadd.s32 %v8857, 16
    %v9034 = vadd.s32 %v8864, 16
    %v9035 = vadd.s32 %v8871, 16
    %v9036 = vadd.s32 %v8878, 16
    %v9037 = vadd.s32 %v8885, 16
    %v9038 = vadd.s32 %v8892, 16
    %v9039 = vadd.s32 %v8899, 16
    %v9040 = vadd.s32 %v8906, 16
    %v9041 = vadd.s32 %v8913, 16
    %v9042 = vsel %vm8978, %v9010, %v8696
    %v9043 = vsel %vm8979, %v9011, %v8703
    %v9044 = vsel %vm8980, %v9012, %v8710
    %v9045 = vsel %vm8981, %v9013, %v8717
    %v9046 = vsel %vm8982, %v9014, %v8724
    %v9047 = vsel %vm8983, %v9015, %v8731
    %v9048 = vsel %vm8984, %v9016, %v8738
    %v9049 = vsel %vm8985, %v9017, %v8745
    %v9050 = vsel %vm8986, %v9018, %v8752
    %v9051 = vsel %vm8987, %v9019, %v8759
    %v9052 = vsel %vm8988, %v9020, %v8766
    %v9053 = vsel %vm8989, %v9021, %v8773
    %v9054 = vsel %vm8990, %v9022, %v8780
    %v9055 = vsel %vm8991, %v9023, %v8787
    %v9056 = vsel %vm8992, %v9024, %v8794
    %v9057 = vsel %vm8993, %v9025, %v8801
    %v9058 = vsel %vm8994, %v9026, %v8808
    %v9059 = vsel %vm8995, %v9027, %v8815
    %v9060 = vsel %vm8996, %v9028, %v8822
    %v9061 = vsel %vm8997, %v9029, %v8829
    %v9062 = vsel %vm8998, %v9030, %v8836
    %v9063 = vsel %vm8999, %v9031, %v8843
    %v9064 = vsel %vm9000, %v9032, %v8850
    %v9065 = vsel %vm9001, %v9033, %v8857
    %v9066 = vsel %vm9002, %v9034, %v8864
    %v9067 = vsel %vm9003, %v9035, %v8871
    %v9068 = vsel %vm9004, %v9036, %v8878
    %v9069 = vsel %vm9005, %v9037, %v8885
    %v9070 = vsel %vm9006, %v9038, %v8892
    %v9071 = vsel %vm9007, %v9039, %v8899
    %v9072 = vsel %vm9008, %v9040, %v8906
    %v9073 = vsel %vm9009, %v9041, %v8913
    %vm9074 = vcmp.eq.s32.totalorder %v9042, %v5078
    %vm9075 = vcmp.eq.s32.totalorder %v9043, %v5078
    %vm9076 = vcmp.eq.s32.totalorder %v9044, %v5078
    %vm9077 = vcmp.eq.s32.totalorder %v9045, %v5078
    %vm9078 = vcmp.eq.s32.totalorder %v9046, %v5078
    %vm9079 = vcmp.eq.s32.totalorder %v9047, %v5078
    %vm9080 = vcmp.eq.s32.totalorder %v9048, %v5078
    %vm9081 = vcmp.eq.s32.totalorder %v9049, %v5078
    %vm9082 = vcmp.eq.s32.totalorder %v9050, %v5078
    %vm9083 = vcmp.eq.s32.totalorder %v9051, %v5078
    %vm9084 = vcmp.eq.s32.totalorder %v9052, %v5078
    %vm9085 = vcmp.eq.s32.totalorder %v9053, %v5078
    %vm9086 = vcmp.eq.s32.totalorder %v9054, %v5078
    %vm9087 = vcmp.eq.s32.totalorder %v9055, %v5078
    %vm9088 = vcmp.eq.s32.totalorder %v9056, %v5078
    %vm9089 = vcmp.eq.s32.totalorder %v9057, %v5078
    %vm9090 = vcmp.eq.s32.totalorder %v9058, %v5078
    %vm9091 = vcmp.eq.s32.totalorder %v9059, %v5078
    %vm9092 = vcmp.eq.s32.totalorder %v9060, %v5078
    %vm9093 = vcmp.eq.s32.totalorder %v9061, %v5078
    %vm9094 = vcmp.eq.s32.totalorder %v9062, %v5078
    %vm9095 = vcmp.eq.s32.totalorder %v9063, %v5078
    %vm9096 = vcmp.eq.s32.totalorder %v9064, %v5078
    %vm9097 = vcmp.eq.s32.totalorder %v9065, %v5078
    %vm9098 = vcmp.eq.s32.totalorder %v9066, %v5078
    %vm9099 = vcmp.eq.s32.totalorder %v9067, %v5078
    %vm9100 = vcmp.eq.s32.totalorder %v9068, %v5078
    %vm9101 = vcmp.eq.s32.totalorder %v9069, %v5078
    %vm9102 = vcmp.eq.s32.totalorder %v9070, %v5078
    %vm9103 = vcmp.eq.s32.totalorder %v9071, %v5078
    %vm9104 = vcmp.eq.s32.totalorder %v9072, %v5078
    %vm9105 = vcmp.eq.s32.totalorder %v9073, %v5078
    %vm9106 = vcmp.lt.s32.totalorder %v4744, 208
    %vm9107 = vcmp.lt.s32.totalorder %v4745, 208
    %vm9108 = vcmp.lt.s32.totalorder %v4746, 208
    %vm9109 = vcmp.lt.s32.totalorder %v4747, 208
    %vm9110 = vcmp.lt.s32.totalorder %v4748, 208
    %vm9111 = vcmp.lt.s32.totalorder %v4749, 208
    %vm9112 = vcmp.lt.s32.totalorder %v4750, 208
    %vm9113 = vcmp.lt.s32.totalorder %v4751, 208
    %vm9114 = vcmp.lt.s32.totalorder %v4752, 208
    %vm9115 = vcmp.lt.s32.totalorder %v4753, 208
    %vm9116 = vcmp.lt.s32.totalorder %v5039, 208
    %vm9117 = vcmp.lt.s32.totalorder %v5040, 208
    %vm9118 = vcmp.lt.s32.totalorder %v5041, 208
    %vm9119 = vcmp.lt.s32.totalorder %v5042, 208
    %vm9120 = vcmp.lt.s32.totalorder %v5043, 208
    %vm9121 = vcmp.lt.s32.totalorder %v5044, 208
    %vm9122 = vcmp.lt.s32.totalorder %v5045, 208
    %vm9123 = vcmp.lt.s32.totalorder %v5046, 208
    %vm9124 = vcmp.lt.s32.totalorder %v5047, 208
    %vm9125 = vcmp.lt.s32.totalorder %v5048, 208
    %vm9126 = vcmp.lt.s32.totalorder %v5049, 208
    %vm9127 = vcmp.lt.s32.totalorder %v5050, 208
    %vm9128 = vcmp.lt.s32.totalorder %v5051, 208
    %vm9129 = vcmp.lt.s32.totalorder %v5052, 208
    %vm9130 = vcmp.lt.s32.totalorder %v5053, 208
    %vm9131 = vcmp.lt.s32.totalorder %v5054, 208
    %vm9132 = vcmp.lt.s32.totalorder %v5055, 208
    %vm9133 = vcmp.lt.s32.totalorder %v5056, 208
    %vm9134 = vcmp.lt.s32.totalorder %v5057, 208
    %vm9135 = vcmp.lt.s32.totalorder %v5058, 208
    %vm9136 = vcmp.lt.s32.totalorder %v5059, 208
    %vm9137 = vcmp.lt.s32.totalorder %v5060, 208
    %vm9138 = vmand %vm9074, %vm9106
    %vm9139 = vmand %vm9075, %vm9107
    %vm9140 = vmand %vm9076, %vm9108
    %vm9141 = vmand %vm9077, %vm9109
    %vm9142 = vmand %vm9078, %vm9110
    %vm9143 = vmand %vm9079, %vm9111
    %vm9144 = vmand %vm9080, %vm9112
    %vm9145 = vmand %vm9081, %vm9113
    %vm9146 = vmand %vm9082, %vm9114
    %vm9147 = vmand %vm9083, %vm9115
    %vm9148 = vmand %vm9084, %vm9116
    %vm9149 = vmand %vm9085, %vm9117
    %vm9150 = vmand %vm9086, %vm9118
    %vm9151 = vmand %vm9087, %vm9119
    %vm9152 = vmand %vm9088, %vm9120
    %vm9153 = vmand %vm9089, %vm9121
    %vm9154 = vmand %vm9090, %vm9122
    %vm9155 = vmand %vm9091, %vm9123
    %vm9156 = vmand %vm9092, %vm9124
    %vm9157 = vmand %vm9093, %vm9125
    %vm9158 = vmand %vm9094, %vm9126
    %vm9159 = vmand %vm9095, %vm9127
    %vm9160 = vmand %vm9096, %vm9128
    %vm9161 = vmand %vm9097, %vm9129
    %vm9162 = vmand %vm9098, %vm9130
    %vm9163 = vmand %vm9099, %vm9131
    %vm9164 = vmand %vm9100, %vm9132
    %vm9165 = vmand %vm9101, %vm9133
    %vm9166 = vmand %vm9102, %vm9134
    %vm9167 = vmand %vm9103, %vm9135
    %vm9168 = vmand %vm9104, %vm9136
    %vm9169 = vmand %vm9105, %vm9137
    %v9170 = vsel %vm9138, 1.0, 0.0
    %v9171 = vsel %vm9139, 1.0, 0.0
    %v9172 = vsel %vm9140, 1.0, 0.0
    %v9173 = vsel %vm9141, 1.0, 0.0
    %v9174 = vsel %vm9142, 1.0, 0.0
    %v9175 = vsel %vm9143, 1.0, 0.0
    %v9176 = vsel %vm9144, 1.0, 0.0
    %v9177 = vsel %vm9145, 1.0, 0.0
    %v9178 = vsel %vm9146, 1.0, 0.0
    %v9179 = vsel %vm9147, 1.0, 0.0
    %v9180 = vsel %vm9148, 1.0, 0.0
    %v9181 = vsel %vm9149, 1.0, 0.0
    %v9182 = vsel %vm9150, 1.0, 0.0
    %v9183 = vsel %vm9151, 1.0, 0.0
    %v9184 = vsel %vm9152, 1.0, 0.0
    %v9185 = vsel %vm9153, 1.0, 0.0
    %v9186 = vsel %vm9154, 1.0, 0.0
    %v9187 = vsel %vm9155, 1.0, 0.0
    %v9188 = vsel %vm9156, 1.0, 0.0
    %v9189 = vsel %vm9157, 1.0, 0.0
    %v9190 = vsel %vm9158, 1.0, 0.0
    %v9191 = vsel %vm9159, 1.0, 0.0
    %v9192 = vsel %vm9160, 1.0, 0.0
    %v9193 = vsel %vm9161, 1.0, 0.0
    %v9194 = vsel %vm9162, 1.0, 0.0
    %v9195 = vsel %vm9163, 1.0, 0.0
    %v9196 = vsel %vm9164, 1.0, 0.0
    %v9197 = vsel %vm9165, 1.0, 0.0
    %v9198 = vsel %vm9166, 1.0, 0.0
    %v9199 = vsel %vm9167, 1.0, 0.0
    %v9200 = vsel %vm9168, 1.0, 0.0
    %v9201 = vsel %vm9169, 1.0, 0.0
    %9202 = vmatprep.subr.mxu0 0.0
    %9203 = vmatpush1.msra.mxu0 %v9170
    %9204 = vmatprep.subr.mxu0 0.0
    %9205 = vmatpush1.msra.mxu0 %v9171
    %9206 = vmatprep.subr.mxu0 0.0
    %9207 = vmatpush1.msra.mxu0 %v9172
    %9208 = vmatprep.subr.mxu0 0.0
    %9209 = vmatpush1.msra.mxu0 %v9173
    %9210 = vmatprep.subr.mxu0 0.0
    %9211 = vmatpush1.msra.mxu0 %v9174
    %9212 = vmatprep.subr.mxu0 0.0
    %9213 = vmatpush1.msra.mxu0 %v9175
    %9214 = vmatprep.subr.mxu0 0.0
    %9215 = vmatpush1.msra.mxu0 %v9176
    %9216 = vmatprep.subr.mxu0 0.0
    %9217 = vmatpush1.msra.mxu0 %v9177
    %9218 = vmatprep.subr.mxu0 0.0
    %9219 = vmatpush1.msra.mxu0 %v9178
    %9220 = vmatprep.subr.mxu0 0.0
    %9221 = vmatpush1.msra.mxu0 %v9179
    %9222 = vmatprep.subr.mxu0 0.0
    %9223 = vmatpush1.msra.mxu0 %v9180
    %9224 = vmatprep.subr.mxu0 0.0
    %9225 = vmatpush1.msra.mxu0 %v9181
    %9226 = vmatprep.subr.mxu0 0.0
    %9227 = vmatpush1.msra.mxu0 %v9182
    %9228 = vmatprep.subr.mxu0 0.0
    %9229 = vmatpush1.msra.mxu0 %v9183
    %9230 = vmatprep.subr.mxu0 0.0
    %9231 = vmatpush1.msra.mxu0 %v9184
    %9232 = vmatprep.subr.mxu0 0.0
    %9233 = vmatpush1.msra.mxu0 %v9185
    %9234 = vmatprep.subr.mxu0 0.0
    %9235 = vmatpush1.msra.mxu0 %v9186
    %9236 = vmatprep.subr.mxu0 0.0
    %9237 = vmatpush1.msra.mxu0 %v9187
    %9238 = vmatprep.subr.mxu0 0.0
    %9239 = vmatpush1.msra.mxu0 %v9188
    %9240 = vmatprep.subr.mxu0 0.0
    %9241 = vmatpush1.msra.mxu0 %v9189
    %9242 = vmatprep.subr.mxu0 0.0
    %9243 = vmatpush1.msra.mxu0 %v9190
    %9244 = vmatprep.subr.mxu0 0.0
    %9245 = vmatpush1.msra.mxu0 %v9191
    %9246 = vmatprep.subr.mxu0 0.0
    %9247 = vmatpush1.msra.mxu0 %v9192
    %9248 = vmatprep.subr.mxu0 0.0
    %9249 = vmatpush1.msra.mxu0 %v9193
    %9250 = vmatprep.subr.mxu0 0.0
    %9251 = vmatpush1.msra.mxu0 %v9194
    %9252 = vmatprep.subr.mxu0 0.0
    %9253 = vmatpush1.msra.mxu0 %v9195
    %9254 = vmatprep.subr.mxu0 0.0
    %9255 = vmatpush1.msra.mxu0 %v9196
    %9256 = vmatprep.subr.mxu0 0.0
    %9257 = vmatpush1.msra.mxu0 %v9197
    %9258 = vmatprep.subr.mxu0 0.0
    %9259 = vmatpush1.msra.mxu0 %v9198
    %9260 = vmatprep.subr.mxu0 0.0
    %9261 = vmatpush1.msra.mxu0 %v9199
    %9262 = vmatprep.subr.mxu0 0.0
    %9263 = vmatpush1.msra.mxu0 %v9200
    %9264 = vmatprep.subr.mxu0 0.0
    %9265 = vmatpush1.msra.mxu0 %v9201
    %9266 = vmatprep.mubr.f32.mxu0 %v8689
    %9267 = vmatmul.mubr.f32.gmra.mrb[0].mxu0 %v8688
    %v9268 = vpop.f32.mrb[0].mxu0
    %v9269 = vadd.f32 0.0, %v9268
    %v9270 = vpop.f32.mrb[0].mxu0
    %9271 = vdwg.mxu0
    %s9272 = smul.f32 %s5987, 169.0
    %v9273 = vstv %s9272
    %v9274 = vrcp.pop %v9273
    %s9275 = vtos %v9274
    %v9276 = vstv %s9275
    %v9277 = vmul.f32 %v9269, %v9276
    %v9278 = vmul.f32 %v9277, %v9277
    %v9280 = vrot.slane %v9278, 7
    %v9282 = vsub.f32 %v9277, %v9280
    %v9283 = vadd.f32 %v9282, 1e-05
    %v9284 = vrsqrt.pop %v9283
    %v9286 = vrot.slane %v9284, 1
    %v9288 = vmul.f32 %v8523, %v9286
    %v9289 = vmul.f32 %v9277, %v9288
    %v9290 = vsub.f32 %v8524, %v9289
    %vm9291 = vcmp.lt.s32.totalorder %v5078, 0
    %v9292 = vsub.s32 0, %v5078
    %v9293 = vsel %vm9291, %v9292, %v5078
    %v9294 = vshrl.u32 %v9293, 4
    %v9295 = vand.u32 %v9293, 15
    %v9296 = vsub.s32 0, %v9295
    %v9297 = vsel %vm9291, %v9296, %v9295
    %vm9298 = vcmp.lt.s32.totalorder %v6007, 0
    %v9299 = vsub.s32 0, %v6007
    %v9300 = vsel %vm9298, %v9299, %v6007
    %v9301 = vshrl.u32 %v9300, 4
    %v9302 = vand.u32 %v9300, 15
    %v9303 = vsub.s32 0, %v9302
    %v9304 = vsel %vm9298, %v9303, %v9302
    %vm9305 = vcmp.ne.s32.totalorder %v9297, 0
    %vm9306 = vcmp.ne.s32.totalorder %v9304, 0
    %vm9307 = vcmp.lt.s32.totalorder %v9297, 0
    %vm9308 = vcmp.lt.s32.totalorder %v9304, 0
    %vm9309 = vmand %vm9307, %vm9305
    %vm9310 = vmand %vm9308, %vm9306
    %v9311 = vadd.s32 %v9297, 16
    %v9312 = vadd.s32 %v9304, 16
    %v9313 = vsel %vm9309, %v9311, %v9297
    %v9314 = vsel %vm9310, %v9312, %v9304
    %vm9315 = vcmp.eq.s32.totalorder %v9313, %v4744
    %vm9316 = vcmp.eq.s32.totalorder %v9314, %v4744
    %vm9317 = vcmp.eq.s32.totalorder %v9313, %v4745
    %vm9318 = vcmp.eq.s32.totalorder %v9314, %v4745
    %vm9319 = vcmp.eq.s32.totalorder %v9313, %v4746
    %vm9320 = vcmp.eq.s32.totalorder %v9314, %v4746
    %vm9321 = vcmp.eq.s32.totalorder %v9313, %v4747
    %vm9322 = vcmp.eq.s32.totalorder %v9314, %v4747
    %vm9323 = vcmp.eq.s32.totalorder %v9313, %v4748
    %vm9324 = vcmp.eq.s32.totalorder %v9314, %v4748
    %vm9325 = vcmp.eq.s32.totalorder %v9313, %v4749
    %vm9326 = vcmp.eq.s32.totalorder %v9314, %v4749
    %vm9327 = vcmp.eq.s32.totalorder %v9313, %v4750
    %vm9328 = vcmp.eq.s32.totalorder %v9314, %v4750
    %vm9329 = vcmp.eq.s32.totalorder %v9313, %v4751
    %vm9330 = vcmp.eq.s32.totalorder %v9314, %v4751
    %vm9331 = vcmp.eq.s32.totalorder %v9313, %v4752
    %vm9332 = vcmp.eq.s32.totalorder %v9314, %v4752
    %vm9333 = vcmp.eq.s32.totalorder %v9313, %v4753
    %vm9334 = vcmp.eq.s32.totalorder %v9314, %v4753
    %vm9335 = vcmp.eq.s32.totalorder %v9313, %v5039
    %vm9336 = vcmp.eq.s32.totalorder %v9314, %v5039
    %vm9337 = vcmp.eq.s32.totalorder %v9313, %v5040
    %vm9338 = vcmp.eq.s32.totalorder %v9314, %v5040
    %vm9339 = vcmp.eq.s32.totalorder %v9313, %v5041
    %vm9340 = vcmp.eq.s32.totalorder %v9314, %v5041
    %vm9341 = vcmp.eq.s32.totalorder %v9313, %v5042
    %vm9342 = vcmp.eq.s32.totalorder %v9314, %v5042
    %vm9343 = vcmp.eq.s32.totalorder %v9313, %v5043
    %vm9344 = vcmp.eq.s32.totalorder %v9314, %v5043
    %vm9345 = vcmp.eq.s32.totalorder %v9313, %v5044
    %vm9346 = vcmp.eq.s32.totalorder %v9314, %v5044
    %v9347 = vsel %vm9315, 1.0, 0.0
    %v9348 = vsel %vm9316, 1.0, 0.0
    %v9349 = vsel %vm9317, 1.0, 0.0
    %v9350 = vsel %vm9318, 1.0, 0.0
    %v9351 = vsel %vm9319, 1.0, 0.0
    %v9352 = vsel %vm9320, 1.0, 0.0
    %v9353 = vsel %vm9321, 1.0, 0.0
    %v9354 = vsel %vm9322, 1.0, 0.0
    %v9355 = vsel %vm9323, 1.0, 0.0
    %v9356 = vsel %vm9324, 1.0, 0.0
    %v9357 = vsel %vm9325, 1.0, 0.0
    %v9358 = vsel %vm9326, 1.0, 0.0
    %v9359 = vsel %vm9327, 1.0, 0.0
    %v9360 = vsel %vm9328, 1.0, 0.0
    %v9361 = vsel %vm9329, 1.0, 0.0
    %v9362 = vsel %vm9330, 1.0, 0.0
    %v9363 = vsel %vm9331, 1.0, 0.0
    %v9364 = vsel %vm9332, 1.0, 0.0
    %v9365 = vsel %vm9333, 1.0, 0.0
    %v9366 = vsel %vm9334, 1.0, 0.0
    %v9367 = vsel %vm9335, 1.0, 0.0
    %v9368 = vsel %vm9336, 1.0, 0.0
    %v9369 = vsel %vm9337, 1.0, 0.0
    %v9370 = vsel %vm9338, 1.0, 0.0
    %v9371 = vsel %vm9339, 1.0, 0.0
    %v9372 = vsel %vm9340, 1.0, 0.0
    %v9373 = vsel %vm9341, 1.0, 0.0
    %v9374 = vsel %vm9342, 1.0, 0.0
    %v9375 = vsel %vm9343, 1.0, 0.0
    %v9376 = vsel %vm9344, 1.0, 0.0
    %v9377 = vsel %vm9345, 1.0, 0.0
    %v9378 = vsel %vm9346, 1.0, 0.0
    %v9380 = vrot.slane %v9290, 7
    %v9382 = vsel %vm5035, %v9288, %v9380
    %9383 = vmatprep.subr.mxu0 %v9348
    %9384 = vmatpush1.msra.mxu0 %v9347
    %9385 = vmatprep.subr.mxu0 %v9350
    %9386 = vmatpush1.msra.mxu0 %v9349
    %9387 = vmatprep.subr.mxu0 %v9352
    %9388 = vmatpush1.msra.mxu0 %v9351
    %9389 = vmatprep.subr.mxu0 %v9354
    %9390 = vmatpush1.msra.mxu0 %v9353
    %9391 = vmatprep.subr.mxu0 %v9356
    %9392 = vmatpush1.msra.mxu0 %v9355
    %9393 = vmatprep.subr.mxu0 %v9358
    %9394 = vmatpush1.msra.mxu0 %v9357
    %9395 = vmatprep.subr.mxu0 %v9360
    %9396 = vmatpush1.msra.mxu0 %v9359
    %9397 = vmatprep.subr.mxu0 %v9362
    %9398 = vmatpush1.msra.mxu0 %v9361
    %9399 = vmatprep.subr.mxu0 %v9364
    %9400 = vmatpush1.msra.mxu0 %v9363
    %9401 = vmatprep.subr.mxu0 %v9366
    %9402 = vmatpush1.msra.mxu0 %v9365
    %9403 = vmatprep.subr.mxu0 %v9368
    %9404 = vmatpush1.msra.mxu0 %v9367
    %9405 = vmatprep.subr.mxu0 %v9370
    %9406 = vmatpush1.msra.mxu0 %v9369
    %9407 = vmatprep.subr.mxu0 %v9372
    %9408 = vmatpush1.msra.mxu0 %v9371
    %9409 = vmatprep.subr.mxu0 %v9374
    %9410 = vmatpush1.msra.mxu0 %v9373
    %9411 = vmatprep.subr.mxu0 %v9376
    %9412 = vmatpush1.msra.mxu0 %v9375
    %9413 = vmatprep.subr.mxu0 %v9378
    %9414 = vmatpush1.msra.mxu0 %v9377
    %9415 = vmatprep.subr.mxu0 0.0
    %9416 = vmatpush1.msra.mxu0 0.0
    %9417 = vmatprep.subr.mxu0 0.0
    %9418 = vmatpush1.msra.mxu0 0.0
    %9419 = vmatprep.subr.mxu0 0.0
    %9420 = vmatpush1.msra.mxu0 0.0
    %9421 = vmatprep.subr.mxu0 0.0
    %9422 = vmatpush1.msra.mxu0 0.0
    %9423 = vmatprep.subr.mxu0 0.0
    %9424 = vmatpush1.msra.mxu0 0.0
    %9425 = vmatprep.subr.mxu0 0.0
    %9426 = vmatpush1.msra.mxu0 0.0
    %9427 = vmatprep.subr.mxu0 0.0
    %9428 = vmatpush1.msra.mxu0 0.0
    %9429 = vmatprep.subr.mxu0 0.0
    %9430 = vmatpush1.msra.mxu0 0.0
    %9431 = vmatprep.subr.mxu0 0.0
    %9432 = vmatpush1.msra.mxu0 0.0
    %9433 = vmatprep.subr.mxu0 0.0
    %9434 = vmatpush1.msra.mxu0 0.0
    %9435 = vmatprep.subr.mxu0 0.0
    %9436 = vmatpush1.msra.mxu0 0.0
    %9437 = vmatprep.subr.mxu0 0.0
    %9438 = vmatpush1.msra.mxu0 0.0
    %9439 = vmatprep.subr.mxu0 0.0
    %9440 = vmatpush1.msra.mxu0 0.0
    %9441 = vmatprep.subr.mxu0 0.0
    %9442 = vmatpush1.msra.mxu0 0.0
    %9443 = vmatprep.subr.mxu0 0.0
    %9444 = vmatpush1.msra.mxu0 0.0
    %9445 = vmatprep.subr.mxu0 0.0
    %9446 = vmatpush1.msra.mxu0 0.0
    %9447 = vmatprep.mubr.f32.mxu0 0.0
    %9448 = vmatmul.mubr.f32.gmra.mrb[0].mxu0 %v9382
    %v9449 = vpop.f32.mrb[0].mxu0
    %v9450 = vadd.f32 0.0, %v9449
    %v9451 = vpop.f32.mrb[0].mxu0
    %v9452 = vadd.f32 0.0, %v9451
    %9453 = vdwg.mxu0
    %v9454 = vlaneseq
    %v9455 = vshrl.u32 %v9454, 7
    %v9456 = vsub.s32 0, %v9455
    %v9457 = vrot.slane %v9450, %v9456
    %v9458 = vlaneseq
    %v9459 = vshrl.u32 %v9458, 7
    %v9460 = vsub.s32 0, %v9459
    %v9461 = vrot.slane %v9452, %v9460
    %v9462 = vmul.f32 %v8497, %v9457
    %v9463 = vmul.f32 %v8498, %v9461
    %v9464 = vmul.f32 %v8499, %v9457
    %v9465 = vmul.f32 %v8500, %v9461
    %v9466 = vmul.f32 %v8501, %v9457
    %v9467 = vmul.f32 %v8502, %v9461
    %v9468 = vmul.f32 %v8503, %v9457
    %v9469 = vmul.f32 %v8504, %v9461
    %v9470 = vmul.f32 %v8505, %v9457
    %v9471 = vmul.f32 %v8506, %v9461
    %v9472 = vmul.f32 %v8507, %v9457
    %v9473 = vmul.f32 %v8508, %v9461
    %v9474 = vmul.f32 %v8509, %v9457
    %v9475 = vmul.f32 %v8510, %v9461
    %v9476 = vmul.f32 %v8511, %v9457
    %v9477 = vmul.f32 %v8512, %v9461
    %v9478 = vmul.f32 %v8513, %v9457
    %v9479 = vmul.f32 %v8514, %v9461
    %v9480 = vmul.f32 %v8515, %v9457
    %v9481 = vmul.f32 %v8516, %v9461
    %v9482 = vmul.f32 %v8517, %v9457
    %v9483 = vmul.f32 %v8518, %v9461
    %v9484 = vmul.f32 %v8519, %v9457
    %v9485 = vmul.f32 %v8520, %v9461
    %v9486 = vmul.f32 %v8521, %v9457
    %v9487 = vmul.f32 %v8522, %v9461
    %v9488 = vlaneseq
    %v9489 = vshrl.u32 %v9488, 7
    %v9490 = vsub.s32 1, %v9489
    %v9491 = vrot.slane %v9450, %v9490
    %v9492 = vlaneseq
    %v9493 = vshrl.u32 %v9492, 7
    %v9494 = vsub.s32 1, %v9493
    %v9495 = vrot.slane %v9452, %v9494
    %v9496 = vadd.f32 %v9462, %v9491
    %v9497 = vadd.f32 %v9463, %v9495
    %v9498 = vadd.f32 %v9464, %v9491
    %v9499 = vadd.f32 %v9465, %v9495
    %v9500 = vadd.f32 %v9466, %v9491
    %v9501 = vadd.f32 %v9467, %v9495
    %v9502 = vadd.f32 %v9468, %v9491
    %v9503 = vadd.f32 %v9469, %v9495
    %v9504 = vadd.f32 %v9470, %v9491
    %v9505 = vadd.f32 %v9471, %v9495
    %v9506 = vadd.f32 %v9472, %v9491
    %v9507 = vadd.f32 %v9473, %v9495
    %v9508 = vadd.f32 %v9474, %v9491
    %v9509 = vadd.f32 %v9475, %v9495
    %v9510 = vadd.f32 %v9476, %v9491
    %v9511 = vadd.f32 %v9477, %v9495
    %v9512 = vadd.f32 %v9478, %v9491
    %v9513 = vadd.f32 %v9479, %v9495
    %v9514 = vadd.f32 %v9480, %v9491
    %v9515 = vadd.f32 %v9481, %v9495
    %v9516 = vadd.f32 %v9482, %v9491
    %v9517 = vadd.f32 %v9483, %v9495
    %v9518 = vadd.f32 %v9484, %v9491
    %v9519 = vadd.f32 %v9485, %v9495
    %v9520 = vadd.f32 %v9486, %v9491
    %v9521 = vadd.f32 %v9487, %v9495
    %v9522 = vmax.f32 %v9496, 0.0
    %v9523 = vmax.f32 %v9497, 0.0
    %v9524 = vmax.f32 %v9498, 0.0
    %v9525 = vmax.f32 %v9499, 0.0
    %v9526 = vmax.f32 %v9500, 0.0
    %v9527 = vmax.f32 %v9501, 0.0
    %v9528 = vmax.f32 %v9502, 0.0
    %v9529 = vmax.f32 %v9503, 0.0
    %v9530 = vmax.f32 %v9504, 0.0
    %v9531 = vmax.f32 %v9505, 0.0
    %v9532 = vmax.f32 %v9506, 0.0
    %v9533 = vmax.f32 %v9507, 0.0
    %v9534 = vmax.f32 %v9508, 0.0
    %v9535 = vmax.f32 %v9509, 0.0
    %v9536 = vmax.f32 %v9510, 0.0
    %v9537 = vmax.f32 %v9511, 0.0
    %v9538 = vmax.f32 %v9512, 0.0
    %v9539 = vmax.f32 %v9513, 0.0
    %v9540 = vmax.f32 %v9514, 0.0
    %v9541 = vmax.f32 %v9515, 0.0
    %v9542 = vmax.f32 %v9516, 0.0
    %v9543 = vmax.f32 %v9517, 0.0
    %v9544 = vmax.f32 %v9518, 0.0
    %v9545 = vmax.f32 %v9519, 0.0
    %v9546 = vmax.f32 %v9520, 0.0
    %v9547 = vmax.f32 %v9521, 0.0
    %v9548 = vpack.c.bf16 %v9524, %v9522
    %v9549 = vpack.c.bf16 %v9525, %v9523
    %v9550 = vpack.c.bf16 %v9528, %v9526
    %v9551 = vpack.c.bf16 %v9529, %v9527
    %v9552 = vpack.c.bf16 %v9532, %v9530
    %v9553 = vpack.c.bf16 %v9533, %v9531
    %v9554 = vpack.c.bf16 %v9536, %v9534
    %v9555 = vpack.c.bf16 %v9537, %v9535
    %v9556 = vpack.c.bf16 %v9540, %v9538
    %v9557 = vpack.c.bf16 %v9541, %v9539
    %v9558 = vpack.c.bf16 %v9544, %v9542
    %v9559 = vpack.c.bf16 %v9545, %v9543
    %v9560 = vpack.c.bf16 %v9546, %v9546
    %v9561 = vpack.c.bf16 %v9547, %v9547
    %v9562 = vld [vmem:[#allocation14] sm:$0xff]
    %v9563 = vld [vmem:[#allocation14 + $0x8] sm:$0xff]
    %v9564 = vld [vmem:[#allocation14 + $0x10] sm:$0xff]
    %v9565 = vld [vmem:[#allocation14 + $0x18] sm:$0xff]
    %v9566 = vld [vmem:[#allocation14 + $0x20] sm:$0xff]
    %v9567 = vld [vmem:[#allocation14 + $0x28] sm:$0xff]
    %v9568 = vld [vmem:[#allocation14 + $0x30] sm:$0xff]
    %v9569 = vld [vmem:[#allocation14 + $0x38] sm:$0xff]
    %v9570 = vld [vmem:[#allocation14 + $0x40] sm:$0xff]
    %v9571 = vld [vmem:[#allocation14 + $0x48] sm:$0xff]
    %v9572 = vld [vmem:[#allocation14 + $0x50] sm:$0xff]
    %v9573 = vld [vmem:[#allocation14 + $0x58] sm:$0xff]
    %v9574 = vld [vmem:[#allocation14 + $0x60] sm:$0xff]
    %v9575 = vld [vmem:[#allocation14 + $0x68] sm:$0xff]
    %v9576 = vld [vmem:[#allocation14 + $0x70] sm:$0xff]
    %v9577 = vld [vmem:[#allocation14 + $0x78] sm:$0xff]
    %v9578 = vld [vmem:[#allocation14 + $0x80] sm:$0xff]
    %v9579 = vld [vmem:[#allocation14 + $0x88] sm:$0xff]
    %v9580 = vld [vmem:[#allocation14 + $0x90] sm:$0xff]
    %v9581 = vld [vmem:[#allocation14 + $0x98] sm:$0xff]
    %v9582 = vld [vmem:[#allocation14 + $0xa0] sm:$0xff]
    %v9583 = vld [vmem:[#allocation14 + $0xa8] sm:$0xff]
    %v9584 = vld [vmem:[#allocation14 + $0xb0] sm:$0xff]
    %v9585 = vld [vmem:[#allocation14 + $0xb8] sm:$0xff]
    %v9586 = vld [vmem:[#allocation14 + $0xc0] sm:$0xff]
    %v9587 = vld [vmem:[#allocation14 + $0xc8] sm:$0xff]
    %v9588 = vld [vmem:[#allocation14 + $0xd0] sm:$0xff]
    %v9589 = vld [vmem:[#allocation14 + $0xd8] sm:$0xff]
    %v9590 = vld [vmem:[#allocation14 + $0xe0] sm:$0xff]
    %v9591 = vld [vmem:[#allocation14 + $0xe8] sm:$0xff]
    %v9592 = vld [vmem:[#allocation14 + $0xf0] sm:$0xff]
    %v9593 = vld [vmem:[#allocation14 + $0xf8] sm:$0xff]
    %v9594 = vld [vmem:[#allocation14 + $0x100] sm:$0xff]
    %v9595 = vld [vmem:[#allocation14 + $0x108] sm:$0xff]
    %v9596 = vld [vmem:[#allocation14 + $0x110] sm:$0xff]
    %v9597 = vld [vmem:[#allocation14 + $0x118] sm:$0xff]
    %v9598 = vld [vmem:[#allocation14 + $0x120] sm:$0xff]
    %v9599 = vld [vmem:[#allocation14 + $0x128] sm:$0xff]
    %v9600 = vld [vmem:[#allocation14 + $0x130] sm:$0xff]
    %v9601 = vld [vmem:[#allocation14 + $0x138] sm:$0xff]
    %v9602 = vld [vmem:[#allocation14 + $0x140] sm:$0xff]
    %v9603 = vld [vmem:[#allocation14 + $0x148] sm:$0xff]
    %v9604 = vld [vmem:[#allocation14 + $0x150] sm:$0xff]
    %v9605 = vld [vmem:[#allocation14 + $0x158] sm:$0xff]
    %v9606 = vld [vmem:[#allocation14 + $0x160] sm:$0xff]
    %v9607 = vld [vmem:[#allocation14 + $0x168] sm:$0xff]
    %v9608 = vld [vmem:[#allocation14 + $0x170] sm:$0xff]
    %v9609 = vld [vmem:[#allocation14 + $0x178] sm:$0xff]
    %v9610 = vld [vmem:[#allocation14 + $0x180] sm:$0xff]
    %v9611 = vld [vmem:[#allocation14 + $0x188] sm:$0xff]
    %v9612 = vld [vmem:[#allocation14 + $0x190] sm:$0xff]
    %v9613 = vld [vmem:[#allocation14 + $0x198] sm:$0xff]
    %v9614 = vld [vmem:[#allocation14 + $0x1a0] sm:$0xff]
    %v9615 = vld [vmem:[#allocation14 + $0x1a8] sm:$0xff]
    %v9616 = vld [vmem:[#allocation14 + $0x1b0] sm:$0xff]
    %v9617 = vld [vmem:[#allocation14 + $0x1b8] sm:$0xff]
    %v9618 = vld [vmem:[#allocation14 + $0x1c0] sm:$0xff]
    %v9619 = vld [vmem:[#allocation14 + $0x1c8] sm:$0xff]
    %v9620 = vld [vmem:[#allocation14 + $0x1d0] sm:$0xff]
    %v9621 = vld [vmem:[#allocation14 + $0x1d8] sm:$0xff]
    %v9622 = vld [vmem:[#allocation14 + $0x1e0] sm:$0xff]
    %v9623 = vld [vmem:[#allocation14 + $0x1e8] sm:$0xff]
    %v9624 = vld [vmem:[#allocation14 + $0x1f0] sm:$0xff]
    %v9625 = vld [vmem:[#allocation14 + $0x1f8] sm:$0xff]
    %v9690 = vunpack.c.l.b16 %v9562
    %v9691 = vunpack.c.h.b16 %v9562
    %v9692 = vunpack.c.l.b16 %v9563
    %v9693 = vunpack.c.h.b16 %v9563
    %v9694 = vunpack.c.l.b16 %v9564
    %v9695 = vunpack.c.h.b16 %v9564
    %v9696 = vunpack.c.l.b16 %v9565
    %v9697 = vunpack.c.h.b16 %v9565
    %v9698 = vunpack.c.l.b16 %v9566
    %v9699 = vunpack.c.h.b16 %v9566
    %v9700 = vunpack.c.l.b16 %v9567
    %v9701 = vunpack.c.h.b16 %v9567
    %v9702 = vunpack.c.l.b16 %v9568
    %v9703 = vunpack.c.h.b16 %v9568
    %v9704 = vunpack.c.l.b16 %v9569
    %v9705 = vunpack.c.h.b16 %v9569
    %v9706 = vunpack.c.l.b16 %v9570
    %v9707 = vunpack.c.h.b16 %v9570
    %v9708 = vunpack.c.l.b16 %v9571
    %v9709 = vunpack.c.h.b16 %v9571
    %v9710 = vunpack.c.l.b16 %v9572
    %v9711 = vunpack.c.h.b16 %v9572
    %v9712 = vunpack.c.l.b16 %v9573
    %v9713 = vunpack.c.h.b16 %v9573
    %v9714 = vunpack.c.l.b16 %v9574
    %v9715 = vunpack.c.h.b16 %v9574
    %v9716 = vunpack.c.l.b16 %v9575
    %v9717 = vunpack.c.h.b16 %v9575
    %v9718 = vunpack.c.l.b16 %v9576
    %v9719 = vunpack.c.h.b16 %v9576
    %v9720 = vunpack.c.l.b16 %v9577
    %v9721 = vunpack.c.h.b16 %v9577
    %v9722 = vunpack.c.l.b16 %v9578
    %v9723 = vunpack.c.h.b16 %v9578
    %v9724 = vunpack.c.l.b16 %v9579
    %v9725 = vunpack.c.h.b16 %v9579
    %v9726 = vunpack.c.l.b16 %v9580
    %v9727 = vunpack.c.h.b16 %v9580
    %v9728 = vunpack.c.l.b16 %v9581
    %v9729 = vunpack.c.h.b16 %v9581
    %v9730 = vunpack.c.l.b16 %v9582
    %v9731 = vunpack.c.h.b16 %v9582
    %v9732 = vunpack.c.l.b16 %v9583
    %v9733 = vunpack.c.h.b16 %v9583
    %v9734 = vunpack.c.l.b16 %v9584
    %v9735 = vunpack.c.h.b16 %v9584
    %v9736 = vunpack.c.l.b16 %v9585
    %v9737 = vunpack.c.h.b16 %v9585
    %v9738 = vunpack.c.l.b16 %v9586
    %v9739 = vunpack.c.h.b16 %v9586
    %v9740 = vunpack.c.l.b16 %v9587
    %v9741 = vunpack.c.h.b16 %v9587
    %v9742 = vunpack.c.l.b16 %v9588
    %v9743 = vunpack.c.h.b16 %v9588
    %v9744 = vunpack.c.l.b16 %v9589
    %v9745 = vunpack.c.h.b16 %v9589
    %v9746 = vunpack.c.l.b16 %v9590
    %v9747 = vunpack.c.h.b16 %v9590
    %v9748 = vunpack.c.l.b16 %v9591
    %v9749 = vunpack.c.h.b16 %v9591
    %v9750 = vunpack.c.l.b16 %v9592
    %v9751 = vunpack.c.h.b16 %v9592
    %v9752 = vunpack.c.l.b16 %v9593
    %v9753 = vunpack.c.h.b16 %v9593
    %v9754 = vunpack.c.l.b16 %v9594
    %v9755 = vunpack.c.h.b16 %v9594
    %v9756 = vunpack.c.l.b16 %v9595
    %v9757 = vunpack.c.h.b16 %v9595
    %v9758 = vunpack.c.l.b16 %v9596
    %v9759 = vunpack.c.h.b16 %v9596
    %v9760 = vunpack.c.l.b16 %v9597
    %v9761 = vunpack.c.h.b16 %v9597
    %v9762 = vunpack.c.l.b16 %v9598
    %v9763 = vunpack.c.h.b16 %v9598
    %v9764 = vunpack.c.l.b16 %v9599
    %v9765 = vunpack.c.h.b16 %v9599
    %v9766 = vunpack.c.l.b16 %v9600
    %v9767 = vunpack.c.h.b16 %v9600
    %v9768 = vunpack.c.l.b16 %v9601
    %v9769 = vunpack.c.h.b16 %v9601
    %v9770 = vunpack.c.l.b16 %v9602
    %v9771 = vunpack.c.h.b16 %v9602
    %v9772 = vunpack.c.l.b16 %v9603
    %v9773 = vunpack.c.h.b16 %v9603
    %v9774 = vunpack.c.l.b16 %v9604
    %v9775 = vunpack.c.h.b16 %v9604
    %v9776 = vunpack.c.l.b16 %v9605
    %v9777 = vunpack.c.h.b16 %v9605
    %v9778 = vunpack.c.l.b16 %v9606
    %v9779 = vunpack.c.h.b16 %v9606
    %v9780 = vunpack.c.l.b16 %v9607
    %v9781 = vunpack.c.h.b16 %v9607
    %v9782 = vunpack.c.l.b16 %v9608
    %v9783 = vunpack.c.h.b16 %v9608
    %v9784 = vunpack.c.l.b16 %v9609
    %v9785 = vunpack.c.h.b16 %v9609
    %v9786 = vunpack.c.l.b16 %v9610
    %v9787 = vunpack.c.h.b16 %v9610
    %v9788 = vunpack.c.l.b16 %v9611
    %v9789 = vunpack.c.h.b16 %v9611
    %v9790 = vunpack.c.l.b16 %v9612
    %v9791 = vunpack.c.h.b16 %v9612
    %v9792 = vunpack.c.l.b16 %v9613
    %v9793 = vunpack.c.h.b16 %v9613
    %v9794 = vunpack.c.l.b16 %v9614
    %v9795 = vunpack.c.h.b16 %v9614
    %v9796 = vunpack.c.l.b16 %v9615
    %v9797 = vunpack.c.h.b16 %v9615
    %v9798 = vunpack.c.l.b16 %v9616
    %v9799 = vunpack.c.h.b16 %v9616
    %v9800 = vunpack.c.l.b16 %v9617
    %v9801 = vunpack.c.h.b16 %v9617
    %v9802 = vunpack.c.l.b16 %v9618
    %v9803 = vunpack.c.h.b16 %v9618
    %v9804 = vunpack.c.l.b16 %v9619
    %v9805 = vunpack.c.h.b16 %v9619
    %v9806 = vunpack.c.l.b16 %v9620
    %v9807 = vunpack.c.h.b16 %v9620
    %v9808 = vunpack.c.l.b16 %v9621
    %v9809 = vunpack.c.h.b16 %v9621
    %v9810 = vunpack.c.l.b16 %v9622
    %v9811 = vunpack.c.h.b16 %v9622
    %v9812 = vunpack.c.l.b16 %v9623
    %v9813 = vunpack.c.h.b16 %v9623
    %v9814 = vunpack.c.l.b16 %v9624
    %v9815 = vunpack.c.h.b16 %v9624
    %v9816 = vunpack.c.l.b16 %v9625
    %v9817 = vunpack.c.h.b16 %v9625
    %v9818 = vpack.c.b16 %v9694, %v9690
    %v9819 = vpack.c.b16 %v9695, %v9691
    %v9820 = vpack.c.b16 %v9696, %v9692
    %v9821 = vpack.c.b16 %v9697, %v9693
    %v9822 = vpack.c.b16 %v9702, %v9698
    %v9823 = vpack.c.b16 %v9703, %v9699
    %v9824 = vpack.c.b16 %v9704, %v9700
    %v9825 = vpack.c.b16 %v9705, %v9701
    %v9826 = vpack.c.b16 %v9710, %v9706
    %v9827 = vpack.c.b16 %v9711, %v9707
    %v9828 = vpack.c.b16 %v9712, %v9708
    %v9829 = vpack.c.b16 %v9713, %v9709
    %v9830 = vpack.c.b16 %v9718, %v9714
    %v9831 = vpack.c.b16 %v9719, %v9715
    %v9832 = vpack.c.b16 %v9720, %v9716
    %v9833 = vpack.c.b16 %v9721, %v9717
    %v9834 = vpack.c.b16 %v9726, %v9722
    %v9835 = vpack.c.b16 %v9727, %v9723
    %v9836 = vpack.c.b16 %v9728, %v9724
    %v9837 = vpack.c.b16 %v9729, %v9725
    %v9838 = vpack.c.b16 %v9734, %v9730
    %v9839 = vpack.c.b16 %v9735, %v9731
    %v9840 = vpack.c.b16 %v9736, %v9732
    %v9841 = vpack.c.b16 %v9737, %v9733
    %v9842 = vpack.c.b16 %v9742, %v9738
    %v9843 = vpack.c.b16 %v9743, %v9739
    %v9844 = vpack.c.b16 %v9744, %v9740
    %v9845 = vpack.c.b16 %v9745, %v9741
    %v9846 = vpack.c.b16 %v9750, %v9746
    %v9847 = vpack.c.b16 %v9751, %v9747
    %v9848 = vpack.c.b16 %v9752, %v9748
    %v9849 = vpack.c.b16 %v9753, %v9749
    %v9850 = vpack.c.b16 %v9758, %v9754
    %v9851 = vpack.c.b16 %v9759, %v9755
    %v9852 = vpack.c.b16 %v9760, %v9756
    %v9853 = vpack.c.b16 %v9761, %v9757
    %v9854 = vpack.c.b16 %v9766, %v9762
    %v9855 = vpack.c.b16 %v9767, %v9763
    %v9856 = vpack.c.b16 %v9768, %v9764
    %v9857 = vpack.c.b16 %v9769, %v9765
    %v9858 = vpack.c.b16 %v9774, %v9770
    %v9859 = vpack.c.b16 %v9775, %v9771
    %v9860 = vpack.c.b16 %v9776, %v9772
    %v9861 = vpack.c.b16 %v9777, %v9773
    %v9862 = vpack.c.b16 %v9782, %v9778
    %v9863 = vpack.c.b16 %v9783, %v9779
    %v9864 = vpack.c.b16 %v9784, %v9780
    %v9865 = vpack.c.b16 %v9785, %v9781
    %v9866 = vpack.c.b16 %v9790, %v9786
    %v9867 = vpack.c.b16 %v9791, %v9787
    %v9868 = vpack.c.b16 %v9792, %v9788
    %v9869 = vpack.c.b16 %v9793, %v9789
    %v9870 = vpack.c.b16 %v9798, %v9794
    %v9871 = vpack.c.b16 %v9799, %v9795
    %v9872 = vpack.c.b16 %v9800, %v9796
    %v9873 = vpack.c.b16 %v9801, %v9797
    %v9874 = vpack.c.b16 %v9806, %v9802
    %v9875 = vpack.c.b16 %v9807, %v9803
    %v9876 = vpack.c.b16 %v9808, %v9804
    %v9877 = vpack.c.b16 %v9809, %v9805
    %v9878 = vpack.c.b16 %v9814, %v9810
    %v9879 = vpack.c.b16 %v9815, %v9811
    %v9880 = vpack.c.b16 %v9816, %v9812
    %v9881 = vpack.c.b16 %v9817, %v9813
    %9946 = vmatprep.subr.bf16.mxu0 %v9819
    %9947 = vmatpush1.bf16.msra.mxu0 %v9818
    %9948 = vmatprep.subr.bf16.mxu0 %v9823
    %9949 = vmatpush1.bf16.msra.mxu0 %v9822
    %9950 = vmatprep.subr.bf16.mxu0 %v9827
    %9951 = vmatpush1.bf16.msra.mxu0 %v9826
    %9952 = vmatprep.subr.bf16.mxu0 %v9831
    %9953 = vmatpush1.bf16.msra.mxu0 %v9830
    %9954 = vmatprep.subr.bf16.mxu0 %v9835
    %9955 = vmatpush1.bf16.msra.mxu0 %v9834
    %9956 = vmatprep.subr.bf16.mxu0 %v9839
    %9957 = vmatpush1.bf16.msra.mxu0 %v9838
    %9958 = vmatprep.subr.bf16.mxu0 %v9843
    %9959 = vmatpush1.bf16.msra.mxu0 %v9842
    %9960 = vmatprep.subr.bf16.mxu0 %v9847
    %9961 = vmatpush1.bf16.msra.mxu0 %v9846
    %9962 = vmatprep.subr.bf16.mxu0 %v9851
    %9963 = vmatpush1.bf16.msra.mxu0 %v9850
    %9964 = vmatprep.subr.bf16.mxu0 %v9855
    %9965 = vmatpush1.bf16.msra.mxu0 %v9854
    %9966 = vmatprep.subr.bf16.mxu0 %v9859
    %9967 = vmatpush1.bf16.msra.mxu0 %v9858
    %9968 = vmatprep.subr.bf16.mxu0 %v9863
    %9969 = vmatpush1.bf16.msra.mxu0 %v9862
    %9970 = vmatprep.subr.bf16.mxu0 %v9867
    %9971 = vmatpush1.bf16.msra.mxu0 %v9866
    %9972 = vmatprep.subr.bf16.mxu0 %v9871
    %9973 = vmatpush1.bf16.msra.mxu0 %v9870
    %9974 = vmatprep.subr.bf16.mxu0 %v9875
    %9975 = vmatpush1.bf16.msra.mxu0 %v9874
    %9976 = vmatprep.subr.bf16.mxu0 %v9879
    %9977 = vmatpush1.bf16.msra.mxu0 %v9878
    %9978 = vmatprep.mubr.bf16.mxu0 %v9549
    %9979 = vmatmul.mubr.bf16.gmra.mrb[0].mxu0 %v9548
    %v9980 = vpop.f32.mrb[0].mxu0
    %v9981 = vadd.f32 0.0, %v9980
    %v9982 = vpop.f32.mrb[0].mxu0
    %v9983 = vadd.f32 0.0, %v9982
    %v9984 = vpop.f32.mrb[0].mxu0
    %v9985 = vadd.f32 0.0, %v9984
    %v9986 = vpop.f32.mrb[0].mxu0
    %v9987 = vadd.f32 0.0, %v9986
    %9988 = vmatprep.mubr.bf16.mxu0 %v9551
    %9989 = vmatmul.mubr.bf16.gmra.mrb[0].mxu0 %v9550
    %v9990 = vpop.f32.mrb[0].mxu0
    %v9991 = vadd.f32 0.0, %v9990
    %v9992 = vpop.f32.mrb[0].mxu0
    %v9993 = vadd.f32 0.0, %v9992
    %v9994 = vpop.f32.mrb[0].mxu0
    %v9995 = vadd.f32 0.0, %v9994
    %v9996 = vpop.f32.mrb[0].mxu0
    %v9997 = vadd.f32 0.0, %v9996
    %9998 = vmatprep.mubr.bf16.mxu0 %v9553
    %9999 = vmatmul.mubr.bf16.gmra.mrb[0].mxu0 %v9552
    %v10000 = vpop.f32.mrb[0].mxu0
    %v10001 = vadd.f32 0.0, %v10000
    %v10002 = vpop.f32.mrb[0].mxu0
    %v10003 = vadd.f32 0.0, %v10002
    %v10004 = vpop.f32.mrb[0].mxu0
    %v10005 = vadd.f32 0.0, %v10004
    %v10006 = vpop.f32.mrb[0].mxu0
    %v10007 = vadd.f32 0.0, %v10006
    %10008 = vmatprep.mubr.bf16.mxu0 %v9555
    %10009 = vmatmul.mubr.bf16.gmra.mrb[0].mxu0 %v9554
    %v10010 = vpop.f32.mrb[0].mxu0
    %v10011 = vadd.f32 0.0, %v10010
    %v10012 = vpop.f32.mrb[0].mxu0
    %v10013 = vadd.f32 0.0, %v10012
    %v10014 = vpop.f32.mrb[0].mxu0
    %v10015 = vadd.f32 0.0, %v10014
    %v10016 = vpop.f32.mrb[0].mxu0
    %v10017 = vadd.f32 0.0, %v10016
    %10018 = vmatprep.mubr.bf16.mxu0 %v9557
    %10019 = vmatmul.mubr.bf16.gmra.mrb[0].mxu0 %v9556
    %v10020 = vpop.f32.mrb[0].mxu0
    %v10021 = vadd.f32 0.0, %v10020
    %v10022 = vpop.f32.mrb[0].mxu0
    %v10023 = vadd.f32 0.0, %v10022
    %v10024 = vpop.f32.mrb[0].mxu0
    %v10025 = vadd.f32 0.0, %v10024
    %v10026 = vpop.f32.mrb[0].mxu0
    %v10027 = vadd.f32 0.0, %v10026
    %10028 = vmatprep.mubr.bf16.mxu0 %v9559
    %10029 = vmatmul.mubr.bf16.gmra.mrb[0].mxu0 %v9558
    %v10030 = vpop.f32.mrb[0].mxu0
    %v10031 = vadd.f32 0.0, %v10030
    %v10032 = vpop.f32.mrb[0].mxu0
    %v10033 = vadd.f32 0.0, %v10032
    %v10034 = vpop.f32.mrb[0].mxu0
    %v10035 = vadd.f32 0.0, %v10034
    %v10036 = vpop.f32.mrb[0].mxu0
    %v10037 = vadd.f32 0.0, %v10036
    %10038 = vmatprep.mubr.bf16.mxu0 %v9561
    %10039 = vmatmul.mubr.bf16.gmra.mrb[0].mxu0 %v9560
    %v10040 = vpop.f32.mrb[0].mxu0
    %v10041 = vadd.f32 0.0, %v10040
    %v10042 = vpop.f32.mrb[0].mxu0
    %v10043 = vadd.f32 0.0, %v10042
    %v10044 = vpop.f32.mrb[0].mxu0
    %v10045 = vpop.f32.mrb[0].mxu0
    %10046 = vdwg.mxu0
    %10047 = vmatprep.subr.bf16.mxu0 %v9821
    %10048 = vmatpush1.bf16.msra.mxu0 %v9820
    %10049 = vmatprep.subr.bf16.mxu0 %v9825
    %10050 = vmatpush1.bf16.msra.mxu0 %v9824
    %10051 = vmatprep.subr.bf16.mxu0 %v9829
    %10052 = vmatpush1.bf16.msra.mxu0 %v9828
    %10053 = vmatprep.subr.bf16.mxu0 %v9833
    %10054 = vmatpush1.bf16.msra.mxu0 %v9832
    %10055 = vmatprep.subr.bf16.mxu0 %v9837
    %10056 = vmatpush1.bf16.msra.mxu0 %v9836
    %10057 = vmatprep.subr.bf16.mxu0 %v9841
    %10058 = vmatpush1.bf16.msra.mxu0 %v9840
    %10059 = vmatprep.subr.bf16.mxu0 %v9845
    %10060 = vmatpush1.bf16.msra.mxu0 %v9844
    %10061 = vmatprep.subr.bf16.mxu0 %v9849
    %10062 = vmatpush1.bf16.msra.mxu0 %v9848
    %10063 = vmatprep.subr.bf16.mxu0 %v9853
    %10064 = vmatpush1.bf16.msra.mxu0 %v9852
    %10065 = vmatprep.subr.bf16.mxu0 %v9857
    %10066 = vmatpush1.bf16.msra.mxu0 %v9856
    %10067 = vmatprep.subr.bf16.mxu0 %v9861
    %10068 = vmatpush1.bf16.msra.mxu0 %v9860
    %10069 = vmatprep.subr.bf16.mxu0 %v9865
    %10070 = vmatpush1.bf16.msra.mxu0 %v9864
    %10071 = vmatprep.subr.bf16.mxu0 %v9869
    %10072 = vmatpush1.bf16.msra.mxu0 %v9868
    %10073 = vmatprep.subr.bf16.mxu0 %v9873
    %10074 = vmatpush1.bf16.msra.mxu0 %v9872
    %10075 = vmatprep.subr.bf16.mxu0 %v9877
    %10076 = vmatpush1.bf16.msra.mxu0 %v9876
    %10077 = vmatprep.subr.bf16.mxu0 %v9881
    %10078 = vmatpush1.bf16.msra.mxu0 %v9880
    %10079 = vmatprep.mubr.bf16.mxu0 %v9549
    %10080 = vmatmul.mubr.bf16.gmra.mrb[0].mxu0 %v9548
    %v10081 = vpop.f32.mrb[0].mxu0
    %v10082 = vadd.f32 0.0, %v10081
    %v10083 = vpop.f32.mrb[0].mxu0
    %v10084 = vadd.f32 0.0, %v10083
    %v10085 = vpop.f32.mrb[0].mxu0
    %v10086 = vadd.f32 0.0, %v10085
    %v10087 = vpop.f32.mrb[0].mxu0
    %v10088 = vadd.f32 0.0, %v10087
    %10089 = vmatprep.mubr.bf16.mxu0 %v9551
    %10090 = vmatmul.mubr.bf16.gmra.mrb[0].mxu0 %v9550
    %v10091 = vpop.f32.mrb[0].mxu0
    %v10092 = vadd.f32 0.0, %v10091
    %v10093 = vpop.f32.mrb[0].mxu0
    %v10094 = vadd.f32 0.0, %v10093
    %v10095 = vpop.f32.mrb[0].mxu0
    %v10096 = vadd.f32 0.0, %v10095
    %v10097 = vpop.f32.mrb[0].mxu0
    %v10098 = vadd.f32 0.0, %v10097
    %10099 = vmatprep.mubr.bf16.mxu0 %v9553
    %10100 = vmatmul.mubr.bf16.gmra.mrb[0].mxu0 %v9552
    %v10101 = vpop.f32.mrb[0].mxu0
    %v10102 = vadd.f32 0.0, %v10101
    %v10103 = vpop.f32.mrb[0].mxu0
    %v10104 = vadd.f32 0.0, %v10103
    %v10105 = vpop.f32.mrb[0].mxu0
    %v10106 = vadd.f32 0.0, %v10105
    %v10107 = vpop.f32.mrb[0].mxu0
    %v10108 = vadd.f32 0.0, %v10107
    %10109 = vmatprep.mubr.bf16.mxu0 %v9555
    %10110 = vmatmul.mubr.bf16.gmra.mrb[0].mxu0 %v9554
    %v10111 = vpop.f32.mrb[0].mxu0
    %v10112 = vadd.f32 0.0, %v10111
    %v10113 = vpop.f32.mrb[0].mxu0
    %v10114 = vadd.f32 0.0, %v10113
    %v10115 = vpop.f32.mrb[0].mxu0
    %v10116 = vadd.f32 0.0, %v10115
    %v10117 = vpop.f32.mrb[0].mxu0
    %v10118 = vadd.f32 0.0, %v10117
    %10119 = vmatprep.mubr.bf16.mxu0 %v9557
    %10120 = vmatmul.mubr.bf16.gmra.mrb[0].mxu0 %v9556
    %v10121 = vpop.f32.mrb[0].mxu0
    %v10122 = vadd.f32 0.0, %v10121
    %v10123 = vpop.f32.mrb[0].mxu0
    %v10124 = vadd.f32 0.0, %v10123
    %v10125 = vpop.f32.mrb[0].mxu0
    %v10126 = vadd.f32 0.0, %v10125
    %v10127 = vpop.f32.mrb[0].mxu0
    %v10128 = vadd.f32 0.0, %v10127
    %10129 = vmatprep.mubr.bf16.mxu0 %v9559
    %10130 = vmatmul.mubr.bf16.gmra.mrb[0].mxu0 %v9558
    %v10131 = vpop.f32.mrb[0].mxu0
    %v10132 = vadd.f32 0.0, %v10131
    %v10133 = vpop.f32.mrb[0].mxu0
    %v10134 = vadd.f32 0.0, %v10133
    %v10135 = vpop.f32.mrb[0].mxu0
    %v10136 = vadd.f32 0.0, %v10135
    %v10137 = vpop.f32.mrb[0].mxu0
    %v10138 = vadd.f32 0.0, %v10137
    %10139 = vmatprep.mubr.bf16.mxu0 %v9561
    %10140 = vmatmul.mubr.bf16.gmra.mrb[0].mxu0 %v9560
    %v10141 = vpop.f32.mrb[0].mxu0
    %v10142 = vadd.f32 0.0, %v10141
    %v10143 = vpop.f32.mrb[0].mxu0
    %v10144 = vadd.f32 0.0, %v10143
    %v10145 = vpop.f32.mrb[0].mxu0
    %v10146 = vpop.f32.mrb[0].mxu0
    %10147 = vdwg.mxu0
    %10148 = vst [vmem:[#allocation5] sm:$0xff] 0.0
    %10149 = vst [vmem:[#allocation5 + $0x8] sm:$0xff] 0.0
    %10150 = vst [vmem:[#allocation5 + $0x10] sm:$0xff] 0.0
    %10151 = vst [vmem:[#allocation5 + $0x18] sm:$0xff] 0.0
    %10152 = vst [vmem:[#allocation5 + $0x20] sm:$0xff] 0.0
    %10153 = vst [vmem:[#allocation5 + $0x28] sm:$0xff] 0.0
    %10154 = vst [vmem:[#allocation5 + $0x30] sm:$0xff] 0.0
    %10155 = vst [vmem:[#allocation5 + $0x38] sm:$0xff] 0.0
    %10156 = vst [vmem:[#allocation5 + $0x40] sm:$0xff] 0.0
    %10157 = vst [vmem:[#allocation5 + $0x48] sm:$0xff] 0.0
    %10158 = vst [vmem:[#allocation5 + $0x50] sm:$0xff] 0.0
    %10159 = vst [vmem:[#allocation5 + $0x58] sm:$0xff] 0.0
    %10160 = vst [vmem:[#allocation5 + $0x60] sm:$0xff] 0.0
    %10161 = vst [vmem:[#allocation5 + $0x68] sm:$0xff] 0.0
    %10162 = vst [vmem:[#allocation6] sm:$0xff] 0.0
    %10163 = vst [vmem:[#allocation6 + $0x8] sm:$0xff] 0.0
    %10164 = vst [vmem:[#allocation6 + $0x10] sm:$0xff] 0.0
    %10165 = vst [vmem:[#allocation6 + $0x18] sm:$0xff] 0.0
    %10166 = vst [vmem:[#allocation6 + $0x20] sm:$0xff] 0.0
    %10167 = vst [vmem:[#allocation6 + $0x28] sm:$0xff] 0.0
    %10168 = vst [vmem:[#allocation6 + $0x30] sm:$0xff] 0.0
    %10169 = vst [vmem:[#allocation6 + $0x38] sm:$0xff] 0.0
    %10170 = vst [vmem:[#allocation6 + $0x40] sm:$0xff] 0.0
    %10171 = vst [vmem:[#allocation6 + $0x48] sm:$0xff] 0.0
    %10172 = vst [vmem:[#allocation6 + $0x50] sm:$0xff] 0.0
    %10173 = vst [vmem:[#allocation6 + $0x58] sm:$0xff] 0.0
    %10174 = vst [vmem:[#allocation6 + $0x60] sm:$0xff] 0.0
    %10175 = vst [vmem:[#allocation6 + $0x68] sm:$0xff] 0.0
    %v10176 = vld [vmem:[#allocation5] sm:$0xff]
    %v10177 = vld [vmem:[#allocation5 + $0x8] sm:$0xff]
    %v10178 = vld [vmem:[#allocation5 + $0x10] sm:$0xff]
    %v10179 = vld [vmem:[#allocation5 + $0x18] sm:$0xff]
    %v10180 = vld [vmem:[#allocation5 + $0x20] sm:$0xff]
    %v10181 = vld [vmem:[#allocation5 + $0x28] sm:$0xff]
    %v10182 = vld [vmem:[#allocation5 + $0x30] sm:$0xff]
    %v10183 = vld [vmem:[#allocation5 + $0x38] sm:$0xff]
    %v10184 = vld [vmem:[#allocation5 + $0x40] sm:$0xff]
    %v10185 = vld [vmem:[#allocation5 + $0x48] sm:$0xff]
    %v10186 = vld [vmem:[#allocation5 + $0x50] sm:$0xff]
    %v10187 = vld [vmem:[#allocation5 + $0x58] sm:$0xff]
    %v10188 = vld [vmem:[#allocation5 + $0x60] sm:$0xff]
    %v10189 = vadd.f32 %v10176, %v9981
    %v10190 = vadd.f32 %v10177, %v9985
    %v10191 = vadd.f32 %v10178, %v9991
    %v10192 = vadd.f32 %v10179, %v9995
    %v10193 = vadd.f32 %v10180, %v10001
    %v10194 = vadd.f32 %v10181, %v10005
    %v10195 = vadd.f32 %v10182, %v10011
    %v10196 = vadd.f32 %v10183, %v10015
    %v10197 = vadd.f32 %v10184, %v10021
    %v10198 = vadd.f32 %v10185, %v10025
    %v10199 = vadd.f32 %v10186, %v10031
    %v10200 = vadd.f32 %v10187, %v10035
    %v10201 = vadd.f32 %v10188, %v10041
    %10202 = vst [vmem:[#allocation5] sm:$0xff] %v10189
    %10203 = vst [vmem:[#allocation5 + $0x8] sm:$0xff] %v10190
    %10204 = vst [vmem:[#allocation5 + $0x10] sm:$0xff] %v10191
    %10205 = vst [vmem:[#allocation5 + $0x18] sm:$0xff] %v10192
    %10206 = vst [vmem:[#allocation5 + $0x20] sm:$0xff] %v10193
    %10207 = vst [vmem:[#allocation5 + $0x28] sm:$0xff] %v10194
    %10208 = vst [vmem:[#allocation5 + $0x30] sm:$0xff] %v10195
    %10209 = vst [vmem:[#allocation5 + $0x38] sm:$0xff] %v10196
    %10210 = vst [vmem:[#allocation5 + $0x40] sm:$0xff] %v10197
    %10211 = vst [vmem:[#allocation5 + $0x48] sm:$0xff] %v10198
    %10212 = vst [vmem:[#allocation5 + $0x50] sm:$0xff] %v10199
    %10213 = vst [vmem:[#allocation5 + $0x58] sm:$0xff] %v10200
    %10214 = vst [vmem:[#allocation5 + $0x60] sm:$0xff] %v10201
    %v10215 = vld [vmem:[#allocation6] sm:$0xff]
    %v10216 = vld [vmem:[#allocation6 + $0x8] sm:$0xff]
    %v10217 = vld [vmem:[#allocation6 + $0x10] sm:$0xff]
    %v10218 = vld [vmem:[#allocation6 + $0x18] sm:$0xff]
    %v10219 = vld [vmem:[#allocation6 + $0x20] sm:$0xff]
    %v10220 = vld [vmem:[#allocation6 + $0x28] sm:$0xff]
    %v10221 = vld [vmem:[#allocation6 + $0x30] sm:$0xff]
    %v10222 = vld [vmem:[#allocation6 + $0x38] sm:$0xff]
    %v10223 = vld [vmem:[#allocation6 + $0x40] sm:$0xff]
    %v10224 = vld [vmem:[#allocation6 + $0x48] sm:$0xff]
    %v10225 = vld [vmem:[#allocation6 + $0x50] sm:$0xff]
    %v10226 = vld [vmem:[#allocation6 + $0x58] sm:$0xff]
    %v10227 = vld [vmem:[#allocation6 + $0x60] sm:$0xff]
    %v10228 = vadd.f32 %v10215, %v9983
    %v10229 = vadd.f32 %v10216, %v9987
    %v10230 = vadd.f32 %v10217, %v9993
    %v10231 = vadd.f32 %v10218, %v9997
    %v10232 = vadd.f32 %v10219, %v10003
    %v10233 = vadd.f32 %v10220, %v10007
    %v10234 = vadd.f32 %v10221, %v10013
    %v10235 = vadd.f32 %v10222, %v10017
    %v10236 = vadd.f32 %v10223, %v10023
    %v10237 = vadd.f32 %v10224, %v10027
    %v10238 = vadd.f32 %v10225, %v10033
    %v10239 = vadd.f32 %v10226, %v10037
    %v10240 = vadd.f32 %v10227, %v10043
    %10241 = vst [vmem:[#allocation6] sm:$0xff] %v10228
    %10242 = vst [vmem:[#allocation6 + $0x8] sm:$0xff] %v10229
    %10243 = vst [vmem:[#allocation6 + $0x10] sm:$0xff] %v10230
    %10244 = vst [vmem:[#allocation6 + $0x18] sm:$0xff] %v10231
    %10245 = vst [vmem:[#allocation6 + $0x20] sm:$0xff] %v10232
    %10246 = vst [vmem:[#allocation6 + $0x28] sm:$0xff] %v10233
    %10247 = vst [vmem:[#allocation6 + $0x30] sm:$0xff] %v10234
    %10248 = vst [vmem:[#allocation6 + $0x38] sm:$0xff] %v10235
    %10249 = vst [vmem:[#allocation6 + $0x40] sm:$0xff] %v10236
    %10250 = vst [vmem:[#allocation6 + $0x48] sm:$0xff] %v10237
    %10251 = vst [vmem:[#allocation6 + $0x50] sm:$0xff] %v10238
    %10252 = vst [vmem:[#allocation6 + $0x58] sm:$0xff] %v10239
    %10253 = vst [vmem:[#allocation6 + $0x60] sm:$0xff] %v10240
    %v10254 = vld [vmem:[#allocation5 + $0x8] sm:$0xff]
    %v10255 = vld [vmem:[#allocation5 + $0x10] sm:$0xff]
    %v10256 = vld [vmem:[#allocation5 + $0x18] sm:$0xff]
    %v10257 = vld [vmem:[#allocation5 + $0x20] sm:$0xff]
    %v10258 = vld [vmem:[#allocation5 + $0x28] sm:$0xff]
    %v10259 = vld [vmem:[#allocation5 + $0x30] sm:$0xff]
    %v10260 = vld [vmem:[#allocation5 + $0x38] sm:$0xff]
    %v10261 = vld [vmem:[#allocation5 + $0x40] sm:$0xff]
    %v10262 = vld [vmem:[#allocation5 + $0x48] sm:$0xff]
    %v10263 = vld [vmem:[#allocation5 + $0x50] sm:$0xff]
    %v10264 = vld [vmem:[#allocation5 + $0x58] sm:$0xff]
    %v10265 = vld [vmem:[#allocation5 + $0x60] sm:$0xff]
    %v10266 = vld [vmem:[#allocation5 + $0x68] sm:$0xff]
    %v10267 = vadd.f32 %v10254, %v10082
    %v10268 = vadd.f32 %v10255, %v10086
    %v10269 = vadd.f32 %v10256, %v10092
    %v10270 = vadd.f32 %v10257, %v10096
    %v10271 = vadd.f32 %v10258, %v10102
    %v10272 = vadd.f32 %v10259, %v10106
    %v10273 = vadd.f32 %v10260, %v10112
    %v10274 = vadd.f32 %v10261, %v10116
    %v10275 = vadd.f32 %v10262, %v10122
    %v10276 = vadd.f32 %v10263, %v10126
    %v10277 = vadd.f32 %v10264, %v10132
    %v10278 = vadd.f32 %v10265, %v10136
    %v10279 = vadd.f32 %v10266, %v10142
    %10280 = vst [vmem:[#allocation5 + $0x8] sm:$0xff] %v10267
    %10281 = vst [vmem:[#allocation5 + $0x10] sm:$0xff] %v10268
    %10282 = vst [vmem:[#allocation5 + $0x18] sm:$0xff] %v10269
    %10283 = vst [vmem:[#allocation5 + $0x20] sm:$0xff] %v10270
    %10284 = vst [vmem:[#allocation5 + $0x28] sm:$0xff] %v10271
    %10285 = vst [vmem:[#allocation5 + $0x30] sm:$0xff] %v10272
    %10286 = vst [vmem:[#allocation5 + $0x38] sm:$0xff] %v10273
    %10287 = vst [vmem:[#allocation5 + $0x40] sm:$0xff] %v10274
    %10288 = vst [vmem:[#allocation5 + $0x48] sm:$0xff] %v10275
    %10289 = vst [vmem:[#allocation5 + $0x50] sm:$0xff] %v10276
    %10290 = vst [vmem:[#allocation5 + $0x58] sm:$0xff] %v10277
    %10291 = vst [vmem:[#allocation5 + $0x60] sm:$0xff] %v10278
    %10292 = vst [vmem:[#allocation5 + $0x68] sm:$0xff] %v10279
    %v10293 = vld [vmem:[#allocation6 + $0x8] sm:$0xff]
    %v10294 = vld [vmem:[#allocation6 + $0x10] sm:$0xff]
    %v10295 = vld [vmem:[#allocation6 + $0x18] sm:$0xff]
    %v10296 = vld [vmem:[#allocation6 + $0x20] sm:$0xff]
    %v10297 = vld [vmem:[#allocation6 + $0x28] sm:$0xff]
    %v10298 = vld [vmem:[#allocation6 + $0x30] sm:$0xff]
    %v10299 = vld [vmem:[#allocation6 + $0x38] sm:$0xff]
    %v10300 = vld [vmem:[#allocation6 + $0x40] sm:$0xff]
    %v10301 = vld [vmem:[#allocation6 + $0x48] sm:$0xff]
    %v10302 = vld [vmem:[#allocation6 + $0x50] sm:$0xff]
    %v10303 = vld [vmem:[#allocation6 + $0x58] sm:$0xff]
    %v10304 = vld [vmem:[#allocation6 + $0x60] sm:$0xff]
    %v10305 = vld [vmem:[#allocation6 + $0x68] sm:$0xff]
    %v10306 = vadd.f32 %v10293, %v10084
    %v10307 = vadd.f32 %v10294, %v10088
    %v10308 = vadd.f32 %v10295, %v10094
    %v10309 = vadd.f32 %v10296, %v10098
    %v10310 = vadd.f32 %v10297, %v10104
    %v10311 = vadd.f32 %v10298, %v10108
    %v10312 = vadd.f32 %v10299, %v10114
    %v10313 = vadd.f32 %v10300, %v10118
    %v10314 = vadd.f32 %v10301, %v10124
    %v10315 = vadd.f32 %v10302, %v10128
    %v10316 = vadd.f32 %v10303, %v10134
    %v10317 = vadd.f32 %v10304, %v10138
    %v10318 = vadd.f32 %v10305, %v10144
    %10319 = vst [vmem:[#allocation6 + $0x8] sm:$0xff] %v10306
    %10320 = vst [vmem:[#allocation6 + $0x10] sm:$0xff] %v10307
    %10321 = vst [vmem:[#allocation6 + $0x18] sm:$0xff] %v10308
    %10322 = vst [vmem:[#allocation6 + $0x20] sm:$0xff] %v10309
    %10323 = vst [vmem:[#allocation6 + $0x28] sm:$0xff] %v10310
    %10324 = vst [vmem:[#allocation6 + $0x30] sm:$0xff] %v10311
    %10325 = vst [vmem:[#allocation6 + $0x38] sm:$0xff] %v10312
    %10326 = vst [vmem:[#allocation6 + $0x40] sm:$0xff] %v10313
    %10327 = vst [vmem:[#allocation6 + $0x48] sm:$0xff] %v10314
    %10328 = vst [vmem:[#allocation6 + $0x50] sm:$0xff] %v10315
    %10329 = vst [vmem:[#allocation6 + $0x58] sm:$0xff] %v10316
    %10330 = vst [vmem:[#allocation6 + $0x60] sm:$0xff] %v10317
    %10331 = vst [vmem:[#allocation6 + $0x68] sm:$0xff] %v10318
    %v10332 = vld [vmem:[#allocation15 + $0x4] sm:$0x1]
    %v10333 = vld [vmem:[#allocation5] sm:$0xff]
    %v10334 = vld [vmem:[#allocation5 + $0x8] sm:$0xff]
    %v10335 = vld [vmem:[#allocation5 + $0x10] sm:$0xff]
    %v10336 = vld [vmem:[#allocation5 + $0x18] sm:$0xff]
    %v10337 = vld [vmem:[#allocation5 + $0x20] sm:$0xff]
    %v10338 = vld [vmem:[#allocation5 + $0x28] sm:$0xff]
    %v10339 = vld [vmem:[#allocation5 + $0x30] sm:$0xff]
    %v10340 = vld [vmem:[#allocation5 + $0x38] sm:$0xff]
    %v10341 = vld [vmem:[#allocation5 + $0x40] sm:$0xff]
    %v10342 = vld [vmem:[#allocation5 + $0x48] sm:$0xff]
    %v10343 = vld [vmem:[#allocation5 + $0x50] sm:$0xff]
    %v10344 = vld [vmem:[#allocation5 + $0x58] sm:$0xff]
    %v10345 = vld [vmem:[#allocation5 + $0x60] sm:$0xff]
    %v10346 = vld [vmem:[#allocation5 + $0x68] sm:$0xff]
    %v10347 = vlaneseq
    %v10348 = vshrl.u32 %v10347, 7
    %v10349 = vsub.s32 0, %v10348
    %v10350 = vrot.slane %v10332, %v10349
    %v10351 = vadd.f32 %v10333, %v10350
    %v10352 = vadd.f32 %v10334, %v10350
    %v10353 = vadd.f32 %v10335, %v10350
    %v10354 = vadd.f32 %v10336, %v10350
    %v10355 = vadd.f32 %v10337, %v10350
    %v10356 = vadd.f32 %v10338, %v10350
    %v10357 = vadd.f32 %v10339, %v10350
    %v10358 = vadd.f32 %v10340, %v10350
    %v10359 = vadd.f32 %v10341, %v10350
    %v10360 = vadd.f32 %v10342, %v10350
    %v10361 = vadd.f32 %v10343, %v10350
    %v10362 = vadd.f32 %v10344, %v10350
    %v10363 = vadd.f32 %v10345, %v10350
    %v10364 = vadd.f32 %v10346, %v10350
    %v10365 = vtanh.pop %v10351
    %v10366 = vtanh.pop %v10352
    %v10367 = vtanh.pop %v10353
    %v10368 = vtanh.pop %v10354
    %v10369 = vtanh.pop %v10355
    %v10370 = vtanh.pop %v10356
    %v10371 = vtanh.pop %v10357
    %v10372 = vtanh.pop %v10358
    %v10373 = vtanh.pop %v10359
    %v10374 = vtanh.pop %v10360
    %v10375 = vtanh.pop %v10361
    %v10376 = vtanh.pop %v10362
    %v10377 = vtanh.pop %v10363
    %v10378 = vtanh.pop %v10364
    %10379 = vst [vmem:[%s7] sm:$0xff] %v10365
    %10380 = vst [vmem:[%s7 + $0x8] sm:$0xff] %v10366
    %10381 = vst [vmem:[%s7 + $0x10] sm:$0xff] %v10367
    %10382 = vst [vmem:[%s7 + $0x18] sm:$0xff] %v10368
    %10383 = vst [vmem:[%s7 + $0x20] sm:$0xff] %v10369
    %10384 = vst [vmem:[%s7 + $0x28] sm:$0xff] %v10370
    %10385 = vst [vmem:[%s7 + $0x30] sm:$0xff] %v10371
    %10386 = vst [vmem:[%s7 + $0x38] sm:$0xff] %v10372
    %10387 = vst [vmem:[%s7 + $0x40] sm:$0xff] %v10373
    %10388 = vst [vmem:[%s7 + $0x48] sm:$0xff] %v10374
    %10389 = vst [vmem:[%s7 + $0x50] sm:$0xff] %v10375
    %10390 = vst [vmem:[%s7 + $0x58] sm:$0xff] %v10376
    %10391 = vst [vmem:[%s7 + $0x60] sm:$0xff] %v10377
    %10392 = vst [vmem:[%s7 + $0x68] sm:$0xff] %v10378
    %v10393 = vld [vmem:[#allocation6] sm:$0xff]
    %v10394 = vld [vmem:[#allocation6 + $0x8] sm:$0xff]
    %v10395 = vld [vmem:[#allocation6 + $0x10] sm:$0xff]
    %v10396 = vld [vmem:[#allocation6 + $0x18] sm:$0xff]
    %v10397 = vld [vmem:[#allocation6 + $0x20] sm:$0xff]
    %v10398 = vld [vmem:[#allocation6 + $0x28] sm:$0xff]
    %v10399 = vld [vmem:[#allocation6 + $0x30] sm:$0xff]
    %v10400 = vld [vmem:[#allocation6 + $0x38] sm:$0xff]
    %v10401 = vld [vmem:[#allocation6 + $0x40] sm:$0xff]
    %v10402 = vld [vmem:[#allocation6 + $0x48] sm:$0xff]
    %v10403 = vld [vmem:[#allocation6 + $0x50] sm:$0xff]
    %v10404 = vld [vmem:[#allocation6 + $0x58] sm:$0xff]
    %v10405 = vld [vmem:[#allocation6 + $0x60] sm:$0xff]
    %v10406 = vld [vmem:[#allocation6 + $0x68] sm:$0xff]
    %v10407 = vadd.f32 %v10393, %v10350
    %v10408 = vadd.f32 %v10394, %v10350
    %v10409 = vadd.f32 %v10395, %v10350
    %v10410 = vadd.f32 %v10396, %v10350
    %v10411 = vadd.f32 %v10397, %v10350
    %v10412 = vadd.f32 %v10398, %v10350
    %v10413 = vadd.f32 %v10399, %v10350
    %v10414 = vadd.f32 %v10400, %v10350
    %v10415 = vadd.f32 %v10401, %v10350
    %v10416 = vadd.f32 %v10402, %v10350
    %v10417 = vadd.f32 %v10403, %v10350
    %v10418 = vadd.f32 %v10404, %v10350
    %v10419 = vadd.f32 %v10405, %v10350
    %v10420 = vadd.f32 %v10406, %v10350
    %v10421 = vtanh.pop %v10407
    %v10422 = vtanh.pop %v10408
    %v10423 = vtanh.pop %v10409
    %v10424 = vtanh.pop %v10410
    %v10425 = vtanh.pop %v10411
    %v10426 = vtanh.pop %v10412
    %v10427 = vtanh.pop %v10413
    %v10428 = vtanh.pop %v10414
    %v10429 = vtanh.pop %v10415
    %v10430 = vtanh.pop %v10416
    %v10431 = vtanh.pop %v10417
    %v10432 = vtanh.pop %v10418
    %v10433 = vtanh.pop %v10419
    %v10434 = vtanh.pop %v10420
    %s10435 = scalar_lea.vmem %s7, 112
    %10436 = vst [vmem:[%s10435] sm:$0xff] %v10421
    %10437 = vst [vmem:[%s10435 + $0x8] sm:$0xff] %v10422
    %10438 = vst [vmem:[%s10435 + $0x10] sm:$0xff] %v10423
    %10439 = vst [vmem:[%s10435 + $0x18] sm:$0xff] %v10424
    %10440 = vst [vmem:[%s10435 + $0x20] sm:$0xff] %v10425
    %10441 = vst [vmem:[%s10435 + $0x28] sm:$0xff] %v10426
    %10442 = vst [vmem:[%s10435 + $0x30] sm:$0xff] %v10427
    %10443 = vst [vmem:[%s10435 + $0x38] sm:$0xff] %v10428
    %10444 = vst [vmem:[%s10435 + $0x40] sm:$0xff] %v10429
    %10445 = vst [vmem:[%s10435 + $0x48] sm:$0xff] %v10430
    %10446 = vst [vmem:[%s10435 + $0x50] sm:$0xff] %v10431
    %10447 = vst [vmem:[%s10435 + $0x58] sm:$0xff] %v10432
    %10448 = vst [vmem:[%s10435 + $0x60] sm:$0xff] %v10433
    %10449 = vst [vmem:[%s10435 + $0x68] sm:$0xff] %v10434
    // Predicated region
    $region54: #{decoder_forward.1} parent=1 // pred_check
      _
    $region55: #{decoder_forward.1} parent=1 // pred_check_branch
      %10451 = sbr.rel (0) target = $region57
    $region56: #{decoder_forward.1} parent=1 // pred_region
      _
    $region57: #{decoder_forward.1} parent=1 // pred_fallthru
      _
    // Predicated region
    $region58: #{decoder_forward.1} parent=1 // pred_check
      _
    $region59: #{decoder_forward.1} parent=1 // pred_check_branch
      %10453 = sbr.rel (0) target = $region61
    $region60: #{decoder_forward.1} parent=1 // pred_region
      _
    $region61: #{decoder_forward.1} parent=1 // pred_fallthru
      _
    %10454 = vsyncpa [#allocation8], 1
    %10455 = vsyncpa [#allocation10], 1
    %10456 = vsyncpa [#allocation13], 1
    %10457 = vsyncpa [#allocation16], 1

</llo_original>
